<compile_context>
chip_gen: v6e
topology: v6e:2x2x1
jax: 0.10.0
libtpu: 0.0.40
codegen_flags: <defaults>
</compile_context>

<pallas_src>
import functools
import math

import jax
import jax.numpy as jnp
from jax.experimental import pallas as pl
from jax.experimental.pallas import tpu as pltpu


# ---------------------------------------------------------------------------
# In-kernel helpers (traced inside the Pallas kernel body)
# ---------------------------------------------------------------------------
def _layer_norm(v, gamma, beta, eps=1e-5):
    mu = jnp.mean(v, axis=-1, keepdims=True)
    var = jnp.mean(jnp.square(v - mu), axis=-1, keepdims=True)
    return (v - mu) * jax.lax.rsqrt(var + eps) * gamma + beta


def _softmax_lastdim(s):
    m = jnp.max(s, axis=-1, keepdims=True)
    e = jnp.exp(s - m)
    return e * pl.reciprocal(jnp.sum(e, axis=-1, keepdims=True), approx=True)


def _attention(q2, kv2, mask_add, wo_ref, bo_ref, num_heads, mxu_dtype):
    """q2:(Sq,D) f32, kv2:(Skv,2D) f32, mask_add:(Sq,Skv) f32, wo:(D,D)."""
    sq, d = q2.shape
    dk = d // num_heads
    scale = 1.0 / math.sqrt(dk)

    def split_heads(t2d, col0):
        # Head-major relayout (== reshape (S, H*dk) -> (H, S, dk)), written as
        # static lane slices + stack so Mosaic lowering is guaranteed.  This is
        # layout plumbing only -- all matmuls below are H-batched / flat GEMMs.
        return jnp.stack(
            [t2d[:, col0 + h * dk: col0 + (h + 1) * dk]
             for h in range(num_heads)], axis=0).astype(mxu_dtype)

    qh = split_heads(q2, 0)        # (H, Sq,  dk)
    kh = split_heads(kv2, 0)       # (H, Skv, dk)
    vh = split_heads(kv2, d)       # (H, Skv, dk)

    # 'NT' batched score matmul -- no explicit transpose of K.
    s = jnp.einsum("hqc,hkc->hqk", qh, kh,
                   preferred_element_type=jnp.float32)           # (H,Sq,Skv)
    s = s * scale + mask_add[None, :, :]
    p = _softmax_lastdim(s)                                      # f32
    ctx = jnp.einsum("hqk,hkc->hqc", p.astype(mxu_dtype), vh,
                     preferred_element_type=jnp.float32)         # (H,Sq,dk)
    # Concatenate heads back onto the lane axis, then ONE output-projection
    # GEMM with full contraction depth K = H*dk = D.
    ctx = jnp.concatenate([ctx[h] for h in range(num_heads)], axis=-1)
    return jnp.dot(ctx.astype(mxu_dtype), wo_ref[...],
                   preferred_element_type=jnp.float32) + bo_ref[...]


# ---------------------------------------------------------------------------
# Pallas kernel: one grid step == (batch element, query tile), layer fused.
# ---------------------------------------------------------------------------
def _decoder_layer_kernel(
    x_ref, enc_ref, tgt_m_ref, src_m_ref,
    sa_wq, sa_bq, sa_wkv, sa_bkv, sa_wo, sa_bo,
    ca_wq, ca_bq, ca_wkv, ca_bkv, ca_wo, ca_bo,
    n1_g, n1_b, n2_g, n2_b, n3_g, n3_b,
    ff_w1, ff_b1, ff_w2, ff_b2,
    o_ref, *, num_heads, q_tile, mxu_dtype):
    # TODO(synk): dropout is identity (eval mode); training-mode dropout would
    # use pltpu.prng_seed / pltpu.prng_random_bits.

    x_full = x_ref[...]                                 # (S, D)      bf16
    enc = enc_ref[...]                                  # (S_enc, D)  bf16
    row0 = pl.multiple_of(pl.program_id(1) * q_tile, q_tile)
    xq = x_ref[pl.ds(row0, q_tile), :]                  # (tS, D)     bf16
    xq_f32 = xq.astype(jnp.float32)

    # 1) masked self-attention (flat Q + fused KV GEMMs) + residual + LN
    q = jnp.dot(xq, sa_wq[...],
                preferred_element_type=jnp.float32) + sa_bq[...]       # (tS,D)
    kv = jnp.dot(x_full, sa_wkv[...],
                 preferred_element_type=jnp.float32) + sa_bkv[...]     # (S,2D)
    attn = _attention(q, kv, tgt_m_ref[...], sa_wo, sa_bo,
                      num_heads, mxu_dtype)
    x1 = _layer_norm(xq_f32 + attn, n1_g[...], n1_b[...])

    # 2) cross-attention with encoder output + residual + LN
    q = jnp.dot(x1.astype(mxu_dtype), ca_wq[...],
                preferred_element_type=jnp.float32) + ca_bq[...]       # (tS,D)
    kv = jnp.dot(enc, ca_wkv[...],
                 preferred_element_type=jnp.float32) + ca_bkv[...]     # (Se,2D)
    attn = _attention(q, kv, src_m_ref[...], ca_wo, ca_bo,
                      num_heads, mxu_dtype)
    x2 = _layer_norm(x1 + attn, n2_g[...], n2_b[...])

    # 3) position-wise FFN (Linear -> ReLU -> Linear) + residual + LN
    h = jnp.dot(x2.astype(mxu_dtype), ff_w1[...],
                preferred_element_type=jnp.float32) + ff_b1[...]
    h = jnp.maximum(h, 0.0)
    ff = jnp.dot(h.astype(mxu_dtype), ff_w2[...],
                 preferred_element_type=jnp.float32) + ff_b2[...]
    x3 = _layer_norm(x2 + ff, n3_g[...], n3_b[...])

    o_ref[...] = x3.astype(o_ref.dtype)


# ---------------------------------------------------------------------------
# Wrapper
# ---------------------------------------------------------------------------
def decoder_layer(x, enc_output, src_mask, tgt_mask, packed_params, num_heads,
                  *, q_tile=None, mxu_dtype=jnp.bfloat16,
                  vmem_limit_bytes=32 * 1024 * 1024,
                  single_buffer_consts=False):
    B, S, D = x.shape
    S_enc = enc_output.shape[1]
    tS = q_tile if q_tile is not None else min(S, 128)
    assert S % tS == 0 and tS % 8 == 0, "q_tile must divide S and be 8-aligned"
    nq = S // tS

    # Activations enter the kernel as bf16 (halves activation DMA, removes
    # repeated per-dot-site f32->bf16 casts).
    x_bf = x.astype(mxu_dtype)
    enc_bf = enc_output.astype(mxu_dtype)

    # Additive masks: 0 where attend, -1e9 where masked (replaces cmp+select).
    tgt_add = jnp.where(tgt_mask > 0, 0.0, -1e9).astype(jnp.float32)
    src_add = jnp.where(src_mask > 0, 0.0, -1e9).astype(jnp.float32)

    def const_spec(shape):
        zeros = (0,) * len(shape)
        # Grid-constant block index -> Pallas skips re-fetch across the grid.
        if single_buffer_consts:
            # v7x (64 MiB VMEM): never-refetched constants need only 1 buffer.
            return pl.BlockSpec(shape, lambda b, t, _z=zeros: _z,
                                pipeline_mode=pl.Buffered(1))
        return pl.BlockSpec(shape, lambda b, t, _z=zeros: _z)

    in_specs = [
        pl.BlockSpec((None, S, D), lambda b, t: (b, 0, 0)),        # full x (K/V)
        pl.BlockSpec((None, S_enc, D), lambda b, t: (b, 0, 0)),    # encoder out
        pl.BlockSpec((tS, S), lambda b, t: (t, 0)),                # tgt mask tile
        pl.BlockSpec((tS, S_enc), lambda b, t: (t, 0)),            # src mask tile
    ] + [const_spec(p.shape) for p in packed_params]

    kernel = functools.partial(_decoder_layer_kernel, num_heads=num_heads,
                               q_tile=tS, mxu_dtype=mxu_dtype)

    return pl.pallas_call(
        kernel,
        out_shape=jax.ShapeDtypeStruct((B, S, D), x.dtype),
        grid_spec=pltpu.PrefetchScalarGridSpec(
            num_scalar_prefetch=0,
            grid=(B, nq),
            in_specs=in_specs,
            out_specs=pl.BlockSpec((None, tS, D), lambda b, t: (b, t, 0)),
        ),
        compiler_params=pltpu.CompilerParams(
            # Both axes independent -> shard over v7x's two TensorCores; on
            # v5e/v6e this is layout hygiene only.
            dimension_semantics=("parallel", "parallel"),
            vmem_limit_bytes=vmem_limit_bytes,
        ),
    )(x_bf, enc_bf, tgt_add, src_add, *packed_params)


# ---------------------------------------------------------------------------
# Deterministic parameter construction + packing into kernel layout
# ---------------------------------------------------------------------------
def init_raw_params(key, d_model, d_ff):
    """Plain per-module params, math convention y = x @ W + b (f32)."""
    ks = jax.random.split(key, 10)

    def lin(k, din, dout):
        kw, kb = jax.random.split(k)
        w = jax.random.normal(kw, (din, dout), jnp.float32) / math.sqrt(din)
        b = 0.01 * jax.random.normal(kb, (dout,), jnp.float32)
        return w, b

    p = {}
    names = ["sa_q", "sa_k", "sa_v", "sa_o", "ca_q", "ca_k", "ca_v", "ca_o"]
    for i, name in enumerate(names):
        p[name] = lin(ks[i], d_model, d_model)
    p["ff1"] = lin(ks[8], d_model, d_ff)
    p["ff2"] = lin(ks[9], d_ff, d_model)
    for i in (1, 2, 3):  # nn.LayerNorm default init
        p[f"ln{i}"] = (jnp.ones((d_model,), jnp.float32),
                       jnp.zeros((d_model,), jnp.float32))
    return p


def pack_params(p, mxu_dtype=jnp.bfloat16):
    """Pack raw params into the flat / lane-dense layout the kernel expects."""
    # TODO(synk): on v7x, optionally store weights as fp8 with per-channel
    # scales (halves weight DMA/VMEM); validate accuracy first.
    def row(b):
        return b.reshape(1, -1)

    sa_wq = p["sa_q"][0].astype(mxu_dtype)                          # (D, D)
    sa_bq = row(p["sa_q"][1])                                       # (1, D)
    sa_wkv = jnp.concatenate([p["sa_k"][0], p["sa_v"][0]],
                             axis=1).astype(mxu_dtype)              # (D, 2D)
    sa_bkv = row(jnp.concatenate([p["sa_k"][1], p["sa_v"][1]]))     # (1, 2D)
    sa_wo = p["sa_o"][0].astype(mxu_dtype)
    sa_bo = row(p["sa_o"][1])

    ca_wq = p["ca_q"][0].astype(mxu_dtype)
    ca_bq = row(p["ca_q"][1])
    ca_wkv = jnp.concatenate([p["ca_k"][0], p["ca_v"][0]],
                             axis=1).astype(mxu_dtype)
    ca_bkv = row(jnp.concatenate([p["ca_k"][1], p["ca_v"][1]]))
    ca_wo = p["ca_o"][0].astype(mxu_dtype)
    ca_bo = row(p["ca_o"][1])

    n1_g, n1_b = row(p["ln1"][0]), row(p["ln1"][1])
    n2_g, n2_b = row(p["ln2"][0]), row(p["ln2"][1])
    n3_g, n3_b = row(p["ln3"][0]), row(p["ln3"][1])

    ff_w1 = p["ff1"][0].astype(mxu_dtype)
    ff_b1 = row(p["ff1"][1])
    ff_w2 = p["ff2"][0].astype(mxu_dtype)
    ff_b2 = row(p["ff2"][1])

    return [sa_wq, sa_bq, sa_wkv, sa_bkv, sa_wo, sa_bo,
            ca_wq, ca_bq, ca_wkv, ca_bkv, ca_wo, ca_bo,
            n1_g, n1_b, n2_g, n2_b, n3_g, n3_b,
            ff_w1, ff_b1, ff_w2, ff_b2]


# ---------------------------------------------------------------------------
# Pure-JAX reference (f32, mirrors the PyTorch DecoderLayer in eval mode)
# ---------------------------------------------------------------------------
def decoder_layer_reference(x, enc, src_mask, tgt_mask, raw, num_heads):
    def mha(q_in, k_in, v_in, mask, wq, bq, wk, bk, wv, bv, wo, bo):
        B, Sq, D = q_in.shape
        dk = D // num_heads

        def split(t):
            return t.reshape(B, -1, num_heads, dk).transpose(0, 2, 1, 3)

        q = split(q_in @ wq + bq)
        k = split(k_in @ wk + bk)
        v = split(v_in @ wv + bv)
        s = jnp.einsum("bhqd,bhkd->bhqk", q, k) / math.sqrt(dk)
        s = jnp.where(mask[None, None] == 0, -1e9, s)
        p = jax.nn.softmax(s, axis=-1)
        ctx = jnp.einsum("bhqk,bhkd->bhqd", p, v)
        ctx = ctx.transpose(0, 2, 1, 3).reshape(B, Sq, D)
        return ctx @ wo + bo

    def ln(v, g, b, eps=1e-5):
        mu = v.mean(-1, keepdims=True)
        var = ((v - mu) ** 2).mean(-1, keepdims=True)
        return (v - mu) / jnp.sqrt(var + eps) * g + b

    a = mha(x, x, x, tgt_mask, *raw["sa_q"], *raw["sa_k"], *raw["sa_v"],
            *raw["sa_o"])
    x1 = ln(x + a, *raw["ln1"])
    a = mha(x1, enc, enc, src_mask, *raw["ca_q"], *raw["ca_k"], *raw["ca_v"],
            *raw["ca_o"])
    x2 = ln(x1 + a, *raw["ln2"])
    w1, b1 = raw["ff1"]
    w2, b2 = raw["ff2"]
    ff = jnp.maximum(x2 @ w1 + b1, 0.0) @ w2 + b2
    return ln(x2 + ff, *raw["ln3"])


if __name__ == "__main__":
    # Small, lane-dense shapes; S=256 with q_tile=128 exercises the (B, S-tile)
    # grid (4 pipelined steps) with full 128-row MXU M-fill per step.
    B, S, S_enc = 2, 256, 128
    d_model, num_heads, d_ff = 128, 4, 256

    key = jax.random.PRNGKey(0)
    kx, kenc, kp = jax.random.split(key, 3)

    x = jax.random.normal(kx, (B, S, d_model), jnp.float32)
    enc_output = jax.random.normal(kenc, (B, S_enc, d_model), jnp.float32)
    # causal target mask (1 = attend, 0 = masked), full source mask
    tgt_mask = jnp.tril(jnp.ones((S, S), jnp.float32))
    src_mask = jnp.ones((S, S_enc), jnp.float32)

    raw = init_raw_params(kp, d_model, d_ff)
    params = pack_params(raw)

    out = decoder_layer(x, enc_output, src_mask, tgt_mask, params, num_heads,
                        q_tile=128)
    jax.block_until_ready(out)
    assert out.shape == (B, S, d_model)

    ref = decoder_layer_reference(x, enc_output, src_mask, tgt_mask, raw,
                                  num_heads)
    err = float(jnp.max(jnp.abs(out - ref)))
    assert err < 2e-1, f"max abs err vs f32 reference = {err}"
    print("KERNEL_OK")
</pallas_src>

<mosaic_0001>
module attributes {stable_mosaic.version = 11 : i64} {
  func.func @_decoder_layer_kernel(%arg0: i32, %arg1: i32, %arg2: memref<1x256x128xbf16, #tpu.memory_space<vmem>>, %arg3: memref<1x128x128xbf16, #tpu.memory_space<vmem>>, %arg4: memref<128x256xf32, #tpu.memory_space<vmem>>, %arg5: memref<128x128xf32, #tpu.memory_space<vmem>>, %arg6: memref<128x128xbf16, #tpu.memory_space<vmem>>, %arg7: memref<1x128xf32, #tpu.memory_space<vmem>>, %arg8: memref<128x256xbf16, #tpu.memory_space<vmem>>, %arg9: memref<1x256xf32, #tpu.memory_space<vmem>>, %arg10: memref<128x128xbf16, #tpu.memory_space<vmem>>, %arg11: memref<1x128xf32, #tpu.memory_space<vmem>>, %arg12: memref<128x128xbf16, #tpu.memory_space<vmem>>, %arg13: memref<1x128xf32, #tpu.memory_space<vmem>>, %arg14: memref<128x256xbf16, #tpu.memory_space<vmem>>, %arg15: memref<1x256xf32, #tpu.memory_space<vmem>>, %arg16: memref<128x128xbf16, #tpu.memory_space<vmem>>, %arg17: memref<1x128xf32, #tpu.memory_space<vmem>>, %arg18: memref<1x128xf32, #tpu.memory_space<vmem>>, %arg19: memref<1x128xf32, #tpu.memory_space<vmem>>, %arg20: memref<1x128xf32, #tpu.memory_space<vmem>>, %arg21: memref<1x128xf32, #tpu.memory_space<vmem>>, %arg22: memref<1x128xf32, #tpu.memory_space<vmem>>, %arg23: memref<1x128xf32, #tpu.memory_space<vmem>>, %arg24: memref<128x256xbf16, #tpu.memory_space<vmem>>, %arg25: memref<1x256xf32, #tpu.memory_space<vmem>>, %arg26: memref<256x128xbf16, #tpu.memory_space<vmem>>, %arg27: memref<1x128xf32, #tpu.memory_space<vmem>>, %arg28: memref<1x128x128xf32, #tpu.memory_space<vmem>>) attributes {dimension_semantics = [#tpu.dimension_semantics<parallel>, #tpu.dimension_semantics<parallel>], iteration_bounds = array<i64: 2, 2>, scalar_prefetch = 0 : i64, scratch_operands = 0 : i64, tpu.core_type = #tpu.core_type<tc>, window_params = [{transform_indices = @transform_0, window_bounds = array<i64: 1, 256, 128>}, {transform_indices = @transform_1, window_bounds = array<i64: 1, 128, 128>}, {transform_indices = @transform_2, window_bounds = array<i64: 128, 256>}, {transform_indices = @transform_3, window_bounds = array<i64: 128, 128>}, {pipeline_mode = #tpu.pipeline_mode<synchronous>, transform_indices = @transform_4, window_bounds = array<i64: 128, 128>}, {pipeline_mode = #tpu.pipeline_mode<synchronous>, transform_indices = @transform_5, window_bounds = array<i64: 1, 128>}, {pipeline_mode = #tpu.pipeline_mode<synchronous>, transform_indices = @transform_6, window_bounds = array<i64: 128, 256>}, {pipeline_mode = #tpu.pipeline_mode<synchronous>, transform_indices = @transform_7, window_bounds = array<i64: 1, 256>}, {pipeline_mode = #tpu.pipeline_mode<synchronous>, transform_indices = @transform_8, window_bounds = array<i64: 128, 128>}, {pipeline_mode = #tpu.pipeline_mode<synchronous>, transform_indices = @transform_9, window_bounds = array<i64: 1, 128>}, {pipeline_mode = #tpu.pipeline_mode<synchronous>, transform_indices = @transform_10, window_bounds = array<i64: 128, 128>}, {pipeline_mode = #tpu.pipeline_mode<synchronous>, transform_indices = @transform_11, window_bounds = array<i64: 1, 128>}, {pipeline_mode = #tpu.pipeline_mode<synchronous>, transform_indices = @transform_12, window_bounds = array<i64: 128, 256>}, {pipeline_mode = #tpu.pipeline_mode<synchronous>, transform_indices = @transform_13, window_bounds = array<i64: 1, 256>}, {pipeline_mode = #tpu.pipeline_mode<synchronous>, transform_indices = @transform_14, window_bounds = array<i64: 128, 128>}, {pipeline_mode = #tpu.pipeline_mode<synchronous>, transform_indices = @transform_15, window_bounds = array<i64: 1, 128>}, {pipeline_mode = #tpu.pipeline_mode<synchronous>, transform_indices = @transform_16, window_bounds = array<i64: 1, 128>}, {pipeline_mode = #tpu.pipeline_mode<synchronous>, transform_indices = @transform_17, window_bounds = array<i64: 1, 128>}, {pipeline_mode = #tpu.pipeline_mode<synchronous>, transform_indices = @transform_18, window_bounds = array<i64: 1, 128>}, {pipeline_mode = #tpu.pipeline_mode<synchronous>, transform_indices = @transform_19, window_bounds = array<i64: 1, 128>}, {pipeline_mode = #tpu.pipeline_mode<synchronous>, transform_indices = @transform_20, window_bounds = array<i64: 1, 128>}, {pipeline_mode = #tpu.pipeline_mode<synchronous>, transform_indices = @transform_21, window_bounds = array<i64: 1, 128>}, {pipeline_mode = #tpu.pipeline_mode<synchronous>, transform_indices = @transform_22, window_bounds = array<i64: 128, 256>}, {pipeline_mode = #tpu.pipeline_mode<synchronous>, transform_indices = @transform_23, window_bounds = array<i64: 1, 256>}, {pipeline_mode = #tpu.pipeline_mode<synchronous>, transform_indices = @transform_24, window_bounds = array<i64: 256, 128>}, {pipeline_mode = #tpu.pipeline_mode<synchronous>, transform_indices = @transform_25, window_bounds = array<i64: 1, 128>}, {transform_indices = @transform_26, window_bounds = array<i64: 1, 128, 128>}]} {
    %c0 = arith.constant 0 : index
    %c0_0 = arith.constant 0 : index
    %c0_1 = arith.constant 0 : index
    %0 = vector.load %arg2[%c0, %c0_0, %c0_1] : memref<1x256x128xbf16, #tpu.memory_space<vmem>>, vector<1x256x128xbf16>
    %1 = vector.shape_cast %0 : vector<1x256x128xbf16> to vector<256x128xbf16>
    %c0_2 = arith.constant 0 : index
    %c0_3 = arith.constant 0 : index
    %c0_4 = arith.constant 0 : index
    %2 = vector.load %arg3[%c0_2, %c0_3, %c0_4] : memref<1x128x128xbf16, #tpu.memory_space<vmem>>, vector<1x128x128xbf16>
    %3 = vector.shape_cast %2 : vector<1x128x128xbf16> to vector<128x128xbf16>
    %c128_i32 = arith.constant 128 : i32
    %4 = arith.muli %arg1, %c128_i32 : i32
    %5 = tpu.assume_multiple %4, 128 : i32
    %c0_5 = arith.constant 0 : index
    %6 = arith.index_cast %5 : i32 to index
    %c0_6 = arith.constant 0 : index
    %7 = vector.load %arg2[%c0_5, %6, %c0_6] : memref<1x256x128xbf16, #tpu.memory_space<vmem>>, vector<1x128x128xbf16>
    %8 = vector.shape_cast %7 : vector<1x128x128xbf16> to vector<128x128xbf16>
    %9 = arith.extf %8 : vector<128x128xbf16> to vector<128x128xf32>
    %c0_7 = arith.constant 0 : index
    %c0_8 = arith.constant 0 : index
    %10 = vector.load %arg6[%c0_7, %c0_8] : memref<128x128xbf16, #tpu.memory_space<vmem>>, vector<128x128xbf16>
    %cst = arith.constant dense<0.000000e+00> : vector<128x128xf32>
    %11 = tpu.matmul %8, %10, %cst {dimension_numbers = #tpu.dot_dimension_numbers<[1], [0], [0], [1], [0, 0, 1, 1], [], []>} : vector<128x128xbf16>, vector<128x128xbf16>, vector<128x128xf32> -> vector<128x128xf32>
    %c0_9 = arith.constant 0 : index
    %c0_10 = arith.constant 0 : index
    %12 = vector.load %arg7[%c0_9, %c0_10] : memref<1x128xf32, #tpu.memory_space<vmem>>, vector<1x128xf32>
    %13 = vector.broadcast %12 : vector<1x128xf32> to vector<128x128xf32>
    %14 = arith.addf %11, %13 : vector<128x128xf32>
    %c0_11 = arith.constant 0 : index
    %c0_12 = arith.constant 0 : index
    %15 = vector.load %arg8[%c0_11, %c0_12] : memref<128x256xbf16, #tpu.memory_space<vmem>>, vector<128x256xbf16>
    %cst_13 = arith.constant dense<0.000000e+00> : vector<256x256xf32>
    %16 = tpu.matmul %1, %15, %cst_13 {dimension_numbers = #tpu.dot_dimension_numbers<[1], [0], [0], [1], [0, 0, 1, 1], [], []>} : vector<256x128xbf16>, vector<128x256xbf16>, vector<256x256xf32> -> vector<256x256xf32>
    %c0_14 = arith.constant 0 : index
    %c0_15 = arith.constant 0 : index
    %17 = vector.load %arg9[%c0_14, %c0_15] : memref<1x256xf32, #tpu.memory_space<vmem>>, vector<1x256xf32>
    %18 = vector.broadcast %17 : vector<1x256xf32> to vector<256x256xf32>
    %19 = arith.addf %16, %18 : vector<256x256xf32>
    %c0_16 = arith.constant 0 : index
    %c0_17 = arith.constant 0 : index
    %20 = vector.load %arg4[%c0_16, %c0_17] : memref<128x256xf32, #tpu.memory_space<vmem>>, vector<128x256xf32>
    %21 = vector.extract_strided_slice %14 {offsets = [0, 0], sizes = [128, 32], strides = [1, 1]} : vector<128x128xf32> to vector<128x32xf32>
    %22 = vector.extract_strided_slice %14 {offsets = [0, 32], sizes = [128, 32], strides = [1, 1]} : vector<128x128xf32> to vector<128x32xf32>
    %23 = vector.extract_strided_slice %14 {offsets = [0, 64], sizes = [128, 32], strides = [1, 1]} : vector<128x128xf32> to vector<128x32xf32>
    %24 = vector.extract_strided_slice %14 {offsets = [0, 96], sizes = [128, 32], strides = [1, 1]} : vector<128x128xf32> to vector<128x32xf32>
    %25 = vector.shape_cast %21 : vector<128x32xf32> to vector<1x128x32xf32>
    %26 = vector.shape_cast %22 : vector<128x32xf32> to vector<1x128x32xf32>
    %27 = vector.shape_cast %23 : vector<128x32xf32> to vector<1x128x32xf32>
    %28 = vector.shape_cast %24 : vector<128x32xf32> to vector<1x128x32xf32>
    %29 = tpu.concatenate %25, %26, %27, %28 in 0 : vector<1x128x32xf32>, vector<1x128x32xf32>, vector<1x128x32xf32>, vector<1x128x32xf32> -> vector<4x128x32xf32>
    %30 = arith.truncf %29 : vector<4x128x32xf32> to vector<4x128x32xbf16>
    %31 = vector.extract_strided_slice %19 {offsets = [0, 0], sizes = [256, 32], strides = [1, 1]} : vector<256x256xf32> to vector<256x32xf32>
    %32 = vector.extract_strided_slice %19 {offsets = [0, 32], sizes = [256, 32], strides = [1, 1]} : vector<256x256xf32> to vector<256x32xf32>
    %33 = vector.extract_strided_slice %19 {offsets = [0, 64], sizes = [256, 32], strides = [1, 1]} : vector<256x256xf32> to vector<256x32xf32>
    %34 = vector.extract_strided_slice %19 {offsets = [0, 96], sizes = [256, 32], strides = [1, 1]} : vector<256x256xf32> to vector<256x32xf32>
    %35 = vector.shape_cast %31 : vector<256x32xf32> to vector<1x256x32xf32>
    %36 = vector.shape_cast %32 : vector<256x32xf32> to vector<1x256x32xf32>
    %37 = vector.shape_cast %33 : vector<256x32xf32> to vector<1x256x32xf32>
    %38 = vector.shape_cast %34 : vector<256x32xf32> to vector<1x256x32xf32>
    %39 = tpu.concatenate %35, %36, %37, %38 in 0 : vector<1x256x32xf32>, vector<1x256x32xf32>, vector<1x256x32xf32>, vector<1x256x32xf32> -> vector<4x256x32xf32>
    %40 = arith.truncf %39 : vector<4x256x32xf32> to vector<4x256x32xbf16>
    %41 = vector.extract_strided_slice %19 {offsets = [0, 128], sizes = [256, 32], strides = [1, 1]} : vector<256x256xf32> to vector<256x32xf32>
    %42 = vector.extract_strided_slice %19 {offsets = [0, 160], sizes = [256, 32], strides = [1, 1]} : vector<256x256xf32> to vector<256x32xf32>
    %43 = vector.extract_strided_slice %19 {offsets = [0, 192], sizes = [256, 32], strides = [1, 1]} : vector<256x256xf32> to vector<256x32xf32>
    %44 = vector.extract_strided_slice %19 {offsets = [0, 224], sizes = [256, 32], strides = [1, 1]} : vector<256x256xf32> to vector<256x32xf32>
    %45 = vector.shape_cast %41 : vector<256x32xf32> to vector<1x256x32xf32>
    %46 = vector.shape_cast %42 : vector<256x32xf32> to vector<1x256x32xf32>
    %47 = vector.shape_cast %43 : vector<256x32xf32> to vector<1x256x32xf32>
    %48 = vector.shape_cast %44 : vector<256x32xf32> to vector<1x256x32xf32>
    %49 = tpu.concatenate %45, %46, %47, %48 in 0 : vector<1x256x32xf32>, vector<1x256x32xf32>, vector<1x256x32xf32>, vector<1x256x32xf32> -> vector<4x256x32xf32>
    %50 = arith.truncf %49 : vector<4x256x32xf32> to vector<4x256x32xbf16>
    "tpu.trace_start"() <{level = 10 : i32, message = "hqc,hkc->hqk"}> : () -> ()
    %cst_18 = arith.constant dense<0.000000e+00> : vector<4x128x256xf32>
    %51 = tpu.matmul %30, %40, %cst_18 {dimension_numbers = #tpu.dot_dimension_numbers<[2], [2], [1], [1], [0, 0, 0, 1, 1, 1], [0], [0]>} : vector<4x128x32xbf16>, vector<4x256x32xbf16>, vector<4x128x256xf32> -> vector<4x128x256xf32>
    "tpu.trace_stop"() : () -> ()
    %cst_19 = arith.constant 0.176776692 : f32
    %52 = vector.broadcast %cst_19 : f32 to vector<4x128x256xf32>
    %53 = arith.mulf %51, %52 : vector<4x128x256xf32>
    %54 = vector.shape_cast %20 : vector<128x256xf32> to vector<1x128x256xf32>
    %55 = vector.broadcast %54 : vector<1x128x256xf32> to vector<4x128x256xf32>
    %56 = arith.addf %53, %55 : vector<4x128x256xf32>
    %cst_20 = arith.constant dense<0xFF800000> : vector<4x128xf32>
    %57 = vector.multi_reduction <maximumf>, %56, %cst_20 [2] : vector<4x128x256xf32> to vector<4x128xf32>
    %58 = vector.shape_cast %57 : vector<4x128xf32> to vector<4x128x1xf32>
    %59 = vector.broadcast %58 : vector<4x128x1xf32> to vector<4x128x256xf32>
    %60 = arith.subf %56, %59 : vector<4x128x256xf32>
    %61 = math.exp %60 : vector<4x128x256xf32>
    %cst_21 = arith.constant dense<0.000000e+00> : vector<4x128xf32>
    %62 = vector.multi_reduction <add>, %61, %cst_21 [2] : vector<4x128x256xf32> to vector<4x128xf32>
    %63 = vector.shape_cast %62 : vector<4x128xf32> to vector<4x128x1xf32>
    %64 = tpu.reciprocal %63 {approx = true} : vector<4x128x1xf32> -> vector<4x128x1xf32>
    %65 = vector.broadcast %64 : vector<4x128x1xf32> to vector<4x128x256xf32>
    %66 = arith.mulf %61, %65 : vector<4x128x256xf32>
    %67 = arith.truncf %66 : vector<4x128x256xf32> to vector<4x128x256xbf16>
    "tpu.trace_start"() <{level = 10 : i32, message = "hqk,hkc->hqc"}> : () -> ()
    %cst_22 = arith.constant dense<0.000000e+00> : vector<4x128x32xf32>
    %68 = tpu.matmul %67, %50, %cst_22 {dimension_numbers = #tpu.dot_dimension_numbers<[2], [1], [1], [2], [0, 0, 0, 1, 1, 2], [0], [0]>} : vector<4x128x256xbf16>, vector<4x256x32xbf16>, vector<4x128x32xf32> -> vector<4x128x32xf32>
    "tpu.trace_stop"() : () -> ()
    %69 = vector.extract_strided_slice %68 {offsets = [0, 0, 0], sizes = [1, 128, 32], strides = [1, 1, 1]} : vector<4x128x32xf32> to vector<1x128x32xf32>
    %70 = vector.shape_cast %69 : vector<1x128x32xf32> to vector<128x32xf32>
    %71 = vector.extract_strided_slice %68 {offsets = [1, 0, 0], sizes = [1, 128, 32], strides = [1, 1, 1]} : vector<4x128x32xf32> to vector<1x128x32xf32>
    %72 = vector.shape_cast %71 : vector<1x128x32xf32> to vector<128x32xf32>
    %73 = vector.extract_strided_slice %68 {offsets = [2, 0, 0], sizes = [1, 128, 32], strides = [1, 1, 1]} : vector<4x128x32xf32> to vector<1x128x32xf32>
    %74 = vector.shape_cast %73 : vector<1x128x32xf32> to vector<128x32xf32>
    %75 = vector.extract_strided_slice %68 {offsets = [3, 0, 0], sizes = [1, 128, 32], strides = [1, 1, 1]} : vector<4x128x32xf32> to vector<1x128x32xf32>
    %76 = vector.shape_cast %75 : vector<1x128x32xf32> to vector<128x32xf32>
    %77 = tpu.concatenate %70, %72, %74, %76 in 1 : vector<128x32xf32>, vector<128x32xf32>, vector<128x32xf32>, vector<128x32xf32> -> vector<128x128xf32>
    %78 = arith.truncf %77 : vector<128x128xf32> to vector<128x128xbf16>
    %c0_23 = arith.constant 0 : index
    %c0_24 = arith.constant 0 : index
    %79 = vector.load %arg10[%c0_23, %c0_24] : memref<128x128xbf16, #tpu.memory_space<vmem>>, vector<128x128xbf16>
    %cst_25 = arith.constant dense<0.000000e+00> : vector<128x128xf32>
    %80 = tpu.matmul %78, %79, %cst_25 {dimension_numbers = #tpu.dot_dimension_numbers<[1], [0], [0], [1], [0, 0, 1, 1], [], []>} : vector<128x128xbf16>, vector<128x128xbf16>, vector<128x128xf32> -> vector<128x128xf32>
    %c0_26 = arith.constant 0 : index
    %c0_27 = arith.constant 0 : index
    %81 = vector.load %arg11[%c0_26, %c0_27] : memref<1x128xf32, #tpu.memory_space<vmem>>, vector<1x128xf32>
    %82 = vector.broadcast %81 : vector<1x128xf32> to vector<128x128xf32>
    %83 = arith.addf %80, %82 : vector<128x128xf32>
    %84 = arith.addf %9, %83 : vector<128x128xf32>
    %c0_28 = arith.constant 0 : index
    %c0_29 = arith.constant 0 : index
    %85 = vector.load %arg18[%c0_28, %c0_29] : memref<1x128xf32, #tpu.memory_space<vmem>>, vector<1x128xf32>
    %c0_30 = arith.constant 0 : index
    %c0_31 = arith.constant 0 : index
    %86 = vector.load %arg19[%c0_30, %c0_31] : memref<1x128xf32, #tpu.memory_space<vmem>>, vector<1x128xf32>
    %cst_32 = arith.constant dense<0.000000e+00> : vector<128xf32>
    %87 = vector.multi_reduction <add>, %84, %cst_32 [1] : vector<128x128xf32> to vector<128xf32>
    %88 = vector.shape_cast %87 : vector<128xf32> to vector<128x1xf32>
    %cst_33 = arith.constant 1.280000e+02 : f32
    %89 = vector.broadcast %cst_33 : f32 to vector<128x1xf32>
    %90 = arith.divf %88, %89 : vector<128x1xf32>
    %91 = vector.broadcast %90 : vector<128x1xf32> to vector<128x128xf32>
    %92 = arith.subf %84, %91 : vector<128x128xf32>
    %93 = arith.mulf %92, %92 : vector<128x128xf32>
    %cst_34 = arith.constant dense<0.000000e+00> : vector<128xf32>
    %94 = vector.multi_reduction <add>, %93, %cst_34 [1] : vector<128x128xf32> to vector<128xf32>
    %95 = vector.shape_cast %94 : vector<128xf32> to vector<128x1xf32>
    %cst_35 = arith.constant 1.280000e+02 : f32
    %96 = vector.broadcast %cst_35 : f32 to vector<128x1xf32>
    %97 = arith.divf %95, %96 : vector<128x1xf32>
    %98 = vector.broadcast %90 : vector<128x1xf32> to vector<128x128xf32>
    %99 = arith.subf %84, %98 : vector<128x128xf32>
    %cst_36 = arith.constant 9.99999974E-6 : f32
    %100 = vector.broadcast %cst_36 : f32 to vector<128x1xf32>
    %101 = arith.addf %97, %100 : vector<128x1xf32>
    %102 = math.rsqrt %101 : vector<128x1xf32>
    %103 = vector.broadcast %102 : vector<128x1xf32> to vector<128x128xf32>
    %104 = arith.mulf %99, %103 : vector<128x128xf32>
    %105 = vector.broadcast %85 : vector<1x128xf32> to vector<128x128xf32>
    %106 = arith.mulf %104, %105 : vector<128x128xf32>
    %107 = vector.broadcast %86 : vector<1x128xf32> to vector<128x128xf32>
    %108 = arith.addf %106, %107 : vector<128x128xf32>
    %109 = arith.truncf %108 : vector<128x128xf32> to vector<128x128xbf16>
    %c0_37 = arith.constant 0 : index
    %c0_38 = arith.constant 0 : index
    %110 = vector.load %arg12[%c0_37, %c0_38] : memref<128x128xbf16, #tpu.memory_space<vmem>>, vector<128x128xbf16>
    %cst_39 = arith.constant dense<0.000000e+00> : vector<128x128xf32>
    %111 = tpu.matmul %109, %110, %cst_39 {dimension_numbers = #tpu.dot_dimension_numbers<[1], [0], [0], [1], [0, 0, 1, 1], [], []>} : vector<128x128xbf16>, vector<128x128xbf16>, vector<128x128xf32> -> vector<128x128xf32>
    %c0_40 = arith.constant 0 : index
    %c0_41 = arith.constant 0 : index
    %112 = vector.load %arg13[%c0_40, %c0_41] : memref<1x128xf32, #tpu.memory_space<vmem>>, vector<1x128xf32>
    %113 = vector.broadcast %112 : vector<1x128xf32> to vector<128x128xf32>
    %114 = arith.addf %111, %113 : vector<128x128xf32>
    %c0_42 = arith.constant 0 : index
    %c0_43 = arith.constant 0 : index
    %115 = vector.load %arg14[%c0_42, %c0_43] : memref<128x256xbf16, #tpu.memory_space<vmem>>, vector<128x256xbf16>
    %cst_44 = arith.constant dense<0.000000e+00> : vector<128x256xf32>
    %116 = tpu.matmul %3, %115, %cst_44 {dimension_numbers = #tpu.dot_dimension_numbers<[1], [0], [0], [1], [0, 0, 1, 1], [], []>} : vector<128x128xbf16>, vector<128x256xbf16>, vector<128x256xf32> -> vector<128x256xf32>
    %c0_45 = arith.constant 0 : index
    %c0_46 = arith.constant 0 : index
    %117 = vector.load %arg15[%c0_45, %c0_46] : memref<1x256xf32, #tpu.memory_space<vmem>>, vector<1x256xf32>
    %118 = vector.broadcast %117 : vector<1x256xf32> to vector<128x256xf32>
    %119 = arith.addf %116, %118 : vector<128x256xf32>
    %c0_47 = arith.constant 0 : index
    %c0_48 = arith.constant 0 : index
    %120 = vector.load %arg5[%c0_47, %c0_48] : memref<128x128xf32, #tpu.memory_space<vmem>>, vector<128x128xf32>
    %121 = vector.extract_strided_slice %114 {offsets = [0, 0], sizes = [128, 32], strides = [1, 1]} : vector<128x128xf32> to vector<128x32xf32>
    %122 = vector.extract_strided_slice %114 {offsets = [0, 32], sizes = [128, 32], strides = [1, 1]} : vector<128x128xf32> to vector<128x32xf32>
    %123 = vector.extract_strided_slice %114 {offsets = [0, 64], sizes = [128, 32], strides = [1, 1]} : vector<128x128xf32> to vector<128x32xf32>
    %124 = vector.extract_strided_slice %114 {offsets = [0, 96], sizes = [128, 32], strides = [1, 1]} : vector<128x128xf32> to vector<128x32xf32>
    %125 = vector.shape_cast %121 : vector<128x32xf32> to vector<1x128x32xf32>
    %126 = vector.shape_cast %122 : vector<128x32xf32> to vector<1x128x32xf32>
    %127 = vector.shape_cast %123 : vector<128x32xf32> to vector<1x128x32xf32>
    %128 = vector.shape_cast %124 : vector<128x32xf32> to vector<1x128x32xf32>
    %129 = tpu.concatenate %125, %126, %127, %128 in 0 : vector<1x128x32xf32>, vector<1x128x32xf32>, vector<1x128x32xf32>, vector<1x128x32xf32> -> vector<4x128x32xf32>
    %130 = arith.truncf %129 : vector<4x128x32xf32> to vector<4x128x32xbf16>
    %131 = vector.extract_strided_slice %119 {offsets = [0, 0], sizes = [128, 32], strides = [1, 1]} : vector<128x256xf32> to vector<128x32xf32>
    %132 = vector.extract_strided_slice %119 {offsets = [0, 32], sizes = [128, 32], strides = [1, 1]} : vector<128x256xf32> to vector<128x32xf32>
    %133 = vector.extract_strided_slice %119 {offsets = [0, 64], sizes = [128, 32], strides = [1, 1]} : vector<128x256xf32> to vector<128x32xf32>
    %134 = vector.extract_strided_slice %119 {offsets = [0, 96], sizes = [128, 32], strides = [1, 1]} : vector<128x256xf32> to vector<128x32xf32>
    %135 = vector.shape_cast %131 : vector<128x32xf32> to vector<1x128x32xf32>
    %136 = vector.shape_cast %132 : vector<128x32xf32> to vector<1x128x32xf32>
    %137 = vector.shape_cast %133 : vector<128x32xf32> to vector<1x128x32xf32>
    %138 = vector.shape_cast %134 : vector<128x32xf32> to vector<1x128x32xf32>
    %139 = tpu.concatenate %135, %136, %137, %138 in 0 : vector<1x128x32xf32>, vector<1x128x32xf32>, vector<1x128x32xf32>, vector<1x128x32xf32> -> vector<4x128x32xf32>
    %140 = arith.truncf %139 : vector<4x128x32xf32> to vector<4x128x32xbf16>
    %141 = vector.extract_strided_slice %119 {offsets = [0, 128], sizes = [128, 32], strides = [1, 1]} : vector<128x256xf32> to vector<128x32xf32>
    %142 = vector.extract_strided_slice %119 {offsets = [0, 160], sizes = [128, 32], strides = [1, 1]} : vector<128x256xf32> to vector<128x32xf32>
    %143 = vector.extract_strided_slice %119 {offsets = [0, 192], sizes = [128, 32], strides = [1, 1]} : vector<128x256xf32> to vector<128x32xf32>
    %144 = vector.extract_strided_slice %119 {offsets = [0, 224], sizes = [128, 32], strides = [1, 1]} : vector<128x256xf32> to vector<128x32xf32>
    %145 = vector.shape_cast %141 : vector<128x32xf32> to vector<1x128x32xf32>
    %146 = vector.shape_cast %142 : vector<128x32xf32> to vector<1x128x32xf32>
    %147 = vector.shape_cast %143 : vector<128x32xf32> to vector<1x128x32xf32>
    %148 = vector.shape_cast %144 : vector<128x32xf32> to vector<1x128x32xf32>
    %149 = tpu.concatenate %145, %146, %147, %148 in 0 : vector<1x128x32xf32>, vector<1x128x32xf32>, vector<1x128x32xf32>, vector<1x128x32xf32> -> vector<4x128x32xf32>
    %150 = arith.truncf %149 : vector<4x128x32xf32> to vector<4x128x32xbf16>
    "tpu.trace_start"() <{level = 10 : i32, message = "hqc,hkc->hqk"}> : () -> ()
    %cst_49 = arith.constant dense<0.000000e+00> : vector<4x128x128xf32>
    %151 = tpu.matmul %130, %140, %cst_49 {dimension_numbers = #tpu.dot_dimension_numbers<[2], [2], [1], [1], [0, 0, 0, 1, 1, 1], [0], [0]>} : vector<4x128x32xbf16>, vector<4x128x32xbf16>, vector<4x128x128xf32> -> vector<4x128x128xf32>
    "tpu.trace_stop"() : () -> ()
    %cst_50 = arith.constant 0.176776692 : f32
    %152 = vector.broadcast %cst_50 : f32 to vector<4x128x128xf32>
    %153 = arith.mulf %151, %152 : vector<4x128x128xf32>
    %154 = vector.shape_cast %120 : vector<128x128xf32> to vector<1x128x128xf32>
    %155 = vector.broadcast %154 : vector<1x128x128xf32> to vector<4x128x128xf32>
    %156 = arith.addf %153, %155 : vector<4x128x128xf32>
    %cst_51 = arith.constant dense<0xFF800000> : vector<4x128xf32>
    %157 = vector.multi_reduction <maximumf>, %156, %cst_51 [2] : vector<4x128x128xf32> to vector<4x128xf32>
    %158 = vector.shape_cast %157 : vector<4x128xf32> to vector<4x128x1xf32>
    %159 = vector.broadcast %158 : vector<4x128x1xf32> to vector<4x128x128xf32>
    %160 = arith.subf %156, %159 : vector<4x128x128xf32>
    %161 = math.exp %160 : vector<4x128x128xf32>
    %cst_52 = arith.constant dense<0.000000e+00> : vector<4x128xf32>
    %162 = vector.multi_reduction <add>, %161, %cst_52 [2] : vector<4x128x128xf32> to vector<4x128xf32>
    %163 = vector.shape_cast %162 : vector<4x128xf32> to vector<4x128x1xf32>
    %164 = tpu.reciprocal %163 {approx = true} : vector<4x128x1xf32> -> vector<4x128x1xf32>
    %165 = vector.broadcast %164 : vector<4x128x1xf32> to vector<4x128x128xf32>
    %166 = arith.mulf %161, %165 : vector<4x128x128xf32>
    %167 = arith.truncf %166 : vector<4x128x128xf32> to vector<4x128x128xbf16>
    "tpu.trace_start"() <{level = 10 : i32, message = "hqk,hkc->hqc"}> : () -> ()
    %cst_53 = arith.constant dense<0.000000e+00> : vector<4x128x32xf32>
    %168 = tpu.matmul %167, %150, %cst_53 {dimension_numbers = #tpu.dot_dimension_numbers<[2], [1], [1], [2], [0, 0, 0, 1, 1, 2], [0], [0]>} : vector<4x128x128xbf16>, vector<4x128x32xbf16>, vector<4x128x32xf32> -> vector<4x128x32xf32>
    "tpu.trace_stop"() : () -> ()
    %169 = vector.extract_strided_slice %168 {offsets = [0, 0, 0], sizes = [1, 128, 32], strides = [1, 1, 1]} : vector<4x128x32xf32> to vector<1x128x32xf32>
    %170 = vector.shape_cast %169 : vector<1x128x32xf32> to vector<128x32xf32>
    %171 = vector.extract_strided_slice %168 {offsets = [1, 0, 0], sizes = [1, 128, 32], strides = [1, 1, 1]} : vector<4x128x32xf32> to vector<1x128x32xf32>
    %172 = vector.shape_cast %171 : vector<1x128x32xf32> to vector<128x32xf32>
    %173 = vector.extract_strided_slice %168 {offsets = [2, 0, 0], sizes = [1, 128, 32], strides = [1, 1, 1]} : vector<4x128x32xf32> to vector<1x128x32xf32>
    %174 = vector.shape_cast %173 : vector<1x128x32xf32> to vector<128x32xf32>
    %175 = vector.extract_strided_slice %168 {offsets = [3, 0, 0], sizes = [1, 128, 32], strides = [1, 1, 1]} : vector<4x128x32xf32> to vector<1x128x32xf32>
    %176 = vector.shape_cast %175 : vector<1x128x32xf32> to vector<128x32xf32>
    %177 = tpu.concatenate %170, %172, %174, %176 in 1 : vector<128x32xf32>, vector<128x32xf32>, vector<128x32xf32>, vector<128x32xf32> -> vector<128x128xf32>
    %178 = arith.truncf %177 : vector<128x128xf32> to vector<128x128xbf16>
    %c0_54 = arith.constant 0 : index
    %c0_55 = arith.constant 0 : index
    %179 = vector.load %arg16[%c0_54, %c0_55] : memref<128x128xbf16, #tpu.memory_space<vmem>>, vector<128x128xbf16>
    %cst_56 = arith.constant dense<0.000000e+00> : vector<128x128xf32>
    %180 = tpu.matmul %178, %179, %cst_56 {dimension_numbers = #tpu.dot_dimension_numbers<[1], [0], [0], [1], [0, 0, 1, 1], [], []>} : vector<128x128xbf16>, vector<128x128xbf16>, vector<128x128xf32> -> vector<128x128xf32>
    %c0_57 = arith.constant 0 : index
    %c0_58 = arith.constant 0 : index
    %181 = vector.load %arg17[%c0_57, %c0_58] : memref<1x128xf32, #tpu.memory_space<vmem>>, vector<1x128xf32>
    %182 = vector.broadcast %181 : vector<1x128xf32> to vector<128x128xf32>
    %183 = arith.addf %180, %182 : vector<128x128xf32>
    %184 = arith.addf %108, %183 : vector<128x128xf32>
    %c0_59 = arith.constant 0 : index
    %c0_60 = arith.constant 0 : index
    %185 = vector.load %arg20[%c0_59, %c0_60] : memref<1x128xf32, #tpu.memory_space<vmem>>, vector<1x128xf32>
    %c0_61 = arith.constant 0 : index
    %c0_62 = arith.constant 0 : index
    %186 = vector.load %arg21[%c0_61, %c0_62] : memref<1x128xf32, #tpu.memory_space<vmem>>, vector<1x128xf32>
    %cst_63 = arith.constant dense<0.000000e+00> : vector<128xf32>
    %187 = vector.multi_reduction <add>, %184, %cst_63 [1] : vector<128x128xf32> to vector<128xf32>
    %188 = vector.shape_cast %187 : vector<128xf32> to vector<128x1xf32>
    %cst_64 = arith.constant 1.280000e+02 : f32
    %189 = vector.broadcast %cst_64 : f32 to vector<128x1xf32>
    %190 = arith.divf %188, %189 : vector<128x1xf32>
    %191 = vector.broadcast %190 : vector<128x1xf32> to vector<128x128xf32>
    %192 = arith.subf %184, %191 : vector<128x128xf32>
    %193 = arith.mulf %192, %192 : vector<128x128xf32>
    %cst_65 = arith.constant dense<0.000000e+00> : vector<128xf32>
    %194 = vector.multi_reduction <add>, %193, %cst_65 [1] : vector<128x128xf32> to vector<128xf32>
    %195 = vector.shape_cast %194 : vector<128xf32> to vector<128x1xf32>
    %cst_66 = arith.constant 1.280000e+02 : f32
    %196 = vector.broadcast %cst_66 : f32 to vector<128x1xf32>
    %197 = arith.divf %195, %196 : vector<128x1xf32>
    %198 = vector.broadcast %190 : vector<128x1xf32> to vector<128x128xf32>
    %199 = arith.subf %184, %198 : vector<128x128xf32>
    %cst_67 = arith.constant 9.99999974E-6 : f32
    %200 = vector.broadcast %cst_67 : f32 to vector<128x1xf32>
    %201 = arith.addf %197, %200 : vector<128x1xf32>
    %202 = math.rsqrt %201 : vector<128x1xf32>
    %203 = vector.broadcast %202 : vector<128x1xf32> to vector<128x128xf32>
    %204 = arith.mulf %199, %203 : vector<128x128xf32>
    %205 = vector.broadcast %185 : vector<1x128xf32> to vector<128x128xf32>
    %206 = arith.mulf %204, %205 : vector<128x128xf32>
    %207 = vector.broadcast %186 : vector<1x128xf32> to vector<128x128xf32>
    %208 = arith.addf %206, %207 : vector<128x128xf32>
    %209 = arith.truncf %208 : vector<128x128xf32> to vector<128x128xbf16>
    %c0_68 = arith.constant 0 : index
    %c0_69 = arith.constant 0 : index
    %210 = vector.load %arg24[%c0_68, %c0_69] : memref<128x256xbf16, #tpu.memory_space<vmem>>, vector<128x256xbf16>
    %cst_70 = arith.constant dense<0.000000e+00> : vector<128x256xf32>
    %211 = tpu.matmul %209, %210, %cst_70 {dimension_numbers = #tpu.dot_dimension_numbers<[1], [0], [0], [1], [0, 0, 1, 1], [], []>} : vector<128x128xbf16>, vector<128x256xbf16>, vector<128x256xf32> -> vector<128x256xf32>
    %c0_71 = arith.constant 0 : index
    %c0_72 = arith.constant 0 : index
    %212 = vector.load %arg25[%c0_71, %c0_72] : memref<1x256xf32, #tpu.memory_space<vmem>>, vector<1x256xf32>
    %213 = vector.broadcast %212 : vector<1x256xf32> to vector<128x256xf32>
    %214 = arith.addf %211, %213 : vector<128x256xf32>
    %cst_73 = arith.constant 0.000000e+00 : f32
    %215 = vector.broadcast %cst_73 : f32 to vector<128x256xf32>
    %216 = arith.maximumf %214, %215 : vector<128x256xf32>
    %217 = arith.truncf %216 : vector<128x256xf32> to vector<128x256xbf16>
    %c0_74 = arith.constant 0 : index
    %c0_75 = arith.constant 0 : index
    %218 = vector.load %arg26[%c0_74, %c0_75] : memref<256x128xbf16, #tpu.memory_space<vmem>>, vector<256x128xbf16>
    %cst_76 = arith.constant dense<0.000000e+00> : vector<128x128xf32>
    %219 = tpu.matmul %217, %218, %cst_76 {dimension_numbers = #tpu.dot_dimension_numbers<[1], [0], [0], [1], [0, 0, 1, 1], [], []>} : vector<128x256xbf16>, vector<256x128xbf16>, vector<128x128xf32> -> vector<128x128xf32>
    %c0_77 = arith.constant 0 : index
    %c0_78 = arith.constant 0 : index
    %220 = vector.load %arg27[%c0_77, %c0_78] : memref<1x128xf32, #tpu.memory_space<vmem>>, vector<1x128xf32>
    %221 = vector.broadcast %220 : vector<1x128xf32> to vector<128x128xf32>
    %222 = arith.addf %219, %221 : vector<128x128xf32>
    %223 = arith.addf %208, %222 : vector<128x128xf32>
    %c0_79 = arith.constant 0 : index
    %c0_80 = arith.constant 0 : index
    %224 = vector.load %arg22[%c0_79, %c0_80] : memref<1x128xf32, #tpu.memory_space<vmem>>, vector<1x128xf32>
    %c0_81 = arith.constant 0 : index
    %c0_82 = arith.constant 0 : index
    %225 = vector.load %arg23[%c0_81, %c0_82] : memref<1x128xf32, #tpu.memory_space<vmem>>, vector<1x128xf32>
    %cst_83 = arith.constant dense<0.000000e+00> : vector<128xf32>
    %226 = vector.multi_reduction <add>, %223, %cst_83 [1] : vector<128x128xf32> to vector<128xf32>
    %227 = vector.shape_cast %226 : vector<128xf32> to vector<128x1xf32>
    %cst_84 = arith.constant 1.280000e+02 : f32
    %228 = vector.broadcast %cst_84 : f32 to vector<128x1xf32>
    %229 = arith.divf %227, %228 : vector<128x1xf32>
    %230 = vector.broadcast %229 : vector<128x1xf32> to vector<128x128xf32>
    %231 = arith.subf %223, %230 : vector<128x128xf32>
    %232 = arith.mulf %231, %231 : vector<128x128xf32>
    %cst_85 = arith.constant dense<0.000000e+00> : vector<128xf32>
    %233 = vector.multi_reduction <add>, %232, %cst_85 [1] : vector<128x128xf32> to vector<128xf32>
    %234 = vector.shape_cast %233 : vector<128xf32> to vector<128x1xf32>
    %cst_86 = arith.constant 1.280000e+02 : f32
    %235 = vector.broadcast %cst_86 : f32 to vector<128x1xf32>
    %236 = arith.divf %234, %235 : vector<128x1xf32>
    %237 = vector.broadcast %229 : vector<128x1xf32> to vector<128x128xf32>
    %238 = arith.subf %223, %237 : vector<128x128xf32>
    %cst_87 = arith.constant 9.99999974E-6 : f32
    %239 = vector.broadcast %cst_87 : f32 to vector<128x1xf32>
    %240 = arith.addf %236, %239 : vector<128x1xf32>
    %241 = math.rsqrt %240 : vector<128x1xf32>
    %242 = vector.broadcast %241 : vector<128x1xf32> to vector<128x128xf32>
    %243 = arith.mulf %238, %242 : vector<128x128xf32>
    %244 = vector.broadcast %224 : vector<1x128xf32> to vector<128x128xf32>
    %245 = arith.mulf %243, %244 : vector<128x128xf32>
    %246 = vector.broadcast %225 : vector<1x128xf32> to vector<128x128xf32>
    %247 = arith.addf %245, %246 : vector<128x128xf32>
    %c0_88 = arith.constant 0 : index
    %c0_89 = arith.constant 0 : index
    %c0_90 = arith.constant 0 : index
    %248 = vector.load %arg28[%c0_88, %c0_89, %c0_90] : memref<1x128x128xf32, #tpu.memory_space<vmem>>, vector<1x128x128xf32>
    %249 = vector.shape_cast %248 : vector<1x128x128xf32> to vector<128x128xf32>
    %250 = vector.shape_cast %247 : vector<128x128xf32> to vector<1x128x128xf32>
    tpu.vector_store %arg28[%c0_88, %c0_89, %c0_90], %250 {strides = array<i32>} : memref<1x128x128xf32, #tpu.memory_space<vmem>>, vector<1x128x128xf32>,
    return
  }
  func.func @transform_0(%arg0: i32, %arg1: i32) -> (i32, i32, i32) {
    %c0_i32 = arith.constant 0 : i32
    %c0_i32_0 = arith.constant 0 : i32
    %c0_i32_1 = arith.constant 0 : i32
    return %arg0, %c0_i32, %c0_i32_0 : i32, i32, i32
  }
  func.func @transform_1(%arg0: i32, %arg1: i32) -> (i32, i32, i32) {
    %c0_i32 = arith.constant 0 : i32
    %c0_i32_0 = arith.constant 0 : i32
    %c0_i32_1 = arith.constant 0 : i32
    return %arg0, %c0_i32, %c0_i32_0 : i32, i32, i32
  }
  func.func @transform_2(%arg0: i32, %arg1: i32) -> (i32, i32) {
    %c0_i32 = arith.constant 0 : i32
    %c0_i32_0 = arith.constant 0 : i32
    return %arg1, %c0_i32 : i32, i32
  }
  func.func @transform_3(%arg0: i32, %arg1: i32) -> (i32, i32) {
    %c0_i32 = arith.constant 0 : i32
    %c0_i32_0 = arith.constant 0 : i32
    return %arg1, %c0_i32 : i32, i32
  }
  func.func @transform_4(%arg0: i32, %arg1: i32) -> (i32, i32) {
    %c0_i32 = arith.constant 0 : i32
    %c0_i32_0 = arith.constant 0 : i32
    %c0_i32_1 = arith.constant 0 : i32
    return %c0_i32, %c0_i32_0 : i32, i32
  }
  func.func @transform_5(%arg0: i32, %arg1: i32) -> (i32, i32) {
    %c0_i32 = arith.constant 0 : i32
    %c0_i32_0 = arith.constant 0 : i32
    %c0_i32_1 = arith.constant 0 : i32
    return %c0_i32, %c0_i32_0 : i32, i32
  }
  func.func @transform_6(%arg0: i32, %arg1: i32) -> (i32, i32) {
    %c0_i32 = arith.constant 0 : i32
    %c0_i32_0 = arith.constant 0 : i32
    %c0_i32_1 = arith.constant 0 : i32
    return %c0_i32, %c0_i32_0 : i32, i32
  }
  func.func @transform_7(%arg0: i32, %arg1: i32) -> (i32, i32) {
    %c0_i32 = arith.constant 0 : i32
    %c0_i32_0 = arith.constant 0 : i32
    %c0_i32_1 = arith.constant 0 : i32
    return %c0_i32, %c0_i32_0 : i32, i32
  }
  func.func @transform_8(%arg0: i32, %arg1: i32) -> (i32, i32) {
    %c0_i32 = arith.constant 0 : i32
    %c0_i32_0 = arith.constant 0 : i32
    %c0_i32_1 = arith.constant 0 : i32
    return %c0_i32, %c0_i32_0 : i32, i32
  }
  func.func @transform_9(%arg0: i32, %arg1: i32) -> (i32, i32) {
    %c0_i32 = arith.constant 0 : i32
    %c0_i32_0 = arith.constant 0 : i32
    %c0_i32_1 = arith.constant 0 : i32
    return %c0_i32, %c0_i32_0 : i32, i32
  }
  func.func @transform_10(%arg0: i32, %arg1: i32) -> (i32, i32) {
    %c0_i32 = arith.constant 0 : i32
    %c0_i32_0 = arith.constant 0 : i32
    %c0_i32_1 = arith.constant 0 : i32
    return %c0_i32, %c0_i32_0 : i32, i32
  }
  func.func @transform_11(%arg0: i32, %arg1: i32) -> (i32, i32) {
    %c0_i32 = arith.constant 0 : i32
    %c0_i32_0 = arith.constant 0 : i32
    %c0_i32_1 = arith.constant 0 : i32
    return %c0_i32, %c0_i32_0 : i32, i32
  }
  func.func @transform_12(%arg0: i32, %arg1: i32) -> (i32, i32) {
    %c0_i32 = arith.constant 0 : i32
    %c0_i32_0 = arith.constant 0 : i32
    %c0_i32_1 = arith.constant 0 : i32
    return %c0_i32, %c0_i32_0 : i32, i32
  }
  func.func @transform_13(%arg0: i32, %arg1: i32) -> (i32, i32) {
    %c0_i32 = arith.constant 0 : i32
    %c0_i32_0 = arith.constant 0 : i32
    %c0_i32_1 = arith.constant 0 : i32
    return %c0_i32, %c0_i32_0 : i32, i32
  }
  func.func @transform_14(%arg0: i32, %arg1: i32) -> (i32, i32) {
    %c0_i32 = arith.constant 0 : i32
    %c0_i32_0 = arith.constant 0 : i32
    %c0_i32_1 = arith.constant 0 : i32
    return %c0_i32, %c0_i32_0 : i32, i32
  }
  func.func @transform_15(%arg0: i32, %arg1: i32) -> (i32, i32) {
    %c0_i32 = arith.constant 0 : i32
    %c0_i32_0 = arith.constant 0 : i32
    %c0_i32_1 = arith.constant 0 : i32
    return %c0_i32, %c0_i32_0 : i32, i32
  }
  func.func @transform_16(%arg0: i32, %arg1: i32) -> (i32, i32) {
    %c0_i32 = arith.constant 0 : i32
    %c0_i32_0 = arith.constant 0 : i32
    %c0_i32_1 = arith.constant 0 : i32
    return %c0_i32, %c0_i32_0 : i32, i32
  }
  func.func @transform_17(%arg0: i32, %arg1: i32) -> (i32, i32) {
    %c0_i32 = arith.constant 0 : i32
    %c0_i32_0 = arith.constant 0 : i32
    %c0_i32_1 = arith.constant 0 : i32
    return %c0_i32, %c0_i32_0 : i32, i32
  }
  func.func @transform_18(%arg0: i32, %arg1: i32) -> (i32, i32) {
    %c0_i32 = arith.constant 0 : i32
    %c0_i32_0 = arith.constant 0 : i32
    %c0_i32_1 = arith.constant 0 : i32
    return %c0_i32, %c0_i32_0 : i32, i32
  }
  func.func @transform_19(%arg0: i32, %arg1: i32) -> (i32, i32) {
    %c0_i32 = arith.constant 0 : i32
    %c0_i32_0 = arith.constant 0 : i32
    %c0_i32_1 = arith.constant 0 : i32
    return %c0_i32, %c0_i32_0 : i32, i32
  }
  func.func @transform_20(%arg0: i32, %arg1: i32) -> (i32, i32) {
    %c0_i32 = arith.constant 0 : i32
    %c0_i32_0 = arith.constant 0 : i32
    %c0_i32_1 = arith.constant 0 : i32
    return %c0_i32, %c0_i32_0 : i32, i32
  }
  func.func @transform_21(%arg0: i32, %arg1: i32) -> (i32, i32) {
    %c0_i32 = arith.constant 0 : i32
    %c0_i32_0 = arith.constant 0 : i32
    %c0_i32_1 = arith.constant 0 : i32
    return %c0_i32, %c0_i32_0 : i32, i32
  }
  func.func @transform_22(%arg0: i32, %arg1: i32) -> (i32, i32) {
    %c0_i32 = arith.constant 0 : i32
    %c0_i32_0 = arith.constant 0 : i32
    %c0_i32_1 = arith.constant 0 : i32
    return %c0_i32, %c0_i32_0 : i32, i32
  }
  func.func @transform_23(%arg0: i32, %arg1: i32) -> (i32, i32) {
    %c0_i32 = arith.constant 0 : i32
    %c0_i32_0 = arith.constant 0 : i32
    %c0_i32_1 = arith.constant 0 : i32
    return %c0_i32, %c0_i32_0 : i32, i32
  }
  func.func @transform_24(%arg0: i32, %arg1: i32) -> (i32, i32) {
    %c0_i32 = arith.constant 0 : i32
    %c0_i32_0 = arith.constant 0 : i32
    %c0_i32_1 = arith.constant 0 : i32
    return %c0_i32, %c0_i32_0 : i32, i32
  }
  func.func @transform_25(%arg0: i32, %arg1: i32) -> (i32, i32) {
    %c0_i32 = arith.constant 0 : i32
    %c0_i32_0 = arith.constant 0 : i32
    %c0_i32_1 = arith.constant 0 : i32
    return %c0_i32, %c0_i32_0 : i32, i32
  }
  func.func @transform_26(%arg0: i32, %arg1: i32) -> (i32, i32, i32) {
    %c0_i32 = arith.constant 0 : i32
    %c0_i32_0 = arith.constant 0 : i32
    return %arg0, %arg1, %c0_i32 : i32, i32, i32
  }
}

</mosaic_0001>

<llo_original>
// kernel: tpu_custom_call.1
$region0: #{tpu_custom_call.1}
  #allocation0 [shape = 'u32[]', space=smem, size = 0x4, offset = 0x4, fixed_abs, tag = 'smem constant byte address 0x4 - core index']
  #allocation1 [shape = 'u32[144,128]{1,0:T(1,128)}', space=vmem, size = 0x12000, scoped, tag = 'internal scratch']
  %s0 = inlined_call_operand.hbm [shape: bf16[2,256,128], index: 0, kind: input, shape index: {}]
  %s1 = inlined_call_operand.hbm [shape: bf16[2,128,128], index: 1, kind: input, shape index: {}]
  %s2 = inlined_call_operand.hbm [shape: f32[256,256], index: 2, kind: input, shape index: {}]
  %s3 = inlined_call_operand.hbm [shape: f32[256,128], index: 3, kind: input, shape index: {}]
  %s4 = inlined_call_operand.hbm [shape: bf16[128,128], index: 4, kind: input, shape index: {}]
  %s5 = inlined_call_operand.vmem [shape: f32[1,128], index: 5, kind: input, shape index: {}]
  %s6 = inlined_call_operand.hbm [shape: bf16[128,256], index: 6, kind: input, shape index: {}]
  %s7 = inlined_call_operand.vmem [shape: f32[1,256], index: 7, kind: input, shape index: {}]
  %s8 = inlined_call_operand.hbm [shape: bf16[128,128], index: 8, kind: input, shape index: {}]
  %s9 = inlined_call_operand.vmem [shape: f32[1,128], index: 9, kind: input, shape index: {}]
  %s10 = inlined_call_operand.hbm [shape: bf16[128,128], index: 10, kind: input, shape index: {}]
  %s11 = inlined_call_operand.vmem [shape: f32[1,128], index: 11, kind: input, shape index: {}]
  %s12 = inlined_call_operand.hbm [shape: bf16[128,256], index: 12, kind: input, shape index: {}]
  %s13 = inlined_call_operand.vmem [shape: f32[1,256], index: 13, kind: input, shape index: {}]
  %s14 = inlined_call_operand.hbm [shape: bf16[128,128], index: 14, kind: input, shape index: {}]
  %s15 = inlined_call_operand.vmem [shape: f32[1,128], index: 15, kind: input, shape index: {}]
  %s16 = inlined_call_operand.vmem [shape: f32[1,128], index: 16, kind: input, shape index: {}]
  %s17 = inlined_call_operand.vmem [shape: f32[1,128], index: 17, kind: input, shape index: {}]
  %s18 = inlined_call_operand.vmem [shape: f32[1,128], index: 18, kind: input, shape index: {}]
  %s19 = inlined_call_operand.vmem [shape: f32[1,128], index: 19, kind: input, shape index: {}]
  %s20 = inlined_call_operand.vmem [shape: f32[1,128], index: 20, kind: input, shape index: {}]
  %s21 = inlined_call_operand.vmem [shape: f32[1,128], index: 21, kind: input, shape index: {}]
  %s22 = inlined_call_operand.hbm [shape: bf16[128,256], index: 22, kind: input, shape index: {}]
  %s23 = inlined_call_operand.vmem [shape: f32[1,256], index: 23, kind: input, shape index: {}]
  %s24 = inlined_call_operand.hbm [shape: bf16[256,128], index: 24, kind: input, shape index: {}]
  %s25 = inlined_call_operand.vmem [shape: f32[1,128], index: 25, kind: input, shape index: {}]
  %s26 = inlined_call_operand.hbm [shape: f32[2,256,128], index: 26, kind: output, shape index: {}]
  %s27 = sld [smem:[#allocation0]]
  $region185: #{tpu_custom_call.1} parent=0
    _
  %s29 = ssub.s32 1, %s27
  %s30 = scalar_select 0, %s29, %s27
  $region1: #{tpu_custom_call.1} parent=0
    #allocation2 [shape = 'u8[131072]{0}', space=vmem, size = 0x20000, scoped, tag = 'input window, operand 0']
    #allocation3 [shape = 's32[2]{0}', space=sflag, size = 0x8, scoped, tag = 'scoped memory for tpu_custom_call.1']
    #allocation4 [shape = 's32[2]{0}', space=sflag, size = 0x8, scoped, tag = 'scoped memory for tpu_custom_call.1']
    #allocation5 [shape = 'u8[65536]{0}', space=vmem, size = 0x10000, scoped, tag = 'input window, operand 1']
    #allocation6 [shape = 's32[2]{0}', space=sflag, size = 0x8, scoped, tag = 'scoped memory for tpu_custom_call.1']
    #allocation7 [shape = 'u8[262144]{0}', space=vmem, size = 0x40000, scoped, tag = 'input window, operand 2']
    #allocation8 [shape = 'u8[131072]{0}', space=vmem, size = 0x20000, scoped, tag = 'input window, operand 3']
    #allocation9 [shape = 's32[2]{0}', space=sflag, size = 0x8, scoped, tag = 'scoped memory for tpu_custom_call.1']
    #allocation10 [shape = 'u8[32768]{0}', space=vmem, size = 0x8000, scoped, tag = 'input window, operand 4, single buffered']
    #allocation11 [shape = 'u8[65536]{0}', space=vmem, size = 0x10000, scoped, tag = 'input window, operand 6, single buffered']
    #allocation12 [shape = 's32[1]{0}', space=sflag, size = 0x4, scoped, tag = 'scoped memory for tpu_custom_call.1']
    #allocation13 [shape = 'u8[32768]{0}', space=vmem, size = 0x8000, scoped, tag = 'input window, operand 8, single buffered']
    #allocation14 [shape = 'u8[32768]{0}', space=vmem, size = 0x8000, scoped, tag = 'input window, operand 10, single buffered']
    #allocation15 [shape = 's32[1]{0}', space=sflag, size = 0x4, scoped, tag = 'scoped memory for tpu_custom_call.1']
    #allocation16 [shape = 'u8[65536]{0}', space=vmem, size = 0x10000, scoped, tag = 'input window, operand 12, single buffered']
    #allocation17 [shape = 'u8[32768]{0}', space=vmem, size = 0x8000, scoped, tag = 'input window, operand 14, single buffered']
    #allocation18 [shape = 's32[1]{0}', space=sflag, size = 0x4, scoped, tag = 'scoped memory for tpu_custom_call.1']
    #allocation19 [shape = 'u8[65536]{0}', space=vmem, size = 0x10000, scoped, tag = 'input window, operand 22, single buffered']
    #allocation20 [shape = 'u8[65536]{0}', space=vmem, size = 0x10000, scoped, tag = 'input window, operand 24, single buffered']
    #allocation21 [shape = 's32[1]{0}', space=sflag, size = 0x4, scoped, tag = 'scoped memory for tpu_custom_call.1']
    #allocation22 [shape = 'u8[131072]{0}', space=vmem, size = 0x20000, scoped, tag = 'output window, operand 0']
    %31 = vsyncpa [#allocation3], 0
    %s32 = scalar_lea.sflag [#allocation3], 1
    %33 = vsyncpa %s32, 0
    %34 = vsyncpa [#allocation6], 0
    %s35 = scalar_lea.sflag [#allocation6], 1
    %36 = vsyncpa %s35, 0
    %37 = vsyncpa [#allocation9], 0
    %s38 = scalar_lea.sflag [#allocation9], 1
    %39 = vsyncpa %s38, 0
    %40 = vsyncpa [#allocation12], 0
    %41 = vsyncpa [#allocation15], 0
    %42 = vsyncpa [#allocation18], 0
    %43 = vsyncpa [#allocation21], 0
    %44 = vsyncpa [#allocation4], 0
    %s45 = scalar_lea.sflag [#allocation4], 1
    %46 = vsyncpa %s45, 0
    loop: start=0, step=1, limit=6
    $region2: #{tpu_custom_call.1} parent=1 // loop_pre_header
      _
    $region3: #{tpu_custom_call.1} parent=1 // loop_header
      %s48 = sphi 0, %s52
      %p49 = scmp.ge.s32.totalorder %s48, 6
      %s55 = sphi 0, %s67
      %s56 = sphi 0, %s63
      %s57 = sphi 0, %s55
      %s58 = sphi 0, %s56
      %s59 = sphi 0, %s57
      %s60 = sphi 0, %s58
      %s70 = sphi 0, %s72
      %s73 = sphi 0, %s70
      %s74 = sphi 0, %s73
      %s90 = sphi 0, %s74
      %s96 = sphi 0, %s98
      %s99 = sphi 0, %s96
      %s100 = sphi 0, %s99
      %s116 = sphi 0, %s100
      %s122 = sphi 0, %s124
      %s125 = sphi 0, %s122
      %s126 = sphi 0, %s125
      %s142 = sphi 0, %s126
      %s148 = sphi 0, %s150
      %s151 = sphi 0, %s148
      %s152 = sphi 0, %s151
      %s168 = sphi 0, %s152
      %s172 = sphi 0, %s172
      %s174 = sphi 0, %s172
      %s175 = sphi 0, %s174
      %s189 = sphi 0, %s175
      %s193 = sphi 0, %s193
      %s195 = sphi 0, %s193
      %s196 = sphi 0, %s195
      %s210 = sphi 0, %s196
      %s214 = sphi 0, %s214
      %s216 = sphi 0, %s214
      %s217 = sphi 0, %s216
      %s231 = sphi 0, %s217
      %s235 = sphi 0, %s235
      %s237 = sphi 0, %s235
      %s238 = sphi 0, %s237
      %s252 = sphi 0, %s238
      %s256 = sphi 0, %s256
      %s258 = sphi 0, %s256
      %s259 = sphi 0, %s258
      %s273 = sphi 0, %s259
      %s277 = sphi 0, %s277
      %s279 = sphi 0, %s277
      %s280 = sphi 0, %s279
      %s294 = sphi 0, %s280
      %s298 = sphi 0, %s298
      %s300 = sphi 0, %s298
      %s301 = sphi 0, %s300
      %s315 = sphi 0, %s301
      %s319 = sphi 0, %s319
      %s321 = sphi 0, %s319
      %s322 = sphi 0, %s321
      %s336 = sphi 0, %s322
      %s340 = sphi 0, %s340
      %s342 = sphi 0, %s340
      %s343 = sphi 0, %s342
      %s357 = sphi 0, %s343
      %s361 = sphi 0, %s361
      %s363 = sphi 0, %s361
      %s364 = sphi 0, %s363
      %s378 = sphi 0, %s364
      %s382 = sphi 0, %s382
      %s384 = sphi 0, %s382
      %s385 = sphi 0, %s384
      %s399 = sphi 0, %s385
      %s403 = sphi 0, %s403
      %s405 = sphi 0, %s403
      %s406 = sphi 0, %s405
      %s420 = sphi 0, %s406
      %s424 = sphi 0, %s424
      %s426 = sphi 0, %s424
      %s427 = sphi 0, %s426
      %s441 = sphi 0, %s427
      %s445 = sphi 0, %s445
      %s447 = sphi 0, %s445
      %s448 = sphi 0, %s447
      %s462 = sphi 0, %s448
      %s466 = sphi 0, %s466
      %s468 = sphi 0, %s466
      %s469 = sphi 0, %s468
      %s483 = sphi 0, %s469
      %s487 = sphi 0, %s487
      %s489 = sphi 0, %s487
      %s490 = sphi 0, %s489
      %s504 = sphi 0, %s490
      %s508 = sphi 0, %s508
      %s510 = sphi 0, %s508
      %s511 = sphi 0, %s510
      %s525 = sphi 0, %s511
      %s529 = sphi 0, %s529
      %s531 = sphi 0, %s529
      %s532 = sphi 0, %s531
      %s546 = sphi 0, %s532
      %s550 = sphi 0, %s550
      %s552 = sphi 0, %s550
      %s553 = sphi 0, %s552
      %s567 = sphi 0, %s553
      %s571 = sphi 0, %s571
      %s573 = sphi 0, %s571
      %s574 = sphi 0, %s573
      %s588 = sphi 0, %s574
      %s592 = sphi 0, %s592
      %s594 = sphi 0, %s592
      %s595 = sphi 0, %s594
      %s609 = sphi 0, %s595
      %s613 = sphi 0, %s613
      %s615 = sphi 0, %s613
      %s616 = sphi 0, %s615
      %s630 = sphi 0, %s616
      %s638 = sphi 0, %s640
      %s641 = sphi 0, %s638
      %s642 = sphi 0, %s641
      %s658 = sphi 0, %s642
    $region4: #{tpu_custom_call.1} parent=1 // loop_header_branch
      %51 = sbr.rel (%p49) target = $region8
    $region5: #{tpu_custom_call.1} parent=1 // loop_body
      %s53 = ssub.s32 %s48, 1
      %s54 = ssub.s32 %s48, 2
      %s61 = sadd.s32 1, %s56
      %p62 = scmp.ge.s32.totalorder %s61, 2
      %s63 = scalar_select %p62, 0, %s61
      %s64 = sadd.s32 1, %s55
      %s65 = scalar_select %p62, %s64, %s55
      %p66 = scmp.ge.s32.totalorder %s65, 2
      %s67 = scalar_select %p66, 0, %s65
      %s68 = ssub.s32 %s55, %s67
      %p69 = scmp.eq.s32.totalorder %s68, 0
      %s71 = sadd.s32 %s70, 1
      %s72 = scalar_select %p69, %s70, %s71
      %p75 = pneg %p69
      %p76 = scmp.eq.s32.totalorder %s48, 3
      %p77 = por %p75, %p76
      %p78 = scmp.ne.s32.totalorder %s70, %s73
      %p79 = scmp.eq.s32.totalorder %s48, 0
      %p80 = por %p78, %p79
      %p81 = scmp.ne.s32.totalorder %s70, %s73
      %p82 = scmp.eq.s32.totalorder %s53, 3
      %p83 = por %p81, %p82
      %p84 = scmp.ne.s32.totalorder %s73, %s74
      %p85 = scmp.eq.s32.totalorder %s53, 0
      %p86 = por %p84, %p85
      %p87 = scmp.ne.s32.totalorder %s73, %s74
      %p88 = scmp.eq.s32.totalorder %s54, 3
      %p89 = por %p87, %p88
      %p91 = scmp.ne.s32.totalorder %s74, %s90
      %p92 = scmp.eq.s32.totalorder %s54, 0
      %p93 = por %p91, %p92
      %s94 = ssub.s32 %s55, %s67
      %p95 = scmp.eq.s32.totalorder %s94, 0
      %s97 = sadd.s32 %s96, 1
      %s98 = scalar_select %p95, %s96, %s97
      %p101 = pneg %p95
      %p102 = scmp.eq.s32.totalorder %s48, 3
      %p103 = por %p101, %p102
      %p104 = scmp.ne.s32.totalorder %s96, %s99
      %p105 = scmp.eq.s32.totalorder %s48, 0
      %p106 = por %p104, %p105
      %p107 = scmp.ne.s32.totalorder %s96, %s99
      %p108 = scmp.eq.s32.totalorder %s53, 3
      %p109 = por %p107, %p108
      %p110 = scmp.ne.s32.totalorder %s99, %s100
      %p111 = scmp.eq.s32.totalorder %s53, 0
      %p112 = por %p110, %p111
      %p113 = scmp.ne.s32.totalorder %s99, %s100
      %p114 = scmp.eq.s32.totalorder %s54, 3
      %p115 = por %p113, %p114
      %p117 = scmp.ne.s32.totalorder %s100, %s116
      %p118 = scmp.eq.s32.totalorder %s54, 0
      %p119 = por %p117, %p118
      %s120 = ssub.s32 %s56, %s63
      %p121 = scmp.eq.s32.totalorder %s120, 0
      %s123 = sadd.s32 %s122, 1
      %s124 = scalar_select %p121, %s122, %s123
      %p127 = pneg %p121
      %p128 = scmp.eq.s32.totalorder %s48, 3
      %p129 = por %p127, %p128
      %p130 = scmp.ne.s32.totalorder %s122, %s125
      %p131 = scmp.eq.s32.totalorder %s48, 0
      %p132 = por %p130, %p131
      %p133 = scmp.ne.s32.totalorder %s122, %s125
      %p134 = scmp.eq.s32.totalorder %s53, 3
      %p135 = por %p133, %p134
      %p136 = scmp.ne.s32.totalorder %s125, %s126
      %p137 = scmp.eq.s32.totalorder %s53, 0
      %p138 = por %p136, %p137
      %p139 = scmp.ne.s32.totalorder %s125, %s126
      %p140 = scmp.eq.s32.totalorder %s54, 3
      %p141 = por %p139, %p140
      %p143 = scmp.ne.s32.totalorder %s126, %s142
      %p144 = scmp.eq.s32.totalorder %s54, 0
      %p145 = por %p143, %p144
      %s146 = ssub.s32 %s56, %s63
      %p147 = scmp.eq.s32.totalorder %s146, 0
      %s149 = sadd.s32 %s148, 1
      %s150 = scalar_select %p147, %s148, %s149
      %p153 = pneg %p147
      %p154 = scmp.eq.s32.totalorder %s48, 3
      %p155 = por %p153, %p154
      %p156 = scmp.ne.s32.totalorder %s148, %s151
      %p157 = scmp.eq.s32.totalorder %s48, 0
      %p158 = por %p156, %p157
      %p159 = scmp.ne.s32.totalorder %s148, %s151
      %p160 = scmp.eq.s32.totalorder %s53, 3
      %p161 = por %p159, %p160
      %p162 = scmp.ne.s32.totalorder %s151, %s152
      %p163 = scmp.eq.s32.totalorder %s53, 0
      %p164 = por %p162, %p163
      %p165 = scmp.ne.s32.totalorder %s151, %s152
      %p166 = scmp.eq.s32.totalorder %s54, 3
      %p167 = por %p165, %p166
      %p169 = scmp.ne.s32.totalorder %s152, %s168
      %p170 = scmp.eq.s32.totalorder %s54, 0
      %p171 = por %p169, %p170
      %s173 = sadd.s32 %s172, 1
      %p176 = scmp.eq.s32.totalorder %s48, 3
      %p177 = scmp.ne.s32.totalorder %s172, %s174
      %p178 = scmp.eq.s32.totalorder %s48, 0
      %p179 = por %p177, %p178
      %p180 = scmp.ne.s32.totalorder %s172, %s174
      %p181 = scmp.eq.s32.totalorder %s53, 3
      %p182 = por %p180, %p181
      %p183 = scmp.ne.s32.totalorder %s174, %s175
      %p184 = scmp.eq.s32.totalorder %s53, 0
      %p185 = por %p183, %p184
      %p186 = scmp.ne.s32.totalorder %s174, %s175
      %p187 = scmp.eq.s32.totalorder %s54, 3
      %p188 = por %p186, %p187
      %p190 = scmp.ne.s32.totalorder %s175, %s189
      %p191 = scmp.eq.s32.totalorder %s54, 0
      %p192 = por %p190, %p191
      %s194 = sadd.s32 %s193, 1
      %p197 = scmp.eq.s32.totalorder %s48, 3
      %p198 = scmp.ne.s32.totalorder %s193, %s195
      %p199 = scmp.eq.s32.totalorder %s48, 0
      %p200 = por %p198, %p199
      %p201 = scmp.ne.s32.totalorder %s193, %s195
      %p202 = scmp.eq.s32.totalorder %s53, 3
      %p203 = por %p201, %p202
      %p204 = scmp.ne.s32.totalorder %s195, %s196
      %p205 = scmp.eq.s32.totalorder %s53, 0
      %p206 = por %p204, %p205
      %p207 = scmp.ne.s32.totalorder %s195, %s196
      %p208 = scmp.eq.s32.totalorder %s54, 3
      %p209 = por %p207, %p208
      %p211 = scmp.ne.s32.totalorder %s196, %s210
      %p212 = scmp.eq.s32.totalorder %s54, 0
      %p213 = por %p211, %p212
      %s215 = sadd.s32 %s214, 1
      %p218 = scmp.eq.s32.totalorder %s48, 3
      %p219 = scmp.ne.s32.totalorder %s214, %s216
      %p220 = scmp.eq.s32.totalorder %s48, 0
      %p221 = por %p219, %p220
      %p222 = scmp.ne.s32.totalorder %s214, %s216
      %p223 = scmp.eq.s32.totalorder %s53, 3
      %p224 = por %p222, %p223
      %p225 = scmp.ne.s32.totalorder %s216, %s217
      %p226 = scmp.eq.s32.totalorder %s53, 0
      %p227 = por %p225, %p226
      %p228 = scmp.ne.s32.totalorder %s216, %s217
      %p229 = scmp.eq.s32.totalorder %s54, 3
      %p230 = por %p228, %p229
      %p232 = scmp.ne.s32.totalorder %s217, %s231
      %p233 = scmp.eq.s32.totalorder %s54, 0
      %p234 = por %p232, %p233
      %s236 = sadd.s32 %s235, 1
      %p239 = scmp.eq.s32.totalorder %s48, 3
      %p240 = scmp.ne.s32.totalorder %s235, %s237
      %p241 = scmp.eq.s32.totalorder %s48, 0
      %p242 = por %p240, %p241
      %p243 = scmp.ne.s32.totalorder %s235, %s237
      %p244 = scmp.eq.s32.totalorder %s53, 3
      %p245 = por %p243, %p244
      %p246 = scmp.ne.s32.totalorder %s237, %s238
      %p247 = scmp.eq.s32.totalorder %s53, 0
      %p248 = por %p246, %p247
      %p249 = scmp.ne.s32.totalorder %s237, %s238
      %p250 = scmp.eq.s32.totalorder %s54, 3
      %p251 = por %p249, %p250
      %p253 = scmp.ne.s32.totalorder %s238, %s252
      %p254 = scmp.eq.s32.totalorder %s54, 0
      %p255 = por %p253, %p254
      %s257 = sadd.s32 %s256, 1
      %p260 = scmp.eq.s32.totalorder %s48, 3
      %p261 = scmp.ne.s32.totalorder %s256, %s258
      %p262 = scmp.eq.s32.totalorder %s48, 0
      %p263 = por %p261, %p262
      %p264 = scmp.ne.s32.totalorder %s256, %s258
      %p265 = scmp.eq.s32.totalorder %s53, 3
      %p266 = por %p264, %p265
      %p267 = scmp.ne.s32.totalorder %s258, %s259
      %p268 = scmp.eq.s32.totalorder %s53, 0
      %p269 = por %p267, %p268
      %p270 = scmp.ne.s32.totalorder %s258, %s259
      %p271 = scmp.eq.s32.totalorder %s54, 3
      %p272 = por %p270, %p271
      %p274 = scmp.ne.s32.totalorder %s259, %s273
      %p275 = scmp.eq.s32.totalorder %s54, 0
      %p276 = por %p274, %p275
      %s278 = sadd.s32 %s277, 1
      %p281 = scmp.eq.s32.totalorder %s48, 3
      %p282 = scmp.ne.s32.totalorder %s277, %s279
      %p283 = scmp.eq.s32.totalorder %s48, 0
      %p284 = por %p282, %p283
      %p285 = scmp.ne.s32.totalorder %s277, %s279
      %p286 = scmp.eq.s32.totalorder %s53, 3
      %p287 = por %p285, %p286
      %p288 = scmp.ne.s32.totalorder %s279, %s280
      %p289 = scmp.eq.s32.totalorder %s53, 0
      %p290 = por %p288, %p289
      %p291 = scmp.ne.s32.totalorder %s279, %s280
      %p292 = scmp.eq.s32.totalorder %s54, 3
      %p293 = por %p291, %p292
      %p295 = scmp.ne.s32.totalorder %s280, %s294
      %p296 = scmp.eq.s32.totalorder %s54, 0
      %p297 = por %p295, %p296
      %s299 = sadd.s32 %s298, 1
      %p302 = scmp.eq.s32.totalorder %s48, 3
      %p303 = scmp.ne.s32.totalorder %s298, %s300
      %p304 = scmp.eq.s32.totalorder %s48, 0
      %p305 = por %p303, %p304
      %p306 = scmp.ne.s32.totalorder %s298, %s300
      %p307 = scmp.eq.s32.totalorder %s53, 3
      %p308 = por %p306, %p307
      %p309 = scmp.ne.s32.totalorder %s300, %s301
      %p310 = scmp.eq.s32.totalorder %s53, 0
      %p311 = por %p309, %p310
      %p312 = scmp.ne.s32.totalorder %s300, %s301
      %p313 = scmp.eq.s32.totalorder %s54, 3
      %p314 = por %p312, %p313
      %p316 = scmp.ne.s32.totalorder %s301, %s315
      %p317 = scmp.eq.s32.totalorder %s54, 0
      %p318 = por %p316, %p317
      %s320 = sadd.s32 %s319, 1
      %p323 = scmp.eq.s32.totalorder %s48, 3
      %p324 = scmp.ne.s32.totalorder %s319, %s321
      %p325 = scmp.eq.s32.totalorder %s48, 0
      %p326 = por %p324, %p325
      %p327 = scmp.ne.s32.totalorder %s319, %s321
      %p328 = scmp.eq.s32.totalorder %s53, 3
      %p329 = por %p327, %p328
      %p330 = scmp.ne.s32.totalorder %s321, %s322
      %p331 = scmp.eq.s32.totalorder %s53, 0
      %p332 = por %p330, %p331
      %p333 = scmp.ne.s32.totalorder %s321, %s322
      %p334 = scmp.eq.s32.totalorder %s54, 3
      %p335 = por %p333, %p334
      %p337 = scmp.ne.s32.totalorder %s322, %s336
      %p338 = scmp.eq.s32.totalorder %s54, 0
      %p339 = por %p337, %p338
      %s341 = sadd.s32 %s340, 1
      %p344 = scmp.eq.s32.totalorder %s48, 3
      %p345 = scmp.ne.s32.totalorder %s340, %s342
      %p346 = scmp.eq.s32.totalorder %s48, 0
      %p347 = por %p345, %p346
      %p348 = scmp.ne.s32.totalorder %s340, %s342
      %p349 = scmp.eq.s32.totalorder %s53, 3
      %p350 = por %p348, %p349
      %p351 = scmp.ne.s32.totalorder %s342, %s343
      %p352 = scmp.eq.s32.totalorder %s53, 0
      %p353 = por %p351, %p352
      %p354 = scmp.ne.s32.totalorder %s342, %s343
      %p355 = scmp.eq.s32.totalorder %s54, 3
      %p356 = por %p354, %p355
      %p358 = scmp.ne.s32.totalorder %s343, %s357
      %p359 = scmp.eq.s32.totalorder %s54, 0
      %p360 = por %p358, %p359
      %s362 = sadd.s32 %s361, 1
      %p365 = scmp.eq.s32.totalorder %s48, 3
      %p366 = scmp.ne.s32.totalorder %s361, %s363
      %p367 = scmp.eq.s32.totalorder %s48, 0
      %p368 = por %p366, %p367
      %p369 = scmp.ne.s32.totalorder %s361, %s363
      %p370 = scmp.eq.s32.totalorder %s53, 3
      %p371 = por %p369, %p370
      %p372 = scmp.ne.s32.totalorder %s363, %s364
      %p373 = scmp.eq.s32.totalorder %s53, 0
      %p374 = por %p372, %p373
      %p375 = scmp.ne.s32.totalorder %s363, %s364
      %p376 = scmp.eq.s32.totalorder %s54, 3
      %p377 = por %p375, %p376
      %p379 = scmp.ne.s32.totalorder %s364, %s378
      %p380 = scmp.eq.s32.totalorder %s54, 0
      %p381 = por %p379, %p380
      %s383 = sadd.s32 %s382, 1
      %p386 = scmp.eq.s32.totalorder %s48, 3
      %p387 = scmp.ne.s32.totalorder %s382, %s384
      %p388 = scmp.eq.s32.totalorder %s48, 0
      %p389 = por %p387, %p388
      %p390 = scmp.ne.s32.totalorder %s382, %s384
      %p391 = scmp.eq.s32.totalorder %s53, 3
      %p392 = por %p390, %p391
      %p393 = scmp.ne.s32.totalorder %s384, %s385
      %p394 = scmp.eq.s32.totalorder %s53, 0
      %p395 = por %p393, %p394
      %p396 = scmp.ne.s32.totalorder %s384, %s385
      %p397 = scmp.eq.s32.totalorder %s54, 3
      %p398 = por %p396, %p397
      %p400 = scmp.ne.s32.totalorder %s385, %s399
      %p401 = scmp.eq.s32.totalorder %s54, 0
      %p402 = por %p400, %p401
      %s404 = sadd.s32 %s403, 1
      %p407 = scmp.eq.s32.totalorder %s48, 3
      %p408 = scmp.ne.s32.totalorder %s403, %s405
      %p409 = scmp.eq.s32.totalorder %s48, 0
      %p410 = por %p408, %p409
      %p411 = scmp.ne.s32.totalorder %s403, %s405
      %p412 = scmp.eq.s32.totalorder %s53, 3
      %p413 = por %p411, %p412
      %p414 = scmp.ne.s32.totalorder %s405, %s406
      %p415 = scmp.eq.s32.totalorder %s53, 0
      %p416 = por %p414, %p415
      %p417 = scmp.ne.s32.totalorder %s405, %s406
      %p418 = scmp.eq.s32.totalorder %s54, 3
      %p419 = por %p417, %p418
      %p421 = scmp.ne.s32.totalorder %s406, %s420
      %p422 = scmp.eq.s32.totalorder %s54, 0
      %p423 = por %p421, %p422
      %s425 = sadd.s32 %s424, 1
      %p428 = scmp.eq.s32.totalorder %s48, 3
      %p429 = scmp.ne.s32.totalorder %s424, %s426
      %p430 = scmp.eq.s32.totalorder %s48, 0
      %p431 = por %p429, %p430
      %p432 = scmp.ne.s32.totalorder %s424, %s426
      %p433 = scmp.eq.s32.totalorder %s53, 3
      %p434 = por %p432, %p433
      %p435 = scmp.ne.s32.totalorder %s426, %s427
      %p436 = scmp.eq.s32.totalorder %s53, 0
      %p437 = por %p435, %p436
      %p438 = scmp.ne.s32.totalorder %s426, %s427
      %p439 = scmp.eq.s32.totalorder %s54, 3
      %p440 = por %p438, %p439
      %p442 = scmp.ne.s32.totalorder %s427, %s441
      %p443 = scmp.eq.s32.totalorder %s54, 0
      %p444 = por %p442, %p443
      %s446 = sadd.s32 %s445, 1
      %p449 = scmp.eq.s32.totalorder %s48, 3
      %p450 = scmp.ne.s32.totalorder %s445, %s447
      %p451 = scmp.eq.s32.totalorder %s48, 0
      %p452 = por %p450, %p451
      %p453 = scmp.ne.s32.totalorder %s445, %s447
      %p454 = scmp.eq.s32.totalorder %s53, 3
      %p455 = por %p453, %p454
      %p456 = scmp.ne.s32.totalorder %s447, %s448
      %p457 = scmp.eq.s32.totalorder %s53, 0
      %p458 = por %p456, %p457
      %p459 = scmp.ne.s32.totalorder %s447, %s448
      %p460 = scmp.eq.s32.totalorder %s54, 3
      %p461 = por %p459, %p460
      %p463 = scmp.ne.s32.totalorder %s448, %s462
      %p464 = scmp.eq.s32.totalorder %s54, 0
      %p465 = por %p463, %p464
      %s467 = sadd.s32 %s466, 1
      %p470 = scmp.eq.s32.totalorder %s48, 3
      %p471 = scmp.ne.s32.totalorder %s466, %s468
      %p472 = scmp.eq.s32.totalorder %s48, 0
      %p473 = por %p471, %p472
      %p474 = scmp.ne.s32.totalorder %s466, %s468
      %p475 = scmp.eq.s32.totalorder %s53, 3
      %p476 = por %p474, %p475
      %p477 = scmp.ne.s32.totalorder %s468, %s469
      %p478 = scmp.eq.s32.totalorder %s53, 0
      %p479 = por %p477, %p478
      %p480 = scmp.ne.s32.totalorder %s468, %s469
      %p481 = scmp.eq.s32.totalorder %s54, 3
      %p482 = por %p480, %p481
      %p484 = scmp.ne.s32.totalorder %s469, %s483
      %p485 = scmp.eq.s32.totalorder %s54, 0
      %p486 = por %p484, %p485
      %s488 = sadd.s32 %s487, 1
      %p491 = scmp.eq.s32.totalorder %s48, 3
      %p492 = scmp.ne.s32.totalorder %s487, %s489
      %p493 = scmp.eq.s32.totalorder %s48, 0
      %p494 = por %p492, %p493
      %p495 = scmp.ne.s32.totalorder %s487, %s489
      %p496 = scmp.eq.s32.totalorder %s53, 3
      %p497 = por %p495, %p496
      %p498 = scmp.ne.s32.totalorder %s489, %s490
      %p499 = scmp.eq.s32.totalorder %s53, 0
      %p500 = por %p498, %p499
      %p501 = scmp.ne.s32.totalorder %s489, %s490
      %p502 = scmp.eq.s32.totalorder %s54, 3
      %p503 = por %p501, %p502
      %p505 = scmp.ne.s32.totalorder %s490, %s504
      %p506 = scmp.eq.s32.totalorder %s54, 0
      %p507 = por %p505, %p506
      %s509 = sadd.s32 %s508, 1
      %p512 = scmp.eq.s32.totalorder %s48, 3
      %p513 = scmp.ne.s32.totalorder %s508, %s510
      %p514 = scmp.eq.s32.totalorder %s48, 0
      %p515 = por %p513, %p514
      %p516 = scmp.ne.s32.totalorder %s508, %s510
      %p517 = scmp.eq.s32.totalorder %s53, 3
      %p518 = por %p516, %p517
      %p519 = scmp.ne.s32.totalorder %s510, %s511
      %p520 = scmp.eq.s32.totalorder %s53, 0
      %p521 = por %p519, %p520
      %p522 = scmp.ne.s32.totalorder %s510, %s511
      %p523 = scmp.eq.s32.totalorder %s54, 3
      %p524 = por %p522, %p523
      %p526 = scmp.ne.s32.totalorder %s511, %s525
      %p527 = scmp.eq.s32.totalorder %s54, 0
      %p528 = por %p526, %p527
      %s530 = sadd.s32 %s529, 1
      %p533 = scmp.eq.s32.totalorder %s48, 3
      %p534 = scmp.ne.s32.totalorder %s529, %s531
      %p535 = scmp.eq.s32.totalorder %s48, 0
      %p536 = por %p534, %p535
      %p537 = scmp.ne.s32.totalorder %s529, %s531
      %p538 = scmp.eq.s32.totalorder %s53, 3
      %p539 = por %p537, %p538
      %p540 = scmp.ne.s32.totalorder %s531, %s532
      %p541 = scmp.eq.s32.totalorder %s53, 0
      %p542 = por %p540, %p541
      %p543 = scmp.ne.s32.totalorder %s531, %s532
      %p544 = scmp.eq.s32.totalorder %s54, 3
      %p545 = por %p543, %p544
      %p547 = scmp.ne.s32.totalorder %s532, %s546
      %p548 = scmp.eq.s32.totalorder %s54, 0
      %p549 = por %p547, %p548
      %s551 = sadd.s32 %s550, 1
      %p554 = scmp.eq.s32.totalorder %s48, 3
      %p555 = scmp.ne.s32.totalorder %s550, %s552
      %p556 = scmp.eq.s32.totalorder %s48, 0
      %p557 = por %p555, %p556
      %p558 = scmp.ne.s32.totalorder %s550, %s552
      %p559 = scmp.eq.s32.totalorder %s53, 3
      %p560 = por %p558, %p559
      %p561 = scmp.ne.s32.totalorder %s552, %s553
      %p562 = scmp.eq.s32.totalorder %s53, 0
      %p563 = por %p561, %p562
      %p564 = scmp.ne.s32.totalorder %s552, %s553
      %p565 = scmp.eq.s32.totalorder %s54, 3
      %p566 = por %p564, %p565
      %p568 = scmp.ne.s32.totalorder %s553, %s567
      %p569 = scmp.eq.s32.totalorder %s54, 0
      %p570 = por %p568, %p569
      %s572 = sadd.s32 %s571, 1
      %p575 = scmp.eq.s32.totalorder %s48, 3
      %p576 = scmp.ne.s32.totalorder %s571, %s573
      %p577 = scmp.eq.s32.totalorder %s48, 0
      %p578 = por %p576, %p577
      %p579 = scmp.ne.s32.totalorder %s571, %s573
      %p580 = scmp.eq.s32.totalorder %s53, 3
      %p581 = por %p579, %p580
      %p582 = scmp.ne.s32.totalorder %s573, %s574
      %p583 = scmp.eq.s32.totalorder %s53, 0
      %p584 = por %p582, %p583
      %p585 = scmp.ne.s32.totalorder %s573, %s574
      %p586 = scmp.eq.s32.totalorder %s54, 3
      %p587 = por %p585, %p586
      %p589 = scmp.ne.s32.totalorder %s574, %s588
      %p590 = scmp.eq.s32.totalorder %s54, 0
      %p591 = por %p589, %p590
      %s593 = sadd.s32 %s592, 1
      %p596 = scmp.eq.s32.totalorder %s48, 3
      %p597 = scmp.ne.s32.totalorder %s592, %s594
      %p598 = scmp.eq.s32.totalorder %s48, 0
      %p599 = por %p597, %p598
      %p600 = scmp.ne.s32.totalorder %s592, %s594
      %p601 = scmp.eq.s32.totalorder %s53, 3
      %p602 = por %p600, %p601
      %p603 = scmp.ne.s32.totalorder %s594, %s595
      %p604 = scmp.eq.s32.totalorder %s53, 0
      %p605 = por %p603, %p604
      %p606 = scmp.ne.s32.totalorder %s594, %s595
      %p607 = scmp.eq.s32.totalorder %s54, 3
      %p608 = por %p606, %p607
      %p610 = scmp.ne.s32.totalorder %s595, %s609
      %p611 = scmp.eq.s32.totalorder %s54, 0
      %p612 = por %p610, %p611
      %s614 = sadd.s32 %s613, 1
      %p617 = scmp.eq.s32.totalorder %s48, 3
      %p618 = scmp.ne.s32.totalorder %s613, %s615
      %p619 = scmp.eq.s32.totalorder %s48, 0
      %p620 = por %p618, %p619
      %p621 = scmp.ne.s32.totalorder %s613, %s615
      %p622 = scmp.eq.s32.totalorder %s53, 3
      %p623 = por %p621, %p622
      %p624 = scmp.ne.s32.totalorder %s615, %s616
      %p625 = scmp.eq.s32.totalorder %s53, 0
      %p626 = por %p624, %p625
      %p627 = scmp.ne.s32.totalorder %s615, %s616
      %p628 = scmp.eq.s32.totalorder %s54, 3
      %p629 = por %p627, %p628
      %p631 = scmp.ne.s32.totalorder %s616, %s630
      %p632 = scmp.eq.s32.totalorder %s54, 0
      %p633 = por %p631, %p632
      %s634 = ssub.s32 %s55, %s67
      %s635 = ssub.s32 %s56, %s63
      %s636 = sor.u32 %s634, %s635
      %p637 = scmp.eq.s32.totalorder %s636, 0
      %s639 = sadd.s32 %s638, 1
      %s640 = scalar_select %p637, %s638, %s639
      %p643 = pneg %p637
      %p644 = scmp.eq.s32.totalorder %s48, 3
      %p645 = por %p643, %p644
      %p646 = scmp.ne.s32.totalorder %s638, %s641
      %p647 = scmp.eq.s32.totalorder %s48, 0
      %p648 = por %p646, %p647
      %p649 = scmp.ne.s32.totalorder %s638, %s641
      %p650 = scmp.eq.s32.totalorder %s53, 3
      %p651 = por %p649, %p650
      %p652 = scmp.ne.s32.totalorder %s641, %s642
      %p653 = scmp.eq.s32.totalorder %s53, 0
      %p654 = por %p652, %p653
      %p655 = scmp.ne.s32.totalorder %s641, %s642
      %p656 = scmp.eq.s32.totalorder %s54, 3
      %p657 = por %p655, %p656
      %p659 = scmp.ne.s32.totalorder %s642, %s658
      %p660 = scmp.eq.s32.totalorder %s54, 0
      %p661 = por %p659, %p660
      %p662 = scmp.le.s32.totalorder 1, %s48
      %p663 = scmp.lt.s32.totalorder %s48, 5
      %p664 = pnand %p662, %p663
      %p665 = pneg %p664
      // Predicated region
      $region9: #{tpu_custom_call.1} parent=5 // pred_check
        _
      $region10: #{tpu_custom_call.1} parent=5 // pred_check_branch
        %667 = sbr.rel (%p664) target = $region12
      $region11: #{tpu_custom_call.1} parent=5 // pred_region
        %s668 = ssub.s32 %s48, 1
        // Predicated region
        $region13: #{tpu_custom_call.1} parent=11 // pred_check
          %p669 = pneg %p185
        $region14: #{tpu_custom_call.1} parent=11 // pred_check_branch
          %671 = sbr.rel (%p669) target = $region16
        $region15: #{tpu_custom_call.1} parent=11 // pred_region
          %s673 = ssub.s32 1024, 1024
          %674 = vsyncadd [#allocation9], %s673
          %s675 = sshll.u32 [#allocation10], 4
          %s676 = int_to_ptr.vmem [resolvable:$true] %s675
          %681 = dma.hbm_to_vmem [thread:$0]  %s4, 1024, %s676, [#allocation9], 64, 64, 4
        $region16: #{tpu_custom_call.1} parent=11 // pred_fallthru
          _
        // Predicated region
        $region17: #{tpu_custom_call.1} parent=11 // pred_check
          %p682 = pneg %p206
        $region18: #{tpu_custom_call.1} parent=11 // pred_check_branch
          %684 = sbr.rel (%p682) target = $region20
        $region19: #{tpu_custom_call.1} parent=11 // pred_region
          _
        $region20: #{tpu_custom_call.1} parent=11 // pred_fallthru
          _
        // Predicated region
        $region21: #{tpu_custom_call.1} parent=11 // pred_check
          %p685 = pneg %p227
        $region22: #{tpu_custom_call.1} parent=11 // pred_check_branch
          %687 = sbr.rel (%p685) target = $region24
        $region23: #{tpu_custom_call.1} parent=11 // pred_region
          %s689 = ssub.s32 2048, 2048
          %690 = vsyncadd [#allocation12], %s689
          %s691 = sshll.u32 [#allocation11], 4
          %s692 = int_to_ptr.vmem [resolvable:$true] %s691
          %697 = dma.hbm_to_vmem [thread:$0]  %s6, 2048, %s692, [#allocation12], 128, 128, 8
        $region24: #{tpu_custom_call.1} parent=11 // pred_fallthru
          _
        // Predicated region
        $region25: #{tpu_custom_call.1} parent=11 // pred_check
          %p698 = pneg %p248
        $region26: #{tpu_custom_call.1} parent=11 // pred_check_branch
          %700 = sbr.rel (%p698) target = $region28
        $region27: #{tpu_custom_call.1} parent=11 // pred_region
          _
        $region28: #{tpu_custom_call.1} parent=11 // pred_fallthru
          _
        // Predicated region
        $region29: #{tpu_custom_call.1} parent=11 // pred_check
          %p701 = pneg %p269
        $region30: #{tpu_custom_call.1} parent=11 // pred_check_branch
          %703 = sbr.rel (%p701) target = $region32
        $region31: #{tpu_custom_call.1} parent=11 // pred_region
          %s705 = ssub.s32 1024, 1024
          %706 = vsyncadd [#allocation12], %s705
          %s707 = sshll.u32 [#allocation13], 4
          %s708 = int_to_ptr.vmem [resolvable:$true] %s707
          %713 = dma.hbm_to_vmem [thread:$0]  %s8, 1024, %s708, [#allocation12], 64, 64, 4
        $region32: #{tpu_custom_call.1} parent=11 // pred_fallthru
          _
        // Predicated region
        $region33: #{tpu_custom_call.1} parent=11 // pred_check
          %p714 = pneg %p290
        $region34: #{tpu_custom_call.1} parent=11 // pred_check_branch
          %716 = sbr.rel (%p714) target = $region36
        $region35: #{tpu_custom_call.1} parent=11 // pred_region
          _
        $region36: #{tpu_custom_call.1} parent=11 // pred_fallthru
          _
        // Predicated region
        $region37: #{tpu_custom_call.1} parent=11 // pred_check
          %p717 = pneg %p311
        $region38: #{tpu_custom_call.1} parent=11 // pred_check_branch
          %719 = sbr.rel (%p717) target = $region40
        $region39: #{tpu_custom_call.1} parent=11 // pred_region
          %s721 = ssub.s32 1024, 1024
          %722 = vsyncadd [#allocation15], %s721
          %s723 = sshll.u32 [#allocation14], 4
          %s724 = int_to_ptr.vmem [resolvable:$true] %s723
          %729 = dma.hbm_to_vmem [thread:$0]  %s10, 1024, %s724, [#allocation15], 64, 64, 4
        $region40: #{tpu_custom_call.1} parent=11 // pred_fallthru
          _
        // Predicated region
        $region41: #{tpu_custom_call.1} parent=11 // pred_check
          %p730 = pneg %p332
        $region42: #{tpu_custom_call.1} parent=11 // pred_check_branch
          %732 = sbr.rel (%p730) target = $region44
        $region43: #{tpu_custom_call.1} parent=11 // pred_region
          _
        $region44: #{tpu_custom_call.1} parent=11 // pred_fallthru
          _
        // Predicated region
        $region45: #{tpu_custom_call.1} parent=11 // pred_check
          %p733 = pneg %p353
        $region46: #{tpu_custom_call.1} parent=11 // pred_check_branch
          %735 = sbr.rel (%p733) target = $region48
        $region47: #{tpu_custom_call.1} parent=11 // pred_region
          %s737 = ssub.s32 2048, 2048
          %738 = vsyncadd [#allocation15], %s737
          %s739 = sshll.u32 [#allocation16], 4
          %s740 = int_to_ptr.vmem [resolvable:$true] %s739
          %745 = dma.hbm_to_vmem [thread:$0]  %s12, 2048, %s740, [#allocation15], 128, 128, 8
        $region48: #{tpu_custom_call.1} parent=11 // pred_fallthru
          _
        // Predicated region
        $region49: #{tpu_custom_call.1} parent=11 // pred_check
          %p746 = pneg %p374
        $region50: #{tpu_custom_call.1} parent=11 // pred_check_branch
          %748 = sbr.rel (%p746) target = $region52
        $region51: #{tpu_custom_call.1} parent=11 // pred_region
          _
        $region52: #{tpu_custom_call.1} parent=11 // pred_fallthru
          _
        // Predicated region
        $region53: #{tpu_custom_call.1} parent=11 // pred_check
          %p749 = pneg %p395
        $region54: #{tpu_custom_call.1} parent=11 // pred_check_branch
          %751 = sbr.rel (%p749) target = $region56
        $region55: #{tpu_custom_call.1} parent=11 // pred_region
          %s753 = ssub.s32 1024, 1024
          %754 = vsyncadd [#allocation18], %s753
          %s755 = sshll.u32 [#allocation17], 4
          %s756 = int_to_ptr.vmem [resolvable:$true] %s755
          %761 = dma.hbm_to_vmem [thread:$0]  %s14, 1024, %s756, [#allocation18], 64, 64, 4
        $region56: #{tpu_custom_call.1} parent=11 // pred_fallthru
          _
        // Predicated region
        $region57: #{tpu_custom_call.1} parent=11 // pred_check
          %p762 = pneg %p416
        $region58: #{tpu_custom_call.1} parent=11 // pred_check_branch
          %764 = sbr.rel (%p762) target = $region60
        $region59: #{tpu_custom_call.1} parent=11 // pred_region
          _
        $region60: #{tpu_custom_call.1} parent=11 // pred_fallthru
          _
        // Predicated region
        $region61: #{tpu_custom_call.1} parent=11 // pred_check
          %p765 = pneg %p437
        $region62: #{tpu_custom_call.1} parent=11 // pred_check_branch
          %767 = sbr.rel (%p765) target = $region64
        $region63: #{tpu_custom_call.1} parent=11 // pred_region
          _
        $region64: #{tpu_custom_call.1} parent=11 // pred_fallthru
          _
        // Predicated region
        $region65: #{tpu_custom_call.1} parent=11 // pred_check
          %p768 = pneg %p458
        $region66: #{tpu_custom_call.1} parent=11 // pred_check_branch
          %770 = sbr.rel (%p768) target = $region68
        $region67: #{tpu_custom_call.1} parent=11 // pred_region
          _
        $region68: #{tpu_custom_call.1} parent=11 // pred_fallthru
          _
        // Predicated region
        $region69: #{tpu_custom_call.1} parent=11 // pred_check
          %p771 = pneg %p479
        $region70: #{tpu_custom_call.1} parent=11 // pred_check_branch
          %773 = sbr.rel (%p771) target = $region72
        $region71: #{tpu_custom_call.1} parent=11 // pred_region
          _
        $region72: #{tpu_custom_call.1} parent=11 // pred_fallthru
          _
        // Predicated region
        $region73: #{tpu_custom_call.1} parent=11 // pred_check
          %p774 = pneg %p500
        $region74: #{tpu_custom_call.1} parent=11 // pred_check_branch
          %776 = sbr.rel (%p774) target = $region76
        $region75: #{tpu_custom_call.1} parent=11 // pred_region
          _
        $region76: #{tpu_custom_call.1} parent=11 // pred_fallthru
          _
        // Predicated region
        $region77: #{tpu_custom_call.1} parent=11 // pred_check
          %p777 = pneg %p521
        $region78: #{tpu_custom_call.1} parent=11 // pred_check_branch
          %779 = sbr.rel (%p777) target = $region80
        $region79: #{tpu_custom_call.1} parent=11 // pred_region
          _
        $region80: #{tpu_custom_call.1} parent=11 // pred_fallthru
          _
        // Predicated region
        $region81: #{tpu_custom_call.1} parent=11 // pred_check
          %p780 = pneg %p542
        $region82: #{tpu_custom_call.1} parent=11 // pred_check_branch
          %782 = sbr.rel (%p780) target = $region84
        $region83: #{tpu_custom_call.1} parent=11 // pred_region
          _
        $region84: #{tpu_custom_call.1} parent=11 // pred_fallthru
          _
        // Predicated region
        $region85: #{tpu_custom_call.1} parent=11 // pred_check
          %p783 = pneg %p563
        $region86: #{tpu_custom_call.1} parent=11 // pred_check_branch
          %785 = sbr.rel (%p783) target = $region88
        $region87: #{tpu_custom_call.1} parent=11 // pred_region
          %s787 = ssub.s32 2048, 2048
          %788 = vsyncadd [#allocation18], %s787
          %s789 = sshll.u32 [#allocation19], 4
          %s790 = int_to_ptr.vmem [resolvable:$true] %s789
          %795 = dma.hbm_to_vmem [thread:$0]  %s22, 2048, %s790, [#allocation18], 128, 128, 8
        $region88: #{tpu_custom_call.1} parent=11 // pred_fallthru
          _
        // Predicated region
        $region89: #{tpu_custom_call.1} parent=11 // pred_check
          %p796 = pneg %p584
        $region90: #{tpu_custom_call.1} parent=11 // pred_check_branch
          %798 = sbr.rel (%p796) target = $region92
        $region91: #{tpu_custom_call.1} parent=11 // pred_region
          _
        $region92: #{tpu_custom_call.1} parent=11 // pred_fallthru
          _
        // Predicated region
        $region93: #{tpu_custom_call.1} parent=11 // pred_check
          %p799 = pneg %p605
        $region94: #{tpu_custom_call.1} parent=11 // pred_check_branch
          %801 = sbr.rel (%p799) target = $region96
        $region95: #{tpu_custom_call.1} parent=11 // pred_region
          %s803 = ssub.s32 2048, 2048
          %804 = vsyncadd [#allocation21], %s803
          %s805 = sshll.u32 [#allocation20], 4
          %s806 = int_to_ptr.vmem [resolvable:$true] %s805
          %811 = dma.hbm_to_vmem [thread:$0]  %s24, 2048, %s806, [#allocation21], 64, 64, 4
        $region96: #{tpu_custom_call.1} parent=11 // pred_fallthru
          _
        // Predicated region
        $region97: #{tpu_custom_call.1} parent=11 // pred_check
          %p812 = pneg %p626
        $region98: #{tpu_custom_call.1} parent=11 // pred_check_branch
          %814 = sbr.rel (%p812) target = $region100
        $region99: #{tpu_custom_call.1} parent=11 // pred_region
          _
        $region100: #{tpu_custom_call.1} parent=11 // pred_fallthru
          _
      $region12: #{tpu_custom_call.1} parent=5 // pred_fallthru
        _
      %p815 = scmp.lt.s32.totalorder %s48, 4
      // Predicated region
      $region101: #{tpu_custom_call.1} parent=5 // pred_check
        %p816 = pneg %p815
      $region102: #{tpu_custom_call.1} parent=5 // pred_check_branch
        %818 = sbr.rel (%p816) target = $region104
      $region103: #{tpu_custom_call.1} parent=5 // pred_region
        // Predicated region
        $region105: #{tpu_custom_call.1} parent=103 // pred_check
          %p819 = pneg %p80
        $region106: #{tpu_custom_call.1} parent=103 // pred_check_branch
          %821 = sbr.rel (%p819) target = $region108
        $region107: #{tpu_custom_call.1} parent=103 // pred_region
          %s822 = sand.u32 %s70, 1
          %s823 = scalar_lea.sflag [#allocation3], %s822
          %s824 = sand.u32 %s70, 1
          %s825 = smul.addr %s824, 128
          %s826 = scalar_lea.vmem [#allocation2], %s825
          %s828 = ssub.s32 2048, 2048
          %829 = vsyncadd %s823, %s828
          %s830 = smul.addr %s55, 32
          %s831 = smul.addr %s830, 64
          %s832 = scalar_lea.hbm %s0, %s831
          %s833 = sshll.u32 %s826, 4
          %s834 = int_to_ptr.vmem [resolvable:$true] %s833
          %839 = dma.hbm_to_vmem [thread:$0]  %s832, 2048, %s834, %s823, 64, 64, 4
        $region108: #{tpu_custom_call.1} parent=103 // pred_fallthru
          _
        // Predicated region
        $region109: #{tpu_custom_call.1} parent=103 // pred_check
          %p840 = pneg %p106
        $region110: #{tpu_custom_call.1} parent=103 // pred_check_branch
          %842 = sbr.rel (%p840) target = $region112
        $region111: #{tpu_custom_call.1} parent=103 // pred_region
          %s843 = sand.u32 %s48, 1
          %s844 = scalar_lea.sflag [#allocation6], %s843
          %s845 = sand.u32 %s96, 1
          %s846 = smul.addr %s845, 64
          %s847 = scalar_lea.vmem [#allocation5], %s846
          %s849 = ssub.s32 1024, 1024
          %850 = vsyncadd %s844, %s849
          %s851 = smul.addr %s55, 16
          %s852 = smul.addr %s851, 64
          %s853 = scalar_lea.hbm %s1, %s852
          %s854 = sshll.u32 %s847, 4
          %s855 = int_to_ptr.vmem [resolvable:$true] %s854
          %860 = dma.hbm_to_vmem [thread:$0]  %s853, 1024, %s855, %s844, 64, 64, 4
        $region112: #{tpu_custom_call.1} parent=103 // pred_fallthru
          _
        // Predicated region
        $region113: #{tpu_custom_call.1} parent=103 // pred_check
          %p861 = pneg %p132
        $region114: #{tpu_custom_call.1} parent=103 // pred_check_branch
          %863 = sbr.rel (%p861) target = $region116
        $region115: #{tpu_custom_call.1} parent=103 // pred_region
          %s864 = sand.u32 %s48, 1
          %s865 = scalar_lea.sflag [#allocation6], %s864
          %s866 = sand.u32 %s122, 1
          %s867 = smul.addr %s866, 256
          %s868 = scalar_lea.vmem [#allocation7], %s867
          %s869 = smul.u32 16, %s56
          %s871 = ssub.s32 4096, 4096
          %872 = vsyncadd %s865, %s871
          %s873 = smul.addr %s869, 2
          %s874 = smul.addr %s873, 128
          %s875 = scalar_lea.hbm %s2, %s874
          %s876 = sshll.u32 %s868, 4
          %s877 = int_to_ptr.vmem [resolvable:$true] %s876
          %882 = dma.hbm_to_vmem [thread:$0]  %s875, 4096, %s877, %s865, 256, 256, 16
        $region116: #{tpu_custom_call.1} parent=103 // pred_fallthru
          _
        // Predicated region
        $region117: #{tpu_custom_call.1} parent=103 // pred_check
          %p883 = pneg %p158
        $region118: #{tpu_custom_call.1} parent=103 // pred_check_branch
          %885 = sbr.rel (%p883) target = $region120
        $region119: #{tpu_custom_call.1} parent=103 // pred_region
          %s886 = sand.u32 %s48, 1
          %s887 = scalar_lea.sflag [#allocation9], %s886
          %s888 = sand.u32 %s148, 1
          %s889 = smul.addr %s888, 128
          %s890 = scalar_lea.vmem [#allocation8], %s889
          %s891 = smul.u32 16, %s56
          %s893 = ssub.s32 2048, 2048
          %894 = vsyncadd %s887, %s893
          %s895 = smul.addr %s891, 128
          %s896 = scalar_lea.hbm %s3, %s895
          %s897 = sshll.u32 %s890, 4
          %s898 = int_to_ptr.vmem [resolvable:$true] %s897
          %903 = dma.hbm_to_vmem [thread:$0]  %s896, 2048, %s898, %s887, 128, 128, 8
        $region120: #{tpu_custom_call.1} parent=103 // pred_fallthru
          _
      $region104: #{tpu_custom_call.1} parent=5 // pred_fallthru
        _
      %p904 = scmp.le.s32.totalorder 1, %s48
      %p905 = scmp.lt.s32.totalorder %s48, 5
      %p906 = pnand %p904, %p905
      %p907 = pneg %p906
      // Predicated region
      $region121: #{tpu_custom_call.1} parent=5 // pred_check
        _
      $region122: #{tpu_custom_call.1} parent=5 // pred_check_branch
        %909 = sbr.rel (%p906) target = $region124
      $region123: #{tpu_custom_call.1} parent=5 // pred_region
        %s910 = ssub.s32 %s48, 1
        %s911 = sand.u32 %s73, 1
        %s912 = scalar_lea.sflag [#allocation3], %s911
        %s913 = sand.u32 %s73, 1
        %s914 = smul.addr %s913, 128
        %s915 = scalar_lea.vmem [#allocation2], %s914
        // Predicated region
        $region125: #{tpu_custom_call.1} parent=123 // pred_check
          %p916 = pneg %p86
        $region126: #{tpu_custom_call.1} parent=123 // pred_check_branch
          %918 = sbr.rel (%p916) target = $region128
        $region127: #{tpu_custom_call.1} parent=123 // pred_region
          %919 = dma.done %s912, 2048
        $region128: #{tpu_custom_call.1} parent=123 // pred_fallthru
          _
        %s920 = sand.u32 %s53, 1
        %s921 = scalar_lea.sflag [#allocation6], %s920
        %s922 = sand.u32 %s99, 1
        %s923 = smul.addr %s922, 64
        %s924 = scalar_lea.vmem [#allocation5], %s923
        // Predicated region
        $region129: #{tpu_custom_call.1} parent=123 // pred_check
          %p925 = pneg %p112
        $region130: #{tpu_custom_call.1} parent=123 // pred_check_branch
          %927 = sbr.rel (%p925) target = $region132
        $region131: #{tpu_custom_call.1} parent=123 // pred_region
          %928 = dma.done %s921, 1024
        $region132: #{tpu_custom_call.1} parent=123 // pred_fallthru
          _
        %s929 = sand.u32 %s53, 1
        %s930 = scalar_lea.sflag [#allocation6], %s929
        %s931 = sand.u32 %s125, 1
        %s932 = smul.addr %s931, 256
        %s933 = scalar_lea.vmem [#allocation7], %s932
        // Predicated region
        $region133: #{tpu_custom_call.1} parent=123 // pred_check
          %p934 = pneg %p138
        $region134: #{tpu_custom_call.1} parent=123 // pred_check_branch
          %936 = sbr.rel (%p934) target = $region136
        $region135: #{tpu_custom_call.1} parent=123 // pred_region
          %937 = dma.done %s930, 4096
        $region136: #{tpu_custom_call.1} parent=123 // pred_fallthru
          _
        %s938 = sand.u32 %s53, 1
        %s939 = scalar_lea.sflag [#allocation9], %s938
        %s940 = sand.u32 %s151, 1
        %s941 = smul.addr %s940, 128
        %s942 = scalar_lea.vmem [#allocation8], %s941
        // Predicated region
        $region137: #{tpu_custom_call.1} parent=123 // pred_check
          %p943 = pneg %p164
        $region138: #{tpu_custom_call.1} parent=123 // pred_check_branch
          %945 = sbr.rel (%p943) target = $region140
        $region139: #{tpu_custom_call.1} parent=123 // pred_region
          %946 = dma.done %s939, 2048
        $region140: #{tpu_custom_call.1} parent=123 // pred_fallthru
          _
        // Predicated region
        $region141: #{tpu_custom_call.1} parent=123 // pred_check
          %p947 = pneg %p185
        $region142: #{tpu_custom_call.1} parent=123 // pred_check_branch
          %949 = sbr.rel (%p947) target = $region144
        $region143: #{tpu_custom_call.1} parent=123 // pred_region
          %950 = dma.done [#allocation9], 1024
        $region144: #{tpu_custom_call.1} parent=123 // pred_fallthru
          _
        // Predicated region
        $region145: #{tpu_custom_call.1} parent=123 // pred_check
          %p951 = pneg %p227
        $region146: #{tpu_custom_call.1} parent=123 // pred_check_branch
          %953 = sbr.rel (%p951) target = $region148
        $region147: #{tpu_custom_call.1} parent=123 // pred_region
          %954 = dma.done [#allocation12], 2048
        $region148: #{tpu_custom_call.1} parent=123 // pred_fallthru
          _
        // Predicated region
        $region149: #{tpu_custom_call.1} parent=123 // pred_check
          %p955 = pneg %p269
        $region150: #{tpu_custom_call.1} parent=123 // pred_check_branch
          %957 = sbr.rel (%p955) target = $region152
        $region151: #{tpu_custom_call.1} parent=123 // pred_region
          %958 = dma.done [#allocation12], 1024
        $region152: #{tpu_custom_call.1} parent=123 // pred_fallthru
          _
        // Predicated region
        $region153: #{tpu_custom_call.1} parent=123 // pred_check
          %p959 = pneg %p311
        $region154: #{tpu_custom_call.1} parent=123 // pred_check_branch
          %961 = sbr.rel (%p959) target = $region156
        $region155: #{tpu_custom_call.1} parent=123 // pred_region
          %962 = dma.done [#allocation15], 1024
        $region156: #{tpu_custom_call.1} parent=123 // pred_fallthru
          _
        // Predicated region
        $region157: #{tpu_custom_call.1} parent=123 // pred_check
          %p963 = pneg %p353
        $region158: #{tpu_custom_call.1} parent=123 // pred_check_branch
          %965 = sbr.rel (%p963) target = $region160
        $region159: #{tpu_custom_call.1} parent=123 // pred_region
          %966 = dma.done [#allocation15], 2048
        $region160: #{tpu_custom_call.1} parent=123 // pred_fallthru
          _
        // Predicated region
        $region161: #{tpu_custom_call.1} parent=123 // pred_check
          %p967 = pneg %p395
        $region162: #{tpu_custom_call.1} parent=123 // pred_check_branch
          %969 = sbr.rel (%p967) target = $region164
        $region163: #{tpu_custom_call.1} parent=123 // pred_region
          %970 = dma.done [#allocation18], 1024
        $region164: #{tpu_custom_call.1} parent=123 // pred_fallthru
          _
        // Predicated region
        $region165: #{tpu_custom_call.1} parent=123 // pred_check
          %p971 = pneg %p563
        $region166: #{tpu_custom_call.1} parent=123 // pred_check_branch
          %973 = sbr.rel (%p971) target = $region168
        $region167: #{tpu_custom_call.1} parent=123 // pred_region
          %974 = dma.done [#allocation18], 2048
        $region168: #{tpu_custom_call.1} parent=123 // pred_fallthru
          _
        // Predicated region
        $region169: #{tpu_custom_call.1} parent=123 // pred_check
          %p975 = pneg %p605
        $region170: #{tpu_custom_call.1} parent=123 // pred_check_branch
          %977 = sbr.rel (%p975) target = $region172
        $region171: #{tpu_custom_call.1} parent=123 // pred_region
          %978 = dma.done [#allocation21], 2048
        $region172: #{tpu_custom_call.1} parent=123 // pred_fallthru
          _
        %s979 = sand.u32 %s73, 1
        %s980 = scalar_lea.sflag [#allocation3], %s979
        %s981 = sand.u32 %s73, 1
        %s982 = smul.addr %s981, 128
        %s983 = scalar_lea.vmem [#allocation2], %s982
        %p984 = pneg %p86
        %p985 = pneg %p83
        %s986 = sand.u32 %s53, 1
        %s987 = scalar_lea.sflag [#allocation6], %s986
        %s988 = sand.u32 %s99, 1
        %s989 = smul.addr %s988, 64
        %s990 = scalar_lea.vmem [#allocation5], %s989
        %p991 = pneg %p112
        %p992 = pneg %p109
        %s993 = sand.u32 %s53, 1
        %s994 = scalar_lea.sflag [#allocation6], %s993
        %s995 = sand.u32 %s125, 1
        %s996 = smul.addr %s995, 256
        %s997 = scalar_lea.vmem [#allocation7], %s996
        %p998 = pneg %p138
        %p999 = pneg %p135
        %s1000 = sand.u32 %s53, 1
        %s1001 = scalar_lea.sflag [#allocation9], %s1000
        %s1002 = sand.u32 %s151, 1
        %s1003 = smul.addr %s1002, 128
        %s1004 = scalar_lea.vmem [#allocation8], %s1003
        %p1005 = pneg %p164
        %p1006 = pneg %p161
        %p1007 = pneg %p185
        %p1008 = pneg %p182
        %p1009 = pneg %p206
        %p1010 = pneg %p203
        %p1011 = pneg %p227
        %p1012 = pneg %p224
        %p1013 = pneg %p248
        %p1014 = pneg %p245
        %p1015 = pneg %p269
        %p1016 = pneg %p266
        %p1017 = pneg %p290
        %p1018 = pneg %p287
        %p1019 = pneg %p311
        %p1020 = pneg %p308
        %p1021 = pneg %p332
        %p1022 = pneg %p329
        %p1023 = pneg %p353
        %p1024 = pneg %p350
        %p1025 = pneg %p374
        %p1026 = pneg %p371
        %p1027 = pneg %p395
        %p1028 = pneg %p392
        %p1029 = pneg %p416
        %p1030 = pneg %p413
        %p1031 = pneg %p437
        %p1032 = pneg %p434
        %p1033 = pneg %p458
        %p1034 = pneg %p455
        %p1035 = pneg %p479
        %p1036 = pneg %p476
        %p1037 = pneg %p500
        %p1038 = pneg %p497
        %p1039 = pneg %p521
        %p1040 = pneg %p518
        %p1041 = pneg %p542
        %p1042 = pneg %p539
        %p1043 = pneg %p563
        %p1044 = pneg %p560
        %p1045 = pneg %p584
        %p1046 = pneg %p581
        %p1047 = pneg %p605
        %p1048 = pneg %p602
        %p1049 = pneg %p626
        %p1050 = pneg %p623
        %p1051 = pneg %p654
        %p1052 = pneg %p651
        %s1053 = sand.u32 %s641, 1
        %s1054 = scalar_lea.sflag [#allocation4], %s1053
        %s1055 = sand.u32 %s641, 1
        %s1056 = smul.addr %s1055, 128
        %s1057 = scalar_lea.vmem [#allocation22], %s1056
        %s1058 = smul.u32 16, %s58
        %s1059 = smul.u32 16, %s58
        %s1060 = smul.u32 16, %s58
        %v1062 = vld [vmem:[%s915] sm:$0xf]
        %v1063 = vld [vmem:[%s915 + $0x4] sm:$0xf]
        %v1064 = vld [vmem:[%s915 + $0x8] sm:$0xf]
        %v1065 = vld [vmem:[%s915 + $0xc] sm:$0xf]
        %v1066 = vld [vmem:[%s915 + $0x10] sm:$0xf]
        %v1067 = vld [vmem:[%s915 + $0x14] sm:$0xf]
        %v1068 = vld [vmem:[%s915 + $0x18] sm:$0xf]
        %v1069 = vld [vmem:[%s915 + $0x1c] sm:$0xf]
        %v1070 = vld [vmem:[%s915 + $0x20] sm:$0xf]
        %v1071 = vld [vmem:[%s915 + $0x24] sm:$0xf]
        %v1072 = vld [vmem:[%s915 + $0x28] sm:$0xf]
        %v1073 = vld [vmem:[%s915 + $0x2c] sm:$0xf]
        %v1074 = vld [vmem:[%s915 + $0x30] sm:$0xf]
        %v1075 = vld [vmem:[%s915 + $0x34] sm:$0xf]
        %v1076 = vld [vmem:[%s915 + $0x38] sm:$0xf]
        %v1077 = vld [vmem:[%s915 + $0x3c] sm:$0xf]
        %v1078 = vld [vmem:[%s915 + $0x40] sm:$0xf]
        %v1079 = vld [vmem:[%s915 + $0x44] sm:$0xf]
        %v1080 = vld [vmem:[%s915 + $0x48] sm:$0xf]
        %v1081 = vld [vmem:[%s915 + $0x4c] sm:$0xf]
        %v1082 = vld [vmem:[%s915 + $0x50] sm:$0xf]
        %v1083 = vld [vmem:[%s915 + $0x54] sm:$0xf]
        %v1084 = vld [vmem:[%s915 + $0x58] sm:$0xf]
        %v1085 = vld [vmem:[%s915 + $0x5c] sm:$0xf]
        %v1086 = vld [vmem:[%s915 + $0x60] sm:$0xf]
        %v1087 = vld [vmem:[%s915 + $0x64] sm:$0xf]
        %v1088 = vld [vmem:[%s915 + $0x68] sm:$0xf]
        %v1089 = vld [vmem:[%s915 + $0x6c] sm:$0xf]
        %v1090 = vld [vmem:[%s915 + $0x70] sm:$0xf]
        %v1091 = vld [vmem:[%s915 + $0x74] sm:$0xf]
        %v1092 = vld [vmem:[%s915 + $0x78] sm:$0xf]
        %v1093 = vld [vmem:[%s915 + $0x7c] sm:$0xf]
        %v1094 = vld [vmem:[%s924] sm:$0xf]
        %v1095 = vld [vmem:[%s924 + $0x4] sm:$0xf]
        %v1096 = vld [vmem:[%s924 + $0x8] sm:$0xf]
        %v1097 = vld [vmem:[%s924 + $0xc] sm:$0xf]
        %v1098 = vld [vmem:[%s924 + $0x10] sm:$0xf]
        %v1099 = vld [vmem:[%s924 + $0x14] sm:$0xf]
        %v1100 = vld [vmem:[%s924 + $0x18] sm:$0xf]
        %v1101 = vld [vmem:[%s924 + $0x1c] sm:$0xf]
        %v1102 = vld [vmem:[%s924 + $0x20] sm:$0xf]
        %v1103 = vld [vmem:[%s924 + $0x24] sm:$0xf]
        %v1104 = vld [vmem:[%s924 + $0x28] sm:$0xf]
        %v1105 = vld [vmem:[%s924 + $0x2c] sm:$0xf]
        %v1106 = vld [vmem:[%s924 + $0x30] sm:$0xf]
        %v1107 = vld [vmem:[%s924 + $0x34] sm:$0xf]
        %v1108 = vld [vmem:[%s924 + $0x38] sm:$0xf]
        %v1109 = vld [vmem:[%s924 + $0x3c] sm:$0xf]
        %s1110 = smul.u32 %s58, 128
        %s1111 = sshra.s32 %s1110, 3
        %s1112 = sand.u32 %s1110, 7
        %s1113 = smul.addr %s1111, 4
        %s1114 = scalar_lea.vmem %s915, %s1113 [#allocation2]
        %v1115 = vld [vmem:[%s1114] sm:$0xf]
        %v1116 = vld [vmem:[%s1114 + $0x4] sm:$0xf]
        %v1117 = vld [vmem:[%s1114 + $0x8] sm:$0xf]
        %v1118 = vld [vmem:[%s1114 + $0xc] sm:$0xf]
        %v1119 = vld [vmem:[%s1114 + $0x10] sm:$0xf]
        %v1120 = vld [vmem:[%s1114 + $0x14] sm:$0xf]
        %v1121 = vld [vmem:[%s1114 + $0x18] sm:$0xf]
        %v1122 = vld [vmem:[%s1114 + $0x1c] sm:$0xf]
        %v1123 = vld [vmem:[%s1114 + $0x20] sm:$0xf]
        %v1124 = vld [vmem:[%s1114 + $0x24] sm:$0xf]
        %v1125 = vld [vmem:[%s1114 + $0x28] sm:$0xf]
        %v1126 = vld [vmem:[%s1114 + $0x2c] sm:$0xf]
        %v1127 = vld [vmem:[%s1114 + $0x30] sm:$0xf]
        %v1128 = vld [vmem:[%s1114 + $0x34] sm:$0xf]
        %v1129 = vld [vmem:[%s1114 + $0x38] sm:$0xf]
        %v1130 = vld [vmem:[%s1114 + $0x3c] sm:$0xf]
        %v1131 = vunpack.c.l.bf16 %v1115
        %v1132 = vunpack.c.l.bf16 %v1116
        %v1133 = vunpack.c.l.bf16 %v1117
        %v1134 = vunpack.c.l.bf16 %v1118
        %v1135 = vunpack.c.l.bf16 %v1119
        %v1136 = vunpack.c.l.bf16 %v1120
        %v1137 = vunpack.c.l.bf16 %v1121
        %v1138 = vunpack.c.l.bf16 %v1122
        %v1139 = vunpack.c.l.bf16 %v1123
        %v1140 = vunpack.c.l.bf16 %v1124
        %v1141 = vunpack.c.l.bf16 %v1125
        %v1142 = vunpack.c.l.bf16 %v1126
        %v1143 = vunpack.c.l.bf16 %v1127
        %v1144 = vunpack.c.l.bf16 %v1128
        %v1145 = vunpack.c.l.bf16 %v1129
        %v1146 = vunpack.c.l.bf16 %v1130
        %v1147 = vld [vmem:[#allocation10] sm:$0xf]
        %v1148 = vld [vmem:[#allocation10 + $0x4] sm:$0xf]
        %v1149 = vld [vmem:[#allocation10 + $0x8] sm:$0xf]
        %v1150 = vld [vmem:[#allocation10 + $0xc] sm:$0xf]
        %v1151 = vld [vmem:[#allocation10 + $0x10] sm:$0xf]
        %v1152 = vld [vmem:[#allocation10 + $0x14] sm:$0xf]
        %v1153 = vld [vmem:[#allocation10 + $0x18] sm:$0xf]
        %v1154 = vld [vmem:[#allocation10 + $0x1c] sm:$0xf]
        %v1155 = vld [vmem:[#allocation10 + $0x20] sm:$0xf]
        %v1156 = vld [vmem:[#allocation10 + $0x24] sm:$0xf]
        %v1157 = vld [vmem:[#allocation10 + $0x28] sm:$0xf]
        %v1158 = vld [vmem:[#allocation10 + $0x2c] sm:$0xf]
        %v1159 = vld [vmem:[#allocation10 + $0x30] sm:$0xf]
        %v1160 = vld [vmem:[#allocation10 + $0x34] sm:$0xf]
        %v1161 = vld [vmem:[#allocation10 + $0x38] sm:$0xf]
        %v1162 = vld [vmem:[#allocation10 + $0x3c] sm:$0xf]
        %v1163 = vld [vmem:[%s5] sm:$0x1]
        %v1165 = vlaneseq
        %v1166 = vshrl.u32 %v1165, 7
        %v1167 = vsub.s32 0, %v1166
        %v1168 = vrot.slane %v1163, %v1167
        %v1186 = vunpack.c.l.b16 %v1115
        %v1187 = vunpack.c.l.b16 %v1116
        %v1188 = vunpack.c.l.b16 %v1117
        %v1189 = vunpack.c.l.b16 %v1118
        %v1190 = vunpack.c.l.b16 %v1119
        %v1191 = vunpack.c.l.b16 %v1120
        %v1192 = vunpack.c.l.b16 %v1121
        %v1193 = vunpack.c.l.b16 %v1122
        %v1194 = vunpack.c.l.b16 %v1123
        %v1195 = vunpack.c.l.b16 %v1124
        %v1196 = vunpack.c.l.b16 %v1125
        %v1197 = vunpack.c.l.b16 %v1126
        %v1198 = vunpack.c.l.b16 %v1127
        %v1199 = vunpack.c.l.b16 %v1128
        %v1200 = vunpack.c.l.b16 %v1129
        %v1201 = vunpack.c.l.b16 %v1130
        %v1202 = vpack.c.b16 %v1187, %v1186
        %v1203 = vpack.c.b16 %v1189, %v1188
        %v1204 = vpack.c.b16 %v1191, %v1190
        %v1205 = vpack.c.b16 %v1193, %v1192
        %v1206 = vpack.c.b16 %v1195, %v1194
        %v1207 = vpack.c.b16 %v1197, %v1196
        %v1208 = vpack.c.b16 %v1199, %v1198
        %v1209 = vpack.c.b16 %v1201, %v1200
        %v1234 = vunpack.c.l.b16 %v1147
        %v1235 = vunpack.c.l.b16 %v1148
        %v1236 = vunpack.c.l.b16 %v1149
        %v1237 = vunpack.c.l.b16 %v1150
        %v1238 = vunpack.c.l.b16 %v1151
        %v1239 = vunpack.c.l.b16 %v1152
        %v1240 = vunpack.c.l.b16 %v1153
        %v1241 = vunpack.c.l.b16 %v1154
        %v1242 = vunpack.c.l.b16 %v1155
        %v1243 = vunpack.c.l.b16 %v1156
        %v1244 = vunpack.c.l.b16 %v1157
        %v1245 = vunpack.c.l.b16 %v1158
        %v1246 = vunpack.c.l.b16 %v1159
        %v1247 = vunpack.c.l.b16 %v1160
        %v1248 = vunpack.c.l.b16 %v1161
        %v1249 = vunpack.c.l.b16 %v1162
        %v1250 = vpack.c.b16 %v1235, %v1234
        %v1251 = vpack.c.b16 %v1237, %v1236
        %v1252 = vpack.c.b16 %v1239, %v1238
        %v1253 = vpack.c.b16 %v1241, %v1240
        %v1254 = vpack.c.b16 %v1243, %v1242
        %v1255 = vpack.c.b16 %v1245, %v1244
        %v1256 = vpack.c.b16 %v1247, %v1246
        %v1257 = vpack.c.b16 %v1249, %v1248
        %1266 = vmatprep.subr.bf16.mxu0 0
        %1267 = vmatpush1.bf16.msra.mxu0 %v1257
        %1268 = vmatprep.subr.bf16.mxu0 0
        %1269 = vmatpush1.bf16.msra.mxu0 %v1256
        %1270 = vmatprep.subr.bf16.mxu0 0
        %1271 = vmatpush1.bf16.msra.mxu0 %v1255
        %1272 = vmatprep.subr.bf16.mxu0 0
        %1273 = vmatpush1.bf16.msra.mxu0 %v1254
        %1274 = vmatprep.subr.bf16.mxu0 0
        %1275 = vmatpush1.bf16.msra.mxu0 %v1253
        %1276 = vmatprep.subr.bf16.mxu0 0
        %1277 = vmatpush1.bf16.msra.mxu0 %v1252
        %1278 = vmatprep.subr.bf16.mxu0 0
        %1279 = vmatpush1.bf16.msra.mxu0 %v1251
        %1280 = vmatprep.subr.bf16.mxu0 0
        %1281 = vmatpush1.bf16.msra.mxu0 %v1250
        %1282 = vmatprep.subr.bf16.mxu0 0
        %1283 = vmatpush2.bf16.msra.mxu0 0
        %1284 = vmatprep.subr.bf16.mxu0 0
        %1285 = vmatpush2.bf16.msra.mxu0 0
        %1286 = vmatprep.subr.bf16.mxu0 0
        %1287 = vmatpush2.bf16.msra.mxu0 0
        %1288 = vmatprep.subr.bf16.mxu0 0
        %1289 = vmatpush2.bf16.msra.mxu0 0
        %1290 = vmatprep.subr.bf16.mxu0 0
        %1291 = vmatpush2.bf16.msra.mxu0 0
        %1292 = vmatprep.subr.bf16.mxu0 0
        %1293 = vmatpush2.bf16.msra.mxu0 0
        %1294 = vmatprep.subr.bf16.mxu0 0
        %1295 = vmatpush2.bf16.msra.mxu0 0
        %1296 = vmatprep.subr.bf16.mxu0 0
        %1297 = vmatpush2.bf16.msra.mxu0 0
        %1298 = vmatprep.mubr.bf16.mxu0 0
        %1299 = vmatmul.mubr.bf16.gmra.mxu0 %v1202
        %v1300 = vpop.f32.mrf.mxu0
        %v1301 = vadd.f32 %v1168, %v1300
        %v1302 = vpop.f32.mrf.mxu0
        %v1303 = vpop.f32.mrf.mxu0
        %v1304 = vadd.f32 %v1168, %v1303
        %v1305 = vpop.f32.mrf.mxu0
        %1306 = vmatprep.mubr.bf16.mxu0 0
        %1307 = vmatmul.mubr.bf16.gmra.mxu0 %v1203
        %v1308 = vpop.f32.mrf.mxu0
        %v1309 = vadd.f32 %v1168, %v1308
        %v1310 = vpop.f32.mrf.mxu0
        %v1311 = vpop.f32.mrf.mxu0
        %v1312 = vadd.f32 %v1168, %v1311
        %v1313 = vpop.f32.mrf.mxu0
        %1314 = vmatprep.mubr.bf16.mxu0 0
        %1315 = vmatmul.mubr.bf16.gmra.mxu0 %v1204
        %v1316 = vpop.f32.mrf.mxu0
        %v1317 = vadd.f32 %v1168, %v1316
        %v1318 = vpop.f32.mrf.mxu0
        %v1319 = vpop.f32.mrf.mxu0
        %v1320 = vadd.f32 %v1168, %v1319
        %v1321 = vpop.f32.mrf.mxu0
        %1322 = vmatprep.mubr.bf16.mxu0 0
        %1323 = vmatmul.mubr.bf16.gmra.mxu0 %v1205
        %v1324 = vpop.f32.mrf.mxu0
        %v1325 = vadd.f32 %v1168, %v1324
        %v1326 = vpop.f32.mrf.mxu0
        %v1327 = vpop.f32.mrf.mxu0
        %v1328 = vadd.f32 %v1168, %v1327
        %v1329 = vpop.f32.mrf.mxu0
        %1330 = vmatprep.mubr.bf16.mxu0 0
        %1331 = vmatmul.mubr.bf16.gmra.mxu0 %v1206
        %v1332 = vpop.f32.mrf.mxu0
        %v1333 = vadd.f32 %v1168, %v1332
        %v1334 = vpop.f32.mrf.mxu0
        %v1335 = vpop.f32.mrf.mxu0
        %v1336 = vadd.f32 %v1168, %v1335
        %v1337 = vpop.f32.mrf.mxu0
        %1338 = vmatprep.mubr.bf16.mxu0 0
        %1339 = vmatmul.mubr.bf16.gmra.mxu0 %v1207
        %v1340 = vpop.f32.mrf.mxu0
        %v1341 = vadd.f32 %v1168, %v1340
        %v1342 = vpop.f32.mrf.mxu0
        %v1343 = vpop.f32.mrf.mxu0
        %v1344 = vadd.f32 %v1168, %v1343
        %v1345 = vpop.f32.mrf.mxu0
        %1346 = vmatprep.mubr.bf16.mxu0 0
        %1347 = vmatmul.mubr.bf16.gmra.mxu0 %v1208
        %v1348 = vpop.f32.mrf.mxu0
        %v1349 = vadd.f32 %v1168, %v1348
        %v1350 = vpop.f32.mrf.mxu0
        %v1351 = vpop.f32.mrf.mxu0
        %v1352 = vadd.f32 %v1168, %v1351
        %v1353 = vpop.f32.mrf.mxu0
        %1354 = vmatprep.mubr.bf16.mxu0 0
        %1355 = vmatmul.mubr.bf16.gmra.mxu0 %v1209
        %v1356 = vpop.f32.mrf.mxu0
        %v1357 = vadd.f32 %v1168, %v1356
        %v1358 = vpop.f32.mrf.mxu0
        %v1359 = vpop.f32.mrf.mxu0
        %v1360 = vadd.f32 %v1168, %v1359
        %v1361 = vpop.f32.mrf.mxu0
        %1362 = vdwg.mxu0
        %v1363 = vld [vmem:[#allocation11] sm:$0xff]
        %v1364 = vld [vmem:[#allocation11 + $0x8] sm:$0xff]
        %v1365 = vld [vmem:[#allocation11 + $0x10] sm:$0xff]
        %v1366 = vld [vmem:[#allocation11 + $0x18] sm:$0xff]
        %v1367 = vld [vmem:[#allocation11 + $0x20] sm:$0xff]
        %v1368 = vld [vmem:[#allocation11 + $0x28] sm:$0xff]
        %v1369 = vld [vmem:[#allocation11 + $0x30] sm:$0xff]
        %v1370 = vld [vmem:[#allocation11 + $0x38] sm:$0xff]
        %v1371 = vld [vmem:[#allocation11 + $0x40] sm:$0xff]
        %v1372 = vld [vmem:[#allocation11 + $0x48] sm:$0xff]
        %v1373 = vld [vmem:[#allocation11 + $0x50] sm:$0xff]
        %v1374 = vld [vmem:[#allocation11 + $0x58] sm:$0xff]
        %v1375 = vld [vmem:[#allocation11 + $0x60] sm:$0xff]
        %v1376 = vld [vmem:[#allocation11 + $0x68] sm:$0xff]
        %v1377 = vld [vmem:[#allocation11 + $0x70] sm:$0xff]
        %v1378 = vld [vmem:[#allocation11 + $0x78] sm:$0xff]
        %v1379 = vld [vmem:[%s7] sm:$0x3]
        %v1381 = vlaneseq
        %v1382 = vshrl.u32 %v1381, 7
        %v1383 = vsub.s32 0, %v1382
        %v1384 = vrot.slane %v1379, %v1383
        %v1385 = vlaneseq
        %v1386 = vshrl.u32 %v1385, 7
        %v1387 = vsub.s32 1, %v1386
        %v1388 = vrot.slane %v1379, %v1387
        %v1423 = vunpack.c.l.b16 %v1062
        %v1424 = vunpack.c.l.b16 %v1063
        %v1425 = vunpack.c.l.b16 %v1064
        %v1426 = vunpack.c.l.b16 %v1065
        %v1427 = vunpack.c.l.b16 %v1066
        %v1428 = vunpack.c.l.b16 %v1067
        %v1429 = vunpack.c.l.b16 %v1068
        %v1430 = vunpack.c.l.b16 %v1069
        %v1431 = vunpack.c.l.b16 %v1070
        %v1432 = vunpack.c.l.b16 %v1071
        %v1433 = vunpack.c.l.b16 %v1072
        %v1434 = vunpack.c.l.b16 %v1073
        %v1435 = vunpack.c.l.b16 %v1074
        %v1436 = vunpack.c.l.b16 %v1075
        %v1437 = vunpack.c.l.b16 %v1076
        %v1438 = vunpack.c.l.b16 %v1077
        %v1439 = vunpack.c.l.b16 %v1078
        %v1440 = vunpack.c.l.b16 %v1079
        %v1441 = vunpack.c.l.b16 %v1080
        %v1442 = vunpack.c.l.b16 %v1081
        %v1443 = vunpack.c.l.b16 %v1082
        %v1444 = vunpack.c.l.b16 %v1083
        %v1445 = vunpack.c.l.b16 %v1084
        %v1446 = vunpack.c.l.b16 %v1085
        %v1447 = vunpack.c.l.b16 %v1086
        %v1448 = vunpack.c.l.b16 %v1087
        %v1449 = vunpack.c.l.b16 %v1088
        %v1450 = vunpack.c.l.b16 %v1089
        %v1451 = vunpack.c.l.b16 %v1090
        %v1452 = vunpack.c.l.b16 %v1091
        %v1453 = vunpack.c.l.b16 %v1092
        %v1454 = vunpack.c.l.b16 %v1093
        %v1455 = vpack.c.b16 %v1424, %v1423
        %v1456 = vpack.c.b16 %v1426, %v1425
        %v1457 = vpack.c.b16 %v1428, %v1427
        %v1458 = vpack.c.b16 %v1430, %v1429
        %v1459 = vpack.c.b16 %v1432, %v1431
        %v1460 = vpack.c.b16 %v1434, %v1433
        %v1461 = vpack.c.b16 %v1436, %v1435
        %v1462 = vpack.c.b16 %v1438, %v1437
        %v1463 = vpack.c.b16 %v1440, %v1439
        %v1464 = vpack.c.b16 %v1442, %v1441
        %v1465 = vpack.c.b16 %v1444, %v1443
        %v1466 = vpack.c.b16 %v1446, %v1445
        %v1467 = vpack.c.b16 %v1448, %v1447
        %v1468 = vpack.c.b16 %v1450, %v1449
        %v1469 = vpack.c.b16 %v1452, %v1451
        %v1470 = vpack.c.b16 %v1454, %v1453
        %v1503 = vunpack.c.l.b16 %v1363
        %v1504 = vunpack.c.h.b16 %v1363
        %v1505 = vunpack.c.l.b16 %v1364
        %v1506 = vunpack.c.h.b16 %v1364
        %v1507 = vunpack.c.l.b16 %v1365
        %v1508 = vunpack.c.h.b16 %v1365
        %v1509 = vunpack.c.l.b16 %v1366
        %v1510 = vunpack.c.h.b16 %v1366
        %v1511 = vunpack.c.l.b16 %v1367
        %v1512 = vunpack.c.h.b16 %v1367
        %v1513 = vunpack.c.l.b16 %v1368
        %v1514 = vunpack.c.h.b16 %v1368
        %v1515 = vunpack.c.l.b16 %v1369
        %v1516 = vunpack.c.h.b16 %v1369
        %v1517 = vunpack.c.l.b16 %v1370
        %v1518 = vunpack.c.h.b16 %v1370
        %v1519 = vunpack.c.l.b16 %v1371
        %v1520 = vunpack.c.h.b16 %v1371
        %v1521 = vunpack.c.l.b16 %v1372
        %v1522 = vunpack.c.h.b16 %v1372
        %v1523 = vunpack.c.l.b16 %v1373
        %v1524 = vunpack.c.h.b16 %v1373
        %v1525 = vunpack.c.l.b16 %v1374
        %v1526 = vunpack.c.h.b16 %v1374
        %v1527 = vunpack.c.l.b16 %v1375
        %v1528 = vunpack.c.h.b16 %v1375
        %v1529 = vunpack.c.l.b16 %v1376
        %v1530 = vunpack.c.h.b16 %v1376
        %v1531 = vunpack.c.l.b16 %v1377
        %v1532 = vunpack.c.h.b16 %v1377
        %v1533 = vunpack.c.l.b16 %v1378
        %v1534 = vunpack.c.h.b16 %v1378
        %v1535 = vpack.c.b16 %v1505, %v1503
        %v1536 = vpack.c.b16 %v1506, %v1504
        %v1537 = vpack.c.b16 %v1509, %v1507
        %v1538 = vpack.c.b16 %v1510, %v1508
        %v1539 = vpack.c.b16 %v1513, %v1511
        %v1540 = vpack.c.b16 %v1514, %v1512
        %v1541 = vpack.c.b16 %v1517, %v1515
        %v1542 = vpack.c.b16 %v1518, %v1516
        %v1543 = vpack.c.b16 %v1521, %v1519
        %v1544 = vpack.c.b16 %v1522, %v1520
        %v1545 = vpack.c.b16 %v1525, %v1523
        %v1546 = vpack.c.b16 %v1526, %v1524
        %v1547 = vpack.c.b16 %v1529, %v1527
        %v1548 = vpack.c.b16 %v1530, %v1528
        %v1549 = vpack.c.b16 %v1533, %v1531
        %v1550 = vpack.c.b16 %v1534, %v1532
        %1567 = vmatprep.subr.bf16.mxu0 %v1550
        %1568 = vmatpush1.bf16.msra.mxu0 %v1549
        %1569 = vmatprep.subr.bf16.mxu0 %v1548
        %1570 = vmatpush1.bf16.msra.mxu0 %v1547
        %1571 = vmatprep.subr.bf16.mxu0 %v1546
        %1572 = vmatpush1.bf16.msra.mxu0 %v1545
        %1573 = vmatprep.subr.bf16.mxu0 %v1544
        %1574 = vmatpush1.bf16.msra.mxu0 %v1543
        %1575 = vmatprep.subr.bf16.mxu0 %v1542
        %1576 = vmatpush1.bf16.msra.mxu0 %v1541
        %1577 = vmatprep.subr.bf16.mxu0 %v1540
        %1578 = vmatpush1.bf16.msra.mxu0 %v1539
        %1579 = vmatprep.subr.bf16.mxu0 %v1538
        %1580 = vmatpush1.bf16.msra.mxu0 %v1537
        %1581 = vmatprep.subr.bf16.mxu0 %v1536
        %1582 = vmatpush1.bf16.msra.mxu0 %v1535
        %1583 = vmatprep.subr.bf16.mxu0 0
        %1584 = vmatpush2.bf16.msra.mxu0 0
        %1585 = vmatprep.subr.bf16.mxu0 0
        %1586 = vmatpush2.bf16.msra.mxu0 0
        %1587 = vmatprep.subr.bf16.mxu0 0
        %1588 = vmatpush2.bf16.msra.mxu0 0
        %1589 = vmatprep.subr.bf16.mxu0 0
        %1590 = vmatpush2.bf16.msra.mxu0 0
        %1591 = vmatprep.subr.bf16.mxu0 0
        %1592 = vmatpush2.bf16.msra.mxu0 0
        %1593 = vmatprep.subr.bf16.mxu0 0
        %1594 = vmatpush2.bf16.msra.mxu0 0
        %1595 = vmatprep.subr.bf16.mxu0 0
        %1596 = vmatpush2.bf16.msra.mxu0 0
        %1597 = vmatprep.subr.bf16.mxu0 0
        %1598 = vmatpush2.bf16.msra.mxu0 0
        %1599 = vmatprep.mubr.bf16.mxu0 0
        %1600 = vmatmul.mubr.bf16.gmra.mxu0 %v1455
        %v1601 = vpop.f32.mrf.mxu0
        %v1602 = vadd.f32 %v1384, %v1601
        %v1603 = vpop.f32.mrf.mxu0
        %v1604 = vadd.f32 %v1388, %v1603
        %v1605 = vpop.f32.mrf.mxu0
        %v1606 = vadd.f32 %v1384, %v1605
        %v1607 = vpop.f32.mrf.mxu0
        %v1608 = vadd.f32 %v1388, %v1607
        %1609 = vmatprep.mubr.bf16.mxu0 0
        %1610 = vmatmul.mubr.bf16.gmra.mxu0 %v1456
        %v1611 = vpop.f32.mrf.mxu0
        %v1612 = vadd.f32 %v1384, %v1611
        %v1613 = vpop.f32.mrf.mxu0
        %v1614 = vadd.f32 %v1388, %v1613
        %v1615 = vpop.f32.mrf.mxu0
        %v1616 = vadd.f32 %v1384, %v1615
        %v1617 = vpop.f32.mrf.mxu0
        %v1618 = vadd.f32 %v1388, %v1617
        %1619 = vmatprep.mubr.bf16.mxu0 0
        %1620 = vmatmul.mubr.bf16.gmra.mxu0 %v1457
        %v1621 = vpop.f32.mrf.mxu0
        %v1622 = vadd.f32 %v1384, %v1621
        %v1623 = vpop.f32.mrf.mxu0
        %v1624 = vadd.f32 %v1388, %v1623
        %v1625 = vpop.f32.mrf.mxu0
        %v1626 = vadd.f32 %v1384, %v1625
        %v1627 = vpop.f32.mrf.mxu0
        %v1628 = vadd.f32 %v1388, %v1627
        %1629 = vmatprep.mubr.bf16.mxu0 0
        %1630 = vmatmul.mubr.bf16.gmra.mxu0 %v1458
        %v1631 = vpop.f32.mrf.mxu0
        %v1632 = vadd.f32 %v1384, %v1631
        %v1633 = vpop.f32.mrf.mxu0
        %v1634 = vadd.f32 %v1388, %v1633
        %v1635 = vpop.f32.mrf.mxu0
        %v1636 = vadd.f32 %v1384, %v1635
        %v1637 = vpop.f32.mrf.mxu0
        %v1638 = vadd.f32 %v1388, %v1637
        %1639 = vmatprep.mubr.bf16.mxu0 0
        %1640 = vmatmul.mubr.bf16.gmra.mxu0 %v1459
        %v1641 = vpop.f32.mrf.mxu0
        %v1642 = vadd.f32 %v1384, %v1641
        %v1643 = vpop.f32.mrf.mxu0
        %v1644 = vadd.f32 %v1388, %v1643
        %v1645 = vpop.f32.mrf.mxu0
        %v1646 = vadd.f32 %v1384, %v1645
        %v1647 = vpop.f32.mrf.mxu0
        %v1648 = vadd.f32 %v1388, %v1647
        %1649 = vmatprep.mubr.bf16.mxu0 0
        %1650 = vmatmul.mubr.bf16.gmra.mxu0 %v1460
        %v1651 = vpop.f32.mrf.mxu0
        %v1652 = vadd.f32 %v1384, %v1651
        %v1653 = vpop.f32.mrf.mxu0
        %v1654 = vadd.f32 %v1388, %v1653
        %v1655 = vpop.f32.mrf.mxu0
        %v1656 = vadd.f32 %v1384, %v1655
        %v1657 = vpop.f32.mrf.mxu0
        %v1658 = vadd.f32 %v1388, %v1657
        %1659 = vmatprep.mubr.bf16.mxu0 0
        %1660 = vmatmul.mubr.bf16.gmra.mxu0 %v1461
        %v1661 = vpop.f32.mrf.mxu0
        %v1662 = vadd.f32 %v1384, %v1661
        %v1663 = vpop.f32.mrf.mxu0
        %v1664 = vadd.f32 %v1388, %v1663
        %v1665 = vpop.f32.mrf.mxu0
        %v1666 = vadd.f32 %v1384, %v1665
        %v1667 = vpop.f32.mrf.mxu0
        %v1668 = vadd.f32 %v1388, %v1667
        %1669 = vmatprep.mubr.bf16.mxu0 0
        %1670 = vmatmul.mubr.bf16.gmra.mxu0 %v1462
        %v1671 = vpop.f32.mrf.mxu0
        %v1672 = vadd.f32 %v1384, %v1671
        %v1673 = vpop.f32.mrf.mxu0
        %v1674 = vadd.f32 %v1388, %v1673
        %v1675 = vpop.f32.mrf.mxu0
        %v1676 = vadd.f32 %v1384, %v1675
        %v1677 = vpop.f32.mrf.mxu0
        %v1678 = vadd.f32 %v1388, %v1677
        %1679 = vmatprep.mubr.bf16.mxu0 0
        %1680 = vmatmul.mubr.bf16.gmra.mxu0 %v1463
        %v1681 = vpop.f32.mrf.mxu0
        %v1682 = vadd.f32 %v1384, %v1681
        %v1683 = vpop.f32.mrf.mxu0
        %v1684 = vadd.f32 %v1388, %v1683
        %v1685 = vpop.f32.mrf.mxu0
        %v1686 = vadd.f32 %v1384, %v1685
        %v1687 = vpop.f32.mrf.mxu0
        %v1688 = vadd.f32 %v1388, %v1687
        %1689 = vmatprep.mubr.bf16.mxu0 0
        %1690 = vmatmul.mubr.bf16.gmra.mxu0 %v1464
        %v1691 = vpop.f32.mrf.mxu0
        %v1692 = vadd.f32 %v1384, %v1691
        %v1693 = vpop.f32.mrf.mxu0
        %v1694 = vadd.f32 %v1388, %v1693
        %v1695 = vpop.f32.mrf.mxu0
        %v1696 = vadd.f32 %v1384, %v1695
        %v1697 = vpop.f32.mrf.mxu0
        %v1698 = vadd.f32 %v1388, %v1697
        %1699 = vmatprep.mubr.bf16.mxu0 0
        %1700 = vmatmul.mubr.bf16.gmra.mxu0 %v1465
        %v1701 = vpop.f32.mrf.mxu0
        %v1702 = vadd.f32 %v1384, %v1701
        %v1703 = vpop.f32.mrf.mxu0
        %v1704 = vadd.f32 %v1388, %v1703
        %v1705 = vpop.f32.mrf.mxu0
        %v1706 = vadd.f32 %v1384, %v1705
        %v1707 = vpop.f32.mrf.mxu0
        %v1708 = vadd.f32 %v1388, %v1707
        %1709 = vmatprep.mubr.bf16.mxu0 0
        %1710 = vmatmul.mubr.bf16.gmra.mxu0 %v1466
        %v1711 = vpop.f32.mrf.mxu0
        %v1712 = vadd.f32 %v1384, %v1711
        %v1713 = vpop.f32.mrf.mxu0
        %v1714 = vadd.f32 %v1388, %v1713
        %v1715 = vpop.f32.mrf.mxu0
        %v1716 = vadd.f32 %v1384, %v1715
        %v1717 = vpop.f32.mrf.mxu0
        %v1718 = vadd.f32 %v1388, %v1717
        %1719 = vmatprep.mubr.bf16.mxu0 0
        %1720 = vmatmul.mubr.bf16.gmra.mxu0 %v1467
        %v1721 = vpop.f32.mrf.mxu0
        %v1722 = vadd.f32 %v1384, %v1721
        %v1723 = vpop.f32.mrf.mxu0
        %v1724 = vadd.f32 %v1388, %v1723
        %v1725 = vpop.f32.mrf.mxu0
        %v1726 = vadd.f32 %v1384, %v1725
        %v1727 = vpop.f32.mrf.mxu0
        %v1728 = vadd.f32 %v1388, %v1727
        %1729 = vmatprep.mubr.bf16.mxu0 0
        %1730 = vmatmul.mubr.bf16.gmra.mxu0 %v1468
        %v1731 = vpop.f32.mrf.mxu0
        %v1732 = vadd.f32 %v1384, %v1731
        %v1733 = vpop.f32.mrf.mxu0
        %v1734 = vadd.f32 %v1388, %v1733
        %v1735 = vpop.f32.mrf.mxu0
        %v1736 = vadd.f32 %v1384, %v1735
        %v1737 = vpop.f32.mrf.mxu0
        %v1738 = vadd.f32 %v1388, %v1737
        %1739 = vmatprep.mubr.bf16.mxu0 0
        %1740 = vmatmul.mubr.bf16.gmra.mxu0 %v1469
        %v1741 = vpop.f32.mrf.mxu0
        %v1742 = vadd.f32 %v1384, %v1741
        %v1743 = vpop.f32.mrf.mxu0
        %v1744 = vadd.f32 %v1388, %v1743
        %v1745 = vpop.f32.mrf.mxu0
        %v1746 = vadd.f32 %v1384, %v1745
        %v1747 = vpop.f32.mrf.mxu0
        %v1748 = vadd.f32 %v1388, %v1747
        %1749 = vmatprep.mubr.bf16.mxu0 0
        %1750 = vmatmul.mubr.bf16.gmra.mxu0 %v1470
        %v1751 = vpop.f32.mrf.mxu0
        %v1752 = vadd.f32 %v1384, %v1751
        %v1753 = vpop.f32.mrf.mxu0
        %v1754 = vadd.f32 %v1388, %v1753
        %v1755 = vpop.f32.mrf.mxu0
        %v1756 = vadd.f32 %v1384, %v1755
        %v1757 = vpop.f32.mrf.mxu0
        %v1758 = vadd.f32 %v1388, %v1757
        %1759 = vdwg.mxu0
        %v1760 = vld [vmem:[%s933] sm:$0xff]
        %v1761 = vld [vmem:[%s933 + $0x8] sm:$0xff]
        %v1762 = vld [vmem:[%s933 + $0x10] sm:$0xff]
        %v1763 = vld [vmem:[%s933 + $0x18] sm:$0xff]
        %v1764 = vld [vmem:[%s933 + $0x20] sm:$0xff]
        %v1765 = vld [vmem:[%s933 + $0x28] sm:$0xff]
        %v1766 = vld [vmem:[%s933 + $0x30] sm:$0xff]
        %v1767 = vld [vmem:[%s933 + $0x38] sm:$0xff]
        %v1768 = vld [vmem:[%s933 + $0x40] sm:$0xff]
        %v1769 = vld [vmem:[%s933 + $0x48] sm:$0xff]
        %v1770 = vld [vmem:[%s933 + $0x50] sm:$0xff]
        %v1771 = vld [vmem:[%s933 + $0x58] sm:$0xff]
        %v1772 = vld [vmem:[%s933 + $0x60] sm:$0xff]
        %v1773 = vld [vmem:[%s933 + $0x68] sm:$0xff]
        %v1774 = vld [vmem:[%s933 + $0x70] sm:$0xff]
        %v1775 = vld [vmem:[%s933 + $0x78] sm:$0xff]
        %v1776 = vld [vmem:[%s933 + $0x80] sm:$0xff]
        %v1777 = vld [vmem:[%s933 + $0x88] sm:$0xff]
        %v1778 = vld [vmem:[%s933 + $0x90] sm:$0xff]
        %v1779 = vld [vmem:[%s933 + $0x98] sm:$0xff]
        %v1780 = vld [vmem:[%s933 + $0xa0] sm:$0xff]
        %v1781 = vld [vmem:[%s933 + $0xa8] sm:$0xff]
        %v1782 = vld [vmem:[%s933 + $0xb0] sm:$0xff]
        %v1783 = vld [vmem:[%s933 + $0xb8] sm:$0xff]
        %v1784 = vld [vmem:[%s933 + $0xc0] sm:$0xff]
        %v1785 = vld [vmem:[%s933 + $0xc8] sm:$0xff]
        %v1786 = vld [vmem:[%s933 + $0xd0] sm:$0xff]
        %v1787 = vld [vmem:[%s933 + $0xd8] sm:$0xff]
        %v1788 = vld [vmem:[%s933 + $0xe0] sm:$0xff]
        %v1789 = vld [vmem:[%s933 + $0xe8] sm:$0xff]
        %v1790 = vld [vmem:[%s933 + $0xf0] sm:$0xff]
        %v1791 = vld [vmem:[%s933 + $0xf8] sm:$0xff]
        %1808 = vrot.lane.b32.xlu0 %v1301, 96
        %v1809 = vpop.permute.xlu0 %1808
        %1810 = vrot.lane.b32.xlu0 %v1304, 96
        %v1811 = vpop.permute.xlu0 %1810
        %1812 = vrot.lane.b32.xlu0 %v1309, 96
        %v1813 = vpop.permute.xlu0 %1812
        %1814 = vrot.lane.b32.xlu0 %v1312, 96
        %v1815 = vpop.permute.xlu0 %1814
        %1816 = vrot.lane.b32.xlu0 %v1317, 96
        %v1817 = vpop.permute.xlu0 %1816
        %1818 = vrot.lane.b32.xlu0 %v1320, 96
        %v1819 = vpop.permute.xlu0 %1818
        %1820 = vrot.lane.b32.xlu0 %v1325, 96
        %v1821 = vpop.permute.xlu0 %1820
        %1822 = vrot.lane.b32.xlu0 %v1328, 96
        %v1823 = vpop.permute.xlu0 %1822
        %1824 = vrot.lane.b32.xlu0 %v1333, 96
        %v1825 = vpop.permute.xlu0 %1824
        %1826 = vrot.lane.b32.xlu0 %v1336, 96
        %v1827 = vpop.permute.xlu0 %1826
        %1828 = vrot.lane.b32.xlu0 %v1341, 96
        %v1829 = vpop.permute.xlu0 %1828
        %1830 = vrot.lane.b32.xlu0 %v1344, 96
        %v1831 = vpop.permute.xlu0 %1830
        %1832 = vrot.lane.b32.xlu0 %v1349, 96
        %v1833 = vpop.permute.xlu0 %1832
        %1834 = vrot.lane.b32.xlu0 %v1352, 96
        %v1835 = vpop.permute.xlu0 %1834
        %1836 = vrot.lane.b32.xlu0 %v1357, 96
        %v1837 = vpop.permute.xlu0 %1836
        %1838 = vrot.lane.b32.xlu0 %v1360, 96
        %v1839 = vpop.permute.xlu0 %1838
        %1856 = vrot.lane.b32.xlu0 %v1301, 64
        %v1857 = vpop.permute.xlu0 %1856
        %1858 = vrot.lane.b32.xlu0 %v1304, 64
        %v1859 = vpop.permute.xlu0 %1858
        %1860 = vrot.lane.b32.xlu0 %v1309, 64
        %v1861 = vpop.permute.xlu0 %1860
        %1862 = vrot.lane.b32.xlu0 %v1312, 64
        %v1863 = vpop.permute.xlu0 %1862
        %1864 = vrot.lane.b32.xlu0 %v1317, 64
        %v1865 = vpop.permute.xlu0 %1864
        %1866 = vrot.lane.b32.xlu0 %v1320, 64
        %v1867 = vpop.permute.xlu0 %1866
        %1868 = vrot.lane.b32.xlu0 %v1325, 64
        %v1869 = vpop.permute.xlu0 %1868
        %1870 = vrot.lane.b32.xlu0 %v1328, 64
        %v1871 = vpop.permute.xlu0 %1870
        %1872 = vrot.lane.b32.xlu0 %v1333, 64
        %v1873 = vpop.permute.xlu0 %1872
        %1874 = vrot.lane.b32.xlu0 %v1336, 64
        %v1875 = vpop.permute.xlu0 %1874
        %1876 = vrot.lane.b32.xlu0 %v1341, 64
        %v1877 = vpop.permute.xlu0 %1876
        %1878 = vrot.lane.b32.xlu0 %v1344, 64
        %v1879 = vpop.permute.xlu0 %1878
        %1880 = vrot.lane.b32.xlu0 %v1349, 64
        %v1881 = vpop.permute.xlu0 %1880
        %1882 = vrot.lane.b32.xlu0 %v1352, 64
        %v1883 = vpop.permute.xlu0 %1882
        %1884 = vrot.lane.b32.xlu0 %v1357, 64
        %v1885 = vpop.permute.xlu0 %1884
        %1886 = vrot.lane.b32.xlu0 %v1360, 64
        %v1887 = vpop.permute.xlu0 %1886
        %1904 = vrot.lane.b32.xlu0 %v1301, 32
        %v1905 = vpop.permute.xlu0 %1904
        %1906 = vrot.lane.b32.xlu0 %v1304, 32
        %v1907 = vpop.permute.xlu0 %1906
        %1908 = vrot.lane.b32.xlu0 %v1309, 32
        %v1909 = vpop.permute.xlu0 %1908
        %1910 = vrot.lane.b32.xlu0 %v1312, 32
        %v1911 = vpop.permute.xlu0 %1910
        %1912 = vrot.lane.b32.xlu0 %v1317, 32
        %v1913 = vpop.permute.xlu0 %1912
        %1914 = vrot.lane.b32.xlu0 %v1320, 32
        %v1915 = vpop.permute.xlu0 %1914
        %1916 = vrot.lane.b32.xlu0 %v1325, 32
        %v1917 = vpop.permute.xlu0 %1916
        %1918 = vrot.lane.b32.xlu0 %v1328, 32
        %v1919 = vpop.permute.xlu0 %1918
        %1920 = vrot.lane.b32.xlu0 %v1333, 32
        %v1921 = vpop.permute.xlu0 %1920
        %1922 = vrot.lane.b32.xlu0 %v1336, 32
        %v1923 = vpop.permute.xlu0 %1922
        %1924 = vrot.lane.b32.xlu0 %v1341, 32
        %v1925 = vpop.permute.xlu0 %1924
        %1926 = vrot.lane.b32.xlu0 %v1344, 32
        %v1927 = vpop.permute.xlu0 %1926
        %1928 = vrot.lane.b32.xlu0 %v1349, 32
        %v1929 = vpop.permute.xlu0 %1928
        %1930 = vrot.lane.b32.xlu0 %v1352, 32
        %v1931 = vpop.permute.xlu0 %1930
        %1932 = vrot.lane.b32.xlu0 %v1357, 32
        %v1933 = vpop.permute.xlu0 %1932
        %1934 = vrot.lane.b32.xlu0 %v1360, 32
        %v1935 = vpop.permute.xlu0 %1934
        %v1952 = vpack.c.bf16 %v1304, %v1301
        %v1953 = vpack.c.bf16 %v1312, %v1309
        %v1954 = vpack.c.bf16 %v1320, %v1317
        %v1955 = vpack.c.bf16 %v1328, %v1325
        %v1956 = vpack.c.bf16 %v1336, %v1333
        %v1957 = vpack.c.bf16 %v1344, %v1341
        %v1958 = vpack.c.bf16 %v1352, %v1349
        %v1959 = vpack.c.bf16 %v1360, %v1357
        %v1960 = vpack.c.bf16 %v1811, %v1809
        %v1961 = vpack.c.bf16 %v1815, %v1813
        %v1962 = vpack.c.bf16 %v1819, %v1817
        %v1963 = vpack.c.bf16 %v1823, %v1821
        %v1964 = vpack.c.bf16 %v1827, %v1825
        %v1965 = vpack.c.bf16 %v1831, %v1829
        %v1966 = vpack.c.bf16 %v1835, %v1833
        %v1967 = vpack.c.bf16 %v1839, %v1837
        %v1968 = vpack.c.bf16 %v1859, %v1857
        %v1969 = vpack.c.bf16 %v1863, %v1861
        %v1970 = vpack.c.bf16 %v1867, %v1865
        %v1971 = vpack.c.bf16 %v1871, %v1869
        %v1972 = vpack.c.bf16 %v1875, %v1873
        %v1973 = vpack.c.bf16 %v1879, %v1877
        %v1974 = vpack.c.bf16 %v1883, %v1881
        %v1975 = vpack.c.bf16 %v1887, %v1885
        %v1976 = vpack.c.bf16 %v1907, %v1905
        %v1977 = vpack.c.bf16 %v1911, %v1909
        %v1978 = vpack.c.bf16 %v1915, %v1913
        %v1979 = vpack.c.bf16 %v1919, %v1917
        %v1980 = vpack.c.bf16 %v1923, %v1921
        %v1981 = vpack.c.bf16 %v1927, %v1925
        %v1982 = vpack.c.bf16 %v1931, %v1929
        %v1983 = vpack.c.bf16 %v1935, %v1933
        %2016 = vrot.lane.b32.xlu0 %v1602, 96
        %v2017 = vpop.permute.xlu0 %2016
        %2018 = vrot.lane.b32.xlu0 %v1606, 96
        %v2019 = vpop.permute.xlu0 %2018
        %2020 = vrot.lane.b32.xlu0 %v1612, 96
        %v2021 = vpop.permute.xlu0 %2020
        %2022 = vrot.lane.b32.xlu0 %v1616, 96
        %v2023 = vpop.permute.xlu0 %2022
        %2024 = vrot.lane.b32.xlu0 %v1622, 96
        %v2025 = vpop.permute.xlu0 %2024
        %2026 = vrot.lane.b32.xlu0 %v1626, 96
        %v2027 = vpop.permute.xlu0 %2026
        %2028 = vrot.lane.b32.xlu0 %v1632, 96
        %v2029 = vpop.permute.xlu0 %2028
        %2030 = vrot.lane.b32.xlu0 %v1636, 96
        %v2031 = vpop.permute.xlu0 %2030
        %2032 = vrot.lane.b32.xlu0 %v1642, 96
        %v2033 = vpop.permute.xlu0 %2032
        %2034 = vrot.lane.b32.xlu0 %v1646, 96
        %v2035 = vpop.permute.xlu0 %2034
        %2036 = vrot.lane.b32.xlu0 %v1652, 96
        %v2037 = vpop.permute.xlu0 %2036
        %2038 = vrot.lane.b32.xlu0 %v1656, 96
        %v2039 = vpop.permute.xlu0 %2038
        %2040 = vrot.lane.b32.xlu0 %v1662, 96
        %v2041 = vpop.permute.xlu0 %2040
        %2042 = vrot.lane.b32.xlu0 %v1666, 96
        %v2043 = vpop.permute.xlu0 %2042
        %2044 = vrot.lane.b32.xlu0 %v1672, 96
        %v2045 = vpop.permute.xlu0 %2044
        %2046 = vrot.lane.b32.xlu0 %v1676, 96
        %v2047 = vpop.permute.xlu0 %2046
        %2048 = vrot.lane.b32.xlu0 %v1682, 96
        %v2049 = vpop.permute.xlu0 %2048
        %2050 = vrot.lane.b32.xlu0 %v1686, 96
        %v2051 = vpop.permute.xlu0 %2050
        %2052 = vrot.lane.b32.xlu0 %v1692, 96
        %v2053 = vpop.permute.xlu0 %2052
        %2054 = vrot.lane.b32.xlu0 %v1696, 96
        %v2055 = vpop.permute.xlu0 %2054
        %2056 = vrot.lane.b32.xlu0 %v1702, 96
        %v2057 = vpop.permute.xlu0 %2056
        %2058 = vrot.lane.b32.xlu0 %v1706, 96
        %v2059 = vpop.permute.xlu0 %2058
        %2060 = vrot.lane.b32.xlu0 %v1712, 96
        %v2061 = vpop.permute.xlu0 %2060
        %2062 = vrot.lane.b32.xlu0 %v1716, 96
        %v2063 = vpop.permute.xlu0 %2062
        %2064 = vrot.lane.b32.xlu0 %v1722, 96
        %v2065 = vpop.permute.xlu0 %2064
        %2066 = vrot.lane.b32.xlu0 %v1726, 96
        %v2067 = vpop.permute.xlu0 %2066
        %2068 = vrot.lane.b32.xlu0 %v1732, 96
        %v2069 = vpop.permute.xlu0 %2068
        %2070 = vrot.lane.b32.xlu0 %v1736, 96
        %v2071 = vpop.permute.xlu0 %2070
        %2072 = vrot.lane.b32.xlu0 %v1742, 96
        %v2073 = vpop.permute.xlu0 %2072
        %2074 = vrot.lane.b32.xlu0 %v1746, 96
        %v2075 = vpop.permute.xlu0 %2074
        %2076 = vrot.lane.b32.xlu0 %v1752, 96
        %v2077 = vpop.permute.xlu0 %2076
        %2078 = vrot.lane.b32.xlu0 %v1756, 96
        %v2079 = vpop.permute.xlu0 %2078
        %2112 = vrot.lane.b32.xlu0 %v1602, 64
        %v2113 = vpop.permute.xlu0 %2112
        %2114 = vrot.lane.b32.xlu0 %v1606, 64
        %v2115 = vpop.permute.xlu0 %2114
        %2116 = vrot.lane.b32.xlu0 %v1612, 64
        %v2117 = vpop.permute.xlu0 %2116
        %2118 = vrot.lane.b32.xlu0 %v1616, 64
        %v2119 = vpop.permute.xlu0 %2118
        %2120 = vrot.lane.b32.xlu0 %v1622, 64
        %v2121 = vpop.permute.xlu0 %2120
        %2122 = vrot.lane.b32.xlu0 %v1626, 64
        %v2123 = vpop.permute.xlu0 %2122
        %2124 = vrot.lane.b32.xlu0 %v1632, 64
        %v2125 = vpop.permute.xlu0 %2124
        %2126 = vrot.lane.b32.xlu0 %v1636, 64
        %v2127 = vpop.permute.xlu0 %2126
        %2128 = vrot.lane.b32.xlu0 %v1642, 64
        %v2129 = vpop.permute.xlu0 %2128
        %2130 = vrot.lane.b32.xlu0 %v1646, 64
        %v2131 = vpop.permute.xlu0 %2130
        %2132 = vrot.lane.b32.xlu0 %v1652, 64
        %v2133 = vpop.permute.xlu0 %2132
        %2134 = vrot.lane.b32.xlu0 %v1656, 64
        %v2135 = vpop.permute.xlu0 %2134
        %2136 = vrot.lane.b32.xlu0 %v1662, 64
        %v2137 = vpop.permute.xlu0 %2136
        %2138 = vrot.lane.b32.xlu0 %v1666, 64
        %v2139 = vpop.permute.xlu0 %2138
        %2140 = vrot.lane.b32.xlu0 %v1672, 64
        %v2141 = vpop.permute.xlu0 %2140
        %2142 = vrot.lane.b32.xlu0 %v1676, 64
        %v2143 = vpop.permute.xlu0 %2142
        %2144 = vrot.lane.b32.xlu0 %v1682, 64
        %v2145 = vpop.permute.xlu0 %2144
        %2146 = vrot.lane.b32.xlu0 %v1686, 64
        %v2147 = vpop.permute.xlu0 %2146
        %2148 = vrot.lane.b32.xlu0 %v1692, 64
        %v2149 = vpop.permute.xlu0 %2148
        %2150 = vrot.lane.b32.xlu0 %v1696, 64
        %v2151 = vpop.permute.xlu0 %2150
        %2152 = vrot.lane.b32.xlu0 %v1702, 64
        %v2153 = vpop.permute.xlu0 %2152
        %2154 = vrot.lane.b32.xlu0 %v1706, 64
        %v2155 = vpop.permute.xlu0 %2154
        %2156 = vrot.lane.b32.xlu0 %v1712, 64
        %v2157 = vpop.permute.xlu0 %2156
        %2158 = vrot.lane.b32.xlu0 %v1716, 64
        %v2159 = vpop.permute.xlu0 %2158
        %2160 = vrot.lane.b32.xlu0 %v1722, 64
        %v2161 = vpop.permute.xlu0 %2160
        %2162 = vrot.lane.b32.xlu0 %v1726, 64
        %v2163 = vpop.permute.xlu0 %2162
        %2164 = vrot.lane.b32.xlu0 %v1732, 64
        %v2165 = vpop.permute.xlu0 %2164
        %2166 = vrot.lane.b32.xlu0 %v1736, 64
        %v2167 = vpop.permute.xlu0 %2166
        %2168 = vrot.lane.b32.xlu0 %v1742, 64
        %v2169 = vpop.permute.xlu0 %2168
        %2170 = vrot.lane.b32.xlu0 %v1746, 64
        %v2171 = vpop.permute.xlu0 %2170
        %2172 = vrot.lane.b32.xlu0 %v1752, 64
        %v2173 = vpop.permute.xlu0 %2172
        %2174 = vrot.lane.b32.xlu0 %v1756, 64
        %v2175 = vpop.permute.xlu0 %2174
        %2208 = vrot.lane.b32.xlu0 %v1602, 32
        %v2209 = vpop.permute.xlu0 %2208
        %2210 = vrot.lane.b32.xlu0 %v1606, 32
        %v2211 = vpop.permute.xlu0 %2210
        %2212 = vrot.lane.b32.xlu0 %v1612, 32
        %v2213 = vpop.permute.xlu0 %2212
        %2214 = vrot.lane.b32.xlu0 %v1616, 32
        %v2215 = vpop.permute.xlu0 %2214
        %2216 = vrot.lane.b32.xlu0 %v1622, 32
        %v2217 = vpop.permute.xlu0 %2216
        %2218 = vrot.lane.b32.xlu0 %v1626, 32
        %v2219 = vpop.permute.xlu0 %2218
        %2220 = vrot.lane.b32.xlu0 %v1632, 32
        %v2221 = vpop.permute.xlu0 %2220
        %2222 = vrot.lane.b32.xlu0 %v1636, 32
        %v2223 = vpop.permute.xlu0 %2222
        %2224 = vrot.lane.b32.xlu0 %v1642, 32
        %v2225 = vpop.permute.xlu0 %2224
        %2226 = vrot.lane.b32.xlu0 %v1646, 32
        %v2227 = vpop.permute.xlu0 %2226
        %2228 = vrot.lane.b32.xlu0 %v1652, 32
        %v2229 = vpop.permute.xlu0 %2228
        %2230 = vrot.lane.b32.xlu0 %v1656, 32
        %v2231 = vpop.permute.xlu0 %2230
        %2232 = vrot.lane.b32.xlu0 %v1662, 32
        %v2233 = vpop.permute.xlu0 %2232
        %2234 = vrot.lane.b32.xlu0 %v1666, 32
        %v2235 = vpop.permute.xlu0 %2234
        %2236 = vrot.lane.b32.xlu0 %v1672, 32
        %v2237 = vpop.permute.xlu0 %2236
        %2238 = vrot.lane.b32.xlu0 %v1676, 32
        %v2239 = vpop.permute.xlu0 %2238
        %2240 = vrot.lane.b32.xlu0 %v1682, 32
        %v2241 = vpop.permute.xlu0 %2240
        %2242 = vrot.lane.b32.xlu0 %v1686, 32
        %v2243 = vpop.permute.xlu0 %2242
        %2244 = vrot.lane.b32.xlu0 %v1692, 32
        %v2245 = vpop.permute.xlu0 %2244
        %2246 = vrot.lane.b32.xlu0 %v1696, 32
        %v2247 = vpop.permute.xlu0 %2246
        %2248 = vrot.lane.b32.xlu0 %v1702, 32
        %v2249 = vpop.permute.xlu0 %2248
        %2250 = vrot.lane.b32.xlu0 %v1706, 32
        %v2251 = vpop.permute.xlu0 %2250
        %2252 = vrot.lane.b32.xlu0 %v1712, 32
        %v2253 = vpop.permute.xlu0 %2252
        %2254 = vrot.lane.b32.xlu0 %v1716, 32
        %v2255 = vpop.permute.xlu0 %2254
        %2256 = vrot.lane.b32.xlu0 %v1722, 32
        %v2257 = vpop.permute.xlu0 %2256
        %2258 = vrot.lane.b32.xlu0 %v1726, 32
        %v2259 = vpop.permute.xlu0 %2258
        %2260 = vrot.lane.b32.xlu0 %v1732, 32
        %v2261 = vpop.permute.xlu0 %2260
        %2262 = vrot.lane.b32.xlu0 %v1736, 32
        %v2263 = vpop.permute.xlu0 %2262
        %2264 = vrot.lane.b32.xlu0 %v1742, 32
        %v2265 = vpop.permute.xlu0 %2264
        %2266 = vrot.lane.b32.xlu0 %v1746, 32
        %v2267 = vpop.permute.xlu0 %2266
        %2268 = vrot.lane.b32.xlu0 %v1752, 32
        %v2269 = vpop.permute.xlu0 %2268
        %2270 = vrot.lane.b32.xlu0 %v1756, 32
        %v2271 = vpop.permute.xlu0 %2270
        %v2304 = vpack.c.bf16 %v1606, %v1602
        %v2305 = vpack.c.bf16 %v1616, %v1612
        %v2306 = vpack.c.bf16 %v1626, %v1622
        %v2307 = vpack.c.bf16 %v1636, %v1632
        %v2308 = vpack.c.bf16 %v1646, %v1642
        %v2309 = vpack.c.bf16 %v1656, %v1652
        %v2310 = vpack.c.bf16 %v1666, %v1662
        %v2311 = vpack.c.bf16 %v1676, %v1672
        %v2312 = vpack.c.bf16 %v1686, %v1682
        %v2313 = vpack.c.bf16 %v1696, %v1692
        %v2314 = vpack.c.bf16 %v1706, %v1702
        %v2315 = vpack.c.bf16 %v1716, %v1712
        %v2316 = vpack.c.bf16 %v1726, %v1722
        %v2317 = vpack.c.bf16 %v1736, %v1732
        %v2318 = vpack.c.bf16 %v1746, %v1742
        %v2319 = vpack.c.bf16 %v1756, %v1752
        %v2320 = vpack.c.bf16 %v2019, %v2017
        %v2321 = vpack.c.bf16 %v2023, %v2021
        %v2322 = vpack.c.bf16 %v2027, %v2025
        %v2323 = vpack.c.bf16 %v2031, %v2029
        %v2324 = vpack.c.bf16 %v2035, %v2033
        %v2325 = vpack.c.bf16 %v2039, %v2037
        %v2326 = vpack.c.bf16 %v2043, %v2041
        %v2327 = vpack.c.bf16 %v2047, %v2045
        %v2328 = vpack.c.bf16 %v2051, %v2049
        %v2329 = vpack.c.bf16 %v2055, %v2053
        %v2330 = vpack.c.bf16 %v2059, %v2057
        %v2331 = vpack.c.bf16 %v2063, %v2061
        %v2332 = vpack.c.bf16 %v2067, %v2065
        %v2333 = vpack.c.bf16 %v2071, %v2069
        %v2334 = vpack.c.bf16 %v2075, %v2073
        %v2335 = vpack.c.bf16 %v2079, %v2077
        %v2336 = vpack.c.bf16 %v2115, %v2113
        %v2337 = vpack.c.bf16 %v2119, %v2117
        %v2338 = vpack.c.bf16 %v2123, %v2121
        %v2339 = vpack.c.bf16 %v2127, %v2125
        %v2340 = vpack.c.bf16 %v2131, %v2129
        %v2341 = vpack.c.bf16 %v2135, %v2133
        %v2342 = vpack.c.bf16 %v2139, %v2137
        %v2343 = vpack.c.bf16 %v2143, %v2141
        %v2344 = vpack.c.bf16 %v2147, %v2145
        %v2345 = vpack.c.bf16 %v2151, %v2149
        %v2346 = vpack.c.bf16 %v2155, %v2153
        %v2347 = vpack.c.bf16 %v2159, %v2157
        %v2348 = vpack.c.bf16 %v2163, %v2161
        %v2349 = vpack.c.bf16 %v2167, %v2165
        %v2350 = vpack.c.bf16 %v2171, %v2169
        %v2351 = vpack.c.bf16 %v2175, %v2173
        %v2352 = vpack.c.bf16 %v2211, %v2209
        %v2353 = vpack.c.bf16 %v2215, %v2213
        %v2354 = vpack.c.bf16 %v2219, %v2217
        %v2355 = vpack.c.bf16 %v2223, %v2221
        %v2356 = vpack.c.bf16 %v2227, %v2225
        %v2357 = vpack.c.bf16 %v2231, %v2229
        %v2358 = vpack.c.bf16 %v2235, %v2233
        %v2359 = vpack.c.bf16 %v2239, %v2237
        %v2360 = vpack.c.bf16 %v2243, %v2241
        %v2361 = vpack.c.bf16 %v2247, %v2245
        %v2362 = vpack.c.bf16 %v2251, %v2249
        %v2363 = vpack.c.bf16 %v2255, %v2253
        %v2364 = vpack.c.bf16 %v2259, %v2257
        %v2365 = vpack.c.bf16 %v2263, %v2261
        %v2366 = vpack.c.bf16 %v2267, %v2265
        %v2367 = vpack.c.bf16 %v2271, %v2269
        %2400 = vrot.lane.b32.xlu0 %v1604, 96
        %v2401 = vpop.permute.xlu0 %2400
        %2402 = vrot.lane.b32.xlu0 %v1608, 96
        %v2403 = vpop.permute.xlu0 %2402
        %2404 = vrot.lane.b32.xlu0 %v1614, 96
        %v2405 = vpop.permute.xlu0 %2404
        %2406 = vrot.lane.b32.xlu0 %v1618, 96
        %v2407 = vpop.permute.xlu0 %2406
        %2408 = vrot.lane.b32.xlu0 %v1624, 96
        %v2409 = vpop.permute.xlu0 %2408
        %2410 = vrot.lane.b32.xlu0 %v1628, 96
        %v2411 = vpop.permute.xlu0 %2410
        %2412 = vrot.lane.b32.xlu0 %v1634, 96
        %v2413 = vpop.permute.xlu0 %2412
        %2414 = vrot.lane.b32.xlu0 %v1638, 96
        %v2415 = vpop.permute.xlu0 %2414
        %2416 = vrot.lane.b32.xlu0 %v1644, 96
        %v2417 = vpop.permute.xlu0 %2416
        %2418 = vrot.lane.b32.xlu0 %v1648, 96
        %v2419 = vpop.permute.xlu0 %2418
        %2420 = vrot.lane.b32.xlu0 %v1654, 96
        %v2421 = vpop.permute.xlu0 %2420
        %2422 = vrot.lane.b32.xlu0 %v1658, 96
        %v2423 = vpop.permute.xlu0 %2422
        %2424 = vrot.lane.b32.xlu0 %v1664, 96
        %v2425 = vpop.permute.xlu0 %2424
        %2426 = vrot.lane.b32.xlu0 %v1668, 96
        %v2427 = vpop.permute.xlu0 %2426
        %2428 = vrot.lane.b32.xlu0 %v1674, 96
        %v2429 = vpop.permute.xlu0 %2428
        %2430 = vrot.lane.b32.xlu0 %v1678, 96
        %v2431 = vpop.permute.xlu0 %2430
        %2432 = vrot.lane.b32.xlu0 %v1684, 96
        %v2433 = vpop.permute.xlu0 %2432
        %2434 = vrot.lane.b32.xlu0 %v1688, 96
        %v2435 = vpop.permute.xlu0 %2434
        %2436 = vrot.lane.b32.xlu0 %v1694, 96
        %v2437 = vpop.permute.xlu0 %2436
        %2438 = vrot.lane.b32.xlu0 %v1698, 96
        %v2439 = vpop.permute.xlu0 %2438
        %2440 = vrot.lane.b32.xlu0 %v1704, 96
        %v2441 = vpop.permute.xlu0 %2440
        %2442 = vrot.lane.b32.xlu0 %v1708, 96
        %v2443 = vpop.permute.xlu0 %2442
        %2444 = vrot.lane.b32.xlu0 %v1714, 96
        %v2445 = vpop.permute.xlu0 %2444
        %2446 = vrot.lane.b32.xlu0 %v1718, 96
        %v2447 = vpop.permute.xlu0 %2446
        %2448 = vrot.lane.b32.xlu0 %v1724, 96
        %v2449 = vpop.permute.xlu0 %2448
        %2450 = vrot.lane.b32.xlu0 %v1728, 96
        %v2451 = vpop.permute.xlu0 %2450
        %2452 = vrot.lane.b32.xlu0 %v1734, 96
        %v2453 = vpop.permute.xlu0 %2452
        %2454 = vrot.lane.b32.xlu0 %v1738, 96
        %v2455 = vpop.permute.xlu0 %2454
        %2456 = vrot.lane.b32.xlu0 %v1744, 96
        %v2457 = vpop.permute.xlu0 %2456
        %2458 = vrot.lane.b32.xlu0 %v1748, 96
        %v2459 = vpop.permute.xlu0 %2458
        %2460 = vrot.lane.b32.xlu0 %v1754, 96
        %v2461 = vpop.permute.xlu0 %2460
        %2462 = vrot.lane.b32.xlu0 %v1758, 96
        %v2463 = vpop.permute.xlu0 %2462
        %2496 = vrot.lane.b32.xlu0 %v1604, 64
        %v2497 = vpop.permute.xlu0 %2496
        %2498 = vrot.lane.b32.xlu0 %v1608, 64
        %v2499 = vpop.permute.xlu0 %2498
        %2500 = vrot.lane.b32.xlu0 %v1614, 64
        %v2501 = vpop.permute.xlu0 %2500
        %2502 = vrot.lane.b32.xlu0 %v1618, 64
        %v2503 = vpop.permute.xlu0 %2502
        %2504 = vrot.lane.b32.xlu0 %v1624, 64
        %v2505 = vpop.permute.xlu0 %2504
        %2506 = vrot.lane.b32.xlu0 %v1628, 64
        %v2507 = vpop.permute.xlu0 %2506
        %2508 = vrot.lane.b32.xlu0 %v1634, 64
        %v2509 = vpop.permute.xlu0 %2508
        %2510 = vrot.lane.b32.xlu0 %v1638, 64
        %v2511 = vpop.permute.xlu0 %2510
        %2512 = vrot.lane.b32.xlu0 %v1644, 64
        %v2513 = vpop.permute.xlu0 %2512
        %2514 = vrot.lane.b32.xlu0 %v1648, 64
        %v2515 = vpop.permute.xlu0 %2514
        %2516 = vrot.lane.b32.xlu0 %v1654, 64
        %v2517 = vpop.permute.xlu0 %2516
        %2518 = vrot.lane.b32.xlu0 %v1658, 64
        %v2519 = vpop.permute.xlu0 %2518
        %2520 = vrot.lane.b32.xlu0 %v1664, 64
        %v2521 = vpop.permute.xlu0 %2520
        %2522 = vrot.lane.b32.xlu0 %v1668, 64
        %v2523 = vpop.permute.xlu0 %2522
        %2524 = vrot.lane.b32.xlu0 %v1674, 64
        %v2525 = vpop.permute.xlu0 %2524
        %2526 = vrot.lane.b32.xlu0 %v1678, 64
        %v2527 = vpop.permute.xlu0 %2526
        %2528 = vrot.lane.b32.xlu0 %v1684, 64
        %v2529 = vpop.permute.xlu0 %2528
        %2530 = vrot.lane.b32.xlu0 %v1688, 64
        %v2531 = vpop.permute.xlu0 %2530
        %2532 = vrot.lane.b32.xlu0 %v1694, 64
        %v2533 = vpop.permute.xlu0 %2532
        %2534 = vrot.lane.b32.xlu0 %v1698, 64
        %v2535 = vpop.permute.xlu0 %2534
        %2536 = vrot.lane.b32.xlu0 %v1704, 64
        %v2537 = vpop.permute.xlu0 %2536
        %2538 = vrot.lane.b32.xlu0 %v1708, 64
        %v2539 = vpop.permute.xlu0 %2538
        %2540 = vrot.lane.b32.xlu0 %v1714, 64
        %v2541 = vpop.permute.xlu0 %2540
        %2542 = vrot.lane.b32.xlu0 %v1718, 64
        %v2543 = vpop.permute.xlu0 %2542
        %2544 = vrot.lane.b32.xlu0 %v1724, 64
        %v2545 = vpop.permute.xlu0 %2544
        %2546 = vrot.lane.b32.xlu0 %v1728, 64
        %v2547 = vpop.permute.xlu0 %2546
        %2548 = vrot.lane.b32.xlu0 %v1734, 64
        %v2549 = vpop.permute.xlu0 %2548
        %2550 = vrot.lane.b32.xlu0 %v1738, 64
        %v2551 = vpop.permute.xlu0 %2550
        %2552 = vrot.lane.b32.xlu0 %v1744, 64
        %v2553 = vpop.permute.xlu0 %2552
        %2554 = vrot.lane.b32.xlu0 %v1748, 64
        %v2555 = vpop.permute.xlu0 %2554
        %2556 = vrot.lane.b32.xlu0 %v1754, 64
        %v2557 = vpop.permute.xlu0 %2556
        %2558 = vrot.lane.b32.xlu0 %v1758, 64
        %v2559 = vpop.permute.xlu0 %2558
        %2592 = vrot.lane.b32.xlu0 %v1604, 32
        %v2593 = vpop.permute.xlu0 %2592
        %2594 = vrot.lane.b32.xlu0 %v1608, 32
        %v2595 = vpop.permute.xlu0 %2594
        %2596 = vrot.lane.b32.xlu0 %v1614, 32
        %v2597 = vpop.permute.xlu0 %2596
        %2598 = vrot.lane.b32.xlu0 %v1618, 32
        %v2599 = vpop.permute.xlu0 %2598
        %2600 = vrot.lane.b32.xlu0 %v1624, 32
        %v2601 = vpop.permute.xlu0 %2600
        %2602 = vrot.lane.b32.xlu0 %v1628, 32
        %v2603 = vpop.permute.xlu0 %2602
        %2604 = vrot.lane.b32.xlu0 %v1634, 32
        %v2605 = vpop.permute.xlu0 %2604
        %2606 = vrot.lane.b32.xlu0 %v1638, 32
        %v2607 = vpop.permute.xlu0 %2606
        %2608 = vrot.lane.b32.xlu0 %v1644, 32
        %v2609 = vpop.permute.xlu0 %2608
        %2610 = vrot.lane.b32.xlu0 %v1648, 32
        %v2611 = vpop.permute.xlu0 %2610
        %2612 = vrot.lane.b32.xlu0 %v1654, 32
        %v2613 = vpop.permute.xlu0 %2612
        %2614 = vrot.lane.b32.xlu0 %v1658, 32
        %v2615 = vpop.permute.xlu0 %2614
        %2616 = vrot.lane.b32.xlu0 %v1664, 32
        %v2617 = vpop.permute.xlu0 %2616
        %2618 = vrot.lane.b32.xlu0 %v1668, 32
        %v2619 = vpop.permute.xlu0 %2618
        %2620 = vrot.lane.b32.xlu0 %v1674, 32
        %v2621 = vpop.permute.xlu0 %2620
        %2622 = vrot.lane.b32.xlu0 %v1678, 32
        %v2623 = vpop.permute.xlu0 %2622
        %2624 = vrot.lane.b32.xlu0 %v1684, 32
        %v2625 = vpop.permute.xlu0 %2624
        %2626 = vrot.lane.b32.xlu0 %v1688, 32
        %v2627 = vpop.permute.xlu0 %2626
        %2628 = vrot.lane.b32.xlu0 %v1694, 32
        %v2629 = vpop.permute.xlu0 %2628
        %2630 = vrot.lane.b32.xlu0 %v1698, 32
        %v2631 = vpop.permute.xlu0 %2630
        %2632 = vrot.lane.b32.xlu0 %v1704, 32
        %v2633 = vpop.permute.xlu0 %2632
        %2634 = vrot.lane.b32.xlu0 %v1708, 32
        %v2635 = vpop.permute.xlu0 %2634
        %2636 = vrot.lane.b32.xlu0 %v1714, 32
        %v2637 = vpop.permute.xlu0 %2636
        %2638 = vrot.lane.b32.xlu0 %v1718, 32
        %v2639 = vpop.permute.xlu0 %2638
        %2640 = vrot.lane.b32.xlu0 %v1724, 32
        %v2641 = vpop.permute.xlu0 %2640
        %2642 = vrot.lane.b32.xlu0 %v1728, 32
        %v2643 = vpop.permute.xlu0 %2642
        %2644 = vrot.lane.b32.xlu0 %v1734, 32
        %v2645 = vpop.permute.xlu0 %2644
        %2646 = vrot.lane.b32.xlu0 %v1738, 32
        %v2647 = vpop.permute.xlu0 %2646
        %2648 = vrot.lane.b32.xlu0 %v1744, 32
        %v2649 = vpop.permute.xlu0 %2648
        %2650 = vrot.lane.b32.xlu0 %v1748, 32
        %v2651 = vpop.permute.xlu0 %2650
        %2652 = vrot.lane.b32.xlu0 %v1754, 32
        %v2653 = vpop.permute.xlu0 %2652
        %2654 = vrot.lane.b32.xlu0 %v1758, 32
        %v2655 = vpop.permute.xlu0 %2654
        %v2688 = vpack.c.bf16 %v1608, %v1604
        %v2689 = vpack.c.bf16 %v1618, %v1614
        %v2690 = vpack.c.bf16 %v1628, %v1624
        %v2691 = vpack.c.bf16 %v1638, %v1634
        %v2692 = vpack.c.bf16 %v1648, %v1644
        %v2693 = vpack.c.bf16 %v1658, %v1654
        %v2694 = vpack.c.bf16 %v1668, %v1664
        %v2695 = vpack.c.bf16 %v1678, %v1674
        %v2696 = vpack.c.bf16 %v1688, %v1684
        %v2697 = vpack.c.bf16 %v1698, %v1694
        %v2698 = vpack.c.bf16 %v1708, %v1704
        %v2699 = vpack.c.bf16 %v1718, %v1714
        %v2700 = vpack.c.bf16 %v1728, %v1724
        %v2701 = vpack.c.bf16 %v1738, %v1734
        %v2702 = vpack.c.bf16 %v1748, %v1744
        %v2703 = vpack.c.bf16 %v1758, %v1754
        %v2704 = vpack.c.bf16 %v2403, %v2401
        %v2705 = vpack.c.bf16 %v2407, %v2405
        %v2706 = vpack.c.bf16 %v2411, %v2409
        %v2707 = vpack.c.bf16 %v2415, %v2413
        %v2708 = vpack.c.bf16 %v2419, %v2417
        %v2709 = vpack.c.bf16 %v2423, %v2421
        %v2710 = vpack.c.bf16 %v2427, %v2425
        %v2711 = vpack.c.bf16 %v2431, %v2429
        %v2712 = vpack.c.bf16 %v2435, %v2433
        %v2713 = vpack.c.bf16 %v2439, %v2437
        %v2714 = vpack.c.bf16 %v2443, %v2441
        %v2715 = vpack.c.bf16 %v2447, %v2445
        %v2716 = vpack.c.bf16 %v2451, %v2449
        %v2717 = vpack.c.bf16 %v2455, %v2453
        %v2718 = vpack.c.bf16 %v2459, %v2457
        %v2719 = vpack.c.bf16 %v2463, %v2461
        %v2720 = vpack.c.bf16 %v2499, %v2497
        %v2721 = vpack.c.bf16 %v2503, %v2501
        %v2722 = vpack.c.bf16 %v2507, %v2505
        %v2723 = vpack.c.bf16 %v2511, %v2509
        %v2724 = vpack.c.bf16 %v2515, %v2513
        %v2725 = vpack.c.bf16 %v2519, %v2517
        %v2726 = vpack.c.bf16 %v2523, %v2521
        %v2727 = vpack.c.bf16 %v2527, %v2525
        %v2728 = vpack.c.bf16 %v2531, %v2529
        %v2729 = vpack.c.bf16 %v2535, %v2533
        %v2730 = vpack.c.bf16 %v2539, %v2537
        %v2731 = vpack.c.bf16 %v2543, %v2541
        %v2732 = vpack.c.bf16 %v2547, %v2545
        %v2733 = vpack.c.bf16 %v2551, %v2549
        %v2734 = vpack.c.bf16 %v2555, %v2553
        %v2735 = vpack.c.bf16 %v2559, %v2557
        %v2736 = vpack.c.bf16 %v2595, %v2593
        %v2737 = vpack.c.bf16 %v2599, %v2597
        %v2738 = vpack.c.bf16 %v2603, %v2601
        %v2739 = vpack.c.bf16 %v2607, %v2605
        %v2740 = vpack.c.bf16 %v2611, %v2609
        %v2741 = vpack.c.bf16 %v2615, %v2613
        %v2742 = vpack.c.bf16 %v2619, %v2617
        %v2743 = vpack.c.bf16 %v2623, %v2621
        %v2744 = vpack.c.bf16 %v2627, %v2625
        %v2745 = vpack.c.bf16 %v2631, %v2629
        %v2746 = vpack.c.bf16 %v2635, %v2633
        %v2747 = vpack.c.bf16 %v2639, %v2637
        %v2748 = vpack.c.bf16 %v2643, %v2641
        %v2749 = vpack.c.bf16 %v2647, %v2645
        %v2750 = vpack.c.bf16 %v2651, %v2649
        %v2751 = vpack.c.bf16 %v2655, %v2653
        %vm2752 = vcmask 261120
        %v2754 = vsel %vm2752, %v1952, 0
        %v2757 = vsel %vm2752, %v1953, 0
        %v2760 = vsel %vm2752, %v1954, 0
        %v2763 = vsel %vm2752, %v1955, 0
        %v2766 = vsel %vm2752, %v1956, 0
        %v2769 = vsel %vm2752, %v1957, 0
        %v2772 = vsel %vm2752, %v1958, 0
        %v2775 = vsel %vm2752, %v1959, 0
        %v2778 = vsel %vm2752, %v2304, 0
        %v2781 = vsel %vm2752, %v2305, 0
        %v2784 = vsel %vm2752, %v2306, 0
        %v2787 = vsel %vm2752, %v2307, 0
        %v2790 = vsel %vm2752, %v2308, 0
        %v2793 = vsel %vm2752, %v2309, 0
        %v2796 = vsel %vm2752, %v2310, 0
        %v2799 = vsel %vm2752, %v2311, 0
        %v2802 = vsel %vm2752, %v2312, 0
        %v2805 = vsel %vm2752, %v2313, 0
        %v2808 = vsel %vm2752, %v2314, 0
        %v2811 = vsel %vm2752, %v2315, 0
        %v2814 = vsel %vm2752, %v2316, 0
        %v2817 = vsel %vm2752, %v2317, 0
        %v2820 = vsel %vm2752, %v2318, 0
        %v2823 = vsel %vm2752, %v2319, 0
        %2825 = vmatprep.subr.bf16.mxu0 0
        %2826 = vmatpush1.bf16.xpose.msra.mxu0 %v2799
        %2827 = vmatprep.subr.bf16.mxu0 0
        %2828 = vmatpush1.bf16.xpose.msra.mxu0 %v2796
        %2829 = vmatprep.subr.bf16.mxu0 0
        %2830 = vmatpush1.bf16.xpose.msra.mxu0 %v2793
        %2831 = vmatprep.subr.bf16.mxu0 0
        %2832 = vmatpush1.bf16.xpose.msra.mxu0 %v2790
        %2833 = vmatprep.subr.bf16.mxu0 0
        %2834 = vmatpush1.bf16.xpose.msra.mxu0 %v2787
        %2835 = vmatprep.subr.bf16.mxu0 0
        %2836 = vmatpush1.bf16.xpose.msra.mxu0 %v2784
        %2837 = vmatprep.subr.bf16.mxu0 0
        %2838 = vmatpush1.bf16.xpose.msra.mxu0 %v2781
        %2839 = vmatprep.subr.bf16.mxu0 0
        %2840 = vmatpush1.bf16.xpose.msra.mxu0 %v2778
        %2841 = vmatprep.subr.bf16.mxu0 0
        %2842 = vmatpush2.bf16.xpose.msra.mxu0 %v2823
        %2843 = vmatprep.subr.bf16.mxu0 0
        %2844 = vmatpush2.bf16.xpose.msra.mxu0 %v2820
        %2845 = vmatprep.subr.bf16.mxu0 0
        %2846 = vmatpush2.bf16.xpose.msra.mxu0 %v2817
        %2847 = vmatprep.subr.bf16.mxu0 0
        %2848 = vmatpush2.bf16.xpose.msra.mxu0 %v2814
        %2849 = vmatprep.subr.bf16.mxu0 0
        %2850 = vmatpush2.bf16.xpose.msra.mxu0 %v2811
        %2851 = vmatprep.subr.bf16.mxu0 0
        %2852 = vmatpush2.bf16.xpose.msra.mxu0 %v2808
        %2853 = vmatprep.subr.bf16.mxu0 0
        %2854 = vmatpush2.bf16.xpose.msra.mxu0 %v2805
        %2855 = vmatprep.subr.bf16.mxu0 0
        %2856 = vmatpush2.bf16.xpose.msra.mxu0 %v2802
        %2857 = vmatprep.mubr.bf16.mxu0 0
        %2858 = vmatmul.mubr.bf16.gmra.mxu0 %v2754
        %v2859 = vpop.f32.mrf.mxu0
        %v2860 = vadd.f32 0.0, %v2859
        %v2861 = vpop.f32.mrf.mxu0
        %v2862 = vadd.f32 0.0, %v2861
        %v2863 = vpop.f32.mrf.mxu0
        %v2864 = vadd.f32 0.0, %v2863
        %v2865 = vpop.f32.mrf.mxu0
        %v2866 = vadd.f32 0.0, %v2865
        %2867 = vmatprep.mubr.bf16.mxu0 0
        %2868 = vmatmul.mubr.bf16.gmra.mxu0 %v2757
        %v2869 = vpop.f32.mrf.mxu0
        %v2870 = vadd.f32 0.0, %v2869
        %v2871 = vpop.f32.mrf.mxu0
        %v2872 = vadd.f32 0.0, %v2871
        %v2873 = vpop.f32.mrf.mxu0
        %v2874 = vadd.f32 0.0, %v2873
        %v2875 = vpop.f32.mrf.mxu0
        %v2876 = vadd.f32 0.0, %v2875
        %2877 = vmatprep.mubr.bf16.mxu0 0
        %2878 = vmatmul.mubr.bf16.gmra.mxu0 %v2760
        %v2879 = vpop.f32.mrf.mxu0
        %v2880 = vadd.f32 0.0, %v2879
        %v2881 = vpop.f32.mrf.mxu0
        %v2882 = vadd.f32 0.0, %v2881
        %v2883 = vpop.f32.mrf.mxu0
        %v2884 = vadd.f32 0.0, %v2883
        %v2885 = vpop.f32.mrf.mxu0
        %v2886 = vadd.f32 0.0, %v2885
        %2887 = vmatprep.mubr.bf16.mxu0 0
        %2888 = vmatmul.mubr.bf16.gmra.mxu0 %v2763
        %v2889 = vpop.f32.mrf.mxu0
        %v2890 = vadd.f32 0.0, %v2889
        %v2891 = vpop.f32.mrf.mxu0
        %v2892 = vadd.f32 0.0, %v2891
        %v2893 = vpop.f32.mrf.mxu0
        %v2894 = vadd.f32 0.0, %v2893
        %v2895 = vpop.f32.mrf.mxu0
        %v2896 = vadd.f32 0.0, %v2895
        %2897 = vmatprep.mubr.bf16.mxu0 0
        %2898 = vmatmul.mubr.bf16.gmra.mxu0 %v2766
        %v2899 = vpop.f32.mrf.mxu0
        %v2900 = vadd.f32 0.0, %v2899
        %v2901 = vpop.f32.mrf.mxu0
        %v2902 = vadd.f32 0.0, %v2901
        %v2903 = vpop.f32.mrf.mxu0
        %v2904 = vadd.f32 0.0, %v2903
        %v2905 = vpop.f32.mrf.mxu0
        %v2906 = vadd.f32 0.0, %v2905
        %2907 = vmatprep.mubr.bf16.mxu0 0
        %2908 = vmatmul.mubr.bf16.gmra.mxu0 %v2769
        %v2909 = vpop.f32.mrf.mxu0
        %v2910 = vadd.f32 0.0, %v2909
        %v2911 = vpop.f32.mrf.mxu0
        %v2912 = vadd.f32 0.0, %v2911
        %v2913 = vpop.f32.mrf.mxu0
        %v2914 = vadd.f32 0.0, %v2913
        %v2915 = vpop.f32.mrf.mxu0
        %v2916 = vadd.f32 0.0, %v2915
        %2917 = vmatprep.mubr.bf16.mxu0 0
        %2918 = vmatmul.mubr.bf16.gmra.mxu0 %v2772
        %v2919 = vpop.f32.mrf.mxu0
        %v2920 = vadd.f32 0.0, %v2919
        %v2921 = vpop.f32.mrf.mxu0
        %v2922 = vadd.f32 0.0, %v2921
        %v2923 = vpop.f32.mrf.mxu0
        %v2924 = vadd.f32 0.0, %v2923
        %v2925 = vpop.f32.mrf.mxu0
        %v2926 = vadd.f32 0.0, %v2925
        %2927 = vmatprep.mubr.bf16.mxu0 0
        %2928 = vmatmul.mubr.bf16.gmra.mxu0 %v2775
        %v2929 = vpop.f32.mrf.mxu0
        %v2930 = vadd.f32 0.0, %v2929
        %v2931 = vpop.f32.mrf.mxu0
        %v2932 = vadd.f32 0.0, %v2931
        %v2933 = vpop.f32.mrf.mxu0
        %v2934 = vadd.f32 0.0, %v2933
        %v2935 = vpop.f32.mrf.mxu0
        %v2936 = vadd.f32 0.0, %v2935
        %2937 = vdwg.mxu0
        %v2939 = vsel %vm2752, %v1960, 0
        %v2942 = vsel %vm2752, %v1961, 0
        %v2945 = vsel %vm2752, %v1962, 0
        %v2948 = vsel %vm2752, %v1963, 0
        %v2951 = vsel %vm2752, %v1964, 0
        %v2954 = vsel %vm2752, %v1965, 0
        %v2957 = vsel %vm2752, %v1966, 0
        %v2960 = vsel %vm2752, %v1967, 0
        %v2963 = vsel %vm2752, %v2320, 0
        %v2966 = vsel %vm2752, %v2321, 0
        %v2969 = vsel %vm2752, %v2322, 0
        %v2972 = vsel %vm2752, %v2323, 0
        %v2975 = vsel %vm2752, %v2324, 0
        %v2978 = vsel %vm2752, %v2325, 0
        %v2981 = vsel %vm2752, %v2326, 0
        %v2984 = vsel %vm2752, %v2327, 0
        %v2987 = vsel %vm2752, %v2328, 0
        %v2990 = vsel %vm2752, %v2329, 0
        %v2993 = vsel %vm2752, %v2330, 0
        %v2996 = vsel %vm2752, %v2331, 0
        %v2999 = vsel %vm2752, %v2332, 0
        %v3002 = vsel %vm2752, %v2333, 0
        %v3005 = vsel %vm2752, %v2334, 0
        %v3008 = vsel %vm2752, %v2335, 0
        %3010 = vmatprep.subr.bf16.mxu0 0
        %3011 = vmatpush1.bf16.xpose.msra.mxu0 %v2984
        %3012 = vmatprep.subr.bf16.mxu0 0
        %3013 = vmatpush1.bf16.xpose.msra.mxu0 %v2981
        %3014 = vmatprep.subr.bf16.mxu0 0
        %3015 = vmatpush1.bf16.xpose.msra.mxu0 %v2978
        %3016 = vmatprep.subr.bf16.mxu0 0
        %3017 = vmatpush1.bf16.xpose.msra.mxu0 %v2975
        %3018 = vmatprep.subr.bf16.mxu0 0
        %3019 = vmatpush1.bf16.xpose.msra.mxu0 %v2972
        %3020 = vmatprep.subr.bf16.mxu0 0
        %3021 = vmatpush1.bf16.xpose.msra.mxu0 %v2969
        %3022 = vmatprep.subr.bf16.mxu0 0
        %3023 = vmatpush1.bf16.xpose.msra.mxu0 %v2966
        %3024 = vmatprep.subr.bf16.mxu0 0
        %3025 = vmatpush1.bf16.xpose.msra.mxu0 %v2963
        %3026 = vmatprep.subr.bf16.mxu0 0
        %3027 = vmatpush2.bf16.xpose.msra.mxu0 %v3008
        %3028 = vmatprep.subr.bf16.mxu0 0
        %3029 = vmatpush2.bf16.xpose.msra.mxu0 %v3005
        %3030 = vmatprep.subr.bf16.mxu0 0
        %3031 = vmatpush2.bf16.xpose.msra.mxu0 %v3002
        %3032 = vmatprep.subr.bf16.mxu0 0
        %3033 = vmatpush2.bf16.xpose.msra.mxu0 %v2999
        %3034 = vmatprep.subr.bf16.mxu0 0
        %3035 = vmatpush2.bf16.xpose.msra.mxu0 %v2996
        %3036 = vmatprep.subr.bf16.mxu0 0
        %3037 = vmatpush2.bf16.xpose.msra.mxu0 %v2993
        %3038 = vmatprep.subr.bf16.mxu0 0
        %3039 = vmatpush2.bf16.xpose.msra.mxu0 %v2990
        %3040 = vmatprep.subr.bf16.mxu0 0
        %3041 = vmatpush2.bf16.xpose.msra.mxu0 %v2987
        %3042 = vmatprep.mubr.bf16.mxu0 0
        %3043 = vmatmul.mubr.bf16.gmra.mxu0 %v2939
        %v3044 = vpop.f32.mrf.mxu0
        %v3045 = vadd.f32 0.0, %v3044
        %v3046 = vpop.f32.mrf.mxu0
        %v3047 = vadd.f32 0.0, %v3046
        %v3048 = vpop.f32.mrf.mxu0
        %v3049 = vadd.f32 0.0, %v3048
        %v3050 = vpop.f32.mrf.mxu0
        %v3051 = vadd.f32 0.0, %v3050
        %3052 = vmatprep.mubr.bf16.mxu0 0
        %3053 = vmatmul.mubr.bf16.gmra.mxu0 %v2942
        %v3054 = vpop.f32.mrf.mxu0
        %v3055 = vadd.f32 0.0, %v3054
        %v3056 = vpop.f32.mrf.mxu0
        %v3057 = vadd.f32 0.0, %v3056
        %v3058 = vpop.f32.mrf.mxu0
        %v3059 = vadd.f32 0.0, %v3058
        %v3060 = vpop.f32.mrf.mxu0
        %v3061 = vadd.f32 0.0, %v3060
        %3062 = vmatprep.mubr.bf16.mxu0 0
        %3063 = vmatmul.mubr.bf16.gmra.mxu0 %v2945
        %v3064 = vpop.f32.mrf.mxu0
        %v3065 = vadd.f32 0.0, %v3064
        %v3066 = vpop.f32.mrf.mxu0
        %v3067 = vadd.f32 0.0, %v3066
        %v3068 = vpop.f32.mrf.mxu0
        %v3069 = vadd.f32 0.0, %v3068
        %v3070 = vpop.f32.mrf.mxu0
        %v3071 = vadd.f32 0.0, %v3070
        %3072 = vmatprep.mubr.bf16.mxu0 0
        %3073 = vmatmul.mubr.bf16.gmra.mxu0 %v2948
        %v3074 = vpop.f32.mrf.mxu0
        %v3075 = vadd.f32 0.0, %v3074
        %v3076 = vpop.f32.mrf.mxu0
        %v3077 = vadd.f32 0.0, %v3076
        %v3078 = vpop.f32.mrf.mxu0
        %v3079 = vadd.f32 0.0, %v3078
        %v3080 = vpop.f32.mrf.mxu0
        %v3081 = vadd.f32 0.0, %v3080
        %3082 = vmatprep.mubr.bf16.mxu0 0
        %3083 = vmatmul.mubr.bf16.gmra.mxu0 %v2951
        %v3084 = vpop.f32.mrf.mxu0
        %v3085 = vadd.f32 0.0, %v3084
        %v3086 = vpop.f32.mrf.mxu0
        %v3087 = vadd.f32 0.0, %v3086
        %v3088 = vpop.f32.mrf.mxu0
        %v3089 = vadd.f32 0.0, %v3088
        %v3090 = vpop.f32.mrf.mxu0
        %v3091 = vadd.f32 0.0, %v3090
        %3092 = vmatprep.mubr.bf16.mxu0 0
        %3093 = vmatmul.mubr.bf16.gmra.mxu0 %v2954
        %v3094 = vpop.f32.mrf.mxu0
        %v3095 = vadd.f32 0.0, %v3094
        %v3096 = vpop.f32.mrf.mxu0
        %v3097 = vadd.f32 0.0, %v3096
        %v3098 = vpop.f32.mrf.mxu0
        %v3099 = vadd.f32 0.0, %v3098
        %v3100 = vpop.f32.mrf.mxu0
        %v3101 = vadd.f32 0.0, %v3100
        %3102 = vmatprep.mubr.bf16.mxu0 0
        %3103 = vmatmul.mubr.bf16.gmra.mxu0 %v2957
        %v3104 = vpop.f32.mrf.mxu0
        %v3105 = vadd.f32 0.0, %v3104
        %v3106 = vpop.f32.mrf.mxu0
        %v3107 = vadd.f32 0.0, %v3106
        %v3108 = vpop.f32.mrf.mxu0
        %v3109 = vadd.f32 0.0, %v3108
        %v3110 = vpop.f32.mrf.mxu0
        %v3111 = vadd.f32 0.0, %v3110
        %3112 = vmatprep.mubr.bf16.mxu0 0
        %3113 = vmatmul.mubr.bf16.gmra.mxu0 %v2960
        %v3114 = vpop.f32.mrf.mxu0
        %v3115 = vadd.f32 0.0, %v3114
        %v3116 = vpop.f32.mrf.mxu0
        %v3117 = vadd.f32 0.0, %v3116
        %v3118 = vpop.f32.mrf.mxu0
        %v3119 = vadd.f32 0.0, %v3118
        %v3120 = vpop.f32.mrf.mxu0
        %v3121 = vadd.f32 0.0, %v3120
        %3122 = vdwg.mxu0
        %v3124 = vsel %vm2752, %v1968, 0
        %v3127 = vsel %vm2752, %v1969, 0
        %v3130 = vsel %vm2752, %v1970, 0
        %v3133 = vsel %vm2752, %v1971, 0
        %v3136 = vsel %vm2752, %v1972, 0
        %v3139 = vsel %vm2752, %v1973, 0
        %v3142 = vsel %vm2752, %v1974, 0
        %v3145 = vsel %vm2752, %v1975, 0
        %v3148 = vsel %vm2752, %v2336, 0
        %v3151 = vsel %vm2752, %v2337, 0
        %v3154 = vsel %vm2752, %v2338, 0
        %v3157 = vsel %vm2752, %v2339, 0
        %v3160 = vsel %vm2752, %v2340, 0
        %v3163 = vsel %vm2752, %v2341, 0
        %v3166 = vsel %vm2752, %v2342, 0
        %v3169 = vsel %vm2752, %v2343, 0
        %v3172 = vsel %vm2752, %v2344, 0
        %v3175 = vsel %vm2752, %v2345, 0
        %v3178 = vsel %vm2752, %v2346, 0
        %v3181 = vsel %vm2752, %v2347, 0
        %v3184 = vsel %vm2752, %v2348, 0
        %v3187 = vsel %vm2752, %v2349, 0
        %v3190 = vsel %vm2752, %v2350, 0
        %v3193 = vsel %vm2752, %v2351, 0
        %3195 = vmatprep.subr.bf16.mxu0 0
        %3196 = vmatpush1.bf16.xpose.msra.mxu0 %v3169
        %3197 = vmatprep.subr.bf16.mxu0 0
        %3198 = vmatpush1.bf16.xpose.msra.mxu0 %v3166
        %3199 = vmatprep.subr.bf16.mxu0 0
        %3200 = vmatpush1.bf16.xpose.msra.mxu0 %v3163
        %3201 = vmatprep.subr.bf16.mxu0 0
        %3202 = vmatpush1.bf16.xpose.msra.mxu0 %v3160
        %3203 = vmatprep.subr.bf16.mxu0 0
        %3204 = vmatpush1.bf16.xpose.msra.mxu0 %v3157
        %3205 = vmatprep.subr.bf16.mxu0 0
        %3206 = vmatpush1.bf16.xpose.msra.mxu0 %v3154
        %3207 = vmatprep.subr.bf16.mxu0 0
        %3208 = vmatpush1.bf16.xpose.msra.mxu0 %v3151
        %3209 = vmatprep.subr.bf16.mxu0 0
        %3210 = vmatpush1.bf16.xpose.msra.mxu0 %v3148
        %3211 = vmatprep.subr.bf16.mxu0 0
        %3212 = vmatpush2.bf16.xpose.msra.mxu0 %v3193
        %3213 = vmatprep.subr.bf16.mxu0 0
        %3214 = vmatpush2.bf16.xpose.msra.mxu0 %v3190
        %3215 = vmatprep.subr.bf16.mxu0 0
        %3216 = vmatpush2.bf16.xpose.msra.mxu0 %v3187
        %3217 = vmatprep.subr.bf16.mxu0 0
        %3218 = vmatpush2.bf16.xpose.msra.mxu0 %v3184
        %3219 = vmatprep.subr.bf16.mxu0 0
        %3220 = vmatpush2.bf16.xpose.msra.mxu0 %v3181
        %3221 = vmatprep.subr.bf16.mxu0 0
        %3222 = vmatpush2.bf16.xpose.msra.mxu0 %v3178
        %3223 = vmatprep.subr.bf16.mxu0 0
        %3224 = vmatpush2.bf16.xpose.msra.mxu0 %v3175
        %3225 = vmatprep.subr.bf16.mxu0 0
        %3226 = vmatpush2.bf16.xpose.msra.mxu0 %v3172
        %3227 = vmatprep.mubr.bf16.mxu0 0
        %3228 = vmatmul.mubr.bf16.gmra.mxu0 %v3124
        %v3229 = vpop.f32.mrf.mxu0
        %v3230 = vadd.f32 0.0, %v3229
        %v3231 = vpop.f32.mrf.mxu0
        %v3232 = vadd.f32 0.0, %v3231
        %v3233 = vpop.f32.mrf.mxu0
        %v3234 = vadd.f32 0.0, %v3233
        %v3235 = vpop.f32.mrf.mxu0
        %v3236 = vadd.f32 0.0, %v3235
        %3237 = vmatprep.mubr.bf16.mxu0 0
        %3238 = vmatmul.mubr.bf16.gmra.mxu0 %v3127
        %v3239 = vpop.f32.mrf.mxu0
        %v3240 = vadd.f32 0.0, %v3239
        %v3241 = vpop.f32.mrf.mxu0
        %v3242 = vadd.f32 0.0, %v3241
        %v3243 = vpop.f32.mrf.mxu0
        %v3244 = vadd.f32 0.0, %v3243
        %v3245 = vpop.f32.mrf.mxu0
        %v3246 = vadd.f32 0.0, %v3245
        %3247 = vmatprep.mubr.bf16.mxu0 0
        %3248 = vmatmul.mubr.bf16.gmra.mxu0 %v3130
        %v3249 = vpop.f32.mrf.mxu0
        %v3250 = vadd.f32 0.0, %v3249
        %v3251 = vpop.f32.mrf.mxu0
        %v3252 = vadd.f32 0.0, %v3251
        %v3253 = vpop.f32.mrf.mxu0
        %v3254 = vadd.f32 0.0, %v3253
        %v3255 = vpop.f32.mrf.mxu0
        %v3256 = vadd.f32 0.0, %v3255
        %3257 = vmatprep.mubr.bf16.mxu0 0
        %3258 = vmatmul.mubr.bf16.gmra.mxu0 %v3133
        %v3259 = vpop.f32.mrf.mxu0
        %v3260 = vadd.f32 0.0, %v3259
        %v3261 = vpop.f32.mrf.mxu0
        %v3262 = vadd.f32 0.0, %v3261
        %v3263 = vpop.f32.mrf.mxu0
        %v3264 = vadd.f32 0.0, %v3263
        %v3265 = vpop.f32.mrf.mxu0
        %v3266 = vadd.f32 0.0, %v3265
        %3267 = vmatprep.mubr.bf16.mxu0 0
        %3268 = vmatmul.mubr.bf16.gmra.mxu0 %v3136
        %v3269 = vpop.f32.mrf.mxu0
        %v3270 = vadd.f32 0.0, %v3269
        %v3271 = vpop.f32.mrf.mxu0
        %v3272 = vadd.f32 0.0, %v3271
        %v3273 = vpop.f32.mrf.mxu0
        %v3274 = vadd.f32 0.0, %v3273
        %v3275 = vpop.f32.mrf.mxu0
        %v3276 = vadd.f32 0.0, %v3275
        %3277 = vmatprep.mubr.bf16.mxu0 0
        %3278 = vmatmul.mubr.bf16.gmra.mxu0 %v3139
        %v3279 = vpop.f32.mrf.mxu0
        %v3280 = vadd.f32 0.0, %v3279
        %v3281 = vpop.f32.mrf.mxu0
        %v3282 = vadd.f32 0.0, %v3281
        %v3283 = vpop.f32.mrf.mxu0
        %v3284 = vadd.f32 0.0, %v3283
        %v3285 = vpop.f32.mrf.mxu0
        %v3286 = vadd.f32 0.0, %v3285
        %3287 = vmatprep.mubr.bf16.mxu0 0
        %3288 = vmatmul.mubr.bf16.gmra.mxu0 %v3142
        %v3289 = vpop.f32.mrf.mxu0
        %v3290 = vadd.f32 0.0, %v3289
        %v3291 = vpop.f32.mrf.mxu0
        %v3292 = vadd.f32 0.0, %v3291
        %v3293 = vpop.f32.mrf.mxu0
        %v3294 = vadd.f32 0.0, %v3293
        %v3295 = vpop.f32.mrf.mxu0
        %v3296 = vadd.f32 0.0, %v3295
        %3297 = vmatprep.mubr.bf16.mxu0 0
        %3298 = vmatmul.mubr.bf16.gmra.mxu0 %v3145
        %v3299 = vpop.f32.mrf.mxu0
        %v3300 = vadd.f32 0.0, %v3299
        %v3301 = vpop.f32.mrf.mxu0
        %v3302 = vadd.f32 0.0, %v3301
        %v3303 = vpop.f32.mrf.mxu0
        %v3304 = vadd.f32 0.0, %v3303
        %v3305 = vpop.f32.mrf.mxu0
        %v3306 = vadd.f32 0.0, %v3305
        %3307 = vdwg.mxu0
        %v3309 = vsel %vm2752, %v1976, 0
        %v3312 = vsel %vm2752, %v1977, 0
        %v3315 = vsel %vm2752, %v1978, 0
        %v3318 = vsel %vm2752, %v1979, 0
        %v3321 = vsel %vm2752, %v1980, 0
        %v3324 = vsel %vm2752, %v1981, 0
        %v3327 = vsel %vm2752, %v1982, 0
        %v3330 = vsel %vm2752, %v1983, 0
        %v3333 = vsel %vm2752, %v2352, 0
        %v3336 = vsel %vm2752, %v2353, 0
        %v3339 = vsel %vm2752, %v2354, 0
        %v3342 = vsel %vm2752, %v2355, 0
        %v3345 = vsel %vm2752, %v2356, 0
        %v3348 = vsel %vm2752, %v2357, 0
        %v3351 = vsel %vm2752, %v2358, 0
        %v3354 = vsel %vm2752, %v2359, 0
        %v3357 = vsel %vm2752, %v2360, 0
        %v3360 = vsel %vm2752, %v2361, 0
        %v3363 = vsel %vm2752, %v2362, 0
        %v3366 = vsel %vm2752, %v2363, 0
        %v3369 = vsel %vm2752, %v2364, 0
        %v3372 = vsel %vm2752, %v2365, 0
        %v3375 = vsel %vm2752, %v2366, 0
        %v3378 = vsel %vm2752, %v2367, 0
        %3380 = vmatprep.subr.bf16.mxu0 0
        %3381 = vmatpush1.bf16.xpose.msra.mxu0 %v3354
        %3382 = vmatprep.subr.bf16.mxu0 0
        %3383 = vmatpush1.bf16.xpose.msra.mxu0 %v3351
        %3384 = vmatprep.subr.bf16.mxu0 0
        %3385 = vmatpush1.bf16.xpose.msra.mxu0 %v3348
        %3386 = vmatprep.subr.bf16.mxu0 0
        %3387 = vmatpush1.bf16.xpose.msra.mxu0 %v3345
        %3388 = vmatprep.subr.bf16.mxu0 0
        %3389 = vmatpush1.bf16.xpose.msra.mxu0 %v3342
        %3390 = vmatprep.subr.bf16.mxu0 0
        %3391 = vmatpush1.bf16.xpose.msra.mxu0 %v3339
        %3392 = vmatprep.subr.bf16.mxu0 0
        %3393 = vmatpush1.bf16.xpose.msra.mxu0 %v3336
        %3394 = vmatprep.subr.bf16.mxu0 0
        %3395 = vmatpush1.bf16.xpose.msra.mxu0 %v3333
        %3396 = vmatprep.subr.bf16.mxu0 0
        %3397 = vmatpush2.bf16.xpose.msra.mxu0 %v3378
        %3398 = vmatprep.subr.bf16.mxu0 0
        %3399 = vmatpush2.bf16.xpose.msra.mxu0 %v3375
        %3400 = vmatprep.subr.bf16.mxu0 0
        %3401 = vmatpush2.bf16.xpose.msra.mxu0 %v3372
        %3402 = vmatprep.subr.bf16.mxu0 0
        %3403 = vmatpush2.bf16.xpose.msra.mxu0 %v3369
        %3404 = vmatprep.subr.bf16.mxu0 0
        %3405 = vmatpush2.bf16.xpose.msra.mxu0 %v3366
        %3406 = vmatprep.subr.bf16.mxu0 0
        %3407 = vmatpush2.bf16.xpose.msra.mxu0 %v3363
        %3408 = vmatprep.subr.bf16.mxu0 0
        %3409 = vmatpush2.bf16.xpose.msra.mxu0 %v3360
        %3410 = vmatprep.subr.bf16.mxu0 0
        %3411 = vmatpush2.bf16.xpose.msra.mxu0 %v3357
        %3412 = vmatprep.mubr.bf16.mxu0 0
        %3413 = vmatmul.mubr.bf16.gmra.mxu0 %v3309
        %v3414 = vpop.f32.mrf.mxu0
        %v3415 = vadd.f32 0.0, %v3414
        %v3416 = vpop.f32.mrf.mxu0
        %v3417 = vadd.f32 0.0, %v3416
        %v3418 = vpop.f32.mrf.mxu0
        %v3419 = vadd.f32 0.0, %v3418
        %v3420 = vpop.f32.mrf.mxu0
        %v3421 = vadd.f32 0.0, %v3420
        %3422 = vmatprep.mubr.bf16.mxu0 0
        %3423 = vmatmul.mubr.bf16.gmra.mxu0 %v3312
        %v3424 = vpop.f32.mrf.mxu0
        %v3425 = vadd.f32 0.0, %v3424
        %v3426 = vpop.f32.mrf.mxu0
        %v3427 = vadd.f32 0.0, %v3426
        %v3428 = vpop.f32.mrf.mxu0
        %v3429 = vadd.f32 0.0, %v3428
        %v3430 = vpop.f32.mrf.mxu0
        %v3431 = vadd.f32 0.0, %v3430
        %3432 = vmatprep.mubr.bf16.mxu0 0
        %3433 = vmatmul.mubr.bf16.gmra.mxu0 %v3315
        %v3434 = vpop.f32.mrf.mxu0
        %v3435 = vadd.f32 0.0, %v3434
        %v3436 = vpop.f32.mrf.mxu0
        %v3437 = vadd.f32 0.0, %v3436
        %v3438 = vpop.f32.mrf.mxu0
        %v3439 = vadd.f32 0.0, %v3438
        %v3440 = vpop.f32.mrf.mxu0
        %v3441 = vadd.f32 0.0, %v3440
        %3442 = vmatprep.mubr.bf16.mxu0 0
        %3443 = vmatmul.mubr.bf16.gmra.mxu0 %v3318
        %v3444 = vpop.f32.mrf.mxu0
        %v3445 = vadd.f32 0.0, %v3444
        %v3446 = vpop.f32.mrf.mxu0
        %v3447 = vadd.f32 0.0, %v3446
        %v3448 = vpop.f32.mrf.mxu0
        %v3449 = vadd.f32 0.0, %v3448
        %v3450 = vpop.f32.mrf.mxu0
        %v3451 = vadd.f32 0.0, %v3450
        %3452 = vmatprep.mubr.bf16.mxu0 0
        %3453 = vmatmul.mubr.bf16.gmra.mxu0 %v3321
        %v3454 = vpop.f32.mrf.mxu0
        %v3455 = vadd.f32 0.0, %v3454
        %v3456 = vpop.f32.mrf.mxu0
        %v3457 = vadd.f32 0.0, %v3456
        %v3458 = vpop.f32.mrf.mxu0
        %v3459 = vadd.f32 0.0, %v3458
        %v3460 = vpop.f32.mrf.mxu0
        %v3461 = vadd.f32 0.0, %v3460
        %3462 = vmatprep.mubr.bf16.mxu0 0
        %3463 = vmatmul.mubr.bf16.gmra.mxu0 %v3324
        %v3464 = vpop.f32.mrf.mxu0
        %v3465 = vadd.f32 0.0, %v3464
        %v3466 = vpop.f32.mrf.mxu0
        %v3467 = vadd.f32 0.0, %v3466
        %v3468 = vpop.f32.mrf.mxu0
        %v3469 = vadd.f32 0.0, %v3468
        %v3470 = vpop.f32.mrf.mxu0
        %v3471 = vadd.f32 0.0, %v3470
        %3472 = vmatprep.mubr.bf16.mxu0 0
        %3473 = vmatmul.mubr.bf16.gmra.mxu0 %v3327
        %v3474 = vpop.f32.mrf.mxu0
        %v3475 = vadd.f32 0.0, %v3474
        %v3476 = vpop.f32.mrf.mxu0
        %v3477 = vadd.f32 0.0, %v3476
        %v3478 = vpop.f32.mrf.mxu0
        %v3479 = vadd.f32 0.0, %v3478
        %v3480 = vpop.f32.mrf.mxu0
        %v3481 = vadd.f32 0.0, %v3480
        %3482 = vmatprep.mubr.bf16.mxu0 0
        %3483 = vmatmul.mubr.bf16.gmra.mxu0 %v3330
        %v3484 = vpop.f32.mrf.mxu0
        %v3485 = vadd.f32 0.0, %v3484
        %v3486 = vpop.f32.mrf.mxu0
        %v3487 = vadd.f32 0.0, %v3486
        %v3488 = vpop.f32.mrf.mxu0
        %v3489 = vadd.f32 0.0, %v3488
        %v3490 = vpop.f32.mrf.mxu0
        %v3491 = vadd.f32 0.0, %v3490
        %3492 = vdwg.mxu0
        %v3493 = vmul.f32 %v2860, 0.17677669
        %v3494 = vmul.f32 %v2862, 0.17677669
        %v3495 = vmul.f32 %v2864, 0.17677669
        %v3496 = vmul.f32 %v2866, 0.17677669
        %v3497 = vmul.f32 %v2870, 0.17677669
        %v3498 = vmul.f32 %v2872, 0.17677669
        %v3499 = vmul.f32 %v2874, 0.17677669
        %v3500 = vmul.f32 %v2876, 0.17677669
        %v3501 = vmul.f32 %v2880, 0.17677669
        %v3502 = vmul.f32 %v2882, 0.17677669
        %v3503 = vmul.f32 %v2884, 0.17677669
        %v3504 = vmul.f32 %v2886, 0.17677669
        %v3505 = vmul.f32 %v2890, 0.17677669
        %v3506 = vmul.f32 %v2892, 0.17677669
        %v3507 = vmul.f32 %v2894, 0.17677669
        %v3508 = vmul.f32 %v2896, 0.17677669
        %v3509 = vmul.f32 %v2900, 0.17677669
        %v3510 = vmul.f32 %v2902, 0.17677669
        %v3511 = vmul.f32 %v2904, 0.17677669
        %v3512 = vmul.f32 %v2906, 0.17677669
        %v3513 = vmul.f32 %v2910, 0.17677669
        %v3514 = vmul.f32 %v2912, 0.17677669
        %v3515 = vmul.f32 %v2914, 0.17677669
        %v3516 = vmul.f32 %v2916, 0.17677669
        %v3517 = vmul.f32 %v2920, 0.17677669
        %v3518 = vmul.f32 %v2922, 0.17677669
        %v3519 = vmul.f32 %v2924, 0.17677669
        %v3520 = vmul.f32 %v2926, 0.17677669
        %v3521 = vmul.f32 %v2930, 0.17677669
        %v3522 = vmul.f32 %v2932, 0.17677669
        %v3523 = vmul.f32 %v2934, 0.17677669
        %v3524 = vmul.f32 %v2936, 0.17677669
        %v3525 = vmul.f32 %v3045, 0.17677669
        %v3526 = vmul.f32 %v3047, 0.17677669
        %v3527 = vmul.f32 %v3049, 0.17677669
        %v3528 = vmul.f32 %v3051, 0.17677669
        %v3529 = vmul.f32 %v3055, 0.17677669
        %v3530 = vmul.f32 %v3057, 0.17677669
        %v3531 = vmul.f32 %v3059, 0.17677669
        %v3532 = vmul.f32 %v3061, 0.17677669
        %v3533 = vmul.f32 %v3065, 0.17677669
        %v3534 = vmul.f32 %v3067, 0.17677669
        %v3535 = vmul.f32 %v3069, 0.17677669
        %v3536 = vmul.f32 %v3071, 0.17677669
        %v3537 = vmul.f32 %v3075, 0.17677669
        %v3538 = vmul.f32 %v3077, 0.17677669
        %v3539 = vmul.f32 %v3079, 0.17677669
        %v3540 = vmul.f32 %v3081, 0.17677669
        %v3541 = vmul.f32 %v3085, 0.17677669
        %v3542 = vmul.f32 %v3087, 0.17677669
        %v3543 = vmul.f32 %v3089, 0.17677669
        %v3544 = vmul.f32 %v3091, 0.17677669
        %v3545 = vmul.f32 %v3095, 0.17677669
        %v3546 = vmul.f32 %v3097, 0.17677669
        %v3547 = vmul.f32 %v3099, 0.17677669
        %v3548 = vmul.f32 %v3101, 0.17677669
        %v3549 = vmul.f32 %v3105, 0.17677669
        %v3550 = vmul.f32 %v3107, 0.17677669
        %v3551 = vmul.f32 %v3109, 0.17677669
        %v3552 = vmul.f32 %v3111, 0.17677669
        %v3553 = vmul.f32 %v3115, 0.17677669
        %v3554 = vmul.f32 %v3117, 0.17677669
        %v3555 = vmul.f32 %v3119, 0.17677669
        %v3556 = vmul.f32 %v3121, 0.17677669
        %v3557 = vmul.f32 %v3230, 0.17677669
        %v3558 = vmul.f32 %v3232, 0.17677669
        %v3559 = vmul.f32 %v3234, 0.17677669
        %v3560 = vmul.f32 %v3236, 0.17677669
        %v3561 = vmul.f32 %v3240, 0.17677669
        %v3562 = vmul.f32 %v3242, 0.17677669
        %v3563 = vmul.f32 %v3244, 0.17677669
        %v3564 = vmul.f32 %v3246, 0.17677669
        %v3565 = vmul.f32 %v3250, 0.17677669
        %v3566 = vmul.f32 %v3252, 0.17677669
        %v3567 = vmul.f32 %v3254, 0.17677669
        %v3568 = vmul.f32 %v3256, 0.17677669
        %v3569 = vmul.f32 %v3260, 0.17677669
        %v3570 = vmul.f32 %v3262, 0.17677669
        %v3571 = vmul.f32 %v3264, 0.17677669
        %v3572 = vmul.f32 %v3266, 0.17677669
        %v3573 = vmul.f32 %v3270, 0.17677669
        %v3574 = vmul.f32 %v3272, 0.17677669
        %v3575 = vmul.f32 %v3274, 0.17677669
        %v3576 = vmul.f32 %v3276, 0.17677669
        %v3577 = vmul.f32 %v3280, 0.17677669
        %v3578 = vmul.f32 %v3282, 0.17677669
        %v3579 = vmul.f32 %v3284, 0.17677669
        %v3580 = vmul.f32 %v3286, 0.17677669
        %v3581 = vmul.f32 %v3290, 0.17677669
        %v3582 = vmul.f32 %v3292, 0.17677669
        %v3583 = vmul.f32 %v3294, 0.17677669
        %v3584 = vmul.f32 %v3296, 0.17677669
        %v3585 = vmul.f32 %v3300, 0.17677669
        %v3586 = vmul.f32 %v3302, 0.17677669
        %v3587 = vmul.f32 %v3304, 0.17677669
        %v3588 = vmul.f32 %v3306, 0.17677669
        %v3589 = vmul.f32 %v3415, 0.17677669
        %v3590 = vmul.f32 %v3417, 0.17677669
        %v3591 = vmul.f32 %v3419, 0.17677669
        %v3592 = vmul.f32 %v3421, 0.17677669
        %v3593 = vmul.f32 %v3425, 0.17677669
        %v3594 = vmul.f32 %v3427, 0.17677669
        %v3595 = vmul.f32 %v3429, 0.17677669
        %v3596 = vmul.f32 %v3431, 0.17677669
        %v3597 = vmul.f32 %v3435, 0.17677669
        %v3598 = vmul.f32 %v3437, 0.17677669
        %v3599 = vmul.f32 %v3439, 0.17677669
        %v3600 = vmul.f32 %v3441, 0.17677669
        %v3601 = vmul.f32 %v3445, 0.17677669
        %v3602 = vmul.f32 %v3447, 0.17677669
        %v3603 = vmul.f32 %v3449, 0.17677669
        %v3604 = vmul.f32 %v3451, 0.17677669
        %v3605 = vmul.f32 %v3455, 0.17677669
        %v3606 = vmul.f32 %v3457, 0.17677669
        %v3607 = vmul.f32 %v3459, 0.17677669
        %v3608 = vmul.f32 %v3461, 0.17677669
        %v3609 = vmul.f32 %v3465, 0.17677669
        %v3610 = vmul.f32 %v3467, 0.17677669
        %v3611 = vmul.f32 %v3469, 0.17677669
        %v3612 = vmul.f32 %v3471, 0.17677669
        %v3613 = vmul.f32 %v3475, 0.17677669
        %v3614 = vmul.f32 %v3477, 0.17677669
        %v3615 = vmul.f32 %v3479, 0.17677669
        %v3616 = vmul.f32 %v3481, 0.17677669
        %v3617 = vmul.f32 %v3485, 0.17677669
        %v3618 = vmul.f32 %v3487, 0.17677669
        %v3619 = vmul.f32 %v3489, 0.17677669
        %v3620 = vmul.f32 %v3491, 0.17677669
        %v3621 = vadd.f32 %v3493, %v1760
        %v3622 = vadd.f32 %v3494, %v1761
        %v3623 = vadd.f32 %v3495, %v1762
        %v3624 = vadd.f32 %v3496, %v1763
        %v3625 = vadd.f32 %v3497, %v1764
        %v3626 = vadd.f32 %v3498, %v1765
        %v3627 = vadd.f32 %v3499, %v1766
        %v3628 = vadd.f32 %v3500, %v1767
        %v3629 = vadd.f32 %v3501, %v1768
        %v3630 = vadd.f32 %v3502, %v1769
        %v3631 = vadd.f32 %v3503, %v1770
        %v3632 = vadd.f32 %v3504, %v1771
        %v3633 = vadd.f32 %v3505, %v1772
        %v3634 = vadd.f32 %v3506, %v1773
        %v3635 = vadd.f32 %v3507, %v1774
        %v3636 = vadd.f32 %v3508, %v1775
        %v3637 = vadd.f32 %v3509, %v1776
        %v3638 = vadd.f32 %v3510, %v1777
        %v3639 = vadd.f32 %v3511, %v1778
        %v3640 = vadd.f32 %v3512, %v1779
        %v3641 = vadd.f32 %v3513, %v1780
        %v3642 = vadd.f32 %v3514, %v1781
        %v3643 = vadd.f32 %v3515, %v1782
        %v3644 = vadd.f32 %v3516, %v1783
        %v3645 = vadd.f32 %v3517, %v1784
        %v3646 = vadd.f32 %v3518, %v1785
        %v3647 = vadd.f32 %v3519, %v1786
        %v3648 = vadd.f32 %v3520, %v1787
        %v3649 = vadd.f32 %v3521, %v1788
        %v3650 = vadd.f32 %v3522, %v1789
        %v3651 = vadd.f32 %v3523, %v1790
        %v3652 = vadd.f32 %v3524, %v1791
        %v3653 = vadd.f32 %v3525, %v1760
        %v3654 = vadd.f32 %v3526, %v1761
        %v3655 = vadd.f32 %v3527, %v1762
        %v3656 = vadd.f32 %v3528, %v1763
        %v3657 = vadd.f32 %v3529, %v1764
        %v3658 = vadd.f32 %v3530, %v1765
        %v3659 = vadd.f32 %v3531, %v1766
        %v3660 = vadd.f32 %v3532, %v1767
        %v3661 = vadd.f32 %v3533, %v1768
        %v3662 = vadd.f32 %v3534, %v1769
        %v3663 = vadd.f32 %v3535, %v1770
        %v3664 = vadd.f32 %v3536, %v1771
        %v3665 = vadd.f32 %v3537, %v1772
        %v3666 = vadd.f32 %v3538, %v1773
        %v3667 = vadd.f32 %v3539, %v1774
        %v3668 = vadd.f32 %v3540, %v1775
        %v3669 = vadd.f32 %v3541, %v1776
        %v3670 = vadd.f32 %v3542, %v1777
        %v3671 = vadd.f32 %v3543, %v1778
        %v3672 = vadd.f32 %v3544, %v1779
        %v3673 = vadd.f32 %v3545, %v1780
        %v3674 = vadd.f32 %v3546, %v1781
        %v3675 = vadd.f32 %v3547, %v1782
        %v3676 = vadd.f32 %v3548, %v1783
        %v3677 = vadd.f32 %v3549, %v1784
        %v3678 = vadd.f32 %v3550, %v1785
        %v3679 = vadd.f32 %v3551, %v1786
        %v3680 = vadd.f32 %v3552, %v1787
        %v3681 = vadd.f32 %v3553, %v1788
        %v3682 = vadd.f32 %v3554, %v1789
        %v3683 = vadd.f32 %v3555, %v1790
        %v3684 = vadd.f32 %v3556, %v1791
        %v3685 = vadd.f32 %v3557, %v1760
        %v3686 = vadd.f32 %v3558, %v1761
        %v3687 = vadd.f32 %v3559, %v1762
        %v3688 = vadd.f32 %v3560, %v1763
        %v3689 = vadd.f32 %v3561, %v1764
        %v3690 = vadd.f32 %v3562, %v1765
        %v3691 = vadd.f32 %v3563, %v1766
        %v3692 = vadd.f32 %v3564, %v1767
        %v3693 = vadd.f32 %v3565, %v1768
        %v3694 = vadd.f32 %v3566, %v1769
        %v3695 = vadd.f32 %v3567, %v1770
        %v3696 = vadd.f32 %v3568, %v1771
        %v3697 = vadd.f32 %v3569, %v1772
        %v3698 = vadd.f32 %v3570, %v1773
        %v3699 = vadd.f32 %v3571, %v1774
        %v3700 = vadd.f32 %v3572, %v1775
        %v3701 = vadd.f32 %v3573, %v1776
        %v3702 = vadd.f32 %v3574, %v1777
        %v3703 = vadd.f32 %v3575, %v1778
        %v3704 = vadd.f32 %v3576, %v1779
        %v3705 = vadd.f32 %v3577, %v1780
        %v3706 = vadd.f32 %v3578, %v1781
        %v3707 = vadd.f32 %v3579, %v1782
        %v3708 = vadd.f32 %v3580, %v1783
        %v3709 = vadd.f32 %v3581, %v1784
        %v3710 = vadd.f32 %v3582, %v1785
        %v3711 = vadd.f32 %v3583, %v1786
        %v3712 = vadd.f32 %v3584, %v1787
        %v3713 = vadd.f32 %v3585, %v1788
        %v3714 = vadd.f32 %v3586, %v1789
        %v3715 = vadd.f32 %v3587, %v1790
        %v3716 = vadd.f32 %v3588, %v1791
        %v3717 = vadd.f32 %v3589, %v1760
        %v3718 = vadd.f32 %v3590, %v1761
        %v3719 = vadd.f32 %v3591, %v1762
        %v3720 = vadd.f32 %v3592, %v1763
        %v3721 = vadd.f32 %v3593, %v1764
        %v3722 = vadd.f32 %v3594, %v1765
        %v3723 = vadd.f32 %v3595, %v1766
        %v3724 = vadd.f32 %v3596, %v1767
        %v3725 = vadd.f32 %v3597, %v1768
        %v3726 = vadd.f32 %v3598, %v1769
        %v3727 = vadd.f32 %v3599, %v1770
        %v3728 = vadd.f32 %v3600, %v1771
        %v3729 = vadd.f32 %v3601, %v1772
        %v3730 = vadd.f32 %v3602, %v1773
        %v3731 = vadd.f32 %v3603, %v1774
        %v3732 = vadd.f32 %v3604, %v1775
        %v3733 = vadd.f32 %v3605, %v1776
        %v3734 = vadd.f32 %v3606, %v1777
        %v3735 = vadd.f32 %v3607, %v1778
        %v3736 = vadd.f32 %v3608, %v1779
        %v3737 = vadd.f32 %v3609, %v1780
        %v3738 = vadd.f32 %v3610, %v1781
        %v3739 = vadd.f32 %v3611, %v1782
        %v3740 = vadd.f32 %v3612, %v1783
        %v3741 = vadd.f32 %v3613, %v1784
        %v3742 = vadd.f32 %v3614, %v1785
        %v3743 = vadd.f32 %v3615, %v1786
        %v3744 = vadd.f32 %v3616, %v1787
        %v3745 = vadd.f32 %v3617, %v1788
        %v3746 = vadd.f32 %v3618, %v1789
        %v3747 = vadd.f32 %v3619, %v1790
        %v3748 = vadd.f32 %v3620, %v1791
        %v3749 = vmax.f32 %v3621, %v3622
        %3750 = vmax.xlane.f32.xlu0 %v3749
        %v3751 = vpop.xlane.xlu0 %3750
        %v3752 = vmax.f32 %v3623, %v3624
        %3753 = vmax.xlane.f32.xlu0 %v3752
        %v3754 = vpop.xlane.xlu0 %3753
        %v3755 = vmax.f32 %v3625, %v3626
        %3756 = vmax.xlane.f32.xlu0 %v3755
        %v3757 = vpop.xlane.xlu0 %3756
        %v3758 = vmax.f32 %v3627, %v3628
        %3759 = vmax.xlane.f32.xlu0 %v3758
        %v3760 = vpop.xlane.xlu0 %3759
        %v3761 = vmax.f32 %v3629, %v3630
        %3762 = vmax.xlane.f32.xlu0 %v3761
        %v3763 = vpop.xlane.xlu0 %3762
        %v3764 = vmax.f32 %v3631, %v3632
        %3765 = vmax.xlane.f32.xlu0 %v3764
        %v3766 = vpop.xlane.xlu0 %3765
        %v3767 = vmax.f32 %v3633, %v3634
        %3768 = vmax.xlane.f32.xlu0 %v3767
        %v3769 = vpop.xlane.xlu0 %3768
        %v3770 = vmax.f32 %v3635, %v3636
        %3771 = vmax.xlane.f32.xlu0 %v3770
        %v3772 = vpop.xlane.xlu0 %3771
        %v3773 = vmax.f32 %v3637, %v3638
        %3774 = vmax.xlane.f32.xlu0 %v3773
        %v3775 = vpop.xlane.xlu0 %3774
        %v3776 = vmax.f32 %v3639, %v3640
        %3777 = vmax.xlane.f32.xlu0 %v3776
        %v3778 = vpop.xlane.xlu0 %3777
        %v3779 = vmax.f32 %v3641, %v3642
        %3780 = vmax.xlane.f32.xlu0 %v3779
        %v3781 = vpop.xlane.xlu0 %3780
        %v3782 = vmax.f32 %v3643, %v3644
        %3783 = vmax.xlane.f32.xlu0 %v3782
        %v3784 = vpop.xlane.xlu0 %3783
        %v3785 = vmax.f32 %v3645, %v3646
        %3786 = vmax.xlane.f32.xlu0 %v3785
        %v3787 = vpop.xlane.xlu0 %3786
        %v3788 = vmax.f32 %v3647, %v3648
        %3789 = vmax.xlane.f32.xlu0 %v3788
        %v3790 = vpop.xlane.xlu0 %3789
        %v3791 = vmax.f32 %v3649, %v3650
        %3792 = vmax.xlane.f32.xlu0 %v3791
        %v3793 = vpop.xlane.xlu0 %3792
        %v3794 = vmax.f32 %v3651, %v3652
        %3795 = vmax.xlane.f32.xlu0 %v3794
        %v3796 = vpop.xlane.xlu0 %3795
        %v3797 = vmax.f32 %v3653, %v3654
        %3798 = vmax.xlane.f32.xlu0 %v3797
        %v3799 = vpop.xlane.xlu0 %3798
        %v3800 = vmax.f32 %v3655, %v3656
        %3801 = vmax.xlane.f32.xlu0 %v3800
        %v3802 = vpop.xlane.xlu0 %3801
        %v3803 = vmax.f32 %v3657, %v3658
        %3804 = vmax.xlane.f32.xlu0 %v3803
        %v3805 = vpop.xlane.xlu0 %3804
        %v3806 = vmax.f32 %v3659, %v3660
        %3807 = vmax.xlane.f32.xlu0 %v3806
        %v3808 = vpop.xlane.xlu0 %3807
        %v3809 = vmax.f32 %v3661, %v3662
        %3810 = vmax.xlane.f32.xlu0 %v3809
        %v3811 = vpop.xlane.xlu0 %3810
        %v3812 = vmax.f32 %v3663, %v3664
        %3813 = vmax.xlane.f32.xlu0 %v3812
        %v3814 = vpop.xlane.xlu0 %3813
        %v3815 = vmax.f32 %v3665, %v3666
        %3816 = vmax.xlane.f32.xlu0 %v3815
        %v3817 = vpop.xlane.xlu0 %3816
        %v3818 = vmax.f32 %v3667, %v3668
        %3819 = vmax.xlane.f32.xlu0 %v3818
        %v3820 = vpop.xlane.xlu0 %3819
        %v3821 = vmax.f32 %v3669, %v3670
        %3822 = vmax.xlane.f32.xlu0 %v3821
        %v3823 = vpop.xlane.xlu0 %3822
        %v3824 = vmax.f32 %v3671, %v3672
        %3825 = vmax.xlane.f32.xlu0 %v3824
        %v3826 = vpop.xlane.xlu0 %3825
        %v3827 = vmax.f32 %v3673, %v3674
        %3828 = vmax.xlane.f32.xlu0 %v3827
        %v3829 = vpop.xlane.xlu0 %3828
        %v3830 = vmax.f32 %v3675, %v3676
        %3831 = vmax.xlane.f32.xlu0 %v3830
        %v3832 = vpop.xlane.xlu0 %3831
        %v3833 = vmax.f32 %v3677, %v3678
        %3834 = vmax.xlane.f32.xlu0 %v3833
        %v3835 = vpop.xlane.xlu0 %3834
        %v3836 = vmax.f32 %v3679, %v3680
        %3837 = vmax.xlane.f32.xlu0 %v3836
        %v3838 = vpop.xlane.xlu0 %3837
        %v3839 = vmax.f32 %v3681, %v3682
        %3840 = vmax.xlane.f32.xlu0 %v3839
        %v3841 = vpop.xlane.xlu0 %3840
        %v3842 = vmax.f32 %v3683, %v3684
        %3843 = vmax.xlane.f32.xlu0 %v3842
        %v3844 = vpop.xlane.xlu0 %3843
        %v3845 = vmax.f32 %v3685, %v3686
        %3846 = vmax.xlane.f32.xlu0 %v3845
        %v3847 = vpop.xlane.xlu0 %3846
        %v3848 = vmax.f32 %v3687, %v3688
        %3849 = vmax.xlane.f32.xlu0 %v3848
        %v3850 = vpop.xlane.xlu0 %3849
        %v3851 = vmax.f32 %v3689, %v3690
        %3852 = vmax.xlane.f32.xlu0 %v3851
        %v3853 = vpop.xlane.xlu0 %3852
        %v3854 = vmax.f32 %v3691, %v3692
        %3855 = vmax.xlane.f32.xlu0 %v3854
        %v3856 = vpop.xlane.xlu0 %3855
        %v3857 = vmax.f32 %v3693, %v3694
        %3858 = vmax.xlane.f32.xlu0 %v3857
        %v3859 = vpop.xlane.xlu0 %3858
        %v3860 = vmax.f32 %v3695, %v3696
        %3861 = vmax.xlane.f32.xlu0 %v3860
        %v3862 = vpop.xlane.xlu0 %3861
        %v3863 = vmax.f32 %v3697, %v3698
        %3864 = vmax.xlane.f32.xlu0 %v3863
        %v3865 = vpop.xlane.xlu0 %3864
        %v3866 = vmax.f32 %v3699, %v3700
        %3867 = vmax.xlane.f32.xlu0 %v3866
        %v3868 = vpop.xlane.xlu0 %3867
        %v3869 = vmax.f32 %v3701, %v3702
        %3870 = vmax.xlane.f32.xlu0 %v3869
        %v3871 = vpop.xlane.xlu0 %3870
        %v3872 = vmax.f32 %v3703, %v3704
        %3873 = vmax.xlane.f32.xlu0 %v3872
        %v3874 = vpop.xlane.xlu0 %3873
        %v3875 = vmax.f32 %v3705, %v3706
        %3876 = vmax.xlane.f32.xlu0 %v3875
        %v3877 = vpop.xlane.xlu0 %3876
        %v3878 = vmax.f32 %v3707, %v3708
        %3879 = vmax.xlane.f32.xlu0 %v3878
        %v3880 = vpop.xlane.xlu0 %3879
        %v3881 = vmax.f32 %v3709, %v3710
        %3882 = vmax.xlane.f32.xlu0 %v3881
        %v3883 = vpop.xlane.xlu0 %3882
        %v3884 = vmax.f32 %v3711, %v3712
        %3885 = vmax.xlane.f32.xlu0 %v3884
        %v3886 = vpop.xlane.xlu0 %3885
        %v3887 = vmax.f32 %v3713, %v3714
        %3888 = vmax.xlane.f32.xlu0 %v3887
        %v3889 = vpop.xlane.xlu0 %3888
        %v3890 = vmax.f32 %v3715, %v3716
        %3891 = vmax.xlane.f32.xlu0 %v3890
        %v3892 = vpop.xlane.xlu0 %3891
        %v3893 = vmax.f32 %v3717, %v3718
        %3894 = vmax.xlane.f32.xlu0 %v3893
        %v3895 = vpop.xlane.xlu0 %3894
        %v3896 = vmax.f32 %v3719, %v3720
        %3897 = vmax.xlane.f32.xlu0 %v3896
        %v3898 = vpop.xlane.xlu0 %3897
        %v3899 = vmax.f32 %v3721, %v3722
        %3900 = vmax.xlane.f32.xlu0 %v3899
        %v3901 = vpop.xlane.xlu0 %3900
        %v3902 = vmax.f32 %v3723, %v3724
        %3903 = vmax.xlane.f32.xlu0 %v3902
        %v3904 = vpop.xlane.xlu0 %3903
        %v3905 = vmax.f32 %v3725, %v3726
        %3906 = vmax.xlane.f32.xlu0 %v3905
        %v3907 = vpop.xlane.xlu0 %3906
        %v3908 = vmax.f32 %v3727, %v3728
        %3909 = vmax.xlane.f32.xlu0 %v3908
        %v3910 = vpop.xlane.xlu0 %3909
        %v3911 = vmax.f32 %v3729, %v3730
        %3912 = vmax.xlane.f32.xlu0 %v3911
        %v3913 = vpop.xlane.xlu0 %3912
        %v3914 = vmax.f32 %v3731, %v3732
        %3915 = vmax.xlane.f32.xlu0 %v3914
        %v3916 = vpop.xlane.xlu0 %3915
        %v3917 = vmax.f32 %v3733, %v3734
        %3918 = vmax.xlane.f32.xlu0 %v3917
        %v3919 = vpop.xlane.xlu0 %3918
        %v3920 = vmax.f32 %v3735, %v3736
        %3921 = vmax.xlane.f32.xlu0 %v3920
        %v3922 = vpop.xlane.xlu0 %3921
        %v3923 = vmax.f32 %v3737, %v3738
        %3924 = vmax.xlane.f32.xlu0 %v3923
        %v3925 = vpop.xlane.xlu0 %3924
        %v3926 = vmax.f32 %v3739, %v3740
        %3927 = vmax.xlane.f32.xlu0 %v3926
        %v3928 = vpop.xlane.xlu0 %3927
        %v3929 = vmax.f32 %v3741, %v3742
        %3930 = vmax.xlane.f32.xlu0 %v3929
        %v3931 = vpop.xlane.xlu0 %3930
        %v3932 = vmax.f32 %v3743, %v3744
        %3933 = vmax.xlane.f32.xlu0 %v3932
        %v3934 = vpop.xlane.xlu0 %3933
        %v3935 = vmax.f32 %v3745, %v3746
        %3936 = vmax.xlane.f32.xlu0 %v3935
        %v3937 = vpop.xlane.xlu0 %3936
        %v3938 = vmax.f32 %v3747, %v3748
        %3939 = vmax.xlane.f32.xlu0 %v3938
        %v3940 = vpop.xlane.xlu0 %3939
        %v3941 = vsub.f32 %v3621, %v3751
        %v3942 = vsub.f32 %v3622, %v3751
        %v3943 = vsub.f32 %v3623, %v3754
        %v3944 = vsub.f32 %v3624, %v3754
        %v3945 = vsub.f32 %v3625, %v3757
        %v3946 = vsub.f32 %v3626, %v3757
        %v3947 = vsub.f32 %v3627, %v3760
        %v3948 = vsub.f32 %v3628, %v3760
        %v3949 = vsub.f32 %v3629, %v3763
        %v3950 = vsub.f32 %v3630, %v3763
        %v3951 = vsub.f32 %v3631, %v3766
        %v3952 = vsub.f32 %v3632, %v3766
        %v3953 = vsub.f32 %v3633, %v3769
        %v3954 = vsub.f32 %v3634, %v3769
        %v3955 = vsub.f32 %v3635, %v3772
        %v3956 = vsub.f32 %v3636, %v3772
        %v3957 = vsub.f32 %v3637, %v3775
        %v3958 = vsub.f32 %v3638, %v3775
        %v3959 = vsub.f32 %v3639, %v3778
        %v3960 = vsub.f32 %v3640, %v3778
        %v3961 = vsub.f32 %v3641, %v3781
        %v3962 = vsub.f32 %v3642, %v3781
        %v3963 = vsub.f32 %v3643, %v3784
        %v3964 = vsub.f32 %v3644, %v3784
        %v3965 = vsub.f32 %v3645, %v3787
        %v3966 = vsub.f32 %v3646, %v3787
        %v3967 = vsub.f32 %v3647, %v3790
        %v3968 = vsub.f32 %v3648, %v3790
        %v3969 = vsub.f32 %v3649, %v3793
        %v3970 = vsub.f32 %v3650, %v3793
        %v3971 = vsub.f32 %v3651, %v3796
        %v3972 = vsub.f32 %v3652, %v3796
        %v3973 = vsub.f32 %v3653, %v3799
        %v3974 = vsub.f32 %v3654, %v3799
        %v3975 = vsub.f32 %v3655, %v3802
        %v3976 = vsub.f32 %v3656, %v3802
        %v3977 = vsub.f32 %v3657, %v3805
        %v3978 = vsub.f32 %v3658, %v3805
        %v3979 = vsub.f32 %v3659, %v3808
        %v3980 = vsub.f32 %v3660, %v3808
        %v3981 = vsub.f32 %v3661, %v3811
        %v3982 = vsub.f32 %v3662, %v3811
        %v3983 = vsub.f32 %v3663, %v3814
        %v3984 = vsub.f32 %v3664, %v3814
        %v3985 = vsub.f32 %v3665, %v3817
        %v3986 = vsub.f32 %v3666, %v3817
        %v3987 = vsub.f32 %v3667, %v3820
        %v3988 = vsub.f32 %v3668, %v3820
        %v3989 = vsub.f32 %v3669, %v3823
        %v3990 = vsub.f32 %v3670, %v3823
        %v3991 = vsub.f32 %v3671, %v3826
        %v3992 = vsub.f32 %v3672, %v3826
        %v3993 = vsub.f32 %v3673, %v3829
        %v3994 = vsub.f32 %v3674, %v3829
        %v3995 = vsub.f32 %v3675, %v3832
        %v3996 = vsub.f32 %v3676, %v3832
        %v3997 = vsub.f32 %v3677, %v3835
        %v3998 = vsub.f32 %v3678, %v3835
        %v3999 = vsub.f32 %v3679, %v3838
        %v4000 = vsub.f32 %v3680, %v3838
        %v4001 = vsub.f32 %v3681, %v3841
        %v4002 = vsub.f32 %v3682, %v3841
        %v4003 = vsub.f32 %v3683, %v3844
        %v4004 = vsub.f32 %v3684, %v3844
        %v4005 = vsub.f32 %v3685, %v3847
        %v4006 = vsub.f32 %v3686, %v3847
        %v4007 = vsub.f32 %v3687, %v3850
        %v4008 = vsub.f32 %v3688, %v3850
        %v4009 = vsub.f32 %v3689, %v3853
        %v4010 = vsub.f32 %v3690, %v3853
        %v4011 = vsub.f32 %v3691, %v3856
        %v4012 = vsub.f32 %v3692, %v3856
        %v4013 = vsub.f32 %v3693, %v3859
        %v4014 = vsub.f32 %v3694, %v3859
        %v4015 = vsub.f32 %v3695, %v3862
        %v4016 = vsub.f32 %v3696, %v3862
        %v4017 = vsub.f32 %v3697, %v3865
        %v4018 = vsub.f32 %v3698, %v3865
        %v4019 = vsub.f32 %v3699, %v3868
        %v4020 = vsub.f32 %v3700, %v3868
        %v4021 = vsub.f32 %v3701, %v3871
        %v4022 = vsub.f32 %v3702, %v3871
        %v4023 = vsub.f32 %v3703, %v3874
        %v4024 = vsub.f32 %v3704, %v3874
        %v4025 = vsub.f32 %v3705, %v3877
        %v4026 = vsub.f32 %v3706, %v3877
        %v4027 = vsub.f32 %v3707, %v3880
        %v4028 = vsub.f32 %v3708, %v3880
        %v4029 = vsub.f32 %v3709, %v3883
        %v4030 = vsub.f32 %v3710, %v3883
        %v4031 = vsub.f32 %v3711, %v3886
        %v4032 = vsub.f32 %v3712, %v3886
        %v4033 = vsub.f32 %v3713, %v3889
        %v4034 = vsub.f32 %v3714, %v3889
        %v4035 = vsub.f32 %v3715, %v3892
        %v4036 = vsub.f32 %v3716, %v3892
        %v4037 = vsub.f32 %v3717, %v3895
        %v4038 = vsub.f32 %v3718, %v3895
        %v4039 = vsub.f32 %v3719, %v3898
        %v4040 = vsub.f32 %v3720, %v3898
        %v4041 = vsub.f32 %v3721, %v3901
        %v4042 = vsub.f32 %v3722, %v3901
        %v4043 = vsub.f32 %v3723, %v3904
        %v4044 = vsub.f32 %v3724, %v3904
        %v4045 = vsub.f32 %v3725, %v3907
        %v4046 = vsub.f32 %v3726, %v3907
        %v4047 = vsub.f32 %v3727, %v3910
        %v4048 = vsub.f32 %v3728, %v3910
        %v4049 = vsub.f32 %v3729, %v3913
        %v4050 = vsub.f32 %v3730, %v3913
        %v4051 = vsub.f32 %v3731, %v3916
        %v4052 = vsub.f32 %v3732, %v3916
        %v4053 = vsub.f32 %v3733, %v3919
        %v4054 = vsub.f32 %v3734, %v3919
        %v4055 = vsub.f32 %v3735, %v3922
        %v4056 = vsub.f32 %v3736, %v3922
        %v4057 = vsub.f32 %v3737, %v3925
        %v4058 = vsub.f32 %v3738, %v3925
        %v4059 = vsub.f32 %v3739, %v3928
        %v4060 = vsub.f32 %v3740, %v3928
        %v4061 = vsub.f32 %v3741, %v3931
        %v4062 = vsub.f32 %v3742, %v3931
        %v4063 = vsub.f32 %v3743, %v3934
        %v4064 = vsub.f32 %v3744, %v3934
        %v4065 = vsub.f32 %v3745, %v3937
        %v4066 = vsub.f32 %v3746, %v3937
        %v4067 = vsub.f32 %v3747, %v3940
        %v4068 = vsub.f32 %v3748, %v3940
        %v4069 = vmul.f32 %v3941, 1.442695
        %v4070 = vpow.pop %v4069
        %v4071 = vmul.f32 %v3942, 1.442695
        %v4072 = vpow.pop %v4071
        %v4073 = vmul.f32 %v3943, 1.442695
        %v4074 = vpow.pop %v4073
        %v4075 = vmul.f32 %v3944, 1.442695
        %v4076 = vpow.pop %v4075
        %v4077 = vmul.f32 %v3945, 1.442695
        %v4078 = vpow.pop %v4077
        %v4079 = vmul.f32 %v3946, 1.442695
        %v4080 = vpow.pop %v4079
        %v4081 = vmul.f32 %v3947, 1.442695
        %v4082 = vpow.pop %v4081
        %v4083 = vmul.f32 %v3948, 1.442695
        %v4084 = vpow.pop %v4083
        %v4085 = vmul.f32 %v3949, 1.442695
        %v4086 = vpow.pop %v4085
        %v4087 = vmul.f32 %v3950, 1.442695
        %v4088 = vpow.pop %v4087
        %v4089 = vmul.f32 %v3951, 1.442695
        %v4090 = vpow.pop %v4089
        %v4091 = vmul.f32 %v3952, 1.442695
        %v4092 = vpow.pop %v4091
        %v4093 = vmul.f32 %v3953, 1.442695
        %v4094 = vpow.pop %v4093
        %v4095 = vmul.f32 %v3954, 1.442695
        %v4096 = vpow.pop %v4095
        %v4097 = vmul.f32 %v3955, 1.442695
        %v4098 = vpow.pop %v4097
        %v4099 = vmul.f32 %v3956, 1.442695
        %v4100 = vpow.pop %v4099
        %v4101 = vmul.f32 %v3957, 1.442695
        %v4102 = vpow.pop %v4101
        %v4103 = vmul.f32 %v3958, 1.442695
        %v4104 = vpow.pop %v4103
        %v4105 = vmul.f32 %v3959, 1.442695
        %v4106 = vpow.pop %v4105
        %v4107 = vmul.f32 %v3960, 1.442695
        %v4108 = vpow.pop %v4107
        %v4109 = vmul.f32 %v3961, 1.442695
        %v4110 = vpow.pop %v4109
        %v4111 = vmul.f32 %v3962, 1.442695
        %v4112 = vpow.pop %v4111
        %v4113 = vmul.f32 %v3963, 1.442695
        %v4114 = vpow.pop %v4113
        %v4115 = vmul.f32 %v3964, 1.442695
        %v4116 = vpow.pop %v4115
        %v4117 = vmul.f32 %v3965, 1.442695
        %v4118 = vpow.pop %v4117
        %v4119 = vmul.f32 %v3966, 1.442695
        %v4120 = vpow.pop %v4119
        %v4121 = vmul.f32 %v3967, 1.442695
        %v4122 = vpow.pop %v4121
        %v4123 = vmul.f32 %v3968, 1.442695
        %v4124 = vpow.pop %v4123
        %v4125 = vmul.f32 %v3969, 1.442695
        %v4126 = vpow.pop %v4125
        %v4127 = vmul.f32 %v3970, 1.442695
        %v4128 = vpow.pop %v4127
        %v4129 = vmul.f32 %v3971, 1.442695
        %v4130 = vpow.pop %v4129
        %v4131 = vmul.f32 %v3972, 1.442695
        %v4132 = vpow.pop %v4131
        %v4133 = vmul.f32 %v3973, 1.442695
        %v4134 = vpow.pop %v4133
        %v4135 = vmul.f32 %v3974, 1.442695
        %v4136 = vpow.pop %v4135
        %v4137 = vmul.f32 %v3975, 1.442695
        %v4138 = vpow.pop %v4137
        %v4139 = vmul.f32 %v3976, 1.442695
        %v4140 = vpow.pop %v4139
        %v4141 = vmul.f32 %v3977, 1.442695
        %v4142 = vpow.pop %v4141
        %v4143 = vmul.f32 %v3978, 1.442695
        %v4144 = vpow.pop %v4143
        %v4145 = vmul.f32 %v3979, 1.442695
        %v4146 = vpow.pop %v4145
        %v4147 = vmul.f32 %v3980, 1.442695
        %v4148 = vpow.pop %v4147
        %v4149 = vmul.f32 %v3981, 1.442695
        %v4150 = vpow.pop %v4149
        %v4151 = vmul.f32 %v3982, 1.442695
        %v4152 = vpow.pop %v4151
        %v4153 = vmul.f32 %v3983, 1.442695
        %v4154 = vpow.pop %v4153
        %v4155 = vmul.f32 %v3984, 1.442695
        %v4156 = vpow.pop %v4155
        %v4157 = vmul.f32 %v3985, 1.442695
        %v4158 = vpow.pop %v4157
        %v4159 = vmul.f32 %v3986, 1.442695
        %v4160 = vpow.pop %v4159
        %v4161 = vmul.f32 %v3987, 1.442695
        %v4162 = vpow.pop %v4161
        %v4163 = vmul.f32 %v3988, 1.442695
        %v4164 = vpow.pop %v4163
        %v4165 = vmul.f32 %v3989, 1.442695
        %v4166 = vpow.pop %v4165
        %v4167 = vmul.f32 %v3990, 1.442695
        %v4168 = vpow.pop %v4167
        %v4169 = vmul.f32 %v3991, 1.442695
        %v4170 = vpow.pop %v4169
        %v4171 = vmul.f32 %v3992, 1.442695
        %v4172 = vpow.pop %v4171
        %v4173 = vmul.f32 %v3993, 1.442695
        %v4174 = vpow.pop %v4173
        %v4175 = vmul.f32 %v3994, 1.442695
        %v4176 = vpow.pop %v4175
        %v4177 = vmul.f32 %v3995, 1.442695
        %v4178 = vpow.pop %v4177
        %v4179 = vmul.f32 %v3996, 1.442695
        %v4180 = vpow.pop %v4179
        %v4181 = vmul.f32 %v3997, 1.442695
        %v4182 = vpow.pop %v4181
        %v4183 = vmul.f32 %v3998, 1.442695
        %v4184 = vpow.pop %v4183
        %v4185 = vmul.f32 %v3999, 1.442695
        %v4186 = vpow.pop %v4185
        %v4187 = vmul.f32 %v4000, 1.442695
        %v4188 = vpow.pop %v4187
        %v4189 = vmul.f32 %v4001, 1.442695
        %v4190 = vpow.pop %v4189
        %v4191 = vmul.f32 %v4002, 1.442695
        %v4192 = vpow.pop %v4191
        %v4193 = vmul.f32 %v4003, 1.442695
        %v4194 = vpow.pop %v4193
        %v4195 = vmul.f32 %v4004, 1.442695
        %v4196 = vpow.pop %v4195
        %v4197 = vmul.f32 %v4005, 1.442695
        %v4198 = vpow.pop %v4197
        %v4199 = vmul.f32 %v4006, 1.442695
        %v4200 = vpow.pop %v4199
        %v4201 = vmul.f32 %v4007, 1.442695
        %v4202 = vpow.pop %v4201
        %v4203 = vmul.f32 %v4008, 1.442695
        %v4204 = vpow.pop %v4203
        %v4205 = vmul.f32 %v4009, 1.442695
        %v4206 = vpow.pop %v4205
        %v4207 = vmul.f32 %v4010, 1.442695
        %v4208 = vpow.pop %v4207
        %v4209 = vmul.f32 %v4011, 1.442695
        %v4210 = vpow.pop %v4209
        %v4211 = vmul.f32 %v4012, 1.442695
        %v4212 = vpow.pop %v4211
        %v4213 = vmul.f32 %v4013, 1.442695
        %v4214 = vpow.pop %v4213
        %v4215 = vmul.f32 %v4014, 1.442695
        %v4216 = vpow.pop %v4215
        %v4217 = vmul.f32 %v4015, 1.442695
        %v4218 = vpow.pop %v4217
        %v4219 = vmul.f32 %v4016, 1.442695
        %v4220 = vpow.pop %v4219
        %v4221 = vmul.f32 %v4017, 1.442695
        %v4222 = vpow.pop %v4221
        %v4223 = vmul.f32 %v4018, 1.442695
        %v4224 = vpow.pop %v4223
        %v4225 = vmul.f32 %v4019, 1.442695
        %v4226 = vpow.pop %v4225
        %v4227 = vmul.f32 %v4020, 1.442695
        %v4228 = vpow.pop %v4227
        %v4229 = vmul.f32 %v4021, 1.442695
        %v4230 = vpow.pop %v4229
        %v4231 = vmul.f32 %v4022, 1.442695
        %v4232 = vpow.pop %v4231
        %v4233 = vmul.f32 %v4023, 1.442695
        %v4234 = vpow.pop %v4233
        %v4235 = vmul.f32 %v4024, 1.442695
        %v4236 = vpow.pop %v4235
        %v4237 = vmul.f32 %v4025, 1.442695
        %v4238 = vpow.pop %v4237
        %v4239 = vmul.f32 %v4026, 1.442695
        %v4240 = vpow.pop %v4239
        %v4241 = vmul.f32 %v4027, 1.442695
        %v4242 = vpow.pop %v4241
        %v4243 = vmul.f32 %v4028, 1.442695
        %v4244 = vpow.pop %v4243
        %v4245 = vmul.f32 %v4029, 1.442695
        %v4246 = vpow.pop %v4245
        %v4247 = vmul.f32 %v4030, 1.442695
        %v4248 = vpow.pop %v4247
        %v4249 = vmul.f32 %v4031, 1.442695
        %v4250 = vpow.pop %v4249
        %v4251 = vmul.f32 %v4032, 1.442695
        %v4252 = vpow.pop %v4251
        %v4253 = vmul.f32 %v4033, 1.442695
        %v4254 = vpow.pop %v4253
        %v4255 = vmul.f32 %v4034, 1.442695
        %v4256 = vpow.pop %v4255
        %v4257 = vmul.f32 %v4035, 1.442695
        %v4258 = vpow.pop %v4257
        %v4259 = vmul.f32 %v4036, 1.442695
        %v4260 = vpow.pop %v4259
        %v4261 = vmul.f32 %v4037, 1.442695
        %v4262 = vpow.pop %v4261
        %v4263 = vmul.f32 %v4038, 1.442695
        %v4264 = vpow.pop %v4263
        %v4265 = vmul.f32 %v4039, 1.442695
        %v4266 = vpow.pop %v4265
        %v4267 = vmul.f32 %v4040, 1.442695
        %v4268 = vpow.pop %v4267
        %v4269 = vmul.f32 %v4041, 1.442695
        %v4270 = vpow.pop %v4269
        %v4271 = vmul.f32 %v4042, 1.442695
        %v4272 = vpow.pop %v4271
        %v4273 = vmul.f32 %v4043, 1.442695
        %v4274 = vpow.pop %v4273
        %v4275 = vmul.f32 %v4044, 1.442695
        %v4276 = vpow.pop %v4275
        %v4277 = vmul.f32 %v4045, 1.442695
        %v4278 = vpow.pop %v4277
        %v4279 = vmul.f32 %v4046, 1.442695
        %v4280 = vpow.pop %v4279
        %v4281 = vmul.f32 %v4047, 1.442695
        %v4282 = vpow.pop %v4281
        %v4283 = vmul.f32 %v4048, 1.442695
        %v4284 = vpow.pop %v4283
        %v4285 = vmul.f32 %v4049, 1.442695
        %v4286 = vpow.pop %v4285
        %v4287 = vmul.f32 %v4050, 1.442695
        %v4288 = vpow.pop %v4287
        %v4289 = vmul.f32 %v4051, 1.442695
        %v4290 = vpow.pop %v4289
        %v4291 = vmul.f32 %v4052, 1.442695
        %v4292 = vpow.pop %v4291
        %v4293 = vmul.f32 %v4053, 1.442695
        %v4294 = vpow.pop %v4293
        %v4295 = vmul.f32 %v4054, 1.442695
        %v4296 = vpow.pop %v4295
        %v4297 = vmul.f32 %v4055, 1.442695
        %v4298 = vpow.pop %v4297
        %v4299 = vmul.f32 %v4056, 1.442695
        %v4300 = vpow.pop %v4299
        %v4301 = vmul.f32 %v4057, 1.442695
        %v4302 = vpow.pop %v4301
        %v4303 = vmul.f32 %v4058, 1.442695
        %v4304 = vpow.pop %v4303
        %v4305 = vmul.f32 %v4059, 1.442695
        %v4306 = vpow.pop %v4305
        %v4307 = vmul.f32 %v4060, 1.442695
        %v4308 = vpow.pop %v4307
        %v4309 = vmul.f32 %v4061, 1.442695
        %v4310 = vpow.pop %v4309
        %v4311 = vmul.f32 %v4062, 1.442695
        %v4312 = vpow.pop %v4311
        %v4313 = vmul.f32 %v4063, 1.442695
        %v4314 = vpow.pop %v4313
        %v4315 = vmul.f32 %v4064, 1.442695
        %v4316 = vpow.pop %v4315
        %v4317 = vmul.f32 %v4065, 1.442695
        %v4318 = vpow.pop %v4317
        %v4319 = vmul.f32 %v4066, 1.442695
        %v4320 = vpow.pop %v4319
        %v4321 = vmul.f32 %v4067, 1.442695
        %v4322 = vpow.pop %v4321
        %v4323 = vmul.f32 %v4068, 1.442695
        %v4324 = vpow.pop %v4323
        %v4325 = vadd.f32 %v4070, %v4072
        %4326 = vadd.xlane.f32.xlu0 %v4325
        %v4327 = vpop.xlane.xlu0 %4326
        %v4328 = vadd.f32 %v4074, %v4076
        %4329 = vadd.xlane.f32.xlu0 %v4328
        %v4330 = vpop.xlane.xlu0 %4329
        %v4331 = vadd.f32 %v4078, %v4080
        %4332 = vadd.xlane.f32.xlu0 %v4331
        %v4333 = vpop.xlane.xlu0 %4332
        %v4334 = vadd.f32 %v4082, %v4084
        %4335 = vadd.xlane.f32.xlu0 %v4334
        %v4336 = vpop.xlane.xlu0 %4335
        %v4337 = vadd.f32 %v4086, %v4088
        %4338 = vadd.xlane.f32.xlu0 %v4337
        %v4339 = vpop.xlane.xlu0 %4338
        %v4340 = vadd.f32 %v4090, %v4092
        %4341 = vadd.xlane.f32.xlu0 %v4340
        %v4342 = vpop.xlane.xlu0 %4341
        %v4343 = vadd.f32 %v4094, %v4096
        %4344 = vadd.xlane.f32.xlu0 %v4343
        %v4345 = vpop.xlane.xlu0 %4344
        %v4346 = vadd.f32 %v4098, %v4100
        %4347 = vadd.xlane.f32.xlu0 %v4346
        %v4348 = vpop.xlane.xlu0 %4347
        %v4349 = vadd.f32 %v4102, %v4104
        %4350 = vadd.xlane.f32.xlu0 %v4349
        %v4351 = vpop.xlane.xlu0 %4350
        %v4352 = vadd.f32 %v4106, %v4108
        %4353 = vadd.xlane.f32.xlu0 %v4352
        %v4354 = vpop.xlane.xlu0 %4353
        %v4355 = vadd.f32 %v4110, %v4112
        %4356 = vadd.xlane.f32.xlu0 %v4355
        %v4357 = vpop.xlane.xlu0 %4356
        %v4358 = vadd.f32 %v4114, %v4116
        %4359 = vadd.xlane.f32.xlu0 %v4358
        %v4360 = vpop.xlane.xlu0 %4359
        %v4361 = vadd.f32 %v4118, %v4120
        %4362 = vadd.xlane.f32.xlu0 %v4361
        %v4363 = vpop.xlane.xlu0 %4362
        %v4364 = vadd.f32 %v4122, %v4124
        %4365 = vadd.xlane.f32.xlu0 %v4364
        %v4366 = vpop.xlane.xlu0 %4365
        %v4367 = vadd.f32 %v4126, %v4128
        %4368 = vadd.xlane.f32.xlu0 %v4367
        %v4369 = vpop.xlane.xlu0 %4368
        %v4370 = vadd.f32 %v4130, %v4132
        %4371 = vadd.xlane.f32.xlu0 %v4370
        %v4372 = vpop.xlane.xlu0 %4371
        %v4373 = vadd.f32 %v4134, %v4136
        %4374 = vadd.xlane.f32.xlu0 %v4373
        %v4375 = vpop.xlane.xlu0 %4374
        %v4376 = vadd.f32 %v4138, %v4140
        %4377 = vadd.xlane.f32.xlu0 %v4376
        %v4378 = vpop.xlane.xlu0 %4377
        %v4379 = vadd.f32 %v4142, %v4144
        %4380 = vadd.xlane.f32.xlu0 %v4379
        %v4381 = vpop.xlane.xlu0 %4380
        %v4382 = vadd.f32 %v4146, %v4148
        %4383 = vadd.xlane.f32.xlu0 %v4382
        %v4384 = vpop.xlane.xlu0 %4383
        %v4385 = vadd.f32 %v4150, %v4152
        %4386 = vadd.xlane.f32.xlu0 %v4385
        %v4387 = vpop.xlane.xlu0 %4386
        %v4388 = vadd.f32 %v4154, %v4156
        %4389 = vadd.xlane.f32.xlu0 %v4388
        %v4390 = vpop.xlane.xlu0 %4389
        %v4391 = vadd.f32 %v4158, %v4160
        %4392 = vadd.xlane.f32.xlu0 %v4391
        %v4393 = vpop.xlane.xlu0 %4392
        %v4394 = vadd.f32 %v4162, %v4164
        %4395 = vadd.xlane.f32.xlu0 %v4394
        %v4396 = vpop.xlane.xlu0 %4395
        %v4397 = vadd.f32 %v4166, %v4168
        %4398 = vadd.xlane.f32.xlu0 %v4397
        %v4399 = vpop.xlane.xlu0 %4398
        %v4400 = vadd.f32 %v4170, %v4172
        %4401 = vadd.xlane.f32.xlu0 %v4400
        %v4402 = vpop.xlane.xlu0 %4401
        %v4403 = vadd.f32 %v4174, %v4176
        %4404 = vadd.xlane.f32.xlu0 %v4403
        %v4405 = vpop.xlane.xlu0 %4404
        %v4406 = vadd.f32 %v4178, %v4180
        %4407 = vadd.xlane.f32.xlu0 %v4406
        %v4408 = vpop.xlane.xlu0 %4407
        %v4409 = vadd.f32 %v4182, %v4184
        %4410 = vadd.xlane.f32.xlu0 %v4409
        %v4411 = vpop.xlane.xlu0 %4410
        %v4412 = vadd.f32 %v4186, %v4188
        %4413 = vadd.xlane.f32.xlu0 %v4412
        %v4414 = vpop.xlane.xlu0 %4413
        %v4415 = vadd.f32 %v4190, %v4192
        %4416 = vadd.xlane.f32.xlu0 %v4415
        %v4417 = vpop.xlane.xlu0 %4416
        %v4418 = vadd.f32 %v4194, %v4196
        %4419 = vadd.xlane.f32.xlu0 %v4418
        %v4420 = vpop.xlane.xlu0 %4419
        %v4421 = vadd.f32 %v4198, %v4200
        %4422 = vadd.xlane.f32.xlu0 %v4421
        %v4423 = vpop.xlane.xlu0 %4422
        %v4424 = vadd.f32 %v4202, %v4204
        %4425 = vadd.xlane.f32.xlu0 %v4424
        %v4426 = vpop.xlane.xlu0 %4425
        %v4427 = vadd.f32 %v4206, %v4208
        %4428 = vadd.xlane.f32.xlu0 %v4427
        %v4429 = vpop.xlane.xlu0 %4428
        %v4430 = vadd.f32 %v4210, %v4212
        %4431 = vadd.xlane.f32.xlu0 %v4430
        %v4432 = vpop.xlane.xlu0 %4431
        %v4433 = vadd.f32 %v4214, %v4216
        %4434 = vadd.xlane.f32.xlu0 %v4433
        %v4435 = vpop.xlane.xlu0 %4434
        %v4436 = vadd.f32 %v4218, %v4220
        %4437 = vadd.xlane.f32.xlu0 %v4436
        %v4438 = vpop.xlane.xlu0 %4437
        %v4439 = vadd.f32 %v4222, %v4224
        %4440 = vadd.xlane.f32.xlu0 %v4439
        %v4441 = vpop.xlane.xlu0 %4440
        %v4442 = vadd.f32 %v4226, %v4228
        %4443 = vadd.xlane.f32.xlu0 %v4442
        %v4444 = vpop.xlane.xlu0 %4443
        %v4445 = vadd.f32 %v4230, %v4232
        %4446 = vadd.xlane.f32.xlu0 %v4445
        %v4447 = vpop.xlane.xlu0 %4446
        %v4448 = vadd.f32 %v4234, %v4236
        %4449 = vadd.xlane.f32.xlu0 %v4448
        %v4450 = vpop.xlane.xlu0 %4449
        %v4451 = vadd.f32 %v4238, %v4240
        %4452 = vadd.xlane.f32.xlu0 %v4451
        %v4453 = vpop.xlane.xlu0 %4452
        %v4454 = vadd.f32 %v4242, %v4244
        %4455 = vadd.xlane.f32.xlu0 %v4454
        %v4456 = vpop.xlane.xlu0 %4455
        %v4457 = vadd.f32 %v4246, %v4248
        %4458 = vadd.xlane.f32.xlu0 %v4457
        %v4459 = vpop.xlane.xlu0 %4458
        %v4460 = vadd.f32 %v4250, %v4252
        %4461 = vadd.xlane.f32.xlu0 %v4460
        %v4462 = vpop.xlane.xlu0 %4461
        %v4463 = vadd.f32 %v4254, %v4256
        %4464 = vadd.xlane.f32.xlu0 %v4463
        %v4465 = vpop.xlane.xlu0 %4464
        %v4466 = vadd.f32 %v4258, %v4260
        %4467 = vadd.xlane.f32.xlu0 %v4466
        %v4468 = vpop.xlane.xlu0 %4467
        %v4469 = vadd.f32 %v4262, %v4264
        %4470 = vadd.xlane.f32.xlu0 %v4469
        %v4471 = vpop.xlane.xlu0 %4470
        %v4472 = vadd.f32 %v4266, %v4268
        %4473 = vadd.xlane.f32.xlu0 %v4472
        %v4474 = vpop.xlane.xlu0 %4473
        %v4475 = vadd.f32 %v4270, %v4272
        %4476 = vadd.xlane.f32.xlu0 %v4475
        %v4477 = vpop.xlane.xlu0 %4476
        %v4478 = vadd.f32 %v4274, %v4276
        %4479 = vadd.xlane.f32.xlu0 %v4478
        %v4480 = vpop.xlane.xlu0 %4479
        %v4481 = vadd.f32 %v4278, %v4280
        %4482 = vadd.xlane.f32.xlu0 %v4481
        %v4483 = vpop.xlane.xlu0 %4482
        %v4484 = vadd.f32 %v4282, %v4284
        %4485 = vadd.xlane.f32.xlu0 %v4484
        %v4486 = vpop.xlane.xlu0 %4485
        %v4487 = vadd.f32 %v4286, %v4288
        %4488 = vadd.xlane.f32.xlu0 %v4487
        %v4489 = vpop.xlane.xlu0 %4488
        %v4490 = vadd.f32 %v4290, %v4292
        %4491 = vadd.xlane.f32.xlu0 %v4490
        %v4492 = vpop.xlane.xlu0 %4491
        %v4493 = vadd.f32 %v4294, %v4296
        %4494 = vadd.xlane.f32.xlu0 %v4493
        %v4495 = vpop.xlane.xlu0 %4494
        %v4496 = vadd.f32 %v4298, %v4300
        %4497 = vadd.xlane.f32.xlu0 %v4496
        %v4498 = vpop.xlane.xlu0 %4497
        %v4499 = vadd.f32 %v4302, %v4304
        %4500 = vadd.xlane.f32.xlu0 %v4499
        %v4501 = vpop.xlane.xlu0 %4500
        %v4502 = vadd.f32 %v4306, %v4308
        %4503 = vadd.xlane.f32.xlu0 %v4502
        %v4504 = vpop.xlane.xlu0 %4503
        %v4505 = vadd.f32 %v4310, %v4312
        %4506 = vadd.xlane.f32.xlu0 %v4505
        %v4507 = vpop.xlane.xlu0 %4506
        %v4508 = vadd.f32 %v4314, %v4316
        %4509 = vadd.xlane.f32.xlu0 %v4508
        %v4510 = vpop.xlane.xlu0 %4509
        %v4511 = vadd.f32 %v4318, %v4320
        %4512 = vadd.xlane.f32.xlu0 %v4511
        %v4513 = vpop.xlane.xlu0 %4512
        %v4514 = vadd.f32 %v4322, %v4324
        %4515 = vadd.xlane.f32.xlu0 %v4514
        %v4516 = vpop.xlane.xlu0 %4515
        %v4517 = vrcp.pop %v4327
        %v4518 = vrcp.pop %v4330
        %v4519 = vrcp.pop %v4333
        %v4520 = vrcp.pop %v4336
        %v4521 = vrcp.pop %v4339
        %v4522 = vrcp.pop %v4342
        %v4523 = vrcp.pop %v4345
        %v4524 = vrcp.pop %v4348
        %v4525 = vrcp.pop %v4351
        %v4526 = vrcp.pop %v4354
        %v4527 = vrcp.pop %v4357
        %v4528 = vrcp.pop %v4360
        %v4529 = vrcp.pop %v4363
        %v4530 = vrcp.pop %v4366
        %v4531 = vrcp.pop %v4369
        %v4532 = vrcp.pop %v4372
        %v4533 = vrcp.pop %v4375
        %v4534 = vrcp.pop %v4378
        %v4535 = vrcp.pop %v4381
        %v4536 = vrcp.pop %v4384
        %v4537 = vrcp.pop %v4387
        %v4538 = vrcp.pop %v4390
        %v4539 = vrcp.pop %v4393
        %v4540 = vrcp.pop %v4396
        %v4541 = vrcp.pop %v4399
        %v4542 = vrcp.pop %v4402
        %v4543 = vrcp.pop %v4405
        %v4544 = vrcp.pop %v4408
        %v4545 = vrcp.pop %v4411
        %v4546 = vrcp.pop %v4414
        %v4547 = vrcp.pop %v4417
        %v4548 = vrcp.pop %v4420
        %v4549 = vrcp.pop %v4423
        %v4550 = vrcp.pop %v4426
        %v4551 = vrcp.pop %v4429
        %v4552 = vrcp.pop %v4432
        %v4553 = vrcp.pop %v4435
        %v4554 = vrcp.pop %v4438
        %v4555 = vrcp.pop %v4441
        %v4556 = vrcp.pop %v4444
        %v4557 = vrcp.pop %v4447
        %v4558 = vrcp.pop %v4450
        %v4559 = vrcp.pop %v4453
        %v4560 = vrcp.pop %v4456
        %v4561 = vrcp.pop %v4459
        %v4562 = vrcp.pop %v4462
        %v4563 = vrcp.pop %v4465
        %v4564 = vrcp.pop %v4468
        %v4565 = vrcp.pop %v4471
        %v4566 = vrcp.pop %v4474
        %v4567 = vrcp.pop %v4477
        %v4568 = vrcp.pop %v4480
        %v4569 = vrcp.pop %v4483
        %v4570 = vrcp.pop %v4486
        %v4571 = vrcp.pop %v4489
        %v4572 = vrcp.pop %v4492
        %v4573 = vrcp.pop %v4495
        %v4574 = vrcp.pop %v4498
        %v4575 = vrcp.pop %v4501
        %v4576 = vrcp.pop %v4504
        %v4577 = vrcp.pop %v4507
        %v4578 = vrcp.pop %v4510
        %v4579 = vrcp.pop %v4513
        %v4580 = vrcp.pop %v4516
        %v4581 = vmul.f32 %v4070, %v4517
        %v4582 = vmul.f32 %v4072, %v4517
        %v4583 = vmul.f32 %v4074, %v4518
        %v4584 = vmul.f32 %v4076, %v4518
        %v4585 = vmul.f32 %v4078, %v4519
        %v4586 = vmul.f32 %v4080, %v4519
        %v4587 = vmul.f32 %v4082, %v4520
        %v4588 = vmul.f32 %v4084, %v4520
        %v4589 = vmul.f32 %v4086, %v4521
        %v4590 = vmul.f32 %v4088, %v4521
        %v4591 = vmul.f32 %v4090, %v4522
        %v4592 = vmul.f32 %v4092, %v4522
        %v4593 = vmul.f32 %v4094, %v4523
        %v4594 = vmul.f32 %v4096, %v4523
        %v4595 = vmul.f32 %v4098, %v4524
        %v4596 = vmul.f32 %v4100, %v4524
        %v4597 = vmul.f32 %v4102, %v4525
        %v4598 = vmul.f32 %v4104, %v4525
        %v4599 = vmul.f32 %v4106, %v4526
        %v4600 = vmul.f32 %v4108, %v4526
        %v4601 = vmul.f32 %v4110, %v4527
        %v4602 = vmul.f32 %v4112, %v4527
        %v4603 = vmul.f32 %v4114, %v4528
        %v4604 = vmul.f32 %v4116, %v4528
        %v4605 = vmul.f32 %v4118, %v4529
        %v4606 = vmul.f32 %v4120, %v4529
        %v4607 = vmul.f32 %v4122, %v4530
        %v4608 = vmul.f32 %v4124, %v4530
        %v4609 = vmul.f32 %v4126, %v4531
        %v4610 = vmul.f32 %v4128, %v4531
        %v4611 = vmul.f32 %v4130, %v4532
        %v4612 = vmul.f32 %v4132, %v4532
        %v4613 = vmul.f32 %v4134, %v4533
        %v4614 = vmul.f32 %v4136, %v4533
        %v4615 = vmul.f32 %v4138, %v4534
        %v4616 = vmul.f32 %v4140, %v4534
        %v4617 = vmul.f32 %v4142, %v4535
        %v4618 = vmul.f32 %v4144, %v4535
        %v4619 = vmul.f32 %v4146, %v4536
        %v4620 = vmul.f32 %v4148, %v4536
        %v4621 = vmul.f32 %v4150, %v4537
        %v4622 = vmul.f32 %v4152, %v4537
        %v4623 = vmul.f32 %v4154, %v4538
        %v4624 = vmul.f32 %v4156, %v4538
        %v4625 = vmul.f32 %v4158, %v4539
        %v4626 = vmul.f32 %v4160, %v4539
        %v4627 = vmul.f32 %v4162, %v4540
        %v4628 = vmul.f32 %v4164, %v4540
        %v4629 = vmul.f32 %v4166, %v4541
        %v4630 = vmul.f32 %v4168, %v4541
        %v4631 = vmul.f32 %v4170, %v4542
        %v4632 = vmul.f32 %v4172, %v4542
        %v4633 = vmul.f32 %v4174, %v4543
        %v4634 = vmul.f32 %v4176, %v4543
        %v4635 = vmul.f32 %v4178, %v4544
        %v4636 = vmul.f32 %v4180, %v4544
        %v4637 = vmul.f32 %v4182, %v4545
        %v4638 = vmul.f32 %v4184, %v4545
        %v4639 = vmul.f32 %v4186, %v4546
        %v4640 = vmul.f32 %v4188, %v4546
        %v4641 = vmul.f32 %v4190, %v4547
        %v4642 = vmul.f32 %v4192, %v4547
        %v4643 = vmul.f32 %v4194, %v4548
        %v4644 = vmul.f32 %v4196, %v4548
        %v4645 = vmul.f32 %v4198, %v4549
        %v4646 = vmul.f32 %v4200, %v4549
        %v4647 = vmul.f32 %v4202, %v4550
        %v4648 = vmul.f32 %v4204, %v4550
        %v4649 = vmul.f32 %v4206, %v4551
        %v4650 = vmul.f32 %v4208, %v4551
        %v4651 = vmul.f32 %v4210, %v4552
        %v4652 = vmul.f32 %v4212, %v4552
        %v4653 = vmul.f32 %v4214, %v4553
        %v4654 = vmul.f32 %v4216, %v4553
        %v4655 = vmul.f32 %v4218, %v4554
        %v4656 = vmul.f32 %v4220, %v4554
        %v4657 = vmul.f32 %v4222, %v4555
        %v4658 = vmul.f32 %v4224, %v4555
        %v4659 = vmul.f32 %v4226, %v4556
        %v4660 = vmul.f32 %v4228, %v4556
        %v4661 = vmul.f32 %v4230, %v4557
        %v4662 = vmul.f32 %v4232, %v4557
        %v4663 = vmul.f32 %v4234, %v4558
        %v4664 = vmul.f32 %v4236, %v4558
        %v4665 = vmul.f32 %v4238, %v4559
        %v4666 = vmul.f32 %v4240, %v4559
        %v4667 = vmul.f32 %v4242, %v4560
        %v4668 = vmul.f32 %v4244, %v4560
        %v4669 = vmul.f32 %v4246, %v4561
        %v4670 = vmul.f32 %v4248, %v4561
        %v4671 = vmul.f32 %v4250, %v4562
        %v4672 = vmul.f32 %v4252, %v4562
        %v4673 = vmul.f32 %v4254, %v4563
        %v4674 = vmul.f32 %v4256, %v4563
        %v4675 = vmul.f32 %v4258, %v4564
        %v4676 = vmul.f32 %v4260, %v4564
        %v4677 = vmul.f32 %v4262, %v4565
        %v4678 = vmul.f32 %v4264, %v4565
        %v4679 = vmul.f32 %v4266, %v4566
        %v4680 = vmul.f32 %v4268, %v4566
        %v4681 = vmul.f32 %v4270, %v4567
        %v4682 = vmul.f32 %v4272, %v4567
        %v4683 = vmul.f32 %v4274, %v4568
        %v4684 = vmul.f32 %v4276, %v4568
        %v4685 = vmul.f32 %v4278, %v4569
        %v4686 = vmul.f32 %v4280, %v4569
        %v4687 = vmul.f32 %v4282, %v4570
        %v4688 = vmul.f32 %v4284, %v4570
        %v4689 = vmul.f32 %v4286, %v4571
        %v4690 = vmul.f32 %v4288, %v4571
        %v4691 = vmul.f32 %v4290, %v4572
        %v4692 = vmul.f32 %v4292, %v4572
        %v4693 = vmul.f32 %v4294, %v4573
        %v4694 = vmul.f32 %v4296, %v4573
        %v4695 = vmul.f32 %v4298, %v4574
        %v4696 = vmul.f32 %v4300, %v4574
        %v4697 = vmul.f32 %v4302, %v4575
        %v4698 = vmul.f32 %v4304, %v4575
        %v4699 = vmul.f32 %v4306, %v4576
        %v4700 = vmul.f32 %v4308, %v4576
        %v4701 = vmul.f32 %v4310, %v4577
        %v4702 = vmul.f32 %v4312, %v4577
        %v4703 = vmul.f32 %v4314, %v4578
        %v4704 = vmul.f32 %v4316, %v4578
        %v4705 = vmul.f32 %v4318, %v4579
        %v4706 = vmul.f32 %v4320, %v4579
        %v4707 = vmul.f32 %v4322, %v4580
        %v4708 = vmul.f32 %v4324, %v4580
        %v4709 = vpack.c.bf16 %v4583, %v4581
        %v4710 = vpack.c.bf16 %v4584, %v4582
        %v4711 = vpack.c.bf16 %v4587, %v4585
        %v4712 = vpack.c.bf16 %v4588, %v4586
        %v4713 = vpack.c.bf16 %v4591, %v4589
        %v4714 = vpack.c.bf16 %v4592, %v4590
        %v4715 = vpack.c.bf16 %v4595, %v4593
        %v4716 = vpack.c.bf16 %v4596, %v4594
        %v4717 = vpack.c.bf16 %v4599, %v4597
        %v4718 = vpack.c.bf16 %v4600, %v4598
        %v4719 = vpack.c.bf16 %v4603, %v4601
        %v4720 = vpack.c.bf16 %v4604, %v4602
        %v4721 = vpack.c.bf16 %v4607, %v4605
        %v4722 = vpack.c.bf16 %v4608, %v4606
        %v4723 = vpack.c.bf16 %v4611, %v4609
        %v4724 = vpack.c.bf16 %v4612, %v4610
        %v4725 = vpack.c.bf16 %v4615, %v4613
        %v4726 = vpack.c.bf16 %v4616, %v4614
        %v4727 = vpack.c.bf16 %v4619, %v4617
        %v4728 = vpack.c.bf16 %v4620, %v4618
        %v4729 = vpack.c.bf16 %v4623, %v4621
        %v4730 = vpack.c.bf16 %v4624, %v4622
        %v4731 = vpack.c.bf16 %v4627, %v4625
        %v4732 = vpack.c.bf16 %v4628, %v4626
        %v4733 = vpack.c.bf16 %v4631, %v4629
        %v4734 = vpack.c.bf16 %v4632, %v4630
        %v4735 = vpack.c.bf16 %v4635, %v4633
        %v4736 = vpack.c.bf16 %v4636, %v4634
        %v4737 = vpack.c.bf16 %v4639, %v4637
        %v4738 = vpack.c.bf16 %v4640, %v4638
        %v4739 = vpack.c.bf16 %v4643, %v4641
        %v4740 = vpack.c.bf16 %v4644, %v4642
        %v4741 = vpack.c.bf16 %v4647, %v4645
        %v4742 = vpack.c.bf16 %v4648, %v4646
        %v4743 = vpack.c.bf16 %v4651, %v4649
        %v4744 = vpack.c.bf16 %v4652, %v4650
        %v4745 = vpack.c.bf16 %v4655, %v4653
        %v4746 = vpack.c.bf16 %v4656, %v4654
        %v4747 = vpack.c.bf16 %v4659, %v4657
        %v4748 = vpack.c.bf16 %v4660, %v4658
        %v4749 = vpack.c.bf16 %v4663, %v4661
        %v4750 = vpack.c.bf16 %v4664, %v4662
        %v4751 = vpack.c.bf16 %v4667, %v4665
        %v4752 = vpack.c.bf16 %v4668, %v4666
        %v4753 = vpack.c.bf16 %v4671, %v4669
        %v4754 = vpack.c.bf16 %v4672, %v4670
        %v4755 = vpack.c.bf16 %v4675, %v4673
        %v4756 = vpack.c.bf16 %v4676, %v4674
        %v4757 = vpack.c.bf16 %v4679, %v4677
        %v4758 = vpack.c.bf16 %v4680, %v4678
        %v4759 = vpack.c.bf16 %v4683, %v4681
        %v4760 = vpack.c.bf16 %v4684, %v4682
        %v4761 = vpack.c.bf16 %v4687, %v4685
        %v4762 = vpack.c.bf16 %v4688, %v4686
        %v4763 = vpack.c.bf16 %v4691, %v4689
        %v4764 = vpack.c.bf16 %v4692, %v4690
        %v4765 = vpack.c.bf16 %v4695, %v4693
        %v4766 = vpack.c.bf16 %v4696, %v4694
        %v4767 = vpack.c.bf16 %v4699, %v4697
        %v4768 = vpack.c.bf16 %v4700, %v4698
        %v4769 = vpack.c.bf16 %v4703, %v4701
        %v4770 = vpack.c.bf16 %v4704, %v4702
        %v4771 = vpack.c.bf16 %v4707, %v4705
        %v4772 = vpack.c.bf16 %v4708, %v4706
        %4773 = vmatprep.subr.bf16.mxu0 0
        %4774 = vmatpush1.bf16.msra.mxu0 %v2695
        %4775 = vmatprep.subr.bf16.mxu0 0
        %4776 = vmatpush1.bf16.msra.mxu0 %v2694
        %4777 = vmatprep.subr.bf16.mxu0 0
        %4778 = vmatpush1.bf16.msra.mxu0 %v2693
        %4779 = vmatprep.subr.bf16.mxu0 0
        %4780 = vmatpush1.bf16.msra.mxu0 %v2692
        %4781 = vmatprep.subr.bf16.mxu0 0
        %4782 = vmatpush1.bf16.msra.mxu0 %v2691
        %4783 = vmatprep.subr.bf16.mxu0 0
        %4784 = vmatpush1.bf16.msra.mxu0 %v2690
        %4785 = vmatprep.subr.bf16.mxu0 0
        %4786 = vmatpush1.bf16.msra.mxu0 %v2689
        %4787 = vmatprep.subr.bf16.mxu0 0
        %4788 = vmatpush1.bf16.msra.mxu0 %v2688
        %4789 = vmatprep.subr.bf16.mxu0 0
        %4790 = vmatpush2.bf16.msra.mxu0 %v2703
        %4791 = vmatprep.subr.bf16.mxu0 0
        %4792 = vmatpush2.bf16.msra.mxu0 %v2702
        %4793 = vmatprep.subr.bf16.mxu0 0
        %4794 = vmatpush2.bf16.msra.mxu0 %v2701
        %4795 = vmatprep.subr.bf16.mxu0 0
        %4796 = vmatpush2.bf16.msra.mxu0 %v2700
        %4797 = vmatprep.subr.bf16.mxu0 0
        %4798 = vmatpush2.bf16.msra.mxu0 %v2699
        %4799 = vmatprep.subr.bf16.mxu0 0
        %4800 = vmatpush2.bf16.msra.mxu0 %v2698
        %4801 = vmatprep.subr.bf16.mxu0 0
        %4802 = vmatpush2.bf16.msra.mxu0 %v2697
        %4803 = vmatprep.subr.bf16.mxu0 0
        %4804 = vmatpush2.bf16.msra.mxu0 %v2696
        %4805 = vmatprep.mubr.bf16.mxu0 %v4710
        %4806 = vmatmul.mubr.bf16.gmra.mxu0 %v4709
        %v4807 = vpop.f32.mrf.mxu0
        %v4808 = vadd.f32 0.0, %v4807
        %v4809 = vpop.f32.mrf.mxu0
        %v4810 = vpop.f32.mrf.mxu0
        %v4811 = vadd.f32 0.0, %v4810
        %v4812 = vpop.f32.mrf.mxu0
        %4813 = vmatprep.mubr.bf16.mxu0 %v4712
        %4814 = vmatmul.mubr.bf16.gmra.mxu0 %v4711
        %v4815 = vpop.f32.mrf.mxu0
        %v4816 = vadd.f32 0.0, %v4815
        %v4817 = vpop.f32.mrf.mxu0
        %v4818 = vpop.f32.mrf.mxu0
        %v4819 = vadd.f32 0.0, %v4818
        %v4820 = vpop.f32.mrf.mxu0
        %4821 = vmatprep.mubr.bf16.mxu0 %v4714
        %4822 = vmatmul.mubr.bf16.gmra.mxu0 %v4713
        %v4823 = vpop.f32.mrf.mxu0
        %v4824 = vadd.f32 0.0, %v4823
        %v4825 = vpop.f32.mrf.mxu0
        %v4826 = vpop.f32.mrf.mxu0
        %v4827 = vadd.f32 0.0, %v4826
        %v4828 = vpop.f32.mrf.mxu0
        %4829 = vmatprep.mubr.bf16.mxu0 %v4716
        %4830 = vmatmul.mubr.bf16.gmra.mxu0 %v4715
        %v4831 = vpop.f32.mrf.mxu0
        %v4832 = vadd.f32 0.0, %v4831
        %v4833 = vpop.f32.mrf.mxu0
        %v4834 = vpop.f32.mrf.mxu0
        %v4835 = vadd.f32 0.0, %v4834
        %v4836 = vpop.f32.mrf.mxu0
        %4837 = vmatprep.mubr.bf16.mxu0 %v4718
        %4838 = vmatmul.mubr.bf16.gmra.mxu0 %v4717
        %v4839 = vpop.f32.mrf.mxu0
        %v4840 = vadd.f32 0.0, %v4839
        %v4841 = vpop.f32.mrf.mxu0
        %v4842 = vpop.f32.mrf.mxu0
        %v4843 = vadd.f32 0.0, %v4842
        %v4844 = vpop.f32.mrf.mxu0
        %4845 = vmatprep.mubr.bf16.mxu0 %v4720
        %4846 = vmatmul.mubr.bf16.gmra.mxu0 %v4719
        %v4847 = vpop.f32.mrf.mxu0
        %v4848 = vadd.f32 0.0, %v4847
        %v4849 = vpop.f32.mrf.mxu0
        %v4850 = vpop.f32.mrf.mxu0
        %v4851 = vadd.f32 0.0, %v4850
        %v4852 = vpop.f32.mrf.mxu0
        %4853 = vmatprep.mubr.bf16.mxu0 %v4722
        %4854 = vmatmul.mubr.bf16.gmra.mxu0 %v4721
        %v4855 = vpop.f32.mrf.mxu0
        %v4856 = vadd.f32 0.0, %v4855
        %v4857 = vpop.f32.mrf.mxu0
        %v4858 = vpop.f32.mrf.mxu0
        %v4859 = vadd.f32 0.0, %v4858
        %v4860 = vpop.f32.mrf.mxu0
        %4861 = vmatprep.mubr.bf16.mxu0 %v4724
        %4862 = vmatmul.mubr.bf16.gmra.mxu0 %v4723
        %v4863 = vpop.f32.mrf.mxu0
        %v4864 = vadd.f32 0.0, %v4863
        %v4865 = vpop.f32.mrf.mxu0
        %v4866 = vpop.f32.mrf.mxu0
        %v4867 = vadd.f32 0.0, %v4866
        %v4868 = vpop.f32.mrf.mxu0
        %4869 = vdwg.mxu0
        %4870 = vmatprep.subr.bf16.mxu0 0
        %4871 = vmatpush1.bf16.msra.mxu0 %v2711
        %4872 = vmatprep.subr.bf16.mxu0 0
        %4873 = vmatpush1.bf16.msra.mxu0 %v2710
        %4874 = vmatprep.subr.bf16.mxu0 0
        %4875 = vmatpush1.bf16.msra.mxu0 %v2709
        %4876 = vmatprep.subr.bf16.mxu0 0
        %4877 = vmatpush1.bf16.msra.mxu0 %v2708
        %4878 = vmatprep.subr.bf16.mxu0 0
        %4879 = vmatpush1.bf16.msra.mxu0 %v2707
        %4880 = vmatprep.subr.bf16.mxu0 0
        %4881 = vmatpush1.bf16.msra.mxu0 %v2706
        %4882 = vmatprep.subr.bf16.mxu0 0
        %4883 = vmatpush1.bf16.msra.mxu0 %v2705
        %4884 = vmatprep.subr.bf16.mxu0 0
        %4885 = vmatpush1.bf16.msra.mxu0 %v2704
        %4886 = vmatprep.subr.bf16.mxu0 0
        %4887 = vmatpush2.bf16.msra.mxu0 %v2719
        %4888 = vmatprep.subr.bf16.mxu0 0
        %4889 = vmatpush2.bf16.msra.mxu0 %v2718
        %4890 = vmatprep.subr.bf16.mxu0 0
        %4891 = vmatpush2.bf16.msra.mxu0 %v2717
        %4892 = vmatprep.subr.bf16.mxu0 0
        %4893 = vmatpush2.bf16.msra.mxu0 %v2716
        %4894 = vmatprep.subr.bf16.mxu0 0
        %4895 = vmatpush2.bf16.msra.mxu0 %v2715
        %4896 = vmatprep.subr.bf16.mxu0 0
        %4897 = vmatpush2.bf16.msra.mxu0 %v2714
        %4898 = vmatprep.subr.bf16.mxu0 0
        %4899 = vmatpush2.bf16.msra.mxu0 %v2713
        %4900 = vmatprep.subr.bf16.mxu0 0
        %4901 = vmatpush2.bf16.msra.mxu0 %v2712
        %4902 = vmatprep.mubr.bf16.mxu0 %v4726
        %4903 = vmatmul.mubr.bf16.gmra.mxu0 %v4725
        %v4904 = vpop.f32.mrf.mxu0
        %v4905 = vadd.f32 0.0, %v4904
        %v4906 = vpop.f32.mrf.mxu0
        %v4907 = vpop.f32.mrf.mxu0
        %v4908 = vadd.f32 0.0, %v4907
        %v4909 = vpop.f32.mrf.mxu0
        %4910 = vmatprep.mubr.bf16.mxu0 %v4728
        %4911 = vmatmul.mubr.bf16.gmra.mxu0 %v4727
        %v4912 = vpop.f32.mrf.mxu0
        %v4913 = vadd.f32 0.0, %v4912
        %v4914 = vpop.f32.mrf.mxu0
        %v4915 = vpop.f32.mrf.mxu0
        %v4916 = vadd.f32 0.0, %v4915
        %v4917 = vpop.f32.mrf.mxu0
        %4918 = vmatprep.mubr.bf16.mxu0 %v4730
        %4919 = vmatmul.mubr.bf16.gmra.mxu0 %v4729
        %v4920 = vpop.f32.mrf.mxu0
        %v4921 = vadd.f32 0.0, %v4920
        %v4922 = vpop.f32.mrf.mxu0
        %v4923 = vpop.f32.mrf.mxu0
        %v4924 = vadd.f32 0.0, %v4923
        %v4925 = vpop.f32.mrf.mxu0
        %4926 = vmatprep.mubr.bf16.mxu0 %v4732
        %4927 = vmatmul.mubr.bf16.gmra.mxu0 %v4731
        %v4928 = vpop.f32.mrf.mxu0
        %v4929 = vadd.f32 0.0, %v4928
        %v4930 = vpop.f32.mrf.mxu0
        %v4931 = vpop.f32.mrf.mxu0
        %v4932 = vadd.f32 0.0, %v4931
        %v4933 = vpop.f32.mrf.mxu0
        %4934 = vmatprep.mubr.bf16.mxu0 %v4734
        %4935 = vmatmul.mubr.bf16.gmra.mxu0 %v4733
        %v4936 = vpop.f32.mrf.mxu0
        %v4937 = vadd.f32 0.0, %v4936
        %v4938 = vpop.f32.mrf.mxu0
        %v4939 = vpop.f32.mrf.mxu0
        %v4940 = vadd.f32 0.0, %v4939
        %v4941 = vpop.f32.mrf.mxu0
        %4942 = vmatprep.mubr.bf16.mxu0 %v4736
        %4943 = vmatmul.mubr.bf16.gmra.mxu0 %v4735
        %v4944 = vpop.f32.mrf.mxu0
        %v4945 = vadd.f32 0.0, %v4944
        %v4946 = vpop.f32.mrf.mxu0
        %v4947 = vpop.f32.mrf.mxu0
        %v4948 = vadd.f32 0.0, %v4947
        %v4949 = vpop.f32.mrf.mxu0
        %4950 = vmatprep.mubr.bf16.mxu0 %v4738
        %4951 = vmatmul.mubr.bf16.gmra.mxu0 %v4737
        %v4952 = vpop.f32.mrf.mxu0
        %v4953 = vadd.f32 0.0, %v4952
        %v4954 = vpop.f32.mrf.mxu0
        %v4955 = vpop.f32.mrf.mxu0
        %v4956 = vadd.f32 0.0, %v4955
        %v4957 = vpop.f32.mrf.mxu0
        %4958 = vmatprep.mubr.bf16.mxu0 %v4740
        %4959 = vmatmul.mubr.bf16.gmra.mxu0 %v4739
        %v4960 = vpop.f32.mrf.mxu0
        %v4961 = vadd.f32 0.0, %v4960
        %v4962 = vpop.f32.mrf.mxu0
        %v4963 = vpop.f32.mrf.mxu0
        %v4964 = vadd.f32 0.0, %v4963
        %v4965 = vpop.f32.mrf.mxu0
        %4966 = vdwg.mxu0
        %4967 = vmatprep.subr.bf16.mxu0 0
        %4968 = vmatpush1.bf16.msra.mxu0 %v2727
        %4969 = vmatprep.subr.bf16.mxu0 0
        %4970 = vmatpush1.bf16.msra.mxu0 %v2726
        %4971 = vmatprep.subr.bf16.mxu0 0
        %4972 = vmatpush1.bf16.msra.mxu0 %v2725
        %4973 = vmatprep.subr.bf16.mxu0 0
        %4974 = vmatpush1.bf16.msra.mxu0 %v2724
        %4975 = vmatprep.subr.bf16.mxu0 0
        %4976 = vmatpush1.bf16.msra.mxu0 %v2723
        %4977 = vmatprep.subr.bf16.mxu0 0
        %4978 = vmatpush1.bf16.msra.mxu0 %v2722
        %4979 = vmatprep.subr.bf16.mxu0 0
        %4980 = vmatpush1.bf16.msra.mxu0 %v2721
        %4981 = vmatprep.subr.bf16.mxu0 0
        %4982 = vmatpush1.bf16.msra.mxu0 %v2720
        %4983 = vmatprep.subr.bf16.mxu0 0
        %4984 = vmatpush2.bf16.msra.mxu0 %v2735
        %4985 = vmatprep.subr.bf16.mxu0 0
        %4986 = vmatpush2.bf16.msra.mxu0 %v2734
        %4987 = vmatprep.subr.bf16.mxu0 0
        %4988 = vmatpush2.bf16.msra.mxu0 %v2733
        %4989 = vmatprep.subr.bf16.mxu0 0
        %4990 = vmatpush2.bf16.msra.mxu0 %v2732
        %4991 = vmatprep.subr.bf16.mxu0 0
        %4992 = vmatpush2.bf16.msra.mxu0 %v2731
        %4993 = vmatprep.subr.bf16.mxu0 0
        %4994 = vmatpush2.bf16.msra.mxu0 %v2730
        %4995 = vmatprep.subr.bf16.mxu0 0
        %4996 = vmatpush2.bf16.msra.mxu0 %v2729
        %4997 = vmatprep.subr.bf16.mxu0 0
        %4998 = vmatpush2.bf16.msra.mxu0 %v2728
        %4999 = vmatprep.mubr.bf16.mxu0 %v4742
        %5000 = vmatmul.mubr.bf16.gmra.mxu0 %v4741
        %v5001 = vpop.f32.mrf.mxu0
        %v5002 = vadd.f32 0.0, %v5001
        %v5003 = vpop.f32.mrf.mxu0
        %v5004 = vpop.f32.mrf.mxu0
        %v5005 = vadd.f32 0.0, %v5004
        %v5006 = vpop.f32.mrf.mxu0
        %5007 = vmatprep.mubr.bf16.mxu0 %v4744
        %5008 = vmatmul.mubr.bf16.gmra.mxu0 %v4743
        %v5009 = vpop.f32.mrf.mxu0
        %v5010 = vadd.f32 0.0, %v5009
        %v5011 = vpop.f32.mrf.mxu0
        %v5012 = vpop.f32.mrf.mxu0
        %v5013 = vadd.f32 0.0, %v5012
        %v5014 = vpop.f32.mrf.mxu0
        %5015 = vmatprep.mubr.bf16.mxu0 %v4746
        %5016 = vmatmul.mubr.bf16.gmra.mxu0 %v4745
        %v5017 = vpop.f32.mrf.mxu0
        %v5018 = vadd.f32 0.0, %v5017
        %v5019 = vpop.f32.mrf.mxu0
        %v5020 = vpop.f32.mrf.mxu0
        %v5021 = vadd.f32 0.0, %v5020
        %v5022 = vpop.f32.mrf.mxu0
        %5023 = vmatprep.mubr.bf16.mxu0 %v4748
        %5024 = vmatmul.mubr.bf16.gmra.mxu0 %v4747
        %v5025 = vpop.f32.mrf.mxu0
        %v5026 = vadd.f32 0.0, %v5025
        %v5027 = vpop.f32.mrf.mxu0
        %v5028 = vpop.f32.mrf.mxu0
        %v5029 = vadd.f32 0.0, %v5028
        %v5030 = vpop.f32.mrf.mxu0
        %5031 = vmatprep.mubr.bf16.mxu0 %v4750
        %5032 = vmatmul.mubr.bf16.gmra.mxu0 %v4749
        %v5033 = vpop.f32.mrf.mxu0
        %v5034 = vadd.f32 0.0, %v5033
        %v5035 = vpop.f32.mrf.mxu0
        %v5036 = vpop.f32.mrf.mxu0
        %v5037 = vadd.f32 0.0, %v5036
        %v5038 = vpop.f32.mrf.mxu0
        %5039 = vmatprep.mubr.bf16.mxu0 %v4752
        %5040 = vmatmul.mubr.bf16.gmra.mxu0 %v4751
        %v5041 = vpop.f32.mrf.mxu0
        %v5042 = vadd.f32 0.0, %v5041
        %v5043 = vpop.f32.mrf.mxu0
        %v5044 = vpop.f32.mrf.mxu0
        %v5045 = vadd.f32 0.0, %v5044
        %v5046 = vpop.f32.mrf.mxu0
        %5047 = vmatprep.mubr.bf16.mxu0 %v4754
        %5048 = vmatmul.mubr.bf16.gmra.mxu0 %v4753
        %v5049 = vpop.f32.mrf.mxu0
        %v5050 = vadd.f32 0.0, %v5049
        %v5051 = vpop.f32.mrf.mxu0
        %v5052 = vpop.f32.mrf.mxu0
        %v5053 = vadd.f32 0.0, %v5052
        %v5054 = vpop.f32.mrf.mxu0
        %5055 = vmatprep.mubr.bf16.mxu0 %v4756
        %5056 = vmatmul.mubr.bf16.gmra.mxu0 %v4755
        %v5057 = vpop.f32.mrf.mxu0
        %v5058 = vadd.f32 0.0, %v5057
        %v5059 = vpop.f32.mrf.mxu0
        %v5060 = vpop.f32.mrf.mxu0
        %v5061 = vadd.f32 0.0, %v5060
        %v5062 = vpop.f32.mrf.mxu0
        %5063 = vdwg.mxu0
        %5064 = vmatprep.subr.bf16.mxu0 0
        %5065 = vmatpush1.bf16.msra.mxu0 %v2743
        %5066 = vmatprep.subr.bf16.mxu0 0
        %5067 = vmatpush1.bf16.msra.mxu0 %v2742
        %5068 = vmatprep.subr.bf16.mxu0 0
        %5069 = vmatpush1.bf16.msra.mxu0 %v2741
        %5070 = vmatprep.subr.bf16.mxu0 0
        %5071 = vmatpush1.bf16.msra.mxu0 %v2740
        %5072 = vmatprep.subr.bf16.mxu0 0
        %5073 = vmatpush1.bf16.msra.mxu0 %v2739
        %5074 = vmatprep.subr.bf16.mxu0 0
        %5075 = vmatpush1.bf16.msra.mxu0 %v2738
        %5076 = vmatprep.subr.bf16.mxu0 0
        %5077 = vmatpush1.bf16.msra.mxu0 %v2737
        %5078 = vmatprep.subr.bf16.mxu0 0
        %5079 = vmatpush1.bf16.msra.mxu0 %v2736
        %5080 = vmatprep.subr.bf16.mxu0 0
        %5081 = vmatpush2.bf16.msra.mxu0 %v2751
        %5082 = vmatprep.subr.bf16.mxu0 0
        %5083 = vmatpush2.bf16.msra.mxu0 %v2750
        %5084 = vmatprep.subr.bf16.mxu0 0
        %5085 = vmatpush2.bf16.msra.mxu0 %v2749
        %5086 = vmatprep.subr.bf16.mxu0 0
        %5087 = vmatpush2.bf16.msra.mxu0 %v2748
        %5088 = vmatprep.subr.bf16.mxu0 0
        %5089 = vmatpush2.bf16.msra.mxu0 %v2747
        %5090 = vmatprep.subr.bf16.mxu0 0
        %5091 = vmatpush2.bf16.msra.mxu0 %v2746
        %5092 = vmatprep.subr.bf16.mxu0 0
        %5093 = vmatpush2.bf16.msra.mxu0 %v2745
        %5094 = vmatprep.subr.bf16.mxu0 0
        %5095 = vmatpush2.bf16.msra.mxu0 %v2744
        %5096 = vmatprep.mubr.bf16.mxu0 %v4758
        %5097 = vmatmul.mubr.bf16.gmra.mxu0 %v4757
        %v5098 = vpop.f32.mrf.mxu0
        %v5099 = vadd.f32 0.0, %v5098
        %v5100 = vpop.f32.mrf.mxu0
        %v5101 = vpop.f32.mrf.mxu0
        %v5102 = vadd.f32 0.0, %v5101
        %v5103 = vpop.f32.mrf.mxu0
        %5104 = vmatprep.mubr.bf16.mxu0 %v4760
        %5105 = vmatmul.mubr.bf16.gmra.mxu0 %v4759
        %v5106 = vpop.f32.mrf.mxu0
        %v5107 = vadd.f32 0.0, %v5106
        %v5108 = vpop.f32.mrf.mxu0
        %v5109 = vpop.f32.mrf.mxu0
        %v5110 = vadd.f32 0.0, %v5109
        %v5111 = vpop.f32.mrf.mxu0
        %5112 = vmatprep.mubr.bf16.mxu0 %v4762
        %5113 = vmatmul.mubr.bf16.gmra.mxu0 %v4761
        %v5114 = vpop.f32.mrf.mxu0
        %v5115 = vadd.f32 0.0, %v5114
        %v5116 = vpop.f32.mrf.mxu0
        %v5117 = vpop.f32.mrf.mxu0
        %v5118 = vadd.f32 0.0, %v5117
        %v5119 = vpop.f32.mrf.mxu0
        %5120 = vmatprep.mubr.bf16.mxu0 %v4764
        %5121 = vmatmul.mubr.bf16.gmra.mxu0 %v4763
        %v5122 = vpop.f32.mrf.mxu0
        %v5123 = vadd.f32 0.0, %v5122
        %v5124 = vpop.f32.mrf.mxu0
        %v5125 = vpop.f32.mrf.mxu0
        %v5126 = vadd.f32 0.0, %v5125
        %v5127 = vpop.f32.mrf.mxu0
        %5128 = vmatprep.mubr.bf16.mxu0 %v4766
        %5129 = vmatmul.mubr.bf16.gmra.mxu0 %v4765
        %v5130 = vpop.f32.mrf.mxu0
        %v5131 = vadd.f32 0.0, %v5130
        %v5132 = vpop.f32.mrf.mxu0
        %v5133 = vpop.f32.mrf.mxu0
        %v5134 = vadd.f32 0.0, %v5133
        %v5135 = vpop.f32.mrf.mxu0
        %5136 = vmatprep.mubr.bf16.mxu0 %v4768
        %5137 = vmatmul.mubr.bf16.gmra.mxu0 %v4767
        %v5138 = vpop.f32.mrf.mxu0
        %v5139 = vadd.f32 0.0, %v5138
        %v5140 = vpop.f32.mrf.mxu0
        %v5141 = vpop.f32.mrf.mxu0
        %v5142 = vadd.f32 0.0, %v5141
        %v5143 = vpop.f32.mrf.mxu0
        %5144 = vmatprep.mubr.bf16.mxu0 %v4770
        %5145 = vmatmul.mubr.bf16.gmra.mxu0 %v4769
        %v5146 = vpop.f32.mrf.mxu0
        %v5147 = vadd.f32 0.0, %v5146
        %v5148 = vpop.f32.mrf.mxu0
        %v5149 = vpop.f32.mrf.mxu0
        %v5150 = vadd.f32 0.0, %v5149
        %v5151 = vpop.f32.mrf.mxu0
        %5152 = vmatprep.mubr.bf16.mxu0 %v4772
        %5153 = vmatmul.mubr.bf16.gmra.mxu0 %v4771
        %v5154 = vpop.f32.mrf.mxu0
        %v5155 = vadd.f32 0.0, %v5154
        %v5156 = vpop.f32.mrf.mxu0
        %v5157 = vpop.f32.mrf.mxu0
        %v5158 = vadd.f32 0.0, %v5157
        %v5159 = vpop.f32.mrf.mxu0
        %5160 = vdwg.mxu0
        %5177 = vrot.lane.b32.xlu0 %v4905, 32
        %v5178 = vpop.permute.xlu0 %5177
        %5179 = vrot.lane.b32.xlu0 %v4908, 32
        %v5180 = vpop.permute.xlu0 %5179
        %5181 = vrot.lane.b32.xlu0 %v4913, 32
        %v5182 = vpop.permute.xlu0 %5181
        %5183 = vrot.lane.b32.xlu0 %v4916, 32
        %v5184 = vpop.permute.xlu0 %5183
        %5185 = vrot.lane.b32.xlu0 %v4921, 32
        %v5186 = vpop.permute.xlu0 %5185
        %5187 = vrot.lane.b32.xlu0 %v4924, 32
        %v5188 = vpop.permute.xlu0 %5187
        %5189 = vrot.lane.b32.xlu0 %v4929, 32
        %v5190 = vpop.permute.xlu0 %5189
        %5191 = vrot.lane.b32.xlu0 %v4932, 32
        %v5192 = vpop.permute.xlu0 %5191
        %5193 = vrot.lane.b32.xlu0 %v4937, 32
        %v5194 = vpop.permute.xlu0 %5193
        %5195 = vrot.lane.b32.xlu0 %v4940, 32
        %v5196 = vpop.permute.xlu0 %5195
        %5197 = vrot.lane.b32.xlu0 %v4945, 32
        %v5198 = vpop.permute.xlu0 %5197
        %5199 = vrot.lane.b32.xlu0 %v4948, 32
        %v5200 = vpop.permute.xlu0 %5199
        %5201 = vrot.lane.b32.xlu0 %v4953, 32
        %v5202 = vpop.permute.xlu0 %5201
        %5203 = vrot.lane.b32.xlu0 %v4956, 32
        %v5204 = vpop.permute.xlu0 %5203
        %5205 = vrot.lane.b32.xlu0 %v4961, 32
        %v5206 = vpop.permute.xlu0 %5205
        %5207 = vrot.lane.b32.xlu0 %v4964, 32
        %v5208 = vpop.permute.xlu0 %5207
        %5241 = vrot.lane.b32.xlu0 %v5002, 64
        %v5242 = vpop.permute.xlu0 %5241
        %5243 = vrot.lane.b32.xlu0 %v5005, 64
        %v5244 = vpop.permute.xlu0 %5243
        %5245 = vrot.lane.b32.xlu0 %v5010, 64
        %v5246 = vpop.permute.xlu0 %5245
        %5247 = vrot.lane.b32.xlu0 %v5013, 64
        %v5248 = vpop.permute.xlu0 %5247
        %5249 = vrot.lane.b32.xlu0 %v5018, 64
        %v5250 = vpop.permute.xlu0 %5249
        %5251 = vrot.lane.b32.xlu0 %v5021, 64
        %v5252 = vpop.permute.xlu0 %5251
        %5253 = vrot.lane.b32.xlu0 %v5026, 64
        %v5254 = vpop.permute.xlu0 %5253
        %5255 = vrot.lane.b32.xlu0 %v5029, 64
        %v5256 = vpop.permute.xlu0 %5255
        %5257 = vrot.lane.b32.xlu0 %v5034, 64
        %v5258 = vpop.permute.xlu0 %5257
        %5259 = vrot.lane.b32.xlu0 %v5037, 64
        %v5260 = vpop.permute.xlu0 %5259
        %5261 = vrot.lane.b32.xlu0 %v5042, 64
        %v5262 = vpop.permute.xlu0 %5261
        %5263 = vrot.lane.b32.xlu0 %v5045, 64
        %v5264 = vpop.permute.xlu0 %5263
        %5265 = vrot.lane.b32.xlu0 %v5050, 64
        %v5266 = vpop.permute.xlu0 %5265
        %5267 = vrot.lane.b32.xlu0 %v5053, 64
        %v5268 = vpop.permute.xlu0 %5267
        %5269 = vrot.lane.b32.xlu0 %v5058, 64
        %v5270 = vpop.permute.xlu0 %5269
        %5271 = vrot.lane.b32.xlu0 %v5061, 64
        %v5272 = vpop.permute.xlu0 %5271
        %5305 = vrot.lane.b32.xlu0 %v5099, 96
        %v5306 = vpop.permute.xlu0 %5305
        %5307 = vrot.lane.b32.xlu0 %v5102, 96
        %v5308 = vpop.permute.xlu0 %5307
        %5309 = vrot.lane.b32.xlu0 %v5107, 96
        %v5310 = vpop.permute.xlu0 %5309
        %5311 = vrot.lane.b32.xlu0 %v5110, 96
        %v5312 = vpop.permute.xlu0 %5311
        %5313 = vrot.lane.b32.xlu0 %v5115, 96
        %v5314 = vpop.permute.xlu0 %5313
        %5315 = vrot.lane.b32.xlu0 %v5118, 96
        %v5316 = vpop.permute.xlu0 %5315
        %5317 = vrot.lane.b32.xlu0 %v5123, 96
        %v5318 = vpop.permute.xlu0 %5317
        %5319 = vrot.lane.b32.xlu0 %v5126, 96
        %v5320 = vpop.permute.xlu0 %5319
        %5321 = vrot.lane.b32.xlu0 %v5131, 96
        %v5322 = vpop.permute.xlu0 %5321
        %5323 = vrot.lane.b32.xlu0 %v5134, 96
        %v5324 = vpop.permute.xlu0 %5323
        %5325 = vrot.lane.b32.xlu0 %v5139, 96
        %v5326 = vpop.permute.xlu0 %5325
        %5327 = vrot.lane.b32.xlu0 %v5142, 96
        %v5328 = vpop.permute.xlu0 %5327
        %5329 = vrot.lane.b32.xlu0 %v5147, 96
        %v5330 = vpop.permute.xlu0 %5329
        %5331 = vrot.lane.b32.xlu0 %v5150, 96
        %v5332 = vpop.permute.xlu0 %5331
        %5333 = vrot.lane.b32.xlu0 %v5155, 96
        %v5334 = vpop.permute.xlu0 %5333
        %5335 = vrot.lane.b32.xlu0 %v5158, 96
        %v5336 = vpop.permute.xlu0 %5335
        %v5353 = vsel %vm2752, %v4808, %v5178
        %v5354 = vsel %vm2752, %v4811, %v5180
        %v5355 = vsel %vm2752, %v4816, %v5182
        %v5356 = vsel %vm2752, %v4819, %v5184
        %v5357 = vsel %vm2752, %v4824, %v5186
        %v5358 = vsel %vm2752, %v4827, %v5188
        %v5359 = vsel %vm2752, %v4832, %v5190
        %v5360 = vsel %vm2752, %v4835, %v5192
        %v5361 = vsel %vm2752, %v4840, %v5194
        %v5362 = vsel %vm2752, %v4843, %v5196
        %v5363 = vsel %vm2752, %v4848, %v5198
        %v5364 = vsel %vm2752, %v4851, %v5200
        %v5365 = vsel %vm2752, %v4856, %v5202
        %v5366 = vsel %vm2752, %v4859, %v5204
        %v5367 = vsel %vm2752, %v4864, %v5206
        %v5368 = vsel %vm2752, %v4867, %v5208
        %vm5369 = vcmask 523264
        %v5370 = vsel %vm5369, %v5353, %v5242
        %v5371 = vsel %vm5369, %v5354, %v5244
        %v5372 = vsel %vm5369, %v5355, %v5246
        %v5373 = vsel %vm5369, %v5356, %v5248
        %v5374 = vsel %vm5369, %v5357, %v5250
        %v5375 = vsel %vm5369, %v5358, %v5252
        %v5376 = vsel %vm5369, %v5359, %v5254
        %v5377 = vsel %vm5369, %v5360, %v5256
        %v5378 = vsel %vm5369, %v5361, %v5258
        %v5379 = vsel %vm5369, %v5362, %v5260
        %v5380 = vsel %vm5369, %v5363, %v5262
        %v5381 = vsel %vm5369, %v5364, %v5264
        %v5382 = vsel %vm5369, %v5365, %v5266
        %v5383 = vsel %vm5369, %v5366, %v5268
        %v5384 = vsel %vm5369, %v5367, %v5270
        %v5385 = vsel %vm5369, %v5368, %v5272
        %vm5386 = vcmask 785408
        %v5387 = vsel %vm5386, %v5370, %v5306
        %v5388 = vsel %vm5386, %v5371, %v5308
        %v5389 = vsel %vm5386, %v5372, %v5310
        %v5390 = vsel %vm5386, %v5373, %v5312
        %v5391 = vsel %vm5386, %v5374, %v5314
        %v5392 = vsel %vm5386, %v5375, %v5316
        %v5393 = vsel %vm5386, %v5376, %v5318
        %v5394 = vsel %vm5386, %v5377, %v5320
        %v5395 = vsel %vm5386, %v5378, %v5322
        %v5396 = vsel %vm5386, %v5379, %v5324
        %v5397 = vsel %vm5386, %v5380, %v5326
        %v5398 = vsel %vm5386, %v5381, %v5328
        %v5399 = vsel %vm5386, %v5382, %v5330
        %v5400 = vsel %vm5386, %v5383, %v5332
        %v5401 = vsel %vm5386, %v5384, %v5334
        %v5402 = vsel %vm5386, %v5385, %v5336
        %v5403 = vpack.c.bf16 %v5388, %v5387
        %v5404 = vpack.c.bf16 %v5390, %v5389
        %v5405 = vpack.c.bf16 %v5392, %v5391
        %v5406 = vpack.c.bf16 %v5394, %v5393
        %v5407 = vpack.c.bf16 %v5396, %v5395
        %v5408 = vpack.c.bf16 %v5398, %v5397
        %v5409 = vpack.c.bf16 %v5400, %v5399
        %v5410 = vpack.c.bf16 %v5402, %v5401
        %v5411 = vld [vmem:[#allocation13] sm:$0xf]
        %v5412 = vld [vmem:[#allocation13 + $0x4] sm:$0xf]
        %v5413 = vld [vmem:[#allocation13 + $0x8] sm:$0xf]
        %v5414 = vld [vmem:[#allocation13 + $0xc] sm:$0xf]
        %v5415 = vld [vmem:[#allocation13 + $0x10] sm:$0xf]
        %v5416 = vld [vmem:[#allocation13 + $0x14] sm:$0xf]
        %v5417 = vld [vmem:[#allocation13 + $0x18] sm:$0xf]
        %v5418 = vld [vmem:[#allocation13 + $0x1c] sm:$0xf]
        %v5419 = vld [vmem:[#allocation13 + $0x20] sm:$0xf]
        %v5420 = vld [vmem:[#allocation13 + $0x24] sm:$0xf]
        %v5421 = vld [vmem:[#allocation13 + $0x28] sm:$0xf]
        %v5422 = vld [vmem:[#allocation13 + $0x2c] sm:$0xf]
        %v5423 = vld [vmem:[#allocation13 + $0x30] sm:$0xf]
        %v5424 = vld [vmem:[#allocation13 + $0x34] sm:$0xf]
        %v5425 = vld [vmem:[#allocation13 + $0x38] sm:$0xf]
        %v5426 = vld [vmem:[#allocation13 + $0x3c] sm:$0xf]
        %v5427 = vld [vmem:[%s9] sm:$0x1]
        %v5429 = vlaneseq
        %v5430 = vshrl.u32 %v5429, 7
        %v5431 = vsub.s32 0, %v5430
        %v5432 = vrot.slane %v5427, %v5431
        %v5450 = vunpack.c.l.b16 %v5411
        %v5451 = vunpack.c.l.b16 %v5412
        %v5452 = vunpack.c.l.b16 %v5413
        %v5453 = vunpack.c.l.b16 %v5414
        %v5454 = vunpack.c.l.b16 %v5415
        %v5455 = vunpack.c.l.b16 %v5416
        %v5456 = vunpack.c.l.b16 %v5417
        %v5457 = vunpack.c.l.b16 %v5418
        %v5458 = vunpack.c.l.b16 %v5419
        %v5459 = vunpack.c.l.b16 %v5420
        %v5460 = vunpack.c.l.b16 %v5421
        %v5461 = vunpack.c.l.b16 %v5422
        %v5462 = vunpack.c.l.b16 %v5423
        %v5463 = vunpack.c.l.b16 %v5424
        %v5464 = vunpack.c.l.b16 %v5425
        %v5465 = vunpack.c.l.b16 %v5426
        %v5466 = vpack.c.b16 %v5451, %v5450
        %v5467 = vpack.c.b16 %v5453, %v5452
        %v5468 = vpack.c.b16 %v5455, %v5454
        %v5469 = vpack.c.b16 %v5457, %v5456
        %v5470 = vpack.c.b16 %v5459, %v5458
        %v5471 = vpack.c.b16 %v5461, %v5460
        %v5472 = vpack.c.b16 %v5463, %v5462
        %v5473 = vpack.c.b16 %v5465, %v5464
        %5482 = vmatprep.subr.bf16.mxu0 0
        %5483 = vmatpush1.bf16.msra.mxu0 %v5473
        %5484 = vmatprep.subr.bf16.mxu0 0
        %5485 = vmatpush1.bf16.msra.mxu0 %v5472
        %5486 = vmatprep.subr.bf16.mxu0 0
        %5487 = vmatpush1.bf16.msra.mxu0 %v5471
        %5488 = vmatprep.subr.bf16.mxu0 0
        %5489 = vmatpush1.bf16.msra.mxu0 %v5470
        %5490 = vmatprep.subr.bf16.mxu0 0
        %5491 = vmatpush1.bf16.msra.mxu0 %v5469
        %5492 = vmatprep.subr.bf16.mxu0 0
        %5493 = vmatpush1.bf16.msra.mxu0 %v5468
        %5494 = vmatprep.subr.bf16.mxu0 0
        %5495 = vmatpush1.bf16.msra.mxu0 %v5467
        %5496 = vmatprep.subr.bf16.mxu0 0
        %5497 = vmatpush1.bf16.msra.mxu0 %v5466
        %5498 = vmatprep.subr.bf16.mxu0 0
        %5499 = vmatpush2.bf16.msra.mxu0 0
        %5500 = vmatprep.subr.bf16.mxu0 0
        %5501 = vmatpush2.bf16.msra.mxu0 0
        %5502 = vmatprep.subr.bf16.mxu0 0
        %5503 = vmatpush2.bf16.msra.mxu0 0
        %5504 = vmatprep.subr.bf16.mxu0 0
        %5505 = vmatpush2.bf16.msra.mxu0 0
        %5506 = vmatprep.subr.bf16.mxu0 0
        %5507 = vmatpush2.bf16.msra.mxu0 0
        %5508 = vmatprep.subr.bf16.mxu0 0
        %5509 = vmatpush2.bf16.msra.mxu0 0
        %5510 = vmatprep.subr.bf16.mxu0 0
        %5511 = vmatpush2.bf16.msra.mxu0 0
        %5512 = vmatprep.subr.bf16.mxu0 0
        %5513 = vmatpush2.bf16.msra.mxu0 0
        %5514 = vmatprep.mubr.bf16.mxu0 0
        %5515 = vmatmul.mubr.bf16.gmra.mxu0 %v5403
        %v5516 = vpop.f32.mrf.mxu0
        %v5517 = vadd.f32 %v5432, %v5516
        %v5518 = vpop.f32.mrf.mxu0
        %v5519 = vpop.f32.mrf.mxu0
        %v5520 = vadd.f32 %v5432, %v5519
        %v5521 = vpop.f32.mrf.mxu0
        %5522 = vmatprep.mubr.bf16.mxu0 0
        %5523 = vmatmul.mubr.bf16.gmra.mxu0 %v5404
        %v5524 = vpop.f32.mrf.mxu0
        %v5525 = vadd.f32 %v5432, %v5524
        %v5526 = vpop.f32.mrf.mxu0
        %v5527 = vpop.f32.mrf.mxu0
        %v5528 = vadd.f32 %v5432, %v5527
        %v5529 = vpop.f32.mrf.mxu0
        %5530 = vmatprep.mubr.bf16.mxu0 0
        %5531 = vmatmul.mubr.bf16.gmra.mxu0 %v5405
        %v5532 = vpop.f32.mrf.mxu0
        %v5533 = vadd.f32 %v5432, %v5532
        %v5534 = vpop.f32.mrf.mxu0
        %v5535 = vpop.f32.mrf.mxu0
        %v5536 = vadd.f32 %v5432, %v5535
        %v5537 = vpop.f32.mrf.mxu0
        %5538 = vmatprep.mubr.bf16.mxu0 0
        %5539 = vmatmul.mubr.bf16.gmra.mxu0 %v5406
        %v5540 = vpop.f32.mrf.mxu0
        %v5541 = vadd.f32 %v5432, %v5540
        %v5542 = vpop.f32.mrf.mxu0
        %v5543 = vpop.f32.mrf.mxu0
        %v5544 = vadd.f32 %v5432, %v5543
        %v5545 = vpop.f32.mrf.mxu0
        %5546 = vmatprep.mubr.bf16.mxu0 0
        %5547 = vmatmul.mubr.bf16.gmra.mxu0 %v5407
        %v5548 = vpop.f32.mrf.mxu0
        %v5549 = vadd.f32 %v5432, %v5548
        %v5550 = vpop.f32.mrf.mxu0
        %v5551 = vpop.f32.mrf.mxu0
        %v5552 = vadd.f32 %v5432, %v5551
        %v5553 = vpop.f32.mrf.mxu0
        %5554 = vmatprep.mubr.bf16.mxu0 0
        %5555 = vmatmul.mubr.bf16.gmra.mxu0 %v5408
        %v5556 = vpop.f32.mrf.mxu0
        %v5557 = vadd.f32 %v5432, %v5556
        %v5558 = vpop.f32.mrf.mxu0
        %v5559 = vpop.f32.mrf.mxu0
        %v5560 = vadd.f32 %v5432, %v5559
        %v5561 = vpop.f32.mrf.mxu0
        %5562 = vmatprep.mubr.bf16.mxu0 0
        %5563 = vmatmul.mubr.bf16.gmra.mxu0 %v5409
        %v5564 = vpop.f32.mrf.mxu0
        %v5565 = vadd.f32 %v5432, %v5564
        %v5566 = vpop.f32.mrf.mxu0
        %v5567 = vpop.f32.mrf.mxu0
        %v5568 = vadd.f32 %v5432, %v5567
        %v5569 = vpop.f32.mrf.mxu0
        %5570 = vmatprep.mubr.bf16.mxu0 0
        %5571 = vmatmul.mubr.bf16.gmra.mxu0 %v5410
        %v5572 = vpop.f32.mrf.mxu0
        %v5573 = vadd.f32 %v5432, %v5572
        %v5574 = vpop.f32.mrf.mxu0
        %v5575 = vpop.f32.mrf.mxu0
        %v5576 = vadd.f32 %v5432, %v5575
        %v5577 = vpop.f32.mrf.mxu0
        %5578 = vdwg.mxu0
        %v5579 = vadd.f32 %v1131, %v5517
        %v5580 = vadd.f32 %v1132, %v5520
        %v5581 = vadd.f32 %v1133, %v5525
        %v5582 = vadd.f32 %v1134, %v5528
        %v5583 = vadd.f32 %v1135, %v5533
        %v5584 = vadd.f32 %v1136, %v5536
        %v5585 = vadd.f32 %v1137, %v5541
        %v5586 = vadd.f32 %v1138, %v5544
        %v5587 = vadd.f32 %v1139, %v5549
        %v5588 = vadd.f32 %v1140, %v5552
        %v5589 = vadd.f32 %v1141, %v5557
        %v5590 = vadd.f32 %v1142, %v5560
        %v5591 = vadd.f32 %v1143, %v5565
        %v5592 = vadd.f32 %v1144, %v5568
        %v5593 = vadd.f32 %v1145, %v5573
        %v5594 = vadd.f32 %v1146, %v5576
        %v5595 = vld [vmem:[%s16] sm:$0x1]
        %v5596 = vld [vmem:[%s17] sm:$0x1]
        %5597 = vadd.xlane.f32.xlu0 %v5579
        %v5598 = vpop.xlane.xlu0 %5597
        %5599 = vadd.xlane.f32.xlu0 %v5580
        %v5600 = vpop.xlane.xlu0 %5599
        %5601 = vadd.xlane.f32.xlu0 %v5581
        %v5602 = vpop.xlane.xlu0 %5601
        %5603 = vadd.xlane.f32.xlu0 %v5582
        %v5604 = vpop.xlane.xlu0 %5603
        %5605 = vadd.xlane.f32.xlu0 %v5583
        %v5606 = vpop.xlane.xlu0 %5605
        %5607 = vadd.xlane.f32.xlu0 %v5584
        %v5608 = vpop.xlane.xlu0 %5607
        %5609 = vadd.xlane.f32.xlu0 %v5585
        %v5610 = vpop.xlane.xlu0 %5609
        %5611 = vadd.xlane.f32.xlu0 %v5586
        %v5612 = vpop.xlane.xlu0 %5611
        %5613 = vadd.xlane.f32.xlu0 %v5587
        %v5614 = vpop.xlane.xlu0 %5613
        %5615 = vadd.xlane.f32.xlu0 %v5588
        %v5616 = vpop.xlane.xlu0 %5615
        %5617 = vadd.xlane.f32.xlu0 %v5589
        %v5618 = vpop.xlane.xlu0 %5617
        %5619 = vadd.xlane.f32.xlu0 %v5590
        %v5620 = vpop.xlane.xlu0 %5619
        %5621 = vadd.xlane.f32.xlu0 %v5591
        %v5622 = vpop.xlane.xlu0 %5621
        %5623 = vadd.xlane.f32.xlu0 %v5592
        %v5624 = vpop.xlane.xlu0 %5623
        %5625 = vadd.xlane.f32.xlu0 %v5593
        %v5626 = vpop.xlane.xlu0 %5625
        %5627 = vadd.xlane.f32.xlu0 %v5594
        %v5628 = vpop.xlane.xlu0 %5627
        %v5629 = vrcp.pop 128.0
        %v5630 = vmul.f32 %v5598, %v5629
        %v5631 = vmul.f32 %v5600, %v5629
        %v5632 = vmul.f32 %v5602, %v5629
        %v5633 = vmul.f32 %v5604, %v5629
        %v5634 = vmul.f32 %v5606, %v5629
        %v5635 = vmul.f32 %v5608, %v5629
        %v5636 = vmul.f32 %v5610, %v5629
        %v5637 = vmul.f32 %v5612, %v5629
        %v5638 = vmul.f32 %v5614, %v5629
        %v5639 = vmul.f32 %v5616, %v5629
        %v5640 = vmul.f32 %v5618, %v5629
        %v5641 = vmul.f32 %v5620, %v5629
        %v5642 = vmul.f32 %v5622, %v5629
        %v5643 = vmul.f32 %v5624, %v5629
        %v5644 = vmul.f32 %v5626, %v5629
        %v5645 = vmul.f32 %v5628, %v5629
        %v5646 = vsub.f32 %v5579, %v5630
        %v5647 = vsub.f32 %v5580, %v5631
        %v5648 = vsub.f32 %v5581, %v5632
        %v5649 = vsub.f32 %v5582, %v5633
        %v5650 = vsub.f32 %v5583, %v5634
        %v5651 = vsub.f32 %v5584, %v5635
        %v5652 = vsub.f32 %v5585, %v5636
        %v5653 = vsub.f32 %v5586, %v5637
        %v5654 = vsub.f32 %v5587, %v5638
        %v5655 = vsub.f32 %v5588, %v5639
        %v5656 = vsub.f32 %v5589, %v5640
        %v5657 = vsub.f32 %v5590, %v5641
        %v5658 = vsub.f32 %v5591, %v5642
        %v5659 = vsub.f32 %v5592, %v5643
        %v5660 = vsub.f32 %v5593, %v5644
        %v5661 = vsub.f32 %v5594, %v5645
        %v5662 = vmul.f32 %v5646, %v5646
        %v5663 = vmul.f32 %v5647, %v5647
        %v5664 = vmul.f32 %v5648, %v5648
        %v5665 = vmul.f32 %v5649, %v5649
        %v5666 = vmul.f32 %v5650, %v5650
        %v5667 = vmul.f32 %v5651, %v5651
        %v5668 = vmul.f32 %v5652, %v5652
        %v5669 = vmul.f32 %v5653, %v5653
        %v5670 = vmul.f32 %v5654, %v5654
        %v5671 = vmul.f32 %v5655, %v5655
        %v5672 = vmul.f32 %v5656, %v5656
        %v5673 = vmul.f32 %v5657, %v5657
        %v5674 = vmul.f32 %v5658, %v5658
        %v5675 = vmul.f32 %v5659, %v5659
        %v5676 = vmul.f32 %v5660, %v5660
        %v5677 = vmul.f32 %v5661, %v5661
        %5678 = vadd.xlane.f32.xlu0 %v5662
        %v5679 = vpop.xlane.xlu0 %5678
        %5680 = vadd.xlane.f32.xlu0 %v5663
        %v5681 = vpop.xlane.xlu0 %5680
        %5682 = vadd.xlane.f32.xlu0 %v5664
        %v5683 = vpop.xlane.xlu0 %5682
        %5684 = vadd.xlane.f32.xlu0 %v5665
        %v5685 = vpop.xlane.xlu0 %5684
        %5686 = vadd.xlane.f32.xlu0 %v5666
        %v5687 = vpop.xlane.xlu0 %5686
        %5688 = vadd.xlane.f32.xlu0 %v5667
        %v5689 = vpop.xlane.xlu0 %5688
        %5690 = vadd.xlane.f32.xlu0 %v5668
        %v5691 = vpop.xlane.xlu0 %5690
        %5692 = vadd.xlane.f32.xlu0 %v5669
        %v5693 = vpop.xlane.xlu0 %5692
        %5694 = vadd.xlane.f32.xlu0 %v5670
        %v5695 = vpop.xlane.xlu0 %5694
        %5696 = vadd.xlane.f32.xlu0 %v5671
        %v5697 = vpop.xlane.xlu0 %5696
        %5698 = vadd.xlane.f32.xlu0 %v5672
        %v5699 = vpop.xlane.xlu0 %5698
        %5700 = vadd.xlane.f32.xlu0 %v5673
        %v5701 = vpop.xlane.xlu0 %5700
        %5702 = vadd.xlane.f32.xlu0 %v5674
        %v5703 = vpop.xlane.xlu0 %5702
        %5704 = vadd.xlane.f32.xlu0 %v5675
        %v5705 = vpop.xlane.xlu0 %5704
        %5706 = vadd.xlane.f32.xlu0 %v5676
        %v5707 = vpop.xlane.xlu0 %5706
        %5708 = vadd.xlane.f32.xlu0 %v5677
        %v5709 = vpop.xlane.xlu0 %5708
        %v5710 = vmul.f32 %v5679, %v5629
        %v5711 = vmul.f32 %v5681, %v5629
        %v5712 = vmul.f32 %v5683, %v5629
        %v5713 = vmul.f32 %v5685, %v5629
        %v5714 = vmul.f32 %v5687, %v5629
        %v5715 = vmul.f32 %v5689, %v5629
        %v5716 = vmul.f32 %v5691, %v5629
        %v5717 = vmul.f32 %v5693, %v5629
        %v5718 = vmul.f32 %v5695, %v5629
        %v5719 = vmul.f32 %v5697, %v5629
        %v5720 = vmul.f32 %v5699, %v5629
        %v5721 = vmul.f32 %v5701, %v5629
        %v5722 = vmul.f32 %v5703, %v5629
        %v5723 = vmul.f32 %v5705, %v5629
        %v5724 = vmul.f32 %v5707, %v5629
        %v5725 = vmul.f32 %v5709, %v5629
        %v5726 = vadd.f32 %v5710, 1e-05
        %v5727 = vadd.f32 %v5711, 1e-05
        %v5728 = vadd.f32 %v5712, 1e-05
        %v5729 = vadd.f32 %v5713, 1e-05
        %v5730 = vadd.f32 %v5714, 1e-05
        %v5731 = vadd.f32 %v5715, 1e-05
        %v5732 = vadd.f32 %v5716, 1e-05
        %v5733 = vadd.f32 %v5717, 1e-05
        %v5734 = vadd.f32 %v5718, 1e-05
        %v5735 = vadd.f32 %v5719, 1e-05
        %v5736 = vadd.f32 %v5720, 1e-05
        %v5737 = vadd.f32 %v5721, 1e-05
        %v5738 = vadd.f32 %v5722, 1e-05
        %v5739 = vadd.f32 %v5723, 1e-05
        %v5740 = vadd.f32 %v5724, 1e-05
        %v5741 = vadd.f32 %v5725, 1e-05
        %v5742 = vrsqrt.pop %v5726
        %v5743 = vrsqrt.pop %v5727
        %v5744 = vrsqrt.pop %v5728
        %v5745 = vrsqrt.pop %v5729
        %v5746 = vrsqrt.pop %v5730
        %v5747 = vrsqrt.pop %v5731
        %v5748 = vrsqrt.pop %v5732
        %v5749 = vrsqrt.pop %v5733
        %v5750 = vrsqrt.pop %v5734
        %v5751 = vrsqrt.pop %v5735
        %v5752 = vrsqrt.pop %v5736
        %v5753 = vrsqrt.pop %v5737
        %v5754 = vrsqrt.pop %v5738
        %v5755 = vrsqrt.pop %v5739
        %v5756 = vrsqrt.pop %v5740
        %v5757 = vrsqrt.pop %v5741
        %v5758 = vmul.f32 %v5646, %v5742
        %v5759 = vmul.f32 %v5647, %v5743
        %v5760 = vmul.f32 %v5648, %v5744
        %v5761 = vmul.f32 %v5649, %v5745
        %v5762 = vmul.f32 %v5650, %v5746
        %v5763 = vmul.f32 %v5651, %v5747
        %v5764 = vmul.f32 %v5652, %v5748
        %v5765 = vmul.f32 %v5653, %v5749
        %v5766 = vmul.f32 %v5654, %v5750
        %v5767 = vmul.f32 %v5655, %v5751
        %v5768 = vmul.f32 %v5656, %v5752
        %v5769 = vmul.f32 %v5657, %v5753
        %v5770 = vmul.f32 %v5658, %v5754
        %v5771 = vmul.f32 %v5659, %v5755
        %v5772 = vmul.f32 %v5660, %v5756
        %v5773 = vmul.f32 %v5661, %v5757
        %v5775 = vlaneseq
        %v5776 = vshrl.u32 %v5775, 7
        %v5777 = vsub.s32 0, %v5776
        %v5778 = vrot.slane %v5595, %v5777
        %v5780 = vmul.f32 %v5758, %v5778
        %v5781 = vmul.f32 %v5759, %v5778
        %v5782 = vmul.f32 %v5760, %v5778
        %v5783 = vmul.f32 %v5761, %v5778
        %v5784 = vmul.f32 %v5762, %v5778
        %v5785 = vmul.f32 %v5763, %v5778
        %v5786 = vmul.f32 %v5764, %v5778
        %v5787 = vmul.f32 %v5765, %v5778
        %v5788 = vmul.f32 %v5766, %v5778
        %v5789 = vmul.f32 %v5767, %v5778
        %v5790 = vmul.f32 %v5768, %v5778
        %v5791 = vmul.f32 %v5769, %v5778
        %v5792 = vmul.f32 %v5770, %v5778
        %v5793 = vmul.f32 %v5771, %v5778
        %v5794 = vmul.f32 %v5772, %v5778
        %v5795 = vmul.f32 %v5773, %v5778
        %v5797 = vlaneseq
        %v5798 = vshrl.u32 %v5797, 7
        %v5799 = vsub.s32 0, %v5798
        %v5800 = vrot.slane %v5596, %v5799
        %v5802 = vadd.f32 %v5780, %v5800
        %v5803 = vadd.f32 %v5781, %v5800
        %v5804 = vadd.f32 %v5782, %v5800
        %v5805 = vadd.f32 %v5783, %v5800
        %v5806 = vadd.f32 %v5784, %v5800
        %v5807 = vadd.f32 %v5785, %v5800
        %v5808 = vadd.f32 %v5786, %v5800
        %v5809 = vadd.f32 %v5787, %v5800
        %v5810 = vadd.f32 %v5788, %v5800
        %v5811 = vadd.f32 %v5789, %v5800
        %v5812 = vadd.f32 %v5790, %v5800
        %v5813 = vadd.f32 %v5791, %v5800
        %v5814 = vadd.f32 %v5792, %v5800
        %v5815 = vadd.f32 %v5793, %v5800
        %v5816 = vadd.f32 %v5794, %v5800
        %v5817 = vadd.f32 %v5795, %v5800
        %v5818 = vpack.c.bf16 %v5803, %v5802
        %v5819 = vpack.c.bf16 %v5805, %v5804
        %v5820 = vpack.c.bf16 %v5807, %v5806
        %v5821 = vpack.c.bf16 %v5809, %v5808
        %v5822 = vpack.c.bf16 %v5811, %v5810
        %v5823 = vpack.c.bf16 %v5813, %v5812
        %v5824 = vpack.c.bf16 %v5815, %v5814
        %v5825 = vpack.c.bf16 %v5817, %v5816
        %v5826 = vld [vmem:[#allocation14] sm:$0xf]
        %v5827 = vld [vmem:[#allocation14 + $0x4] sm:$0xf]
        %v5828 = vld [vmem:[#allocation14 + $0x8] sm:$0xf]
        %v5829 = vld [vmem:[#allocation14 + $0xc] sm:$0xf]
        %v5830 = vld [vmem:[#allocation14 + $0x10] sm:$0xf]
        %v5831 = vld [vmem:[#allocation14 + $0x14] sm:$0xf]
        %v5832 = vld [vmem:[#allocation14 + $0x18] sm:$0xf]
        %v5833 = vld [vmem:[#allocation14 + $0x1c] sm:$0xf]
        %v5834 = vld [vmem:[#allocation14 + $0x20] sm:$0xf]
        %v5835 = vld [vmem:[#allocation14 + $0x24] sm:$0xf]
        %v5836 = vld [vmem:[#allocation14 + $0x28] sm:$0xf]
        %v5837 = vld [vmem:[#allocation14 + $0x2c] sm:$0xf]
        %v5838 = vld [vmem:[#allocation14 + $0x30] sm:$0xf]
        %v5839 = vld [vmem:[#allocation14 + $0x34] sm:$0xf]
        %v5840 = vld [vmem:[#allocation14 + $0x38] sm:$0xf]
        %v5841 = vld [vmem:[#allocation14 + $0x3c] sm:$0xf]
        %v5842 = vld [vmem:[%s11] sm:$0x1]
        %v5844 = vlaneseq
        %v5845 = vshrl.u32 %v5844, 7
        %v5846 = vsub.s32 0, %v5845
        %v5847 = vrot.slane %v5842, %v5846
        %v5865 = vunpack.c.l.b16 %v5826
        %v5866 = vunpack.c.l.b16 %v5827
        %v5867 = vunpack.c.l.b16 %v5828
        %v5868 = vunpack.c.l.b16 %v5829
        %v5869 = vunpack.c.l.b16 %v5830
        %v5870 = vunpack.c.l.b16 %v5831
        %v5871 = vunpack.c.l.b16 %v5832
        %v5872 = vunpack.c.l.b16 %v5833
        %v5873 = vunpack.c.l.b16 %v5834
        %v5874 = vunpack.c.l.b16 %v5835
        %v5875 = vunpack.c.l.b16 %v5836
        %v5876 = vunpack.c.l.b16 %v5837
        %v5877 = vunpack.c.l.b16 %v5838
        %v5878 = vunpack.c.l.b16 %v5839
        %v5879 = vunpack.c.l.b16 %v5840
        %v5880 = vunpack.c.l.b16 %v5841
        %v5881 = vpack.c.b16 %v5866, %v5865
        %v5882 = vpack.c.b16 %v5868, %v5867
        %v5883 = vpack.c.b16 %v5870, %v5869
        %v5884 = vpack.c.b16 %v5872, %v5871
        %v5885 = vpack.c.b16 %v5874, %v5873
        %v5886 = vpack.c.b16 %v5876, %v5875
        %v5887 = vpack.c.b16 %v5878, %v5877
        %v5888 = vpack.c.b16 %v5880, %v5879
        %5897 = vmatprep.subr.bf16.mxu0 0
        %5898 = vmatpush1.bf16.msra.mxu0 %v5888
        %5899 = vmatprep.subr.bf16.mxu0 0
        %5900 = vmatpush1.bf16.msra.mxu0 %v5887
        %5901 = vmatprep.subr.bf16.mxu0 0
        %5902 = vmatpush1.bf16.msra.mxu0 %v5886
        %5903 = vmatprep.subr.bf16.mxu0 0
        %5904 = vmatpush1.bf16.msra.mxu0 %v5885
        %5905 = vmatprep.subr.bf16.mxu0 0
        %5906 = vmatpush1.bf16.msra.mxu0 %v5884
        %5907 = vmatprep.subr.bf16.mxu0 0
        %5908 = vmatpush1.bf16.msra.mxu0 %v5883
        %5909 = vmatprep.subr.bf16.mxu0 0
        %5910 = vmatpush1.bf16.msra.mxu0 %v5882
        %5911 = vmatprep.subr.bf16.mxu0 0
        %5912 = vmatpush1.bf16.msra.mxu0 %v5881
        %5913 = vmatprep.subr.bf16.mxu0 0
        %5914 = vmatpush2.bf16.msra.mxu0 0
        %5915 = vmatprep.subr.bf16.mxu0 0
        %5916 = vmatpush2.bf16.msra.mxu0 0
        %5917 = vmatprep.subr.bf16.mxu0 0
        %5918 = vmatpush2.bf16.msra.mxu0 0
        %5919 = vmatprep.subr.bf16.mxu0 0
        %5920 = vmatpush2.bf16.msra.mxu0 0
        %5921 = vmatprep.subr.bf16.mxu0 0
        %5922 = vmatpush2.bf16.msra.mxu0 0
        %5923 = vmatprep.subr.bf16.mxu0 0
        %5924 = vmatpush2.bf16.msra.mxu0 0
        %5925 = vmatprep.subr.bf16.mxu0 0
        %5926 = vmatpush2.bf16.msra.mxu0 0
        %5927 = vmatprep.subr.bf16.mxu0 0
        %5928 = vmatpush2.bf16.msra.mxu0 0
        %5929 = vmatprep.mubr.bf16.mxu0 0
        %5930 = vmatmul.mubr.bf16.gmra.mxu0 %v5818
        %v5931 = vpop.f32.mrf.mxu0
        %v5932 = vadd.f32 %v5847, %v5931
        %v5933 = vpop.f32.mrf.mxu0
        %v5934 = vpop.f32.mrf.mxu0
        %v5935 = vadd.f32 %v5847, %v5934
        %v5936 = vpop.f32.mrf.mxu0
        %5937 = vmatprep.mubr.bf16.mxu0 0
        %5938 = vmatmul.mubr.bf16.gmra.mxu0 %v5819
        %v5939 = vpop.f32.mrf.mxu0
        %v5940 = vadd.f32 %v5847, %v5939
        %v5941 = vpop.f32.mrf.mxu0
        %v5942 = vpop.f32.mrf.mxu0
        %v5943 = vadd.f32 %v5847, %v5942
        %v5944 = vpop.f32.mrf.mxu0
        %5945 = vmatprep.mubr.bf16.mxu0 0
        %5946 = vmatmul.mubr.bf16.gmra.mxu0 %v5820
        %v5947 = vpop.f32.mrf.mxu0
        %v5948 = vadd.f32 %v5847, %v5947
        %v5949 = vpop.f32.mrf.mxu0
        %v5950 = vpop.f32.mrf.mxu0
        %v5951 = vadd.f32 %v5847, %v5950
        %v5952 = vpop.f32.mrf.mxu0
        %5953 = vmatprep.mubr.bf16.mxu0 0
        %5954 = vmatmul.mubr.bf16.gmra.mxu0 %v5821
        %v5955 = vpop.f32.mrf.mxu0
        %v5956 = vadd.f32 %v5847, %v5955
        %v5957 = vpop.f32.mrf.mxu0
        %v5958 = vpop.f32.mrf.mxu0
        %v5959 = vadd.f32 %v5847, %v5958
        %v5960 = vpop.f32.mrf.mxu0
        %5961 = vmatprep.mubr.bf16.mxu0 0
        %5962 = vmatmul.mubr.bf16.gmra.mxu0 %v5822
        %v5963 = vpop.f32.mrf.mxu0
        %v5964 = vadd.f32 %v5847, %v5963
        %v5965 = vpop.f32.mrf.mxu0
        %v5966 = vpop.f32.mrf.mxu0
        %v5967 = vadd.f32 %v5847, %v5966
        %v5968 = vpop.f32.mrf.mxu0
        %5969 = vmatprep.mubr.bf16.mxu0 0
        %5970 = vmatmul.mubr.bf16.gmra.mxu0 %v5823
        %v5971 = vpop.f32.mrf.mxu0
        %v5972 = vadd.f32 %v5847, %v5971
        %v5973 = vpop.f32.mrf.mxu0
        %v5974 = vpop.f32.mrf.mxu0
        %v5975 = vadd.f32 %v5847, %v5974
        %v5976 = vpop.f32.mrf.mxu0
        %5977 = vmatprep.mubr.bf16.mxu0 0
        %5978 = vmatmul.mubr.bf16.gmra.mxu0 %v5824
        %v5979 = vpop.f32.mrf.mxu0
        %v5980 = vadd.f32 %v5847, %v5979
        %v5981 = vpop.f32.mrf.mxu0
        %v5982 = vpop.f32.mrf.mxu0
        %v5983 = vadd.f32 %v5847, %v5982
        %v5984 = vpop.f32.mrf.mxu0
        %5985 = vmatprep.mubr.bf16.mxu0 0
        %5986 = vmatmul.mubr.bf16.gmra.mxu0 %v5825
        %v5987 = vpop.f32.mrf.mxu0
        %v5988 = vadd.f32 %v5847, %v5987
        %v5989 = vpop.f32.mrf.mxu0
        %v5990 = vpop.f32.mrf.mxu0
        %v5991 = vadd.f32 %v5847, %v5990
        %v5992 = vpop.f32.mrf.mxu0
        %5993 = vdwg.mxu0
        %v5994 = vld [vmem:[#allocation16] sm:$0xff]
        %v5995 = vld [vmem:[#allocation16 + $0x8] sm:$0xff]
        %v5996 = vld [vmem:[#allocation16 + $0x10] sm:$0xff]
        %v5997 = vld [vmem:[#allocation16 + $0x18] sm:$0xff]
        %v5998 = vld [vmem:[#allocation16 + $0x20] sm:$0xff]
        %v5999 = vld [vmem:[#allocation16 + $0x28] sm:$0xff]
        %v6000 = vld [vmem:[#allocation16 + $0x30] sm:$0xff]
        %v6001 = vld [vmem:[#allocation16 + $0x38] sm:$0xff]
        %v6002 = vld [vmem:[#allocation16 + $0x40] sm:$0xff]
        %v6003 = vld [vmem:[#allocation16 + $0x48] sm:$0xff]
        %v6004 = vld [vmem:[#allocation16 + $0x50] sm:$0xff]
        %v6005 = vld [vmem:[#allocation16 + $0x58] sm:$0xff]
        %v6006 = vld [vmem:[#allocation16 + $0x60] sm:$0xff]
        %v6007 = vld [vmem:[#allocation16 + $0x68] sm:$0xff]
        %v6008 = vld [vmem:[#allocation16 + $0x70] sm:$0xff]
        %v6009 = vld [vmem:[#allocation16 + $0x78] sm:$0xff]
        %v6010 = vld [vmem:[%s13] sm:$0x3]
        %v6012 = vlaneseq
        %v6013 = vshrl.u32 %v6012, 7
        %v6014 = vsub.s32 0, %v6013
        %v6015 = vrot.slane %v6010, %v6014
        %v6016 = vlaneseq
        %v6017 = vshrl.u32 %v6016, 7
        %v6018 = vsub.s32 1, %v6017
        %v6019 = vrot.slane %v6010, %v6018
        %v6038 = vunpack.c.l.b16 %v1094
        %v6039 = vunpack.c.l.b16 %v1095
        %v6040 = vunpack.c.l.b16 %v1096
        %v6041 = vunpack.c.l.b16 %v1097
        %v6042 = vunpack.c.l.b16 %v1098
        %v6043 = vunpack.c.l.b16 %v1099
        %v6044 = vunpack.c.l.b16 %v1100
        %v6045 = vunpack.c.l.b16 %v1101
        %v6046 = vunpack.c.l.b16 %v1102
        %v6047 = vunpack.c.l.b16 %v1103
        %v6048 = vunpack.c.l.b16 %v1104
        %v6049 = vunpack.c.l.b16 %v1105
        %v6050 = vunpack.c.l.b16 %v1106
        %v6051 = vunpack.c.l.b16 %v1107
        %v6052 = vunpack.c.l.b16 %v1108
        %v6053 = vunpack.c.l.b16 %v1109
        %v6054 = vpack.c.b16 %v6039, %v6038
        %v6055 = vpack.c.b16 %v6041, %v6040
        %v6056 = vpack.c.b16 %v6043, %v6042
        %v6057 = vpack.c.b16 %v6045, %v6044
        %v6058 = vpack.c.b16 %v6047, %v6046
        %v6059 = vpack.c.b16 %v6049, %v6048
        %v6060 = vpack.c.b16 %v6051, %v6050
        %v6061 = vpack.c.b16 %v6053, %v6052
        %v6086 = vunpack.c.l.b16 %v5994
        %v6087 = vunpack.c.h.b16 %v5994
        %v6088 = vunpack.c.l.b16 %v5995
        %v6089 = vunpack.c.h.b16 %v5995
        %v6090 = vunpack.c.l.b16 %v5996
        %v6091 = vunpack.c.h.b16 %v5996
        %v6092 = vunpack.c.l.b16 %v5997
        %v6093 = vunpack.c.h.b16 %v5997
        %v6094 = vunpack.c.l.b16 %v5998
        %v6095 = vunpack.c.h.b16 %v5998
        %v6096 = vunpack.c.l.b16 %v5999
        %v6097 = vunpack.c.h.b16 %v5999
        %v6098 = vunpack.c.l.b16 %v6000
        %v6099 = vunpack.c.h.b16 %v6000
        %v6100 = vunpack.c.l.b16 %v6001
        %v6101 = vunpack.c.h.b16 %v6001
        %v6102 = vunpack.c.l.b16 %v6002
        %v6103 = vunpack.c.h.b16 %v6002
        %v6104 = vunpack.c.l.b16 %v6003
        %v6105 = vunpack.c.h.b16 %v6003
        %v6106 = vunpack.c.l.b16 %v6004
        %v6107 = vunpack.c.h.b16 %v6004
        %v6108 = vunpack.c.l.b16 %v6005
        %v6109 = vunpack.c.h.b16 %v6005
        %v6110 = vunpack.c.l.b16 %v6006
        %v6111 = vunpack.c.h.b16 %v6006
        %v6112 = vunpack.c.l.b16 %v6007
        %v6113 = vunpack.c.h.b16 %v6007
        %v6114 = vunpack.c.l.b16 %v6008
        %v6115 = vunpack.c.h.b16 %v6008
        %v6116 = vunpack.c.l.b16 %v6009
        %v6117 = vunpack.c.h.b16 %v6009
        %v6118 = vpack.c.b16 %v6088, %v6086
        %v6119 = vpack.c.b16 %v6089, %v6087
        %v6120 = vpack.c.b16 %v6092, %v6090
        %v6121 = vpack.c.b16 %v6093, %v6091
        %v6122 = vpack.c.b16 %v6096, %v6094
        %v6123 = vpack.c.b16 %v6097, %v6095
        %v6124 = vpack.c.b16 %v6100, %v6098
        %v6125 = vpack.c.b16 %v6101, %v6099
        %v6126 = vpack.c.b16 %v6104, %v6102
        %v6127 = vpack.c.b16 %v6105, %v6103
        %v6128 = vpack.c.b16 %v6108, %v6106
        %v6129 = vpack.c.b16 %v6109, %v6107
        %v6130 = vpack.c.b16 %v6112, %v6110
        %v6131 = vpack.c.b16 %v6113, %v6111
        %v6132 = vpack.c.b16 %v6116, %v6114
        %v6133 = vpack.c.b16 %v6117, %v6115
        %6150 = vmatprep.subr.bf16.mxu0 %v6133
        %6151 = vmatpush1.bf16.msra.mxu0 %v6132
        %6152 = vmatprep.subr.bf16.mxu0 %v6131
        %6153 = vmatpush1.bf16.msra.mxu0 %v6130
        %6154 = vmatprep.subr.bf16.mxu0 %v6129
        %6155 = vmatpush1.bf16.msra.mxu0 %v6128
        %6156 = vmatprep.subr.bf16.mxu0 %v6127
        %6157 = vmatpush1.bf16.msra.mxu0 %v6126
        %6158 = vmatprep.subr.bf16.mxu0 %v6125
        %6159 = vmatpush1.bf16.msra.mxu0 %v6124
        %6160 = vmatprep.subr.bf16.mxu0 %v6123
        %6161 = vmatpush1.bf16.msra.mxu0 %v6122
        %6162 = vmatprep.subr.bf16.mxu0 %v6121
        %6163 = vmatpush1.bf16.msra.mxu0 %v6120
        %6164 = vmatprep.subr.bf16.mxu0 %v6119
        %6165 = vmatpush1.bf16.msra.mxu0 %v6118
        %6166 = vmatprep.subr.bf16.mxu0 0
        %6167 = vmatpush2.bf16.msra.mxu0 0
        %6168 = vmatprep.subr.bf16.mxu0 0
        %6169 = vmatpush2.bf16.msra.mxu0 0
        %6170 = vmatprep.subr.bf16.mxu0 0
        %6171 = vmatpush2.bf16.msra.mxu0 0
        %6172 = vmatprep.subr.bf16.mxu0 0
        %6173 = vmatpush2.bf16.msra.mxu0 0
        %6174 = vmatprep.subr.bf16.mxu0 0
        %6175 = vmatpush2.bf16.msra.mxu0 0
        %6176 = vmatprep.subr.bf16.mxu0 0
        %6177 = vmatpush2.bf16.msra.mxu0 0
        %6178 = vmatprep.subr.bf16.mxu0 0
        %6179 = vmatpush2.bf16.msra.mxu0 0
        %6180 = vmatprep.subr.bf16.mxu0 0
        %6181 = vmatpush2.bf16.msra.mxu0 0
        %6182 = vmatprep.mubr.bf16.mxu0 0
        %6183 = vmatmul.mubr.bf16.gmra.mxu0 %v6054
        %v6184 = vpop.f32.mrf.mxu0
        %v6185 = vadd.f32 %v6015, %v6184
        %v6186 = vpop.f32.mrf.mxu0
        %v6187 = vadd.f32 %v6019, %v6186
        %v6188 = vpop.f32.mrf.mxu0
        %v6189 = vadd.f32 %v6015, %v6188
        %v6190 = vpop.f32.mrf.mxu0
        %v6191 = vadd.f32 %v6019, %v6190
        %6192 = vmatprep.mubr.bf16.mxu0 0
        %6193 = vmatmul.mubr.bf16.gmra.mxu0 %v6055
        %v6194 = vpop.f32.mrf.mxu0
        %v6195 = vadd.f32 %v6015, %v6194
        %v6196 = vpop.f32.mrf.mxu0
        %v6197 = vadd.f32 %v6019, %v6196
        %v6198 = vpop.f32.mrf.mxu0
        %v6199 = vadd.f32 %v6015, %v6198
        %v6200 = vpop.f32.mrf.mxu0
        %v6201 = vadd.f32 %v6019, %v6200
        %6202 = vmatprep.mubr.bf16.mxu0 0
        %6203 = vmatmul.mubr.bf16.gmra.mxu0 %v6056
        %v6204 = vpop.f32.mrf.mxu0
        %v6205 = vadd.f32 %v6015, %v6204
        %v6206 = vpop.f32.mrf.mxu0
        %v6207 = vadd.f32 %v6019, %v6206
        %v6208 = vpop.f32.mrf.mxu0
        %v6209 = vadd.f32 %v6015, %v6208
        %v6210 = vpop.f32.mrf.mxu0
        %v6211 = vadd.f32 %v6019, %v6210
        %6212 = vmatprep.mubr.bf16.mxu0 0
        %6213 = vmatmul.mubr.bf16.gmra.mxu0 %v6057
        %v6214 = vpop.f32.mrf.mxu0
        %v6215 = vadd.f32 %v6015, %v6214
        %v6216 = vpop.f32.mrf.mxu0
        %v6217 = vadd.f32 %v6019, %v6216
        %v6218 = vpop.f32.mrf.mxu0
        %v6219 = vadd.f32 %v6015, %v6218
        %v6220 = vpop.f32.mrf.mxu0
        %v6221 = vadd.f32 %v6019, %v6220
        %6222 = vmatprep.mubr.bf16.mxu0 0
        %6223 = vmatmul.mubr.bf16.gmra.mxu0 %v6058
        %v6224 = vpop.f32.mrf.mxu0
        %v6225 = vadd.f32 %v6015, %v6224
        %v6226 = vpop.f32.mrf.mxu0
        %v6227 = vadd.f32 %v6019, %v6226
        %v6228 = vpop.f32.mrf.mxu0
        %v6229 = vadd.f32 %v6015, %v6228
        %v6230 = vpop.f32.mrf.mxu0
        %v6231 = vadd.f32 %v6019, %v6230
        %6232 = vmatprep.mubr.bf16.mxu0 0
        %6233 = vmatmul.mubr.bf16.gmra.mxu0 %v6059
        %v6234 = vpop.f32.mrf.mxu0
        %v6235 = vadd.f32 %v6015, %v6234
        %v6236 = vpop.f32.mrf.mxu0
        %v6237 = vadd.f32 %v6019, %v6236
        %v6238 = vpop.f32.mrf.mxu0
        %v6239 = vadd.f32 %v6015, %v6238
        %v6240 = vpop.f32.mrf.mxu0
        %v6241 = vadd.f32 %v6019, %v6240
        %6242 = vmatprep.mubr.bf16.mxu0 0
        %6243 = vmatmul.mubr.bf16.gmra.mxu0 %v6060
        %v6244 = vpop.f32.mrf.mxu0
        %v6245 = vadd.f32 %v6015, %v6244
        %v6246 = vpop.f32.mrf.mxu0
        %v6247 = vadd.f32 %v6019, %v6246
        %v6248 = vpop.f32.mrf.mxu0
        %v6249 = vadd.f32 %v6015, %v6248
        %v6250 = vpop.f32.mrf.mxu0
        %v6251 = vadd.f32 %v6019, %v6250
        %6252 = vmatprep.mubr.bf16.mxu0 0
        %6253 = vmatmul.mubr.bf16.gmra.mxu0 %v6061
        %v6254 = vpop.f32.mrf.mxu0
        %v6255 = vadd.f32 %v6015, %v6254
        %v6256 = vpop.f32.mrf.mxu0
        %v6257 = vadd.f32 %v6019, %v6256
        %v6258 = vpop.f32.mrf.mxu0
        %v6259 = vadd.f32 %v6015, %v6258
        %v6260 = vpop.f32.mrf.mxu0
        %v6261 = vadd.f32 %v6019, %v6260
        %6262 = vdwg.mxu0
        %v6263 = vld [vmem:[%s942] sm:$0xff]
        %v6264 = vld [vmem:[%s942 + $0x8] sm:$0xff]
        %v6265 = vld [vmem:[%s942 + $0x10] sm:$0xff]
        %v6266 = vld [vmem:[%s942 + $0x18] sm:$0xff]
        %v6267 = vld [vmem:[%s942 + $0x20] sm:$0xff]
        %v6268 = vld [vmem:[%s942 + $0x28] sm:$0xff]
        %v6269 = vld [vmem:[%s942 + $0x30] sm:$0xff]
        %v6270 = vld [vmem:[%s942 + $0x38] sm:$0xff]
        %v6271 = vld [vmem:[%s942 + $0x40] sm:$0xff]
        %v6272 = vld [vmem:[%s942 + $0x48] sm:$0xff]
        %v6273 = vld [vmem:[%s942 + $0x50] sm:$0xff]
        %v6274 = vld [vmem:[%s942 + $0x58] sm:$0xff]
        %v6275 = vld [vmem:[%s942 + $0x60] sm:$0xff]
        %v6276 = vld [vmem:[%s942 + $0x68] sm:$0xff]
        %v6277 = vld [vmem:[%s942 + $0x70] sm:$0xff]
        %v6278 = vld [vmem:[%s942 + $0x78] sm:$0xff]
        %6295 = vrot.lane.b32.xlu0 %v5932, 96
        %v6296 = vpop.permute.xlu0 %6295
        %6297 = vrot.lane.b32.xlu0 %v5935, 96
        %v6298 = vpop.permute.xlu0 %6297
        %6299 = vrot.lane.b32.xlu0 %v5940, 96
        %v6300 = vpop.permute.xlu0 %6299
        %6301 = vrot.lane.b32.xlu0 %v5943, 96
        %v6302 = vpop.permute.xlu0 %6301
        %6303 = vrot.lane.b32.xlu0 %v5948, 96
        %v6304 = vpop.permute.xlu0 %6303
        %6305 = vrot.lane.b32.xlu0 %v5951, 96
        %v6306 = vpop.permute.xlu0 %6305
        %6307 = vrot.lane.b32.xlu0 %v5956, 96
        %v6308 = vpop.permute.xlu0 %6307
        %6309 = vrot.lane.b32.xlu0 %v5959, 96
        %v6310 = vpop.permute.xlu0 %6309
        %6311 = vrot.lane.b32.xlu0 %v5964, 96
        %v6312 = vpop.permute.xlu0 %6311
        %6313 = vrot.lane.b32.xlu0 %v5967, 96
        %v6314 = vpop.permute.xlu0 %6313
        %6315 = vrot.lane.b32.xlu0 %v5972, 96
        %v6316 = vpop.permute.xlu0 %6315
        %6317 = vrot.lane.b32.xlu0 %v5975, 96
        %v6318 = vpop.permute.xlu0 %6317
        %6319 = vrot.lane.b32.xlu0 %v5980, 96
        %v6320 = vpop.permute.xlu0 %6319
        %6321 = vrot.lane.b32.xlu0 %v5983, 96
        %v6322 = vpop.permute.xlu0 %6321
        %6323 = vrot.lane.b32.xlu0 %v5988, 96
        %v6324 = vpop.permute.xlu0 %6323
        %6325 = vrot.lane.b32.xlu0 %v5991, 96
        %v6326 = vpop.permute.xlu0 %6325
        %6343 = vrot.lane.b32.xlu0 %v5932, 64
        %v6344 = vpop.permute.xlu0 %6343
        %6345 = vrot.lane.b32.xlu0 %v5935, 64
        %v6346 = vpop.permute.xlu0 %6345
        %6347 = vrot.lane.b32.xlu0 %v5940, 64
        %v6348 = vpop.permute.xlu0 %6347
        %6349 = vrot.lane.b32.xlu0 %v5943, 64
        %v6350 = vpop.permute.xlu0 %6349
        %6351 = vrot.lane.b32.xlu0 %v5948, 64
        %v6352 = vpop.permute.xlu0 %6351
        %6353 = vrot.lane.b32.xlu0 %v5951, 64
        %v6354 = vpop.permute.xlu0 %6353
        %6355 = vrot.lane.b32.xlu0 %v5956, 64
        %v6356 = vpop.permute.xlu0 %6355
        %6357 = vrot.lane.b32.xlu0 %v5959, 64
        %v6358 = vpop.permute.xlu0 %6357
        %6359 = vrot.lane.b32.xlu0 %v5964, 64
        %v6360 = vpop.permute.xlu0 %6359
        %6361 = vrot.lane.b32.xlu0 %v5967, 64
        %v6362 = vpop.permute.xlu0 %6361
        %6363 = vrot.lane.b32.xlu0 %v5972, 64
        %v6364 = vpop.permute.xlu0 %6363
        %6365 = vrot.lane.b32.xlu0 %v5975, 64
        %v6366 = vpop.permute.xlu0 %6365
        %6367 = vrot.lane.b32.xlu0 %v5980, 64
        %v6368 = vpop.permute.xlu0 %6367
        %6369 = vrot.lane.b32.xlu0 %v5983, 64
        %v6370 = vpop.permute.xlu0 %6369
        %6371 = vrot.lane.b32.xlu0 %v5988, 64
        %v6372 = vpop.permute.xlu0 %6371
        %6373 = vrot.lane.b32.xlu0 %v5991, 64
        %v6374 = vpop.permute.xlu0 %6373
        %6391 = vrot.lane.b32.xlu0 %v5932, 32
        %v6392 = vpop.permute.xlu0 %6391
        %6393 = vrot.lane.b32.xlu0 %v5935, 32
        %v6394 = vpop.permute.xlu0 %6393
        %6395 = vrot.lane.b32.xlu0 %v5940, 32
        %v6396 = vpop.permute.xlu0 %6395
        %6397 = vrot.lane.b32.xlu0 %v5943, 32
        %v6398 = vpop.permute.xlu0 %6397
        %6399 = vrot.lane.b32.xlu0 %v5948, 32
        %v6400 = vpop.permute.xlu0 %6399
        %6401 = vrot.lane.b32.xlu0 %v5951, 32
        %v6402 = vpop.permute.xlu0 %6401
        %6403 = vrot.lane.b32.xlu0 %v5956, 32
        %v6404 = vpop.permute.xlu0 %6403
        %6405 = vrot.lane.b32.xlu0 %v5959, 32
        %v6406 = vpop.permute.xlu0 %6405
        %6407 = vrot.lane.b32.xlu0 %v5964, 32
        %v6408 = vpop.permute.xlu0 %6407
        %6409 = vrot.lane.b32.xlu0 %v5967, 32
        %v6410 = vpop.permute.xlu0 %6409
        %6411 = vrot.lane.b32.xlu0 %v5972, 32
        %v6412 = vpop.permute.xlu0 %6411
        %6413 = vrot.lane.b32.xlu0 %v5975, 32
        %v6414 = vpop.permute.xlu0 %6413
        %6415 = vrot.lane.b32.xlu0 %v5980, 32
        %v6416 = vpop.permute.xlu0 %6415
        %6417 = vrot.lane.b32.xlu0 %v5983, 32
        %v6418 = vpop.permute.xlu0 %6417
        %6419 = vrot.lane.b32.xlu0 %v5988, 32
        %v6420 = vpop.permute.xlu0 %6419
        %6421 = vrot.lane.b32.xlu0 %v5991, 32
        %v6422 = vpop.permute.xlu0 %6421
        %v6439 = vpack.c.bf16 %v5935, %v5932
        %v6440 = vpack.c.bf16 %v5943, %v5940
        %v6441 = vpack.c.bf16 %v5951, %v5948
        %v6442 = vpack.c.bf16 %v5959, %v5956
        %v6443 = vpack.c.bf16 %v5967, %v5964
        %v6444 = vpack.c.bf16 %v5975, %v5972
        %v6445 = vpack.c.bf16 %v5983, %v5980
        %v6446 = vpack.c.bf16 %v5991, %v5988
        %v6447 = vpack.c.bf16 %v6298, %v6296
        %v6448 = vpack.c.bf16 %v6302, %v6300
        %v6449 = vpack.c.bf16 %v6306, %v6304
        %v6450 = vpack.c.bf16 %v6310, %v6308
        %v6451 = vpack.c.bf16 %v6314, %v6312
        %v6452 = vpack.c.bf16 %v6318, %v6316
        %v6453 = vpack.c.bf16 %v6322, %v6320
        %v6454 = vpack.c.bf16 %v6326, %v6324
        %v6455 = vpack.c.bf16 %v6346, %v6344
        %v6456 = vpack.c.bf16 %v6350, %v6348
        %v6457 = vpack.c.bf16 %v6354, %v6352
        %v6458 = vpack.c.bf16 %v6358, %v6356
        %v6459 = vpack.c.bf16 %v6362, %v6360
        %v6460 = vpack.c.bf16 %v6366, %v6364
        %v6461 = vpack.c.bf16 %v6370, %v6368
        %v6462 = vpack.c.bf16 %v6374, %v6372
        %v6463 = vpack.c.bf16 %v6394, %v6392
        %v6464 = vpack.c.bf16 %v6398, %v6396
        %v6465 = vpack.c.bf16 %v6402, %v6400
        %v6466 = vpack.c.bf16 %v6406, %v6404
        %v6467 = vpack.c.bf16 %v6410, %v6408
        %v6468 = vpack.c.bf16 %v6414, %v6412
        %v6469 = vpack.c.bf16 %v6418, %v6416
        %v6470 = vpack.c.bf16 %v6422, %v6420
        %6487 = vrot.lane.b32.xlu0 %v6185, 96
        %v6488 = vpop.permute.xlu0 %6487
        %6489 = vrot.lane.b32.xlu0 %v6189, 96
        %v6490 = vpop.permute.xlu0 %6489
        %6491 = vrot.lane.b32.xlu0 %v6195, 96
        %v6492 = vpop.permute.xlu0 %6491
        %6493 = vrot.lane.b32.xlu0 %v6199, 96
        %v6494 = vpop.permute.xlu0 %6493
        %6495 = vrot.lane.b32.xlu0 %v6205, 96
        %v6496 = vpop.permute.xlu0 %6495
        %6497 = vrot.lane.b32.xlu0 %v6209, 96
        %v6498 = vpop.permute.xlu0 %6497
        %6499 = vrot.lane.b32.xlu0 %v6215, 96
        %v6500 = vpop.permute.xlu0 %6499
        %6501 = vrot.lane.b32.xlu0 %v6219, 96
        %v6502 = vpop.permute.xlu0 %6501
        %6503 = vrot.lane.b32.xlu0 %v6225, 96
        %v6504 = vpop.permute.xlu0 %6503
        %6505 = vrot.lane.b32.xlu0 %v6229, 96
        %v6506 = vpop.permute.xlu0 %6505
        %6507 = vrot.lane.b32.xlu0 %v6235, 96
        %v6508 = vpop.permute.xlu0 %6507
        %6509 = vrot.lane.b32.xlu0 %v6239, 96
        %v6510 = vpop.permute.xlu0 %6509
        %6511 = vrot.lane.b32.xlu0 %v6245, 96
        %v6512 = vpop.permute.xlu0 %6511
        %6513 = vrot.lane.b32.xlu0 %v6249, 96
        %v6514 = vpop.permute.xlu0 %6513
        %6515 = vrot.lane.b32.xlu0 %v6255, 96
        %v6516 = vpop.permute.xlu0 %6515
        %6517 = vrot.lane.b32.xlu0 %v6259, 96
        %v6518 = vpop.permute.xlu0 %6517
        %6535 = vrot.lane.b32.xlu0 %v6185, 64
        %v6536 = vpop.permute.xlu0 %6535
        %6537 = vrot.lane.b32.xlu0 %v6189, 64
        %v6538 = vpop.permute.xlu0 %6537
        %6539 = vrot.lane.b32.xlu0 %v6195, 64
        %v6540 = vpop.permute.xlu0 %6539
        %6541 = vrot.lane.b32.xlu0 %v6199, 64
        %v6542 = vpop.permute.xlu0 %6541
        %6543 = vrot.lane.b32.xlu0 %v6205, 64
        %v6544 = vpop.permute.xlu0 %6543
        %6545 = vrot.lane.b32.xlu0 %v6209, 64
        %v6546 = vpop.permute.xlu0 %6545
        %6547 = vrot.lane.b32.xlu0 %v6215, 64
        %v6548 = vpop.permute.xlu0 %6547
        %6549 = vrot.lane.b32.xlu0 %v6219, 64
        %v6550 = vpop.permute.xlu0 %6549
        %6551 = vrot.lane.b32.xlu0 %v6225, 64
        %v6552 = vpop.permute.xlu0 %6551
        %6553 = vrot.lane.b32.xlu0 %v6229, 64
        %v6554 = vpop.permute.xlu0 %6553
        %6555 = vrot.lane.b32.xlu0 %v6235, 64
        %v6556 = vpop.permute.xlu0 %6555
        %6557 = vrot.lane.b32.xlu0 %v6239, 64
        %v6558 = vpop.permute.xlu0 %6557
        %6559 = vrot.lane.b32.xlu0 %v6245, 64
        %v6560 = vpop.permute.xlu0 %6559
        %6561 = vrot.lane.b32.xlu0 %v6249, 64
        %v6562 = vpop.permute.xlu0 %6561
        %6563 = vrot.lane.b32.xlu0 %v6255, 64
        %v6564 = vpop.permute.xlu0 %6563
        %6565 = vrot.lane.b32.xlu0 %v6259, 64
        %v6566 = vpop.permute.xlu0 %6565
        %6583 = vrot.lane.b32.xlu0 %v6185, 32
        %v6584 = vpop.permute.xlu0 %6583
        %6585 = vrot.lane.b32.xlu0 %v6189, 32
        %v6586 = vpop.permute.xlu0 %6585
        %6587 = vrot.lane.b32.xlu0 %v6195, 32
        %v6588 = vpop.permute.xlu0 %6587
        %6589 = vrot.lane.b32.xlu0 %v6199, 32
        %v6590 = vpop.permute.xlu0 %6589
        %6591 = vrot.lane.b32.xlu0 %v6205, 32
        %v6592 = vpop.permute.xlu0 %6591
        %6593 = vrot.lane.b32.xlu0 %v6209, 32
        %v6594 = vpop.permute.xlu0 %6593
        %6595 = vrot.lane.b32.xlu0 %v6215, 32
        %v6596 = vpop.permute.xlu0 %6595
        %6597 = vrot.lane.b32.xlu0 %v6219, 32
        %v6598 = vpop.permute.xlu0 %6597
        %6599 = vrot.lane.b32.xlu0 %v6225, 32
        %v6600 = vpop.permute.xlu0 %6599
        %6601 = vrot.lane.b32.xlu0 %v6229, 32
        %v6602 = vpop.permute.xlu0 %6601
        %6603 = vrot.lane.b32.xlu0 %v6235, 32
        %v6604 = vpop.permute.xlu0 %6603
        %6605 = vrot.lane.b32.xlu0 %v6239, 32
        %v6606 = vpop.permute.xlu0 %6605
        %6607 = vrot.lane.b32.xlu0 %v6245, 32
        %v6608 = vpop.permute.xlu0 %6607
        %6609 = vrot.lane.b32.xlu0 %v6249, 32
        %v6610 = vpop.permute.xlu0 %6609
        %6611 = vrot.lane.b32.xlu0 %v6255, 32
        %v6612 = vpop.permute.xlu0 %6611
        %6613 = vrot.lane.b32.xlu0 %v6259, 32
        %v6614 = vpop.permute.xlu0 %6613
        %v6631 = vpack.c.bf16 %v6189, %v6185
        %v6632 = vpack.c.bf16 %v6199, %v6195
        %v6633 = vpack.c.bf16 %v6209, %v6205
        %v6634 = vpack.c.bf16 %v6219, %v6215
        %v6635 = vpack.c.bf16 %v6229, %v6225
        %v6636 = vpack.c.bf16 %v6239, %v6235
        %v6637 = vpack.c.bf16 %v6249, %v6245
        %v6638 = vpack.c.bf16 %v6259, %v6255
        %v6639 = vpack.c.bf16 %v6490, %v6488
        %v6640 = vpack.c.bf16 %v6494, %v6492
        %v6641 = vpack.c.bf16 %v6498, %v6496
        %v6642 = vpack.c.bf16 %v6502, %v6500
        %v6643 = vpack.c.bf16 %v6506, %v6504
        %v6644 = vpack.c.bf16 %v6510, %v6508
        %v6645 = vpack.c.bf16 %v6514, %v6512
        %v6646 = vpack.c.bf16 %v6518, %v6516
        %v6647 = vpack.c.bf16 %v6538, %v6536
        %v6648 = vpack.c.bf16 %v6542, %v6540
        %v6649 = vpack.c.bf16 %v6546, %v6544
        %v6650 = vpack.c.bf16 %v6550, %v6548
        %v6651 = vpack.c.bf16 %v6554, %v6552
        %v6652 = vpack.c.bf16 %v6558, %v6556
        %v6653 = vpack.c.bf16 %v6562, %v6560
        %v6654 = vpack.c.bf16 %v6566, %v6564
        %v6655 = vpack.c.bf16 %v6586, %v6584
        %v6656 = vpack.c.bf16 %v6590, %v6588
        %v6657 = vpack.c.bf16 %v6594, %v6592
        %v6658 = vpack.c.bf16 %v6598, %v6596
        %v6659 = vpack.c.bf16 %v6602, %v6600
        %v6660 = vpack.c.bf16 %v6606, %v6604
        %v6661 = vpack.c.bf16 %v6610, %v6608
        %v6662 = vpack.c.bf16 %v6614, %v6612
        %6679 = vrot.lane.b32.xlu0 %v6187, 96
        %v6680 = vpop.permute.xlu0 %6679
        %6681 = vrot.lane.b32.xlu0 %v6191, 96
        %v6682 = vpop.permute.xlu0 %6681
        %6683 = vrot.lane.b32.xlu0 %v6197, 96
        %v6684 = vpop.permute.xlu0 %6683
        %6685 = vrot.lane.b32.xlu0 %v6201, 96
        %v6686 = vpop.permute.xlu0 %6685
        %6687 = vrot.lane.b32.xlu0 %v6207, 96
        %v6688 = vpop.permute.xlu0 %6687
        %6689 = vrot.lane.b32.xlu0 %v6211, 96
        %v6690 = vpop.permute.xlu0 %6689
        %6691 = vrot.lane.b32.xlu0 %v6217, 96
        %v6692 = vpop.permute.xlu0 %6691
        %6693 = vrot.lane.b32.xlu0 %v6221, 96
        %v6694 = vpop.permute.xlu0 %6693
        %6695 = vrot.lane.b32.xlu0 %v6227, 96
        %v6696 = vpop.permute.xlu0 %6695
        %6697 = vrot.lane.b32.xlu0 %v6231, 96
        %v6698 = vpop.permute.xlu0 %6697
        %6699 = vrot.lane.b32.xlu0 %v6237, 96
        %v6700 = vpop.permute.xlu0 %6699
        %6701 = vrot.lane.b32.xlu0 %v6241, 96
        %v6702 = vpop.permute.xlu0 %6701
        %6703 = vrot.lane.b32.xlu0 %v6247, 96
        %v6704 = vpop.permute.xlu0 %6703
        %6705 = vrot.lane.b32.xlu0 %v6251, 96
        %v6706 = vpop.permute.xlu0 %6705
        %6707 = vrot.lane.b32.xlu0 %v6257, 96
        %v6708 = vpop.permute.xlu0 %6707
        %6709 = vrot.lane.b32.xlu0 %v6261, 96
        %v6710 = vpop.permute.xlu0 %6709
        %6727 = vrot.lane.b32.xlu0 %v6187, 64
        %v6728 = vpop.permute.xlu0 %6727
        %6729 = vrot.lane.b32.xlu0 %v6191, 64
        %v6730 = vpop.permute.xlu0 %6729
        %6731 = vrot.lane.b32.xlu0 %v6197, 64
        %v6732 = vpop.permute.xlu0 %6731
        %6733 = vrot.lane.b32.xlu0 %v6201, 64
        %v6734 = vpop.permute.xlu0 %6733
        %6735 = vrot.lane.b32.xlu0 %v6207, 64
        %v6736 = vpop.permute.xlu0 %6735
        %6737 = vrot.lane.b32.xlu0 %v6211, 64
        %v6738 = vpop.permute.xlu0 %6737
        %6739 = vrot.lane.b32.xlu0 %v6217, 64
        %v6740 = vpop.permute.xlu0 %6739
        %6741 = vrot.lane.b32.xlu0 %v6221, 64
        %v6742 = vpop.permute.xlu0 %6741
        %6743 = vrot.lane.b32.xlu0 %v6227, 64
        %v6744 = vpop.permute.xlu0 %6743
        %6745 = vrot.lane.b32.xlu0 %v6231, 64
        %v6746 = vpop.permute.xlu0 %6745
        %6747 = vrot.lane.b32.xlu0 %v6237, 64
        %v6748 = vpop.permute.xlu0 %6747
        %6749 = vrot.lane.b32.xlu0 %v6241, 64
        %v6750 = vpop.permute.xlu0 %6749
        %6751 = vrot.lane.b32.xlu0 %v6247, 64
        %v6752 = vpop.permute.xlu0 %6751
        %6753 = vrot.lane.b32.xlu0 %v6251, 64
        %v6754 = vpop.permute.xlu0 %6753
        %6755 = vrot.lane.b32.xlu0 %v6257, 64
        %v6756 = vpop.permute.xlu0 %6755
        %6757 = vrot.lane.b32.xlu0 %v6261, 64
        %v6758 = vpop.permute.xlu0 %6757
        %6775 = vrot.lane.b32.xlu0 %v6187, 32
        %v6776 = vpop.permute.xlu0 %6775
        %6777 = vrot.lane.b32.xlu0 %v6191, 32
        %v6778 = vpop.permute.xlu0 %6777
        %6779 = vrot.lane.b32.xlu0 %v6197, 32
        %v6780 = vpop.permute.xlu0 %6779
        %6781 = vrot.lane.b32.xlu0 %v6201, 32
        %v6782 = vpop.permute.xlu0 %6781
        %6783 = vrot.lane.b32.xlu0 %v6207, 32
        %v6784 = vpop.permute.xlu0 %6783
        %6785 = vrot.lane.b32.xlu0 %v6211, 32
        %v6786 = vpop.permute.xlu0 %6785
        %6787 = vrot.lane.b32.xlu0 %v6217, 32
        %v6788 = vpop.permute.xlu0 %6787
        %6789 = vrot.lane.b32.xlu0 %v6221, 32
        %v6790 = vpop.permute.xlu0 %6789
        %6791 = vrot.lane.b32.xlu0 %v6227, 32
        %v6792 = vpop.permute.xlu0 %6791
        %6793 = vrot.lane.b32.xlu0 %v6231, 32
        %v6794 = vpop.permute.xlu0 %6793
        %6795 = vrot.lane.b32.xlu0 %v6237, 32
        %v6796 = vpop.permute.xlu0 %6795
        %6797 = vrot.lane.b32.xlu0 %v6241, 32
        %v6798 = vpop.permute.xlu0 %6797
        %6799 = vrot.lane.b32.xlu0 %v6247, 32
        %v6800 = vpop.permute.xlu0 %6799
        %6801 = vrot.lane.b32.xlu0 %v6251, 32
        %v6802 = vpop.permute.xlu0 %6801
        %6803 = vrot.lane.b32.xlu0 %v6257, 32
        %v6804 = vpop.permute.xlu0 %6803
        %6805 = vrot.lane.b32.xlu0 %v6261, 32
        %v6806 = vpop.permute.xlu0 %6805
        %v6823 = vpack.c.bf16 %v6191, %v6187
        %v6824 = vpack.c.bf16 %v6201, %v6197
        %v6825 = vpack.c.bf16 %v6211, %v6207
        %v6826 = vpack.c.bf16 %v6221, %v6217
        %v6827 = vpack.c.bf16 %v6231, %v6227
        %v6828 = vpack.c.bf16 %v6241, %v6237
        %v6829 = vpack.c.bf16 %v6251, %v6247
        %v6830 = vpack.c.bf16 %v6261, %v6257
        %v6831 = vpack.c.bf16 %v6682, %v6680
        %v6832 = vpack.c.bf16 %v6686, %v6684
        %v6833 = vpack.c.bf16 %v6690, %v6688
        %v6834 = vpack.c.bf16 %v6694, %v6692
        %v6835 = vpack.c.bf16 %v6698, %v6696
        %v6836 = vpack.c.bf16 %v6702, %v6700
        %v6837 = vpack.c.bf16 %v6706, %v6704
        %v6838 = vpack.c.bf16 %v6710, %v6708
        %v6839 = vpack.c.bf16 %v6730, %v6728
        %v6840 = vpack.c.bf16 %v6734, %v6732
        %v6841 = vpack.c.bf16 %v6738, %v6736
        %v6842 = vpack.c.bf16 %v6742, %v6740
        %v6843 = vpack.c.bf16 %v6746, %v6744
        %v6844 = vpack.c.bf16 %v6750, %v6748
        %v6845 = vpack.c.bf16 %v6754, %v6752
        %v6846 = vpack.c.bf16 %v6758, %v6756
        %v6847 = vpack.c.bf16 %v6778, %v6776
        %v6848 = vpack.c.bf16 %v6782, %v6780
        %v6849 = vpack.c.bf16 %v6786, %v6784
        %v6850 = vpack.c.bf16 %v6790, %v6788
        %v6851 = vpack.c.bf16 %v6794, %v6792
        %v6852 = vpack.c.bf16 %v6798, %v6796
        %v6853 = vpack.c.bf16 %v6802, %v6800
        %v6854 = vpack.c.bf16 %v6806, %v6804
        %v6856 = vsel %vm2752, %v6439, 0
        %v6859 = vsel %vm2752, %v6440, 0
        %v6862 = vsel %vm2752, %v6441, 0
        %v6865 = vsel %vm2752, %v6442, 0
        %v6868 = vsel %vm2752, %v6443, 0
        %v6871 = vsel %vm2752, %v6444, 0
        %v6874 = vsel %vm2752, %v6445, 0
        %v6877 = vsel %vm2752, %v6446, 0
        %v6880 = vsel %vm2752, %v6631, 0
        %v6883 = vsel %vm2752, %v6632, 0
        %v6886 = vsel %vm2752, %v6633, 0
        %v6889 = vsel %vm2752, %v6634, 0
        %v6892 = vsel %vm2752, %v6635, 0
        %v6895 = vsel %vm2752, %v6636, 0
        %v6898 = vsel %vm2752, %v6637, 0
        %v6901 = vsel %vm2752, %v6638, 0
        %6903 = vmatprep.subr.bf16.mxu0 0
        %6904 = vmatpush1.bf16.xpose.msra.mxu0 %v6901
        %6905 = vmatprep.subr.bf16.mxu0 0
        %6906 = vmatpush1.bf16.xpose.msra.mxu0 %v6898
        %6907 = vmatprep.subr.bf16.mxu0 0
        %6908 = vmatpush1.bf16.xpose.msra.mxu0 %v6895
        %6909 = vmatprep.subr.bf16.mxu0 0
        %6910 = vmatpush1.bf16.xpose.msra.mxu0 %v6892
        %6911 = vmatprep.subr.bf16.mxu0 0
        %6912 = vmatpush1.bf16.xpose.msra.mxu0 %v6889
        %6913 = vmatprep.subr.bf16.mxu0 0
        %6914 = vmatpush1.bf16.xpose.msra.mxu0 %v6886
        %6915 = vmatprep.subr.bf16.mxu0 0
        %6916 = vmatpush1.bf16.xpose.msra.mxu0 %v6883
        %6917 = vmatprep.subr.bf16.mxu0 0
        %6918 = vmatpush1.bf16.xpose.msra.mxu0 %v6880
        %6919 = vmatprep.subr.bf16.mxu0 0
        %6920 = vmatpush2.bf16.xpose.msra.mxu0 0
        %6921 = vmatprep.subr.bf16.mxu0 0
        %6922 = vmatpush2.bf16.xpose.msra.mxu0 0
        %6923 = vmatprep.subr.bf16.mxu0 0
        %6924 = vmatpush2.bf16.xpose.msra.mxu0 0
        %6925 = vmatprep.subr.bf16.mxu0 0
        %6926 = vmatpush2.bf16.xpose.msra.mxu0 0
        %6927 = vmatprep.subr.bf16.mxu0 0
        %6928 = vmatpush2.bf16.xpose.msra.mxu0 0
        %6929 = vmatprep.subr.bf16.mxu0 0
        %6930 = vmatpush2.bf16.xpose.msra.mxu0 0
        %6931 = vmatprep.subr.bf16.mxu0 0
        %6932 = vmatpush2.bf16.xpose.msra.mxu0 0
        %6933 = vmatprep.subr.bf16.mxu0 0
        %6934 = vmatpush2.bf16.xpose.msra.mxu0 0
        %6935 = vmatprep.mubr.bf16.mxu0 0
        %6936 = vmatmul.mubr.bf16.gmra.mxu0 %v6856
        %v6937 = vpop.f32.mrf.mxu0
        %v6938 = vadd.f32 0.0, %v6937
        %v6939 = vpop.f32.mrf.mxu0
        %v6940 = vpop.f32.mrf.mxu0
        %v6941 = vadd.f32 0.0, %v6940
        %v6942 = vpop.f32.mrf.mxu0
        %6943 = vmatprep.mubr.bf16.mxu0 0
        %6944 = vmatmul.mubr.bf16.gmra.mxu0 %v6859
        %v6945 = vpop.f32.mrf.mxu0
        %v6946 = vadd.f32 0.0, %v6945
        %v6947 = vpop.f32.mrf.mxu0
        %v6948 = vpop.f32.mrf.mxu0
        %v6949 = vadd.f32 0.0, %v6948
        %v6950 = vpop.f32.mrf.mxu0
        %6951 = vmatprep.mubr.bf16.mxu0 0
        %6952 = vmatmul.mubr.bf16.gmra.mxu0 %v6862
        %v6953 = vpop.f32.mrf.mxu0
        %v6954 = vadd.f32 0.0, %v6953
        %v6955 = vpop.f32.mrf.mxu0
        %v6956 = vpop.f32.mrf.mxu0
        %v6957 = vadd.f32 0.0, %v6956
        %v6958 = vpop.f32.mrf.mxu0
        %6959 = vmatprep.mubr.bf16.mxu0 0
        %6960 = vmatmul.mubr.bf16.gmra.mxu0 %v6865
        %v6961 = vpop.f32.mrf.mxu0
        %v6962 = vadd.f32 0.0, %v6961
        %v6963 = vpop.f32.mrf.mxu0
        %v6964 = vpop.f32.mrf.mxu0
        %v6965 = vadd.f32 0.0, %v6964
        %v6966 = vpop.f32.mrf.mxu0
        %6967 = vmatprep.mubr.bf16.mxu0 0
        %6968 = vmatmul.mubr.bf16.gmra.mxu0 %v6868
        %v6969 = vpop.f32.mrf.mxu0
        %v6970 = vadd.f32 0.0, %v6969
        %v6971 = vpop.f32.mrf.mxu0
        %v6972 = vpop.f32.mrf.mxu0
        %v6973 = vadd.f32 0.0, %v6972
        %v6974 = vpop.f32.mrf.mxu0
        %6975 = vmatprep.mubr.bf16.mxu0 0
        %6976 = vmatmul.mubr.bf16.gmra.mxu0 %v6871
        %v6977 = vpop.f32.mrf.mxu0
        %v6978 = vadd.f32 0.0, %v6977
        %v6979 = vpop.f32.mrf.mxu0
        %v6980 = vpop.f32.mrf.mxu0
        %v6981 = vadd.f32 0.0, %v6980
        %v6982 = vpop.f32.mrf.mxu0
        %6983 = vmatprep.mubr.bf16.mxu0 0
        %6984 = vmatmul.mubr.bf16.gmra.mxu0 %v6874
        %v6985 = vpop.f32.mrf.mxu0
        %v6986 = vadd.f32 0.0, %v6985
        %v6987 = vpop.f32.mrf.mxu0
        %v6988 = vpop.f32.mrf.mxu0
        %v6989 = vadd.f32 0.0, %v6988
        %v6990 = vpop.f32.mrf.mxu0
        %6991 = vmatprep.mubr.bf16.mxu0 0
        %6992 = vmatmul.mubr.bf16.gmra.mxu0 %v6877
        %v6993 = vpop.f32.mrf.mxu0
        %v6994 = vadd.f32 0.0, %v6993
        %v6995 = vpop.f32.mrf.mxu0
        %v6996 = vpop.f32.mrf.mxu0
        %v6997 = vadd.f32 0.0, %v6996
        %v6998 = vpop.f32.mrf.mxu0
        %6999 = vdwg.mxu0
        %v7001 = vsel %vm2752, %v6447, 0
        %v7004 = vsel %vm2752, %v6448, 0
        %v7007 = vsel %vm2752, %v6449, 0
        %v7010 = vsel %vm2752, %v6450, 0
        %v7013 = vsel %vm2752, %v6451, 0
        %v7016 = vsel %vm2752, %v6452, 0
        %v7019 = vsel %vm2752, %v6453, 0
        %v7022 = vsel %vm2752, %v6454, 0
        %v7025 = vsel %vm2752, %v6639, 0
        %v7028 = vsel %vm2752, %v6640, 0
        %v7031 = vsel %vm2752, %v6641, 0
        %v7034 = vsel %vm2752, %v6642, 0
        %v7037 = vsel %vm2752, %v6643, 0
        %v7040 = vsel %vm2752, %v6644, 0
        %v7043 = vsel %vm2752, %v6645, 0
        %v7046 = vsel %vm2752, %v6646, 0
        %7048 = vmatprep.subr.bf16.mxu0 0
        %7049 = vmatpush1.bf16.xpose.msra.mxu0 %v7046
        %7050 = vmatprep.subr.bf16.mxu0 0
        %7051 = vmatpush1.bf16.xpose.msra.mxu0 %v7043
        %7052 = vmatprep.subr.bf16.mxu0 0
        %7053 = vmatpush1.bf16.xpose.msra.mxu0 %v7040
        %7054 = vmatprep.subr.bf16.mxu0 0
        %7055 = vmatpush1.bf16.xpose.msra.mxu0 %v7037
        %7056 = vmatprep.subr.bf16.mxu0 0
        %7057 = vmatpush1.bf16.xpose.msra.mxu0 %v7034
        %7058 = vmatprep.subr.bf16.mxu0 0
        %7059 = vmatpush1.bf16.xpose.msra.mxu0 %v7031
        %7060 = vmatprep.subr.bf16.mxu0 0
        %7061 = vmatpush1.bf16.xpose.msra.mxu0 %v7028
        %7062 = vmatprep.subr.bf16.mxu0 0
        %7063 = vmatpush1.bf16.xpose.msra.mxu0 %v7025
        %7064 = vmatprep.subr.bf16.mxu0 0
        %7065 = vmatpush2.bf16.xpose.msra.mxu0 0
        %7066 = vmatprep.subr.bf16.mxu0 0
        %7067 = vmatpush2.bf16.xpose.msra.mxu0 0
        %7068 = vmatprep.subr.bf16.mxu0 0
        %7069 = vmatpush2.bf16.xpose.msra.mxu0 0
        %7070 = vmatprep.subr.bf16.mxu0 0
        %7071 = vmatpush2.bf16.xpose.msra.mxu0 0
        %7072 = vmatprep.subr.bf16.mxu0 0
        %7073 = vmatpush2.bf16.xpose.msra.mxu0 0
        %7074 = vmatprep.subr.bf16.mxu0 0
        %7075 = vmatpush2.bf16.xpose.msra.mxu0 0
        %7076 = vmatprep.subr.bf16.mxu0 0
        %7077 = vmatpush2.bf16.xpose.msra.mxu0 0
        %7078 = vmatprep.subr.bf16.mxu0 0
        %7079 = vmatpush2.bf16.xpose.msra.mxu0 0
        %7080 = vmatprep.mubr.bf16.mxu0 0
        %7081 = vmatmul.mubr.bf16.gmra.mxu0 %v7001
        %v7082 = vpop.f32.mrf.mxu0
        %v7083 = vadd.f32 0.0, %v7082
        %v7084 = vpop.f32.mrf.mxu0
        %v7085 = vpop.f32.mrf.mxu0
        %v7086 = vadd.f32 0.0, %v7085
        %v7087 = vpop.f32.mrf.mxu0
        %7088 = vmatprep.mubr.bf16.mxu0 0
        %7089 = vmatmul.mubr.bf16.gmra.mxu0 %v7004
        %v7090 = vpop.f32.mrf.mxu0
        %v7091 = vadd.f32 0.0, %v7090
        %v7092 = vpop.f32.mrf.mxu0
        %v7093 = vpop.f32.mrf.mxu0
        %v7094 = vadd.f32 0.0, %v7093
        %v7095 = vpop.f32.mrf.mxu0
        %7096 = vmatprep.mubr.bf16.mxu0 0
        %7097 = vmatmul.mubr.bf16.gmra.mxu0 %v7007
        %v7098 = vpop.f32.mrf.mxu0
        %v7099 = vadd.f32 0.0, %v7098
        %v7100 = vpop.f32.mrf.mxu0
        %v7101 = vpop.f32.mrf.mxu0
        %v7102 = vadd.f32 0.0, %v7101
        %v7103 = vpop.f32.mrf.mxu0
        %7104 = vmatprep.mubr.bf16.mxu0 0
        %7105 = vmatmul.mubr.bf16.gmra.mxu0 %v7010
        %v7106 = vpop.f32.mrf.mxu0
        %v7107 = vadd.f32 0.0, %v7106
        %v7108 = vpop.f32.mrf.mxu0
        %v7109 = vpop.f32.mrf.mxu0
        %v7110 = vadd.f32 0.0, %v7109
        %v7111 = vpop.f32.mrf.mxu0
        %7112 = vmatprep.mubr.bf16.mxu0 0
        %7113 = vmatmul.mubr.bf16.gmra.mxu0 %v7013
        %v7114 = vpop.f32.mrf.mxu0
        %v7115 = vadd.f32 0.0, %v7114
        %v7116 = vpop.f32.mrf.mxu0
        %v7117 = vpop.f32.mrf.mxu0
        %v7118 = vadd.f32 0.0, %v7117
        %v7119 = vpop.f32.mrf.mxu0
        %7120 = vmatprep.mubr.bf16.mxu0 0
        %7121 = vmatmul.mubr.bf16.gmra.mxu0 %v7016
        %v7122 = vpop.f32.mrf.mxu0
        %v7123 = vadd.f32 0.0, %v7122
        %v7124 = vpop.f32.mrf.mxu0
        %v7125 = vpop.f32.mrf.mxu0
        %v7126 = vadd.f32 0.0, %v7125
        %v7127 = vpop.f32.mrf.mxu0
        %7128 = vmatprep.mubr.bf16.mxu0 0
        %7129 = vmatmul.mubr.bf16.gmra.mxu0 %v7019
        %v7130 = vpop.f32.mrf.mxu0
        %v7131 = vadd.f32 0.0, %v7130
        %v7132 = vpop.f32.mrf.mxu0
        %v7133 = vpop.f32.mrf.mxu0
        %v7134 = vadd.f32 0.0, %v7133
        %v7135 = vpop.f32.mrf.mxu0
        %7136 = vmatprep.mubr.bf16.mxu0 0
        %7137 = vmatmul.mubr.bf16.gmra.mxu0 %v7022
        %v7138 = vpop.f32.mrf.mxu0
        %v7139 = vadd.f32 0.0, %v7138
        %v7140 = vpop.f32.mrf.mxu0
        %v7141 = vpop.f32.mrf.mxu0
        %v7142 = vadd.f32 0.0, %v7141
        %v7143 = vpop.f32.mrf.mxu0
        %7144 = vdwg.mxu0
        %v7146 = vsel %vm2752, %v6455, 0
        %v7149 = vsel %vm2752, %v6456, 0
        %v7152 = vsel %vm2752, %v6457, 0
        %v7155 = vsel %vm2752, %v6458, 0
        %v7158 = vsel %vm2752, %v6459, 0
        %v7161 = vsel %vm2752, %v6460, 0
        %v7164 = vsel %vm2752, %v6461, 0
        %v7167 = vsel %vm2752, %v6462, 0
        %v7170 = vsel %vm2752, %v6647, 0
        %v7173 = vsel %vm2752, %v6648, 0
        %v7176 = vsel %vm2752, %v6649, 0
        %v7179 = vsel %vm2752, %v6650, 0
        %v7182 = vsel %vm2752, %v6651, 0
        %v7185 = vsel %vm2752, %v6652, 0
        %v7188 = vsel %vm2752, %v6653, 0
        %v7191 = vsel %vm2752, %v6654, 0
        %7193 = vmatprep.subr.bf16.mxu0 0
        %7194 = vmatpush1.bf16.xpose.msra.mxu0 %v7191
        %7195 = vmatprep.subr.bf16.mxu0 0
        %7196 = vmatpush1.bf16.xpose.msra.mxu0 %v7188
        %7197 = vmatprep.subr.bf16.mxu0 0
        %7198 = vmatpush1.bf16.xpose.msra.mxu0 %v7185
        %7199 = vmatprep.subr.bf16.mxu0 0
        %7200 = vmatpush1.bf16.xpose.msra.mxu0 %v7182
        %7201 = vmatprep.subr.bf16.mxu0 0
        %7202 = vmatpush1.bf16.xpose.msra.mxu0 %v7179
        %7203 = vmatprep.subr.bf16.mxu0 0
        %7204 = vmatpush1.bf16.xpose.msra.mxu0 %v7176
        %7205 = vmatprep.subr.bf16.mxu0 0
        %7206 = vmatpush1.bf16.xpose.msra.mxu0 %v7173
        %7207 = vmatprep.subr.bf16.mxu0 0
        %7208 = vmatpush1.bf16.xpose.msra.mxu0 %v7170
        %7209 = vmatprep.subr.bf16.mxu0 0
        %7210 = vmatpush2.bf16.xpose.msra.mxu0 0
        %7211 = vmatprep.subr.bf16.mxu0 0
        %7212 = vmatpush2.bf16.xpose.msra.mxu0 0
        %7213 = vmatprep.subr.bf16.mxu0 0
        %7214 = vmatpush2.bf16.xpose.msra.mxu0 0
        %7215 = vmatprep.subr.bf16.mxu0 0
        %7216 = vmatpush2.bf16.xpose.msra.mxu0 0
        %7217 = vmatprep.subr.bf16.mxu0 0
        %7218 = vmatpush2.bf16.xpose.msra.mxu0 0
        %7219 = vmatprep.subr.bf16.mxu0 0
        %7220 = vmatpush2.bf16.xpose.msra.mxu0 0
        %7221 = vmatprep.subr.bf16.mxu0 0
        %7222 = vmatpush2.bf16.xpose.msra.mxu0 0
        %7223 = vmatprep.subr.bf16.mxu0 0
        %7224 = vmatpush2.bf16.xpose.msra.mxu0 0
        %7225 = vmatprep.mubr.bf16.mxu0 0
        %7226 = vmatmul.mubr.bf16.gmra.mxu0 %v7146
        %v7227 = vpop.f32.mrf.mxu0
        %v7228 = vadd.f32 0.0, %v7227
        %v7229 = vpop.f32.mrf.mxu0
        %v7230 = vpop.f32.mrf.mxu0
        %v7231 = vadd.f32 0.0, %v7230
        %v7232 = vpop.f32.mrf.mxu0
        %7233 = vmatprep.mubr.bf16.mxu0 0
        %7234 = vmatmul.mubr.bf16.gmra.mxu0 %v7149
        %v7235 = vpop.f32.mrf.mxu0
        %v7236 = vadd.f32 0.0, %v7235
        %v7237 = vpop.f32.mrf.mxu0
        %v7238 = vpop.f32.mrf.mxu0
        %v7239 = vadd.f32 0.0, %v7238
        %v7240 = vpop.f32.mrf.mxu0
        %7241 = vmatprep.mubr.bf16.mxu0 0
        %7242 = vmatmul.mubr.bf16.gmra.mxu0 %v7152
        %v7243 = vpop.f32.mrf.mxu0
        %v7244 = vadd.f32 0.0, %v7243
        %v7245 = vpop.f32.mrf.mxu0
        %v7246 = vpop.f32.mrf.mxu0
        %v7247 = vadd.f32 0.0, %v7246
        %v7248 = vpop.f32.mrf.mxu0
        %7249 = vmatprep.mubr.bf16.mxu0 0
        %7250 = vmatmul.mubr.bf16.gmra.mxu0 %v7155
        %v7251 = vpop.f32.mrf.mxu0
        %v7252 = vadd.f32 0.0, %v7251
        %v7253 = vpop.f32.mrf.mxu0
        %v7254 = vpop.f32.mrf.mxu0
        %v7255 = vadd.f32 0.0, %v7254
        %v7256 = vpop.f32.mrf.mxu0
        %7257 = vmatprep.mubr.bf16.mxu0 0
        %7258 = vmatmul.mubr.bf16.gmra.mxu0 %v7158
        %v7259 = vpop.f32.mrf.mxu0
        %v7260 = vadd.f32 0.0, %v7259
        %v7261 = vpop.f32.mrf.mxu0
        %v7262 = vpop.f32.mrf.mxu0
        %v7263 = vadd.f32 0.0, %v7262
        %v7264 = vpop.f32.mrf.mxu0
        %7265 = vmatprep.mubr.bf16.mxu0 0
        %7266 = vmatmul.mubr.bf16.gmra.mxu0 %v7161
        %v7267 = vpop.f32.mrf.mxu0
        %v7268 = vadd.f32 0.0, %v7267
        %v7269 = vpop.f32.mrf.mxu0
        %v7270 = vpop.f32.mrf.mxu0
        %v7271 = vadd.f32 0.0, %v7270
        %v7272 = vpop.f32.mrf.mxu0
        %7273 = vmatprep.mubr.bf16.mxu0 0
        %7274 = vmatmul.mubr.bf16.gmra.mxu0 %v7164
        %v7275 = vpop.f32.mrf.mxu0
        %v7276 = vadd.f32 0.0, %v7275
        %v7277 = vpop.f32.mrf.mxu0
        %v7278 = vpop.f32.mrf.mxu0
        %v7279 = vadd.f32 0.0, %v7278
        %v7280 = vpop.f32.mrf.mxu0
        %7281 = vmatprep.mubr.bf16.mxu0 0
        %7282 = vmatmul.mubr.bf16.gmra.mxu0 %v7167
        %v7283 = vpop.f32.mrf.mxu0
        %v7284 = vadd.f32 0.0, %v7283
        %v7285 = vpop.f32.mrf.mxu0
        %v7286 = vpop.f32.mrf.mxu0
        %v7287 = vadd.f32 0.0, %v7286
        %v7288 = vpop.f32.mrf.mxu0
        %7289 = vdwg.mxu0
        %v7291 = vsel %vm2752, %v6463, 0
        %v7294 = vsel %vm2752, %v6464, 0
        %v7297 = vsel %vm2752, %v6465, 0
        %v7300 = vsel %vm2752, %v6466, 0
        %v7303 = vsel %vm2752, %v6467, 0
        %v7306 = vsel %vm2752, %v6468, 0
        %v7309 = vsel %vm2752, %v6469, 0
        %v7312 = vsel %vm2752, %v6470, 0
        %v7315 = vsel %vm2752, %v6655, 0
        %v7318 = vsel %vm2752, %v6656, 0
        %v7321 = vsel %vm2752, %v6657, 0
        %v7324 = vsel %vm2752, %v6658, 0
        %v7327 = vsel %vm2752, %v6659, 0
        %v7330 = vsel %vm2752, %v6660, 0
        %v7333 = vsel %vm2752, %v6661, 0
        %v7336 = vsel %vm2752, %v6662, 0
        %7338 = vmatprep.subr.bf16.mxu0 0
        %7339 = vmatpush1.bf16.xpose.msra.mxu0 %v7336
        %7340 = vmatprep.subr.bf16.mxu0 0
        %7341 = vmatpush1.bf16.xpose.msra.mxu0 %v7333
        %7342 = vmatprep.subr.bf16.mxu0 0
        %7343 = vmatpush1.bf16.xpose.msra.mxu0 %v7330
        %7344 = vmatprep.subr.bf16.mxu0 0
        %7345 = vmatpush1.bf16.xpose.msra.mxu0 %v7327
        %7346 = vmatprep.subr.bf16.mxu0 0
        %7347 = vmatpush1.bf16.xpose.msra.mxu0 %v7324
        %7348 = vmatprep.subr.bf16.mxu0 0
        %7349 = vmatpush1.bf16.xpose.msra.mxu0 %v7321
        %7350 = vmatprep.subr.bf16.mxu0 0
        %7351 = vmatpush1.bf16.xpose.msra.mxu0 %v7318
        %7352 = vmatprep.subr.bf16.mxu0 0
        %7353 = vmatpush1.bf16.xpose.msra.mxu0 %v7315
        %7354 = vmatprep.subr.bf16.mxu0 0
        %7355 = vmatpush2.bf16.xpose.msra.mxu0 0
        %7356 = vmatprep.subr.bf16.mxu0 0
        %7357 = vmatpush2.bf16.xpose.msra.mxu0 0
        %7358 = vmatprep.subr.bf16.mxu0 0
        %7359 = vmatpush2.bf16.xpose.msra.mxu0 0
        %7360 = vmatprep.subr.bf16.mxu0 0
        %7361 = vmatpush2.bf16.xpose.msra.mxu0 0
        %7362 = vmatprep.subr.bf16.mxu0 0
        %7363 = vmatpush2.bf16.xpose.msra.mxu0 0
        %7364 = vmatprep.subr.bf16.mxu0 0
        %7365 = vmatpush2.bf16.xpose.msra.mxu0 0
        %7366 = vmatprep.subr.bf16.mxu0 0
        %7367 = vmatpush2.bf16.xpose.msra.mxu0 0
        %7368 = vmatprep.subr.bf16.mxu0 0
        %7369 = vmatpush2.bf16.xpose.msra.mxu0 0
        %7370 = vmatprep.mubr.bf16.mxu0 0
        %7371 = vmatmul.mubr.bf16.gmra.mxu0 %v7291
        %v7372 = vpop.f32.mrf.mxu0
        %v7373 = vadd.f32 0.0, %v7372
        %v7374 = vpop.f32.mrf.mxu0
        %v7375 = vpop.f32.mrf.mxu0
        %v7376 = vadd.f32 0.0, %v7375
        %v7377 = vpop.f32.mrf.mxu0
        %7378 = vmatprep.mubr.bf16.mxu0 0
        %7379 = vmatmul.mubr.bf16.gmra.mxu0 %v7294
        %v7380 = vpop.f32.mrf.mxu0
        %v7381 = vadd.f32 0.0, %v7380
        %v7382 = vpop.f32.mrf.mxu0
        %v7383 = vpop.f32.mrf.mxu0
        %v7384 = vadd.f32 0.0, %v7383
        %v7385 = vpop.f32.mrf.mxu0
        %7386 = vmatprep.mubr.bf16.mxu0 0
        %7387 = vmatmul.mubr.bf16.gmra.mxu0 %v7297
        %v7388 = vpop.f32.mrf.mxu0
        %v7389 = vadd.f32 0.0, %v7388
        %v7390 = vpop.f32.mrf.mxu0
        %v7391 = vpop.f32.mrf.mxu0
        %v7392 = vadd.f32 0.0, %v7391
        %v7393 = vpop.f32.mrf.mxu0
        %7394 = vmatprep.mubr.bf16.mxu0 0
        %7395 = vmatmul.mubr.bf16.gmra.mxu0 %v7300
        %v7396 = vpop.f32.mrf.mxu0
        %v7397 = vadd.f32 0.0, %v7396
        %v7398 = vpop.f32.mrf.mxu0
        %v7399 = vpop.f32.mrf.mxu0
        %v7400 = vadd.f32 0.0, %v7399
        %v7401 = vpop.f32.mrf.mxu0
        %7402 = vmatprep.mubr.bf16.mxu0 0
        %7403 = vmatmul.mubr.bf16.gmra.mxu0 %v7303
        %v7404 = vpop.f32.mrf.mxu0
        %v7405 = vadd.f32 0.0, %v7404
        %v7406 = vpop.f32.mrf.mxu0
        %v7407 = vpop.f32.mrf.mxu0
        %v7408 = vadd.f32 0.0, %v7407
        %v7409 = vpop.f32.mrf.mxu0
        %7410 = vmatprep.mubr.bf16.mxu0 0
        %7411 = vmatmul.mubr.bf16.gmra.mxu0 %v7306
        %v7412 = vpop.f32.mrf.mxu0
        %v7413 = vadd.f32 0.0, %v7412
        %v7414 = vpop.f32.mrf.mxu0
        %v7415 = vpop.f32.mrf.mxu0
        %v7416 = vadd.f32 0.0, %v7415
        %v7417 = vpop.f32.mrf.mxu0
        %7418 = vmatprep.mubr.bf16.mxu0 0
        %7419 = vmatmul.mubr.bf16.gmra.mxu0 %v7309
        %v7420 = vpop.f32.mrf.mxu0
        %v7421 = vadd.f32 0.0, %v7420
        %v7422 = vpop.f32.mrf.mxu0
        %v7423 = vpop.f32.mrf.mxu0
        %v7424 = vadd.f32 0.0, %v7423
        %v7425 = vpop.f32.mrf.mxu0
        %7426 = vmatprep.mubr.bf16.mxu0 0
        %7427 = vmatmul.mubr.bf16.gmra.mxu0 %v7312
        %v7428 = vpop.f32.mrf.mxu0
        %v7429 = vadd.f32 0.0, %v7428
        %v7430 = vpop.f32.mrf.mxu0
        %v7431 = vpop.f32.mrf.mxu0
        %v7432 = vadd.f32 0.0, %v7431
        %v7433 = vpop.f32.mrf.mxu0
        %7434 = vdwg.mxu0
        %v7435 = vmul.f32 %v6938, 0.17677669
        %v7436 = vmul.f32 %v6941, 0.17677669
        %v7437 = vmul.f32 %v6946, 0.17677669
        %v7438 = vmul.f32 %v6949, 0.17677669
        %v7439 = vmul.f32 %v6954, 0.17677669
        %v7440 = vmul.f32 %v6957, 0.17677669
        %v7441 = vmul.f32 %v6962, 0.17677669
        %v7442 = vmul.f32 %v6965, 0.17677669
        %v7443 = vmul.f32 %v6970, 0.17677669
        %v7444 = vmul.f32 %v6973, 0.17677669
        %v7445 = vmul.f32 %v6978, 0.17677669
        %v7446 = vmul.f32 %v6981, 0.17677669
        %v7447 = vmul.f32 %v6986, 0.17677669
        %v7448 = vmul.f32 %v6989, 0.17677669
        %v7449 = vmul.f32 %v6994, 0.17677669
        %v7450 = vmul.f32 %v6997, 0.17677669
        %v7451 = vmul.f32 %v7083, 0.17677669
        %v7452 = vmul.f32 %v7086, 0.17677669
        %v7453 = vmul.f32 %v7091, 0.17677669
        %v7454 = vmul.f32 %v7094, 0.17677669
        %v7455 = vmul.f32 %v7099, 0.17677669
        %v7456 = vmul.f32 %v7102, 0.17677669
        %v7457 = vmul.f32 %v7107, 0.17677669
        %v7458 = vmul.f32 %v7110, 0.17677669
        %v7459 = vmul.f32 %v7115, 0.17677669
        %v7460 = vmul.f32 %v7118, 0.17677669
        %v7461 = vmul.f32 %v7123, 0.17677669
        %v7462 = vmul.f32 %v7126, 0.17677669
        %v7463 = vmul.f32 %v7131, 0.17677669
        %v7464 = vmul.f32 %v7134, 0.17677669
        %v7465 = vmul.f32 %v7139, 0.17677669
        %v7466 = vmul.f32 %v7142, 0.17677669
        %v7467 = vmul.f32 %v7228, 0.17677669
        %v7468 = vmul.f32 %v7231, 0.17677669
        %v7469 = vmul.f32 %v7236, 0.17677669
        %v7470 = vmul.f32 %v7239, 0.17677669
        %v7471 = vmul.f32 %v7244, 0.17677669
        %v7472 = vmul.f32 %v7247, 0.17677669
        %v7473 = vmul.f32 %v7252, 0.17677669
        %v7474 = vmul.f32 %v7255, 0.17677669
        %v7475 = vmul.f32 %v7260, 0.17677669
        %v7476 = vmul.f32 %v7263, 0.17677669
        %v7477 = vmul.f32 %v7268, 0.17677669
        %v7478 = vmul.f32 %v7271, 0.17677669
        %v7479 = vmul.f32 %v7276, 0.17677669
        %v7480 = vmul.f32 %v7279, 0.17677669
        %v7481 = vmul.f32 %v7284, 0.17677669
        %v7482 = vmul.f32 %v7287, 0.17677669
        %v7483 = vmul.f32 %v7373, 0.17677669
        %v7484 = vmul.f32 %v7376, 0.17677669
        %v7485 = vmul.f32 %v7381, 0.17677669
        %v7486 = vmul.f32 %v7384, 0.17677669
        %v7487 = vmul.f32 %v7389, 0.17677669
        %v7488 = vmul.f32 %v7392, 0.17677669
        %v7489 = vmul.f32 %v7397, 0.17677669
        %v7490 = vmul.f32 %v7400, 0.17677669
        %v7491 = vmul.f32 %v7405, 0.17677669
        %v7492 = vmul.f32 %v7408, 0.17677669
        %v7493 = vmul.f32 %v7413, 0.17677669
        %v7494 = vmul.f32 %v7416, 0.17677669
        %v7495 = vmul.f32 %v7421, 0.17677669
        %v7496 = vmul.f32 %v7424, 0.17677669
        %v7497 = vmul.f32 %v7429, 0.17677669
        %v7498 = vmul.f32 %v7432, 0.17677669
        %v7499 = vadd.f32 %v7435, %v6263
        %v7500 = vadd.f32 %v7436, %v6264
        %v7501 = vadd.f32 %v7437, %v6265
        %v7502 = vadd.f32 %v7438, %v6266
        %v7503 = vadd.f32 %v7439, %v6267
        %v7504 = vadd.f32 %v7440, %v6268
        %v7505 = vadd.f32 %v7441, %v6269
        %v7506 = vadd.f32 %v7442, %v6270
        %v7507 = vadd.f32 %v7443, %v6271
        %v7508 = vadd.f32 %v7444, %v6272
        %v7509 = vadd.f32 %v7445, %v6273
        %v7510 = vadd.f32 %v7446, %v6274
        %v7511 = vadd.f32 %v7447, %v6275
        %v7512 = vadd.f32 %v7448, %v6276
        %v7513 = vadd.f32 %v7449, %v6277
        %v7514 = vadd.f32 %v7450, %v6278
        %v7515 = vadd.f32 %v7451, %v6263
        %v7516 = vadd.f32 %v7452, %v6264
        %v7517 = vadd.f32 %v7453, %v6265
        %v7518 = vadd.f32 %v7454, %v6266
        %v7519 = vadd.f32 %v7455, %v6267
        %v7520 = vadd.f32 %v7456, %v6268
        %v7521 = vadd.f32 %v7457, %v6269
        %v7522 = vadd.f32 %v7458, %v6270
        %v7523 = vadd.f32 %v7459, %v6271
        %v7524 = vadd.f32 %v7460, %v6272
        %v7525 = vadd.f32 %v7461, %v6273
        %v7526 = vadd.f32 %v7462, %v6274
        %v7527 = vadd.f32 %v7463, %v6275
        %v7528 = vadd.f32 %v7464, %v6276
        %v7529 = vadd.f32 %v7465, %v6277
        %v7530 = vadd.f32 %v7466, %v6278
        %v7531 = vadd.f32 %v7467, %v6263
        %v7532 = vadd.f32 %v7468, %v6264
        %v7533 = vadd.f32 %v7469, %v6265
        %v7534 = vadd.f32 %v7470, %v6266
        %v7535 = vadd.f32 %v7471, %v6267
        %v7536 = vadd.f32 %v7472, %v6268
        %v7537 = vadd.f32 %v7473, %v6269
        %v7538 = vadd.f32 %v7474, %v6270
        %v7539 = vadd.f32 %v7475, %v6271
        %v7540 = vadd.f32 %v7476, %v6272
        %v7541 = vadd.f32 %v7477, %v6273
        %v7542 = vadd.f32 %v7478, %v6274
        %v7543 = vadd.f32 %v7479, %v6275
        %v7544 = vadd.f32 %v7480, %v6276
        %v7545 = vadd.f32 %v7481, %v6277
        %v7546 = vadd.f32 %v7482, %v6278
        %v7547 = vadd.f32 %v7483, %v6263
        %v7548 = vadd.f32 %v7484, %v6264
        %v7549 = vadd.f32 %v7485, %v6265
        %v7550 = vadd.f32 %v7486, %v6266
        %v7551 = vadd.f32 %v7487, %v6267
        %v7552 = vadd.f32 %v7488, %v6268
        %v7553 = vadd.f32 %v7489, %v6269
        %v7554 = vadd.f32 %v7490, %v6270
        %v7555 = vadd.f32 %v7491, %v6271
        %v7556 = vadd.f32 %v7492, %v6272
        %v7557 = vadd.f32 %v7493, %v6273
        %v7558 = vadd.f32 %v7494, %v6274
        %v7559 = vadd.f32 %v7495, %v6275
        %v7560 = vadd.f32 %v7496, %v6276
        %v7561 = vadd.f32 %v7497, %v6277
        %v7562 = vadd.f32 %v7498, %v6278
        %7563 = vmax.xlane.f32.xlu0 %v7499
        %v7564 = vpop.xlane.xlu0 %7563
        %7565 = vmax.xlane.f32.xlu0 %v7500
        %v7566 = vpop.xlane.xlu0 %7565
        %7567 = vmax.xlane.f32.xlu0 %v7501
        %v7568 = vpop.xlane.xlu0 %7567
        %7569 = vmax.xlane.f32.xlu0 %v7502
        %v7570 = vpop.xlane.xlu0 %7569
        %7571 = vmax.xlane.f32.xlu0 %v7503
        %v7572 = vpop.xlane.xlu0 %7571
        %7573 = vmax.xlane.f32.xlu0 %v7504
        %v7574 = vpop.xlane.xlu0 %7573
        %7575 = vmax.xlane.f32.xlu0 %v7505
        %v7576 = vpop.xlane.xlu0 %7575
        %7577 = vmax.xlane.f32.xlu0 %v7506
        %v7578 = vpop.xlane.xlu0 %7577
        %7579 = vmax.xlane.f32.xlu0 %v7507
        %v7580 = vpop.xlane.xlu0 %7579
        %7581 = vmax.xlane.f32.xlu0 %v7508
        %v7582 = vpop.xlane.xlu0 %7581
        %7583 = vmax.xlane.f32.xlu0 %v7509
        %v7584 = vpop.xlane.xlu0 %7583
        %7585 = vmax.xlane.f32.xlu0 %v7510
        %v7586 = vpop.xlane.xlu0 %7585
        %7587 = vmax.xlane.f32.xlu0 %v7511
        %v7588 = vpop.xlane.xlu0 %7587
        %7589 = vmax.xlane.f32.xlu0 %v7512
        %v7590 = vpop.xlane.xlu0 %7589
        %7591 = vmax.xlane.f32.xlu0 %v7513
        %v7592 = vpop.xlane.xlu0 %7591
        %7593 = vmax.xlane.f32.xlu0 %v7514
        %v7594 = vpop.xlane.xlu0 %7593
        %7595 = vmax.xlane.f32.xlu0 %v7515
        %v7596 = vpop.xlane.xlu0 %7595
        %7597 = vmax.xlane.f32.xlu0 %v7516
        %v7598 = vpop.xlane.xlu0 %7597
        %7599 = vmax.xlane.f32.xlu0 %v7517
        %v7600 = vpop.xlane.xlu0 %7599
        %7601 = vmax.xlane.f32.xlu0 %v7518
        %v7602 = vpop.xlane.xlu0 %7601
        %7603 = vmax.xlane.f32.xlu0 %v7519
        %v7604 = vpop.xlane.xlu0 %7603
        %7605 = vmax.xlane.f32.xlu0 %v7520
        %v7606 = vpop.xlane.xlu0 %7605
        %7607 = vmax.xlane.f32.xlu0 %v7521
        %v7608 = vpop.xlane.xlu0 %7607
        %7609 = vmax.xlane.f32.xlu0 %v7522
        %v7610 = vpop.xlane.xlu0 %7609
        %7611 = vmax.xlane.f32.xlu0 %v7523
        %v7612 = vpop.xlane.xlu0 %7611
        %7613 = vmax.xlane.f32.xlu0 %v7524
        %v7614 = vpop.xlane.xlu0 %7613
        %7615 = vmax.xlane.f32.xlu0 %v7525
        %v7616 = vpop.xlane.xlu0 %7615
        %7617 = vmax.xlane.f32.xlu0 %v7526
        %v7618 = vpop.xlane.xlu0 %7617
        %7619 = vmax.xlane.f32.xlu0 %v7527
        %v7620 = vpop.xlane.xlu0 %7619
        %7621 = vmax.xlane.f32.xlu0 %v7528
        %v7622 = vpop.xlane.xlu0 %7621
        %7623 = vmax.xlane.f32.xlu0 %v7529
        %v7624 = vpop.xlane.xlu0 %7623
        %7625 = vmax.xlane.f32.xlu0 %v7530
        %v7626 = vpop.xlane.xlu0 %7625
        %7627 = vmax.xlane.f32.xlu0 %v7531
        %v7628 = vpop.xlane.xlu0 %7627
        %7629 = vmax.xlane.f32.xlu0 %v7532
        %v7630 = vpop.xlane.xlu0 %7629
        %7631 = vmax.xlane.f32.xlu0 %v7533
        %v7632 = vpop.xlane.xlu0 %7631
        %7633 = vmax.xlane.f32.xlu0 %v7534
        %v7634 = vpop.xlane.xlu0 %7633
        %7635 = vmax.xlane.f32.xlu0 %v7535
        %v7636 = vpop.xlane.xlu0 %7635
        %7637 = vmax.xlane.f32.xlu0 %v7536
        %v7638 = vpop.xlane.xlu0 %7637
        %7639 = vmax.xlane.f32.xlu0 %v7537
        %v7640 = vpop.xlane.xlu0 %7639
        %7641 = vmax.xlane.f32.xlu0 %v7538
        %v7642 = vpop.xlane.xlu0 %7641
        %7643 = vmax.xlane.f32.xlu0 %v7539
        %v7644 = vpop.xlane.xlu0 %7643
        %7645 = vmax.xlane.f32.xlu0 %v7540
        %v7646 = vpop.xlane.xlu0 %7645
        %7647 = vmax.xlane.f32.xlu0 %v7541
        %v7648 = vpop.xlane.xlu0 %7647
        %7649 = vmax.xlane.f32.xlu0 %v7542
        %v7650 = vpop.xlane.xlu0 %7649
        %7651 = vmax.xlane.f32.xlu0 %v7543
        %v7652 = vpop.xlane.xlu0 %7651
        %7653 = vmax.xlane.f32.xlu0 %v7544
        %v7654 = vpop.xlane.xlu0 %7653
        %7655 = vmax.xlane.f32.xlu0 %v7545
        %v7656 = vpop.xlane.xlu0 %7655
        %7657 = vmax.xlane.f32.xlu0 %v7546
        %v7658 = vpop.xlane.xlu0 %7657
        %7659 = vmax.xlane.f32.xlu0 %v7547
        %v7660 = vpop.xlane.xlu0 %7659
        %7661 = vmax.xlane.f32.xlu0 %v7548
        %v7662 = vpop.xlane.xlu0 %7661
        %7663 = vmax.xlane.f32.xlu0 %v7549
        %v7664 = vpop.xlane.xlu0 %7663
        %7665 = vmax.xlane.f32.xlu0 %v7550
        %v7666 = vpop.xlane.xlu0 %7665
        %7667 = vmax.xlane.f32.xlu0 %v7551
        %v7668 = vpop.xlane.xlu0 %7667
        %7669 = vmax.xlane.f32.xlu0 %v7552
        %v7670 = vpop.xlane.xlu0 %7669
        %7671 = vmax.xlane.f32.xlu0 %v7553
        %v7672 = vpop.xlane.xlu0 %7671
        %7673 = vmax.xlane.f32.xlu0 %v7554
        %v7674 = vpop.xlane.xlu0 %7673
        %7675 = vmax.xlane.f32.xlu0 %v7555
        %v7676 = vpop.xlane.xlu0 %7675
        %7677 = vmax.xlane.f32.xlu0 %v7556
        %v7678 = vpop.xlane.xlu0 %7677
        %7679 = vmax.xlane.f32.xlu0 %v7557
        %v7680 = vpop.xlane.xlu0 %7679
        %7681 = vmax.xlane.f32.xlu0 %v7558
        %v7682 = vpop.xlane.xlu0 %7681
        %7683 = vmax.xlane.f32.xlu0 %v7559
        %v7684 = vpop.xlane.xlu0 %7683
        %7685 = vmax.xlane.f32.xlu0 %v7560
        %v7686 = vpop.xlane.xlu0 %7685
        %7687 = vmax.xlane.f32.xlu0 %v7561
        %v7688 = vpop.xlane.xlu0 %7687
        %7689 = vmax.xlane.f32.xlu0 %v7562
        %v7690 = vpop.xlane.xlu0 %7689
        %v7691 = vsub.f32 %v7499, %v7564
        %v7692 = vsub.f32 %v7500, %v7566
        %v7693 = vsub.f32 %v7501, %v7568
        %v7694 = vsub.f32 %v7502, %v7570
        %v7695 = vsub.f32 %v7503, %v7572
        %v7696 = vsub.f32 %v7504, %v7574
        %v7697 = vsub.f32 %v7505, %v7576
        %v7698 = vsub.f32 %v7506, %v7578
        %v7699 = vsub.f32 %v7507, %v7580
        %v7700 = vsub.f32 %v7508, %v7582
        %v7701 = vsub.f32 %v7509, %v7584
        %v7702 = vsub.f32 %v7510, %v7586
        %v7703 = vsub.f32 %v7511, %v7588
        %v7704 = vsub.f32 %v7512, %v7590
        %v7705 = vsub.f32 %v7513, %v7592
        %v7706 = vsub.f32 %v7514, %v7594
        %v7707 = vsub.f32 %v7515, %v7596
        %v7708 = vsub.f32 %v7516, %v7598
        %v7709 = vsub.f32 %v7517, %v7600
        %v7710 = vsub.f32 %v7518, %v7602
        %v7711 = vsub.f32 %v7519, %v7604
        %v7712 = vsub.f32 %v7520, %v7606
        %v7713 = vsub.f32 %v7521, %v7608
        %v7714 = vsub.f32 %v7522, %v7610
        %v7715 = vsub.f32 %v7523, %v7612
        %v7716 = vsub.f32 %v7524, %v7614
        %v7717 = vsub.f32 %v7525, %v7616
        %v7718 = vsub.f32 %v7526, %v7618
        %v7719 = vsub.f32 %v7527, %v7620
        %v7720 = vsub.f32 %v7528, %v7622
        %v7721 = vsub.f32 %v7529, %v7624
        %v7722 = vsub.f32 %v7530, %v7626
        %v7723 = vsub.f32 %v7531, %v7628
        %v7724 = vsub.f32 %v7532, %v7630
        %v7725 = vsub.f32 %v7533, %v7632
        %v7726 = vsub.f32 %v7534, %v7634
        %v7727 = vsub.f32 %v7535, %v7636
        %v7728 = vsub.f32 %v7536, %v7638
        %v7729 = vsub.f32 %v7537, %v7640
        %v7730 = vsub.f32 %v7538, %v7642
        %v7731 = vsub.f32 %v7539, %v7644
        %v7732 = vsub.f32 %v7540, %v7646
        %v7733 = vsub.f32 %v7541, %v7648
        %v7734 = vsub.f32 %v7542, %v7650
        %v7735 = vsub.f32 %v7543, %v7652
        %v7736 = vsub.f32 %v7544, %v7654
        %v7737 = vsub.f32 %v7545, %v7656
        %v7738 = vsub.f32 %v7546, %v7658
        %v7739 = vsub.f32 %v7547, %v7660
        %v7740 = vsub.f32 %v7548, %v7662
        %v7741 = vsub.f32 %v7549, %v7664
        %v7742 = vsub.f32 %v7550, %v7666
        %v7743 = vsub.f32 %v7551, %v7668
        %v7744 = vsub.f32 %v7552, %v7670
        %v7745 = vsub.f32 %v7553, %v7672
        %v7746 = vsub.f32 %v7554, %v7674
        %v7747 = vsub.f32 %v7555, %v7676
        %v7748 = vsub.f32 %v7556, %v7678
        %v7749 = vsub.f32 %v7557, %v7680
        %v7750 = vsub.f32 %v7558, %v7682
        %v7751 = vsub.f32 %v7559, %v7684
        %v7752 = vsub.f32 %v7560, %v7686
        %v7753 = vsub.f32 %v7561, %v7688
        %v7754 = vsub.f32 %v7562, %v7690
        %v7755 = vmul.f32 %v7691, 1.442695
        %v7756 = vpow.pop %v7755
        %v7757 = vmul.f32 %v7692, 1.442695
        %v7758 = vpow.pop %v7757
        %v7759 = vmul.f32 %v7693, 1.442695
        %v7760 = vpow.pop %v7759
        %v7761 = vmul.f32 %v7694, 1.442695
        %v7762 = vpow.pop %v7761
        %v7763 = vmul.f32 %v7695, 1.442695
        %v7764 = vpow.pop %v7763
        %v7765 = vmul.f32 %v7696, 1.442695
        %v7766 = vpow.pop %v7765
        %v7767 = vmul.f32 %v7697, 1.442695
        %v7768 = vpow.pop %v7767
        %v7769 = vmul.f32 %v7698, 1.442695
        %v7770 = vpow.pop %v7769
        %v7771 = vmul.f32 %v7699, 1.442695
        %v7772 = vpow.pop %v7771
        %v7773 = vmul.f32 %v7700, 1.442695
        %v7774 = vpow.pop %v7773
        %v7775 = vmul.f32 %v7701, 1.442695
        %v7776 = vpow.pop %v7775
        %v7777 = vmul.f32 %v7702, 1.442695
        %v7778 = vpow.pop %v7777
        %v7779 = vmul.f32 %v7703, 1.442695
        %v7780 = vpow.pop %v7779
        %v7781 = vmul.f32 %v7704, 1.442695
        %v7782 = vpow.pop %v7781
        %v7783 = vmul.f32 %v7705, 1.442695
        %v7784 = vpow.pop %v7783
        %v7785 = vmul.f32 %v7706, 1.442695
        %v7786 = vpow.pop %v7785
        %v7787 = vmul.f32 %v7707, 1.442695
        %v7788 = vpow.pop %v7787
        %v7789 = vmul.f32 %v7708, 1.442695
        %v7790 = vpow.pop %v7789
        %v7791 = vmul.f32 %v7709, 1.442695
        %v7792 = vpow.pop %v7791
        %v7793 = vmul.f32 %v7710, 1.442695
        %v7794 = vpow.pop %v7793
        %v7795 = vmul.f32 %v7711, 1.442695
        %v7796 = vpow.pop %v7795
        %v7797 = vmul.f32 %v7712, 1.442695
        %v7798 = vpow.pop %v7797
        %v7799 = vmul.f32 %v7713, 1.442695
        %v7800 = vpow.pop %v7799
        %v7801 = vmul.f32 %v7714, 1.442695
        %v7802 = vpow.pop %v7801
        %v7803 = vmul.f32 %v7715, 1.442695
        %v7804 = vpow.pop %v7803
        %v7805 = vmul.f32 %v7716, 1.442695
        %v7806 = vpow.pop %v7805
        %v7807 = vmul.f32 %v7717, 1.442695
        %v7808 = vpow.pop %v7807
        %v7809 = vmul.f32 %v7718, 1.442695
        %v7810 = vpow.pop %v7809
        %v7811 = vmul.f32 %v7719, 1.442695
        %v7812 = vpow.pop %v7811
        %v7813 = vmul.f32 %v7720, 1.442695
        %v7814 = vpow.pop %v7813
        %v7815 = vmul.f32 %v7721, 1.442695
        %v7816 = vpow.pop %v7815
        %v7817 = vmul.f32 %v7722, 1.442695
        %v7818 = vpow.pop %v7817
        %v7819 = vmul.f32 %v7723, 1.442695
        %v7820 = vpow.pop %v7819
        %v7821 = vmul.f32 %v7724, 1.442695
        %v7822 = vpow.pop %v7821
        %v7823 = vmul.f32 %v7725, 1.442695
        %v7824 = vpow.pop %v7823
        %v7825 = vmul.f32 %v7726, 1.442695
        %v7826 = vpow.pop %v7825
        %v7827 = vmul.f32 %v7727, 1.442695
        %v7828 = vpow.pop %v7827
        %v7829 = vmul.f32 %v7728, 1.442695
        %v7830 = vpow.pop %v7829
        %v7831 = vmul.f32 %v7729, 1.442695
        %v7832 = vpow.pop %v7831
        %v7833 = vmul.f32 %v7730, 1.442695
        %v7834 = vpow.pop %v7833
        %v7835 = vmul.f32 %v7731, 1.442695
        %v7836 = vpow.pop %v7835
        %v7837 = vmul.f32 %v7732, 1.442695
        %v7838 = vpow.pop %v7837
        %v7839 = vmul.f32 %v7733, 1.442695
        %v7840 = vpow.pop %v7839
        %v7841 = vmul.f32 %v7734, 1.442695
        %v7842 = vpow.pop %v7841
        %v7843 = vmul.f32 %v7735, 1.442695
        %v7844 = vpow.pop %v7843
        %v7845 = vmul.f32 %v7736, 1.442695
        %v7846 = vpow.pop %v7845
        %v7847 = vmul.f32 %v7737, 1.442695
        %v7848 = vpow.pop %v7847
        %v7849 = vmul.f32 %v7738, 1.442695
        %v7850 = vpow.pop %v7849
        %v7851 = vmul.f32 %v7739, 1.442695
        %v7852 = vpow.pop %v7851
        %v7853 = vmul.f32 %v7740, 1.442695
        %v7854 = vpow.pop %v7853
        %v7855 = vmul.f32 %v7741, 1.442695
        %v7856 = vpow.pop %v7855
        %v7857 = vmul.f32 %v7742, 1.442695
        %v7858 = vpow.pop %v7857
        %v7859 = vmul.f32 %v7743, 1.442695
        %v7860 = vpow.pop %v7859
        %v7861 = vmul.f32 %v7744, 1.442695
        %v7862 = vpow.pop %v7861
        %v7863 = vmul.f32 %v7745, 1.442695
        %v7864 = vpow.pop %v7863
        %v7865 = vmul.f32 %v7746, 1.442695
        %v7866 = vpow.pop %v7865
        %v7867 = vmul.f32 %v7747, 1.442695
        %v7868 = vpow.pop %v7867
        %v7869 = vmul.f32 %v7748, 1.442695
        %v7870 = vpow.pop %v7869
        %v7871 = vmul.f32 %v7749, 1.442695
        %v7872 = vpow.pop %v7871
        %v7873 = vmul.f32 %v7750, 1.442695
        %v7874 = vpow.pop %v7873
        %v7875 = vmul.f32 %v7751, 1.442695
        %v7876 = vpow.pop %v7875
        %v7877 = vmul.f32 %v7752, 1.442695
        %v7878 = vpow.pop %v7877
        %v7879 = vmul.f32 %v7753, 1.442695
        %v7880 = vpow.pop %v7879
        %v7881 = vmul.f32 %v7754, 1.442695
        %v7882 = vpow.pop %v7881
        %7883 = vadd.xlane.f32.xlu0 %v7756
        %v7884 = vpop.xlane.xlu0 %7883
        %7885 = vadd.xlane.f32.xlu0 %v7758
        %v7886 = vpop.xlane.xlu0 %7885
        %7887 = vadd.xlane.f32.xlu0 %v7760
        %v7888 = vpop.xlane.xlu0 %7887
        %7889 = vadd.xlane.f32.xlu0 %v7762
        %v7890 = vpop.xlane.xlu0 %7889
        %7891 = vadd.xlane.f32.xlu0 %v7764
        %v7892 = vpop.xlane.xlu0 %7891
        %7893 = vadd.xlane.f32.xlu0 %v7766
        %v7894 = vpop.xlane.xlu0 %7893
        %7895 = vadd.xlane.f32.xlu0 %v7768
        %v7896 = vpop.xlane.xlu0 %7895
        %7897 = vadd.xlane.f32.xlu0 %v7770
        %v7898 = vpop.xlane.xlu0 %7897
        %7899 = vadd.xlane.f32.xlu0 %v7772
        %v7900 = vpop.xlane.xlu0 %7899
        %7901 = vadd.xlane.f32.xlu0 %v7774
        %v7902 = vpop.xlane.xlu0 %7901
        %7903 = vadd.xlane.f32.xlu0 %v7776
        %v7904 = vpop.xlane.xlu0 %7903
        %7905 = vadd.xlane.f32.xlu0 %v7778
        %v7906 = vpop.xlane.xlu0 %7905
        %7907 = vadd.xlane.f32.xlu0 %v7780
        %v7908 = vpop.xlane.xlu0 %7907
        %7909 = vadd.xlane.f32.xlu0 %v7782
        %v7910 = vpop.xlane.xlu0 %7909
        %7911 = vadd.xlane.f32.xlu0 %v7784
        %v7912 = vpop.xlane.xlu0 %7911
        %7913 = vadd.xlane.f32.xlu0 %v7786
        %v7914 = vpop.xlane.xlu0 %7913
        %7915 = vadd.xlane.f32.xlu0 %v7788
        %v7916 = vpop.xlane.xlu0 %7915
        %7917 = vadd.xlane.f32.xlu0 %v7790
        %v7918 = vpop.xlane.xlu0 %7917
        %7919 = vadd.xlane.f32.xlu0 %v7792
        %v7920 = vpop.xlane.xlu0 %7919
        %7921 = vadd.xlane.f32.xlu0 %v7794
        %v7922 = vpop.xlane.xlu0 %7921
        %7923 = vadd.xlane.f32.xlu0 %v7796
        %v7924 = vpop.xlane.xlu0 %7923
        %7925 = vadd.xlane.f32.xlu0 %v7798
        %v7926 = vpop.xlane.xlu0 %7925
        %7927 = vadd.xlane.f32.xlu0 %v7800
        %v7928 = vpop.xlane.xlu0 %7927
        %7929 = vadd.xlane.f32.xlu0 %v7802
        %v7930 = vpop.xlane.xlu0 %7929
        %7931 = vadd.xlane.f32.xlu0 %v7804
        %v7932 = vpop.xlane.xlu0 %7931
        %7933 = vadd.xlane.f32.xlu0 %v7806
        %v7934 = vpop.xlane.xlu0 %7933
        %7935 = vadd.xlane.f32.xlu0 %v7808
        %v7936 = vpop.xlane.xlu0 %7935
        %7937 = vadd.xlane.f32.xlu0 %v7810
        %v7938 = vpop.xlane.xlu0 %7937
        %7939 = vadd.xlane.f32.xlu0 %v7812
        %v7940 = vpop.xlane.xlu0 %7939
        %7941 = vadd.xlane.f32.xlu0 %v7814
        %v7942 = vpop.xlane.xlu0 %7941
        %7943 = vadd.xlane.f32.xlu0 %v7816
        %v7944 = vpop.xlane.xlu0 %7943
        %7945 = vadd.xlane.f32.xlu0 %v7818
        %v7946 = vpop.xlane.xlu0 %7945
        %7947 = vadd.xlane.f32.xlu0 %v7820
        %v7948 = vpop.xlane.xlu0 %7947
        %7949 = vadd.xlane.f32.xlu0 %v7822
        %v7950 = vpop.xlane.xlu0 %7949
        %7951 = vadd.xlane.f32.xlu0 %v7824
        %v7952 = vpop.xlane.xlu0 %7951
        %7953 = vadd.xlane.f32.xlu0 %v7826
        %v7954 = vpop.xlane.xlu0 %7953
        %7955 = vadd.xlane.f32.xlu0 %v7828
        %v7956 = vpop.xlane.xlu0 %7955
        %7957 = vadd.xlane.f32.xlu0 %v7830
        %v7958 = vpop.xlane.xlu0 %7957
        %7959 = vadd.xlane.f32.xlu0 %v7832
        %v7960 = vpop.xlane.xlu0 %7959
        %7961 = vadd.xlane.f32.xlu0 %v7834
        %v7962 = vpop.xlane.xlu0 %7961
        %7963 = vadd.xlane.f32.xlu0 %v7836
        %v7964 = vpop.xlane.xlu0 %7963
        %7965 = vadd.xlane.f32.xlu0 %v7838
        %v7966 = vpop.xlane.xlu0 %7965
        %7967 = vadd.xlane.f32.xlu0 %v7840
        %v7968 = vpop.xlane.xlu0 %7967
        %7969 = vadd.xlane.f32.xlu0 %v7842
        %v7970 = vpop.xlane.xlu0 %7969
        %7971 = vadd.xlane.f32.xlu0 %v7844
        %v7972 = vpop.xlane.xlu0 %7971
        %7973 = vadd.xlane.f32.xlu0 %v7846
        %v7974 = vpop.xlane.xlu0 %7973
        %7975 = vadd.xlane.f32.xlu0 %v7848
        %v7976 = vpop.xlane.xlu0 %7975
        %7977 = vadd.xlane.f32.xlu0 %v7850
        %v7978 = vpop.xlane.xlu0 %7977
        %7979 = vadd.xlane.f32.xlu0 %v7852
        %v7980 = vpop.xlane.xlu0 %7979
        %7981 = vadd.xlane.f32.xlu0 %v7854
        %v7982 = vpop.xlane.xlu0 %7981
        %7983 = vadd.xlane.f32.xlu0 %v7856
        %v7984 = vpop.xlane.xlu0 %7983
        %7985 = vadd.xlane.f32.xlu0 %v7858
        %v7986 = vpop.xlane.xlu0 %7985
        %7987 = vadd.xlane.f32.xlu0 %v7860
        %v7988 = vpop.xlane.xlu0 %7987
        %7989 = vadd.xlane.f32.xlu0 %v7862
        %v7990 = vpop.xlane.xlu0 %7989
        %7991 = vadd.xlane.f32.xlu0 %v7864
        %v7992 = vpop.xlane.xlu0 %7991
        %7993 = vadd.xlane.f32.xlu0 %v7866
        %v7994 = vpop.xlane.xlu0 %7993
        %7995 = vadd.xlane.f32.xlu0 %v7868
        %v7996 = vpop.xlane.xlu0 %7995
        %7997 = vadd.xlane.f32.xlu0 %v7870
        %v7998 = vpop.xlane.xlu0 %7997
        %7999 = vadd.xlane.f32.xlu0 %v7872
        %v8000 = vpop.xlane.xlu0 %7999
        %8001 = vadd.xlane.f32.xlu0 %v7874
        %v8002 = vpop.xlane.xlu0 %8001
        %8003 = vadd.xlane.f32.xlu0 %v7876
        %v8004 = vpop.xlane.xlu0 %8003
        %8005 = vadd.xlane.f32.xlu0 %v7878
        %v8006 = vpop.xlane.xlu0 %8005
        %8007 = vadd.xlane.f32.xlu0 %v7880
        %v8008 = vpop.xlane.xlu0 %8007
        %8009 = vadd.xlane.f32.xlu0 %v7882
        %v8010 = vpop.xlane.xlu0 %8009
        %v8011 = vrcp.pop %v7884
        %v8012 = vrcp.pop %v7886
        %v8013 = vrcp.pop %v7888
        %v8014 = vrcp.pop %v7890
        %v8015 = vrcp.pop %v7892
        %v8016 = vrcp.pop %v7894
        %v8017 = vrcp.pop %v7896
        %v8018 = vrcp.pop %v7898
        %v8019 = vrcp.pop %v7900
        %v8020 = vrcp.pop %v7902
        %v8021 = vrcp.pop %v7904
        %v8022 = vrcp.pop %v7906
        %v8023 = vrcp.pop %v7908
        %v8024 = vrcp.pop %v7910
        %v8025 = vrcp.pop %v7912
        %v8026 = vrcp.pop %v7914
        %v8027 = vrcp.pop %v7916
        %v8028 = vrcp.pop %v7918
        %v8029 = vrcp.pop %v7920
        %v8030 = vrcp.pop %v7922
        %v8031 = vrcp.pop %v7924
        %v8032 = vrcp.pop %v7926
        %v8033 = vrcp.pop %v7928
        %v8034 = vrcp.pop %v7930
        %v8035 = vrcp.pop %v7932
        %v8036 = vrcp.pop %v7934
        %v8037 = vrcp.pop %v7936
        %v8038 = vrcp.pop %v7938
        %v8039 = vrcp.pop %v7940
        %v8040 = vrcp.pop %v7942
        %v8041 = vrcp.pop %v7944
        %v8042 = vrcp.pop %v7946
        %v8043 = vrcp.pop %v7948
        %v8044 = vrcp.pop %v7950
        %v8045 = vrcp.pop %v7952
        %v8046 = vrcp.pop %v7954
        %v8047 = vrcp.pop %v7956
        %v8048 = vrcp.pop %v7958
        %v8049 = vrcp.pop %v7960
        %v8050 = vrcp.pop %v7962
        %v8051 = vrcp.pop %v7964
        %v8052 = vrcp.pop %v7966
        %v8053 = vrcp.pop %v7968
        %v8054 = vrcp.pop %v7970
        %v8055 = vrcp.pop %v7972
        %v8056 = vrcp.pop %v7974
        %v8057 = vrcp.pop %v7976
        %v8058 = vrcp.pop %v7978
        %v8059 = vrcp.pop %v7980
        %v8060 = vrcp.pop %v7982
        %v8061 = vrcp.pop %v7984
        %v8062 = vrcp.pop %v7986
        %v8063 = vrcp.pop %v7988
        %v8064 = vrcp.pop %v7990
        %v8065 = vrcp.pop %v7992
        %v8066 = vrcp.pop %v7994
        %v8067 = vrcp.pop %v7996
        %v8068 = vrcp.pop %v7998
        %v8069 = vrcp.pop %v8000
        %v8070 = vrcp.pop %v8002
        %v8071 = vrcp.pop %v8004
        %v8072 = vrcp.pop %v8006
        %v8073 = vrcp.pop %v8008
        %v8074 = vrcp.pop %v8010
        %v8075 = vmul.f32 %v7756, %v8011
        %v8076 = vmul.f32 %v7758, %v8012
        %v8077 = vmul.f32 %v7760, %v8013
        %v8078 = vmul.f32 %v7762, %v8014
        %v8079 = vmul.f32 %v7764, %v8015
        %v8080 = vmul.f32 %v7766, %v8016
        %v8081 = vmul.f32 %v7768, %v8017
        %v8082 = vmul.f32 %v7770, %v8018
        %v8083 = vmul.f32 %v7772, %v8019
        %v8084 = vmul.f32 %v7774, %v8020
        %v8085 = vmul.f32 %v7776, %v8021
        %v8086 = vmul.f32 %v7778, %v8022
        %v8087 = vmul.f32 %v7780, %v8023
        %v8088 = vmul.f32 %v7782, %v8024
        %v8089 = vmul.f32 %v7784, %v8025
        %v8090 = vmul.f32 %v7786, %v8026
        %v8091 = vmul.f32 %v7788, %v8027
        %v8092 = vmul.f32 %v7790, %v8028
        %v8093 = vmul.f32 %v7792, %v8029
        %v8094 = vmul.f32 %v7794, %v8030
        %v8095 = vmul.f32 %v7796, %v8031
        %v8096 = vmul.f32 %v7798, %v8032
        %v8097 = vmul.f32 %v7800, %v8033
        %v8098 = vmul.f32 %v7802, %v8034
        %v8099 = vmul.f32 %v7804, %v8035
        %v8100 = vmul.f32 %v7806, %v8036
        %v8101 = vmul.f32 %v7808, %v8037
        %v8102 = vmul.f32 %v7810, %v8038
        %v8103 = vmul.f32 %v7812, %v8039
        %v8104 = vmul.f32 %v7814, %v8040
        %v8105 = vmul.f32 %v7816, %v8041
        %v8106 = vmul.f32 %v7818, %v8042
        %v8107 = vmul.f32 %v7820, %v8043
        %v8108 = vmul.f32 %v7822, %v8044
        %v8109 = vmul.f32 %v7824, %v8045
        %v8110 = vmul.f32 %v7826, %v8046
        %v8111 = vmul.f32 %v7828, %v8047
        %v8112 = vmul.f32 %v7830, %v8048
        %v8113 = vmul.f32 %v7832, %v8049
        %v8114 = vmul.f32 %v7834, %v8050
        %v8115 = vmul.f32 %v7836, %v8051
        %v8116 = vmul.f32 %v7838, %v8052
        %v8117 = vmul.f32 %v7840, %v8053
        %v8118 = vmul.f32 %v7842, %v8054
        %v8119 = vmul.f32 %v7844, %v8055
        %v8120 = vmul.f32 %v7846, %v8056
        %v8121 = vmul.f32 %v7848, %v8057
        %v8122 = vmul.f32 %v7850, %v8058
        %v8123 = vmul.f32 %v7852, %v8059
        %v8124 = vmul.f32 %v7854, %v8060
        %v8125 = vmul.f32 %v7856, %v8061
        %v8126 = vmul.f32 %v7858, %v8062
        %v8127 = vmul.f32 %v7860, %v8063
        %v8128 = vmul.f32 %v7862, %v8064
        %v8129 = vmul.f32 %v7864, %v8065
        %v8130 = vmul.f32 %v7866, %v8066
        %v8131 = vmul.f32 %v7868, %v8067
        %v8132 = vmul.f32 %v7870, %v8068
        %v8133 = vmul.f32 %v7872, %v8069
        %v8134 = vmul.f32 %v7874, %v8070
        %v8135 = vmul.f32 %v7876, %v8071
        %v8136 = vmul.f32 %v7878, %v8072
        %v8137 = vmul.f32 %v7880, %v8073
        %v8138 = vmul.f32 %v7882, %v8074
        %v8139 = vpack.c.bf16 %v8076, %v8075
        %v8140 = vpack.c.bf16 %v8078, %v8077
        %v8141 = vpack.c.bf16 %v8080, %v8079
        %v8142 = vpack.c.bf16 %v8082, %v8081
        %v8143 = vpack.c.bf16 %v8084, %v8083
        %v8144 = vpack.c.bf16 %v8086, %v8085
        %v8145 = vpack.c.bf16 %v8088, %v8087
        %v8146 = vpack.c.bf16 %v8090, %v8089
        %v8147 = vpack.c.bf16 %v8092, %v8091
        %v8148 = vpack.c.bf16 %v8094, %v8093
        %v8149 = vpack.c.bf16 %v8096, %v8095
        %v8150 = vpack.c.bf16 %v8098, %v8097
        %v8151 = vpack.c.bf16 %v8100, %v8099
        %v8152 = vpack.c.bf16 %v8102, %v8101
        %v8153 = vpack.c.bf16 %v8104, %v8103
        %v8154 = vpack.c.bf16 %v8106, %v8105
        %v8155 = vpack.c.bf16 %v8108, %v8107
        %v8156 = vpack.c.bf16 %v8110, %v8109
        %v8157 = vpack.c.bf16 %v8112, %v8111
        %v8158 = vpack.c.bf16 %v8114, %v8113
        %v8159 = vpack.c.bf16 %v8116, %v8115
        %v8160 = vpack.c.bf16 %v8118, %v8117
        %v8161 = vpack.c.bf16 %v8120, %v8119
        %v8162 = vpack.c.bf16 %v8122, %v8121
        %v8163 = vpack.c.bf16 %v8124, %v8123
        %v8164 = vpack.c.bf16 %v8126, %v8125
        %v8165 = vpack.c.bf16 %v8128, %v8127
        %v8166 = vpack.c.bf16 %v8130, %v8129
        %v8167 = vpack.c.bf16 %v8132, %v8131
        %v8168 = vpack.c.bf16 %v8134, %v8133
        %v8169 = vpack.c.bf16 %v8136, %v8135
        %v8170 = vpack.c.bf16 %v8138, %v8137
        %8171 = vmatprep.subr.bf16.mxu0 0
        %8172 = vmatpush1.bf16.msra.mxu0 %v6830
        %8173 = vmatprep.subr.bf16.mxu0 0
        %8174 = vmatpush1.bf16.msra.mxu0 %v6829
        %8175 = vmatprep.subr.bf16.mxu0 0
        %8176 = vmatpush1.bf16.msra.mxu0 %v6828
        %8177 = vmatprep.subr.bf16.mxu0 0
        %8178 = vmatpush1.bf16.msra.mxu0 %v6827
        %8179 = vmatprep.subr.bf16.mxu0 0
        %8180 = vmatpush1.bf16.msra.mxu0 %v6826
        %8181 = vmatprep.subr.bf16.mxu0 0
        %8182 = vmatpush1.bf16.msra.mxu0 %v6825
        %8183 = vmatprep.subr.bf16.mxu0 0
        %8184 = vmatpush1.bf16.msra.mxu0 %v6824
        %8185 = vmatprep.subr.bf16.mxu0 0
        %8186 = vmatpush1.bf16.msra.mxu0 %v6823
        %8187 = vmatprep.subr.bf16.mxu0 0
        %8188 = vmatpush2.bf16.msra.mxu0 0
        %8189 = vmatprep.subr.bf16.mxu0 0
        %8190 = vmatpush2.bf16.msra.mxu0 0
        %8191 = vmatprep.subr.bf16.mxu0 0
        %8192 = vmatpush2.bf16.msra.mxu0 0
        %8193 = vmatprep.subr.bf16.mxu0 0
        %8194 = vmatpush2.bf16.msra.mxu0 0
        %8195 = vmatprep.subr.bf16.mxu0 0
        %8196 = vmatpush2.bf16.msra.mxu0 0
        %8197 = vmatprep.subr.bf16.mxu0 0
        %8198 = vmatpush2.bf16.msra.mxu0 0
        %8199 = vmatprep.subr.bf16.mxu0 0
        %8200 = vmatpush2.bf16.msra.mxu0 0
        %8201 = vmatprep.subr.bf16.mxu0 0
        %8202 = vmatpush2.bf16.msra.mxu0 0
        %8203 = vmatprep.mubr.bf16.mxu0 0
        %8204 = vmatmul.mubr.bf16.gmra.mxu0 %v8139
        %v8205 = vpop.f32.mrf.mxu0
        %v8206 = vadd.f32 0.0, %v8205
        %v8207 = vpop.f32.mrf.mxu0
        %v8208 = vpop.f32.mrf.mxu0
        %v8209 = vadd.f32 0.0, %v8208
        %v8210 = vpop.f32.mrf.mxu0
        %8211 = vmatprep.mubr.bf16.mxu0 0
        %8212 = vmatmul.mubr.bf16.gmra.mxu0 %v8140
        %v8213 = vpop.f32.mrf.mxu0
        %v8214 = vadd.f32 0.0, %v8213
        %v8215 = vpop.f32.mrf.mxu0
        %v8216 = vpop.f32.mrf.mxu0
        %v8217 = vadd.f32 0.0, %v8216
        %v8218 = vpop.f32.mrf.mxu0
        %8219 = vmatprep.mubr.bf16.mxu0 0
        %8220 = vmatmul.mubr.bf16.gmra.mxu0 %v8141
        %v8221 = vpop.f32.mrf.mxu0
        %v8222 = vadd.f32 0.0, %v8221
        %v8223 = vpop.f32.mrf.mxu0
        %v8224 = vpop.f32.mrf.mxu0
        %v8225 = vadd.f32 0.0, %v8224
        %v8226 = vpop.f32.mrf.mxu0
        %8227 = vmatprep.mubr.bf16.mxu0 0
        %8228 = vmatmul.mubr.bf16.gmra.mxu0 %v8142
        %v8229 = vpop.f32.mrf.mxu0
        %v8230 = vadd.f32 0.0, %v8229
        %v8231 = vpop.f32.mrf.mxu0
        %v8232 = vpop.f32.mrf.mxu0
        %v8233 = vadd.f32 0.0, %v8232
        %v8234 = vpop.f32.mrf.mxu0
        %8235 = vmatprep.mubr.bf16.mxu0 0
        %8236 = vmatmul.mubr.bf16.gmra.mxu0 %v8143
        %v8237 = vpop.f32.mrf.mxu0
        %v8238 = vadd.f32 0.0, %v8237
        %v8239 = vpop.f32.mrf.mxu0
        %v8240 = vpop.f32.mrf.mxu0
        %v8241 = vadd.f32 0.0, %v8240
        %v8242 = vpop.f32.mrf.mxu0
        %8243 = vmatprep.mubr.bf16.mxu0 0
        %8244 = vmatmul.mubr.bf16.gmra.mxu0 %v8144
        %v8245 = vpop.f32.mrf.mxu0
        %v8246 = vadd.f32 0.0, %v8245
        %v8247 = vpop.f32.mrf.mxu0
        %v8248 = vpop.f32.mrf.mxu0
        %v8249 = vadd.f32 0.0, %v8248
        %v8250 = vpop.f32.mrf.mxu0
        %8251 = vmatprep.mubr.bf16.mxu0 0
        %8252 = vmatmul.mubr.bf16.gmra.mxu0 %v8145
        %v8253 = vpop.f32.mrf.mxu0
        %v8254 = vadd.f32 0.0, %v8253
        %v8255 = vpop.f32.mrf.mxu0
        %v8256 = vpop.f32.mrf.mxu0
        %v8257 = vadd.f32 0.0, %v8256
        %v8258 = vpop.f32.mrf.mxu0
        %8259 = vmatprep.mubr.bf16.mxu0 0
        %8260 = vmatmul.mubr.bf16.gmra.mxu0 %v8146
        %v8261 = vpop.f32.mrf.mxu0
        %v8262 = vadd.f32 0.0, %v8261
        %v8263 = vpop.f32.mrf.mxu0
        %v8264 = vpop.f32.mrf.mxu0
        %v8265 = vadd.f32 0.0, %v8264
        %v8266 = vpop.f32.mrf.mxu0
        %8267 = vdwg.mxu0
        %8268 = vmatprep.subr.bf16.mxu0 0
        %8269 = vmatpush1.bf16.msra.mxu0 %v6838
        %8270 = vmatprep.subr.bf16.mxu0 0
        %8271 = vmatpush1.bf16.msra.mxu0 %v6837
        %8272 = vmatprep.subr.bf16.mxu0 0
        %8273 = vmatpush1.bf16.msra.mxu0 %v6836
        %8274 = vmatprep.subr.bf16.mxu0 0
        %8275 = vmatpush1.bf16.msra.mxu0 %v6835
        %8276 = vmatprep.subr.bf16.mxu0 0
        %8277 = vmatpush1.bf16.msra.mxu0 %v6834
        %8278 = vmatprep.subr.bf16.mxu0 0
        %8279 = vmatpush1.bf16.msra.mxu0 %v6833
        %8280 = vmatprep.subr.bf16.mxu0 0
        %8281 = vmatpush1.bf16.msra.mxu0 %v6832
        %8282 = vmatprep.subr.bf16.mxu0 0
        %8283 = vmatpush1.bf16.msra.mxu0 %v6831
        %8284 = vmatprep.subr.bf16.mxu0 0
        %8285 = vmatpush2.bf16.msra.mxu0 0
        %8286 = vmatprep.subr.bf16.mxu0 0
        %8287 = vmatpush2.bf16.msra.mxu0 0
        %8288 = vmatprep.subr.bf16.mxu0 0
        %8289 = vmatpush2.bf16.msra.mxu0 0
        %8290 = vmatprep.subr.bf16.mxu0 0
        %8291 = vmatpush2.bf16.msra.mxu0 0
        %8292 = vmatprep.subr.bf16.mxu0 0
        %8293 = vmatpush2.bf16.msra.mxu0 0
        %8294 = vmatprep.subr.bf16.mxu0 0
        %8295 = vmatpush2.bf16.msra.mxu0 0
        %8296 = vmatprep.subr.bf16.mxu0 0
        %8297 = vmatpush2.bf16.msra.mxu0 0
        %8298 = vmatprep.subr.bf16.mxu0 0
        %8299 = vmatpush2.bf16.msra.mxu0 0
        %8300 = vmatprep.mubr.bf16.mxu0 0
        %8301 = vmatmul.mubr.bf16.gmra.mxu0 %v8147
        %v8302 = vpop.f32.mrf.mxu0
        %v8303 = vadd.f32 0.0, %v8302
        %v8304 = vpop.f32.mrf.mxu0
        %v8305 = vpop.f32.mrf.mxu0
        %v8306 = vadd.f32 0.0, %v8305
        %v8307 = vpop.f32.mrf.mxu0
        %8308 = vmatprep.mubr.bf16.mxu0 0
        %8309 = vmatmul.mubr.bf16.gmra.mxu0 %v8148
        %v8310 = vpop.f32.mrf.mxu0
        %v8311 = vadd.f32 0.0, %v8310
        %v8312 = vpop.f32.mrf.mxu0
        %v8313 = vpop.f32.mrf.mxu0
        %v8314 = vadd.f32 0.0, %v8313
        %v8315 = vpop.f32.mrf.mxu0
        %8316 = vmatprep.mubr.bf16.mxu0 0
        %8317 = vmatmul.mubr.bf16.gmra.mxu0 %v8149
        %v8318 = vpop.f32.mrf.mxu0
        %v8319 = vadd.f32 0.0, %v8318
        %v8320 = vpop.f32.mrf.mxu0
        %v8321 = vpop.f32.mrf.mxu0
        %v8322 = vadd.f32 0.0, %v8321
        %v8323 = vpop.f32.mrf.mxu0
        %8324 = vmatprep.mubr.bf16.mxu0 0
        %8325 = vmatmul.mubr.bf16.gmra.mxu0 %v8150
        %v8326 = vpop.f32.mrf.mxu0
        %v8327 = vadd.f32 0.0, %v8326
        %v8328 = vpop.f32.mrf.mxu0
        %v8329 = vpop.f32.mrf.mxu0
        %v8330 = vadd.f32 0.0, %v8329
        %v8331 = vpop.f32.mrf.mxu0
        %8332 = vmatprep.mubr.bf16.mxu0 0
        %8333 = vmatmul.mubr.bf16.gmra.mxu0 %v8151
        %v8334 = vpop.f32.mrf.mxu0
        %v8335 = vadd.f32 0.0, %v8334
        %v8336 = vpop.f32.mrf.mxu0
        %v8337 = vpop.f32.mrf.mxu0
        %v8338 = vadd.f32 0.0, %v8337
        %v8339 = vpop.f32.mrf.mxu0
        %8340 = vmatprep.mubr.bf16.mxu0 0
        %8341 = vmatmul.mubr.bf16.gmra.mxu0 %v8152
        %v8342 = vpop.f32.mrf.mxu0
        %v8343 = vadd.f32 0.0, %v8342
        %v8344 = vpop.f32.mrf.mxu0
        %v8345 = vpop.f32.mrf.mxu0
        %v8346 = vadd.f32 0.0, %v8345
        %v8347 = vpop.f32.mrf.mxu0
        %8348 = vmatprep.mubr.bf16.mxu0 0
        %8349 = vmatmul.mubr.bf16.gmra.mxu0 %v8153
        %v8350 = vpop.f32.mrf.mxu0
        %v8351 = vadd.f32 0.0, %v8350
        %v8352 = vpop.f32.mrf.mxu0
        %v8353 = vpop.f32.mrf.mxu0
        %v8354 = vadd.f32 0.0, %v8353
        %v8355 = vpop.f32.mrf.mxu0
        %8356 = vmatprep.mubr.bf16.mxu0 0
        %8357 = vmatmul.mubr.bf16.gmra.mxu0 %v8154
        %v8358 = vpop.f32.mrf.mxu0
        %v8359 = vadd.f32 0.0, %v8358
        %v8360 = vpop.f32.mrf.mxu0
        %v8361 = vpop.f32.mrf.mxu0
        %v8362 = vadd.f32 0.0, %v8361
        %v8363 = vpop.f32.mrf.mxu0
        %8364 = vdwg.mxu0
        %8365 = vmatprep.subr.bf16.mxu0 0
        %8366 = vmatpush1.bf16.msra.mxu0 %v6846
        %8367 = vmatprep.subr.bf16.mxu0 0
        %8368 = vmatpush1.bf16.msra.mxu0 %v6845
        %8369 = vmatprep.subr.bf16.mxu0 0
        %8370 = vmatpush1.bf16.msra.mxu0 %v6844
        %8371 = vmatprep.subr.bf16.mxu0 0
        %8372 = vmatpush1.bf16.msra.mxu0 %v6843
        %8373 = vmatprep.subr.bf16.mxu0 0
        %8374 = vmatpush1.bf16.msra.mxu0 %v6842
        %8375 = vmatprep.subr.bf16.mxu0 0
        %8376 = vmatpush1.bf16.msra.mxu0 %v6841
        %8377 = vmatprep.subr.bf16.mxu0 0
        %8378 = vmatpush1.bf16.msra.mxu0 %v6840
        %8379 = vmatprep.subr.bf16.mxu0 0
        %8380 = vmatpush1.bf16.msra.mxu0 %v6839
        %8381 = vmatprep.subr.bf16.mxu0 0
        %8382 = vmatpush2.bf16.msra.mxu0 0
        %8383 = vmatprep.subr.bf16.mxu0 0
        %8384 = vmatpush2.bf16.msra.mxu0 0
        %8385 = vmatprep.subr.bf16.mxu0 0
        %8386 = vmatpush2.bf16.msra.mxu0 0
        %8387 = vmatprep.subr.bf16.mxu0 0
        %8388 = vmatpush2.bf16.msra.mxu0 0
        %8389 = vmatprep.subr.bf16.mxu0 0
        %8390 = vmatpush2.bf16.msra.mxu0 0
        %8391 = vmatprep.subr.bf16.mxu0 0
        %8392 = vmatpush2.bf16.msra.mxu0 0
        %8393 = vmatprep.subr.bf16.mxu0 0
        %8394 = vmatpush2.bf16.msra.mxu0 0
        %8395 = vmatprep.subr.bf16.mxu0 0
        %8396 = vmatpush2.bf16.msra.mxu0 0
        %8397 = vmatprep.mubr.bf16.mxu0 0
        %8398 = vmatmul.mubr.bf16.gmra.mxu0 %v8155
        %v8399 = vpop.f32.mrf.mxu0
        %v8400 = vadd.f32 0.0, %v8399
        %v8401 = vpop.f32.mrf.mxu0
        %v8402 = vpop.f32.mrf.mxu0
        %v8403 = vadd.f32 0.0, %v8402
        %v8404 = vpop.f32.mrf.mxu0
        %8405 = vmatprep.mubr.bf16.mxu0 0
        %8406 = vmatmul.mubr.bf16.gmra.mxu0 %v8156
        %v8407 = vpop.f32.mrf.mxu0
        %v8408 = vadd.f32 0.0, %v8407
        %v8409 = vpop.f32.mrf.mxu0
        %v8410 = vpop.f32.mrf.mxu0
        %v8411 = vadd.f32 0.0, %v8410
        %v8412 = vpop.f32.mrf.mxu0
        %8413 = vmatprep.mubr.bf16.mxu0 0
        %8414 = vmatmul.mubr.bf16.gmra.mxu0 %v8157
        %v8415 = vpop.f32.mrf.mxu0
        %v8416 = vadd.f32 0.0, %v8415
        %v8417 = vpop.f32.mrf.mxu0
        %v8418 = vpop.f32.mrf.mxu0
        %v8419 = vadd.f32 0.0, %v8418
        %v8420 = vpop.f32.mrf.mxu0
        %8421 = vmatprep.mubr.bf16.mxu0 0
        %8422 = vmatmul.mubr.bf16.gmra.mxu0 %v8158
        %v8423 = vpop.f32.mrf.mxu0
        %v8424 = vadd.f32 0.0, %v8423
        %v8425 = vpop.f32.mrf.mxu0
        %v8426 = vpop.f32.mrf.mxu0
        %v8427 = vadd.f32 0.0, %v8426
        %v8428 = vpop.f32.mrf.mxu0
        %8429 = vmatprep.mubr.bf16.mxu0 0
        %8430 = vmatmul.mubr.bf16.gmra.mxu0 %v8159
        %v8431 = vpop.f32.mrf.mxu0
        %v8432 = vadd.f32 0.0, %v8431
        %v8433 = vpop.f32.mrf.mxu0
        %v8434 = vpop.f32.mrf.mxu0
        %v8435 = vadd.f32 0.0, %v8434
        %v8436 = vpop.f32.mrf.mxu0
        %8437 = vmatprep.mubr.bf16.mxu0 0
        %8438 = vmatmul.mubr.bf16.gmra.mxu0 %v8160
        %v8439 = vpop.f32.mrf.mxu0
        %v8440 = vadd.f32 0.0, %v8439
        %v8441 = vpop.f32.mrf.mxu0
        %v8442 = vpop.f32.mrf.mxu0
        %v8443 = vadd.f32 0.0, %v8442
        %v8444 = vpop.f32.mrf.mxu0
        %8445 = vmatprep.mubr.bf16.mxu0 0
        %8446 = vmatmul.mubr.bf16.gmra.mxu0 %v8161
        %v8447 = vpop.f32.mrf.mxu0
        %v8448 = vadd.f32 0.0, %v8447
        %v8449 = vpop.f32.mrf.mxu0
        %v8450 = vpop.f32.mrf.mxu0
        %v8451 = vadd.f32 0.0, %v8450
        %v8452 = vpop.f32.mrf.mxu0
        %8453 = vmatprep.mubr.bf16.mxu0 0
        %8454 = vmatmul.mubr.bf16.gmra.mxu0 %v8162
        %v8455 = vpop.f32.mrf.mxu0
        %v8456 = vadd.f32 0.0, %v8455
        %v8457 = vpop.f32.mrf.mxu0
        %v8458 = vpop.f32.mrf.mxu0
        %v8459 = vadd.f32 0.0, %v8458
        %v8460 = vpop.f32.mrf.mxu0
        %8461 = vdwg.mxu0
        %8462 = vmatprep.subr.bf16.mxu0 0
        %8463 = vmatpush1.bf16.msra.mxu0 %v6854
        %8464 = vmatprep.subr.bf16.mxu0 0
        %8465 = vmatpush1.bf16.msra.mxu0 %v6853
        %8466 = vmatprep.subr.bf16.mxu0 0
        %8467 = vmatpush1.bf16.msra.mxu0 %v6852
        %8468 = vmatprep.subr.bf16.mxu0 0
        %8469 = vmatpush1.bf16.msra.mxu0 %v6851
        %8470 = vmatprep.subr.bf16.mxu0 0
        %8471 = vmatpush1.bf16.msra.mxu0 %v6850
        %8472 = vmatprep.subr.bf16.mxu0 0
        %8473 = vmatpush1.bf16.msra.mxu0 %v6849
        %8474 = vmatprep.subr.bf16.mxu0 0
        %8475 = vmatpush1.bf16.msra.mxu0 %v6848
        %8476 = vmatprep.subr.bf16.mxu0 0
        %8477 = vmatpush1.bf16.msra.mxu0 %v6847
        %8478 = vmatprep.subr.bf16.mxu0 0
        %8479 = vmatpush2.bf16.msra.mxu0 0
        %8480 = vmatprep.subr.bf16.mxu0 0
        %8481 = vmatpush2.bf16.msra.mxu0 0
        %8482 = vmatprep.subr.bf16.mxu0 0
        %8483 = vmatpush2.bf16.msra.mxu0 0
        %8484 = vmatprep.subr.bf16.mxu0 0
        %8485 = vmatpush2.bf16.msra.mxu0 0
        %8486 = vmatprep.subr.bf16.mxu0 0
        %8487 = vmatpush2.bf16.msra.mxu0 0
        %8488 = vmatprep.subr.bf16.mxu0 0
        %8489 = vmatpush2.bf16.msra.mxu0 0
        %8490 = vmatprep.subr.bf16.mxu0 0
        %8491 = vmatpush2.bf16.msra.mxu0 0
        %8492 = vmatprep.subr.bf16.mxu0 0
        %8493 = vmatpush2.bf16.msra.mxu0 0
        %8494 = vmatprep.mubr.bf16.mxu0 0
        %8495 = vmatmul.mubr.bf16.gmra.mxu0 %v8163
        %v8496 = vpop.f32.mrf.mxu0
        %v8497 = vadd.f32 0.0, %v8496
        %v8498 = vpop.f32.mrf.mxu0
        %v8499 = vpop.f32.mrf.mxu0
        %v8500 = vadd.f32 0.0, %v8499
        %v8501 = vpop.f32.mrf.mxu0
        %8502 = vmatprep.mubr.bf16.mxu0 0
        %8503 = vmatmul.mubr.bf16.gmra.mxu0 %v8164
        %v8504 = vpop.f32.mrf.mxu0
        %v8505 = vadd.f32 0.0, %v8504
        %v8506 = vpop.f32.mrf.mxu0
        %v8507 = vpop.f32.mrf.mxu0
        %v8508 = vadd.f32 0.0, %v8507
        %v8509 = vpop.f32.mrf.mxu0
        %8510 = vmatprep.mubr.bf16.mxu0 0
        %8511 = vmatmul.mubr.bf16.gmra.mxu0 %v8165
        %v8512 = vpop.f32.mrf.mxu0
        %v8513 = vadd.f32 0.0, %v8512
        %v8514 = vpop.f32.mrf.mxu0
        %v8515 = vpop.f32.mrf.mxu0
        %v8516 = vadd.f32 0.0, %v8515
        %v8517 = vpop.f32.mrf.mxu0
        %8518 = vmatprep.mubr.bf16.mxu0 0
        %8519 = vmatmul.mubr.bf16.gmra.mxu0 %v8166
        %v8520 = vpop.f32.mrf.mxu0
        %v8521 = vadd.f32 0.0, %v8520
        %v8522 = vpop.f32.mrf.mxu0
        %v8523 = vpop.f32.mrf.mxu0
        %v8524 = vadd.f32 0.0, %v8523
        %v8525 = vpop.f32.mrf.mxu0
        %8526 = vmatprep.mubr.bf16.mxu0 0
        %8527 = vmatmul.mubr.bf16.gmra.mxu0 %v8167
        %v8528 = vpop.f32.mrf.mxu0
        %v8529 = vadd.f32 0.0, %v8528
        %v8530 = vpop.f32.mrf.mxu0
        %v8531 = vpop.f32.mrf.mxu0
        %v8532 = vadd.f32 0.0, %v8531
        %v8533 = vpop.f32.mrf.mxu0
        %8534 = vmatprep.mubr.bf16.mxu0 0
        %8535 = vmatmul.mubr.bf16.gmra.mxu0 %v8168
        %v8536 = vpop.f32.mrf.mxu0
        %v8537 = vadd.f32 0.0, %v8536
        %v8538 = vpop.f32.mrf.mxu0
        %v8539 = vpop.f32.mrf.mxu0
        %v8540 = vadd.f32 0.0, %v8539
        %v8541 = vpop.f32.mrf.mxu0
        %8542 = vmatprep.mubr.bf16.mxu0 0
        %8543 = vmatmul.mubr.bf16.gmra.mxu0 %v8169
        %v8544 = vpop.f32.mrf.mxu0
        %v8545 = vadd.f32 0.0, %v8544
        %v8546 = vpop.f32.mrf.mxu0
        %v8547 = vpop.f32.mrf.mxu0
        %v8548 = vadd.f32 0.0, %v8547
        %v8549 = vpop.f32.mrf.mxu0
        %8550 = vmatprep.mubr.bf16.mxu0 0
        %8551 = vmatmul.mubr.bf16.gmra.mxu0 %v8170
        %v8552 = vpop.f32.mrf.mxu0
        %v8553 = vadd.f32 0.0, %v8552
        %v8554 = vpop.f32.mrf.mxu0
        %v8555 = vpop.f32.mrf.mxu0
        %v8556 = vadd.f32 0.0, %v8555
        %v8557 = vpop.f32.mrf.mxu0
        %8558 = vdwg.mxu0
        %8575 = vrot.lane.b32.xlu0 %v8303, 32
        %v8576 = vpop.permute.xlu0 %8575
        %8577 = vrot.lane.b32.xlu0 %v8306, 32
        %v8578 = vpop.permute.xlu0 %8577
        %8579 = vrot.lane.b32.xlu0 %v8311, 32
        %v8580 = vpop.permute.xlu0 %8579
        %8581 = vrot.lane.b32.xlu0 %v8314, 32
        %v8582 = vpop.permute.xlu0 %8581
        %8583 = vrot.lane.b32.xlu0 %v8319, 32
        %v8584 = vpop.permute.xlu0 %8583
        %8585 = vrot.lane.b32.xlu0 %v8322, 32
        %v8586 = vpop.permute.xlu0 %8585
        %8587 = vrot.lane.b32.xlu0 %v8327, 32
        %v8588 = vpop.permute.xlu0 %8587
        %8589 = vrot.lane.b32.xlu0 %v8330, 32
        %v8590 = vpop.permute.xlu0 %8589
        %8591 = vrot.lane.b32.xlu0 %v8335, 32
        %v8592 = vpop.permute.xlu0 %8591
        %8593 = vrot.lane.b32.xlu0 %v8338, 32
        %v8594 = vpop.permute.xlu0 %8593
        %8595 = vrot.lane.b32.xlu0 %v8343, 32
        %v8596 = vpop.permute.xlu0 %8595
        %8597 = vrot.lane.b32.xlu0 %v8346, 32
        %v8598 = vpop.permute.xlu0 %8597
        %8599 = vrot.lane.b32.xlu0 %v8351, 32
        %v8600 = vpop.permute.xlu0 %8599
        %8601 = vrot.lane.b32.xlu0 %v8354, 32
        %v8602 = vpop.permute.xlu0 %8601
        %8603 = vrot.lane.b32.xlu0 %v8359, 32
        %v8604 = vpop.permute.xlu0 %8603
        %8605 = vrot.lane.b32.xlu0 %v8362, 32
        %v8606 = vpop.permute.xlu0 %8605
        %8639 = vrot.lane.b32.xlu0 %v8400, 64
        %v8640 = vpop.permute.xlu0 %8639
        %8641 = vrot.lane.b32.xlu0 %v8403, 64
        %v8642 = vpop.permute.xlu0 %8641
        %8643 = vrot.lane.b32.xlu0 %v8408, 64
        %v8644 = vpop.permute.xlu0 %8643
        %8645 = vrot.lane.b32.xlu0 %v8411, 64
        %v8646 = vpop.permute.xlu0 %8645
        %8647 = vrot.lane.b32.xlu0 %v8416, 64
        %v8648 = vpop.permute.xlu0 %8647
        %8649 = vrot.lane.b32.xlu0 %v8419, 64
        %v8650 = vpop.permute.xlu0 %8649
        %8651 = vrot.lane.b32.xlu0 %v8424, 64
        %v8652 = vpop.permute.xlu0 %8651
        %8653 = vrot.lane.b32.xlu0 %v8427, 64
        %v8654 = vpop.permute.xlu0 %8653
        %8655 = vrot.lane.b32.xlu0 %v8432, 64
        %v8656 = vpop.permute.xlu0 %8655
        %8657 = vrot.lane.b32.xlu0 %v8435, 64
        %v8658 = vpop.permute.xlu0 %8657
        %8659 = vrot.lane.b32.xlu0 %v8440, 64
        %v8660 = vpop.permute.xlu0 %8659
        %8661 = vrot.lane.b32.xlu0 %v8443, 64
        %v8662 = vpop.permute.xlu0 %8661
        %8663 = vrot.lane.b32.xlu0 %v8448, 64
        %v8664 = vpop.permute.xlu0 %8663
        %8665 = vrot.lane.b32.xlu0 %v8451, 64
        %v8666 = vpop.permute.xlu0 %8665
        %8667 = vrot.lane.b32.xlu0 %v8456, 64
        %v8668 = vpop.permute.xlu0 %8667
        %8669 = vrot.lane.b32.xlu0 %v8459, 64
        %v8670 = vpop.permute.xlu0 %8669
        %8703 = vrot.lane.b32.xlu0 %v8497, 96
        %v8704 = vpop.permute.xlu0 %8703
        %8705 = vrot.lane.b32.xlu0 %v8500, 96
        %v8706 = vpop.permute.xlu0 %8705
        %8707 = vrot.lane.b32.xlu0 %v8505, 96
        %v8708 = vpop.permute.xlu0 %8707
        %8709 = vrot.lane.b32.xlu0 %v8508, 96
        %v8710 = vpop.permute.xlu0 %8709
        %8711 = vrot.lane.b32.xlu0 %v8513, 96
        %v8712 = vpop.permute.xlu0 %8711
        %8713 = vrot.lane.b32.xlu0 %v8516, 96
        %v8714 = vpop.permute.xlu0 %8713
        %8715 = vrot.lane.b32.xlu0 %v8521, 96
        %v8716 = vpop.permute.xlu0 %8715
        %8717 = vrot.lane.b32.xlu0 %v8524, 96
        %v8718 = vpop.permute.xlu0 %8717
        %8719 = vrot.lane.b32.xlu0 %v8529, 96
        %v8720 = vpop.permute.xlu0 %8719
        %8721 = vrot.lane.b32.xlu0 %v8532, 96
        %v8722 = vpop.permute.xlu0 %8721
        %8723 = vrot.lane.b32.xlu0 %v8537, 96
        %v8724 = vpop.permute.xlu0 %8723
        %8725 = vrot.lane.b32.xlu0 %v8540, 96
        %v8726 = vpop.permute.xlu0 %8725
        %8727 = vrot.lane.b32.xlu0 %v8545, 96
        %v8728 = vpop.permute.xlu0 %8727
        %8729 = vrot.lane.b32.xlu0 %v8548, 96
        %v8730 = vpop.permute.xlu0 %8729
        %8731 = vrot.lane.b32.xlu0 %v8553, 96
        %v8732 = vpop.permute.xlu0 %8731
        %8733 = vrot.lane.b32.xlu0 %v8556, 96
        %v8734 = vpop.permute.xlu0 %8733
        %v8751 = vsel %vm2752, %v8206, %v8576
        %v8752 = vsel %vm2752, %v8209, %v8578
        %v8753 = vsel %vm2752, %v8214, %v8580
        %v8754 = vsel %vm2752, %v8217, %v8582
        %v8755 = vsel %vm2752, %v8222, %v8584
        %v8756 = vsel %vm2752, %v8225, %v8586
        %v8757 = vsel %vm2752, %v8230, %v8588
        %v8758 = vsel %vm2752, %v8233, %v8590
        %v8759 = vsel %vm2752, %v8238, %v8592
        %v8760 = vsel %vm2752, %v8241, %v8594
        %v8761 = vsel %vm2752, %v8246, %v8596
        %v8762 = vsel %vm2752, %v8249, %v8598
        %v8763 = vsel %vm2752, %v8254, %v8600
        %v8764 = vsel %vm2752, %v8257, %v8602
        %v8765 = vsel %vm2752, %v8262, %v8604
        %v8766 = vsel %vm2752, %v8265, %v8606
        %v8767 = vsel %vm5369, %v8751, %v8640
        %v8768 = vsel %vm5369, %v8752, %v8642
        %v8769 = vsel %vm5369, %v8753, %v8644
        %v8770 = vsel %vm5369, %v8754, %v8646
        %v8771 = vsel %vm5369, %v8755, %v8648
        %v8772 = vsel %vm5369, %v8756, %v8650
        %v8773 = vsel %vm5369, %v8757, %v8652
        %v8774 = vsel %vm5369, %v8758, %v8654
        %v8775 = vsel %vm5369, %v8759, %v8656
        %v8776 = vsel %vm5369, %v8760, %v8658
        %v8777 = vsel %vm5369, %v8761, %v8660
        %v8778 = vsel %vm5369, %v8762, %v8662
        %v8779 = vsel %vm5369, %v8763, %v8664
        %v8780 = vsel %vm5369, %v8764, %v8666
        %v8781 = vsel %vm5369, %v8765, %v8668
        %v8782 = vsel %vm5369, %v8766, %v8670
        %v8783 = vsel %vm5386, %v8767, %v8704
        %v8784 = vsel %vm5386, %v8768, %v8706
        %v8785 = vsel %vm5386, %v8769, %v8708
        %v8786 = vsel %vm5386, %v8770, %v8710
        %v8787 = vsel %vm5386, %v8771, %v8712
        %v8788 = vsel %vm5386, %v8772, %v8714
        %v8789 = vsel %vm5386, %v8773, %v8716
        %v8790 = vsel %vm5386, %v8774, %v8718
        %v8791 = vsel %vm5386, %v8775, %v8720
        %v8792 = vsel %vm5386, %v8776, %v8722
        %v8793 = vsel %vm5386, %v8777, %v8724
        %v8794 = vsel %vm5386, %v8778, %v8726
        %v8795 = vsel %vm5386, %v8779, %v8728
        %v8796 = vsel %vm5386, %v8780, %v8730
        %v8797 = vsel %vm5386, %v8781, %v8732
        %v8798 = vsel %vm5386, %v8782, %v8734
        %v8799 = vpack.c.bf16 %v8784, %v8783
        %v8800 = vpack.c.bf16 %v8786, %v8785
        %v8801 = vpack.c.bf16 %v8788, %v8787
        %v8802 = vpack.c.bf16 %v8790, %v8789
        %v8803 = vpack.c.bf16 %v8792, %v8791
        %v8804 = vpack.c.bf16 %v8794, %v8793
        %v8805 = vpack.c.bf16 %v8796, %v8795
        %v8806 = vpack.c.bf16 %v8798, %v8797
        %v8807 = vld [vmem:[#allocation17] sm:$0xf]
        %v8808 = vld [vmem:[#allocation17 + $0x4] sm:$0xf]
        %v8809 = vld [vmem:[#allocation17 + $0x8] sm:$0xf]
        %v8810 = vld [vmem:[#allocation17 + $0xc] sm:$0xf]
        %v8811 = vld [vmem:[#allocation17 + $0x10] sm:$0xf]
        %v8812 = vld [vmem:[#allocation17 + $0x14] sm:$0xf]
        %v8813 = vld [vmem:[#allocation17 + $0x18] sm:$0xf]
        %v8814 = vld [vmem:[#allocation17 + $0x1c] sm:$0xf]
        %v8815 = vld [vmem:[#allocation17 + $0x20] sm:$0xf]
        %v8816 = vld [vmem:[#allocation17 + $0x24] sm:$0xf]
        %v8817 = vld [vmem:[#allocation17 + $0x28] sm:$0xf]
        %v8818 = vld [vmem:[#allocation17 + $0x2c] sm:$0xf]
        %v8819 = vld [vmem:[#allocation17 + $0x30] sm:$0xf]
        %v8820 = vld [vmem:[#allocation17 + $0x34] sm:$0xf]
        %v8821 = vld [vmem:[#allocation17 + $0x38] sm:$0xf]
        %v8822 = vld [vmem:[#allocation17 + $0x3c] sm:$0xf]
        %v8823 = vld [vmem:[%s15] sm:$0x1]
        %v8825 = vlaneseq
        %v8826 = vshrl.u32 %v8825, 7
        %v8827 = vsub.s32 0, %v8826
        %v8828 = vrot.slane %v8823, %v8827
        %v8846 = vunpack.c.l.b16 %v8807
        %v8847 = vunpack.c.l.b16 %v8808
        %v8848 = vunpack.c.l.b16 %v8809
        %v8849 = vunpack.c.l.b16 %v8810
        %v8850 = vunpack.c.l.b16 %v8811
        %v8851 = vunpack.c.l.b16 %v8812
        %v8852 = vunpack.c.l.b16 %v8813
        %v8853 = vunpack.c.l.b16 %v8814
        %v8854 = vunpack.c.l.b16 %v8815
        %v8855 = vunpack.c.l.b16 %v8816
        %v8856 = vunpack.c.l.b16 %v8817
        %v8857 = vunpack.c.l.b16 %v8818
        %v8858 = vunpack.c.l.b16 %v8819
        %v8859 = vunpack.c.l.b16 %v8820
        %v8860 = vunpack.c.l.b16 %v8821
        %v8861 = vunpack.c.l.b16 %v8822
        %v8862 = vpack.c.b16 %v8847, %v8846
        %v8863 = vpack.c.b16 %v8849, %v8848
        %v8864 = vpack.c.b16 %v8851, %v8850
        %v8865 = vpack.c.b16 %v8853, %v8852
        %v8866 = vpack.c.b16 %v8855, %v8854
        %v8867 = vpack.c.b16 %v8857, %v8856
        %v8868 = vpack.c.b16 %v8859, %v8858
        %v8869 = vpack.c.b16 %v8861, %v8860
        %8878 = vmatprep.subr.bf16.mxu0 0
        %8879 = vmatpush1.bf16.msra.mxu0 %v8869
        %8880 = vmatprep.subr.bf16.mxu0 0
        %8881 = vmatpush1.bf16.msra.mxu0 %v8868
        %8882 = vmatprep.subr.bf16.mxu0 0
        %8883 = vmatpush1.bf16.msra.mxu0 %v8867
        %8884 = vmatprep.subr.bf16.mxu0 0
        %8885 = vmatpush1.bf16.msra.mxu0 %v8866
        %8886 = vmatprep.subr.bf16.mxu0 0
        %8887 = vmatpush1.bf16.msra.mxu0 %v8865
        %8888 = vmatprep.subr.bf16.mxu0 0
        %8889 = vmatpush1.bf16.msra.mxu0 %v8864
        %8890 = vmatprep.subr.bf16.mxu0 0
        %8891 = vmatpush1.bf16.msra.mxu0 %v8863
        %8892 = vmatprep.subr.bf16.mxu0 0
        %8893 = vmatpush1.bf16.msra.mxu0 %v8862
        %8894 = vmatprep.subr.bf16.mxu0 0
        %8895 = vmatpush2.bf16.msra.mxu0 0
        %8896 = vmatprep.subr.bf16.mxu0 0
        %8897 = vmatpush2.bf16.msra.mxu0 0
        %8898 = vmatprep.subr.bf16.mxu0 0
        %8899 = vmatpush2.bf16.msra.mxu0 0
        %8900 = vmatprep.subr.bf16.mxu0 0
        %8901 = vmatpush2.bf16.msra.mxu0 0
        %8902 = vmatprep.subr.bf16.mxu0 0
        %8903 = vmatpush2.bf16.msra.mxu0 0
        %8904 = vmatprep.subr.bf16.mxu0 0
        %8905 = vmatpush2.bf16.msra.mxu0 0
        %8906 = vmatprep.subr.bf16.mxu0 0
        %8907 = vmatpush2.bf16.msra.mxu0 0
        %8908 = vmatprep.subr.bf16.mxu0 0
        %8909 = vmatpush2.bf16.msra.mxu0 0
        %8910 = vmatprep.mubr.bf16.mxu0 0
        %8911 = vmatmul.mubr.bf16.gmra.mxu0 %v8799
        %v8912 = vpop.f32.mrf.mxu0
        %v8913 = vadd.f32 %v8828, %v8912
        %v8914 = vpop.f32.mrf.mxu0
        %v8915 = vpop.f32.mrf.mxu0
        %v8916 = vadd.f32 %v8828, %v8915
        %v8917 = vpop.f32.mrf.mxu0
        %8918 = vmatprep.mubr.bf16.mxu0 0
        %8919 = vmatmul.mubr.bf16.gmra.mxu0 %v8800
        %v8920 = vpop.f32.mrf.mxu0
        %v8921 = vadd.f32 %v8828, %v8920
        %v8922 = vpop.f32.mrf.mxu0
        %v8923 = vpop.f32.mrf.mxu0
        %v8924 = vadd.f32 %v8828, %v8923
        %v8925 = vpop.f32.mrf.mxu0
        %8926 = vmatprep.mubr.bf16.mxu0 0
        %8927 = vmatmul.mubr.bf16.gmra.mxu0 %v8801
        %v8928 = vpop.f32.mrf.mxu0
        %v8929 = vadd.f32 %v8828, %v8928
        %v8930 = vpop.f32.mrf.mxu0
        %v8931 = vpop.f32.mrf.mxu0
        %v8932 = vadd.f32 %v8828, %v8931
        %v8933 = vpop.f32.mrf.mxu0
        %8934 = vmatprep.mubr.bf16.mxu0 0
        %8935 = vmatmul.mubr.bf16.gmra.mxu0 %v8802
        %v8936 = vpop.f32.mrf.mxu0
        %v8937 = vadd.f32 %v8828, %v8936
        %v8938 = vpop.f32.mrf.mxu0
        %v8939 = vpop.f32.mrf.mxu0
        %v8940 = vadd.f32 %v8828, %v8939
        %v8941 = vpop.f32.mrf.mxu0
        %8942 = vmatprep.mubr.bf16.mxu0 0
        %8943 = vmatmul.mubr.bf16.gmra.mxu0 %v8803
        %v8944 = vpop.f32.mrf.mxu0
        %v8945 = vadd.f32 %v8828, %v8944
        %v8946 = vpop.f32.mrf.mxu0
        %v8947 = vpop.f32.mrf.mxu0
        %v8948 = vadd.f32 %v8828, %v8947
        %v8949 = vpop.f32.mrf.mxu0
        %8950 = vmatprep.mubr.bf16.mxu0 0
        %8951 = vmatmul.mubr.bf16.gmra.mxu0 %v8804
        %v8952 = vpop.f32.mrf.mxu0
        %v8953 = vadd.f32 %v8828, %v8952
        %v8954 = vpop.f32.mrf.mxu0
        %v8955 = vpop.f32.mrf.mxu0
        %v8956 = vadd.f32 %v8828, %v8955
        %v8957 = vpop.f32.mrf.mxu0
        %8958 = vmatprep.mubr.bf16.mxu0 0
        %8959 = vmatmul.mubr.bf16.gmra.mxu0 %v8805
        %v8960 = vpop.f32.mrf.mxu0
        %v8961 = vadd.f32 %v8828, %v8960
        %v8962 = vpop.f32.mrf.mxu0
        %v8963 = vpop.f32.mrf.mxu0
        %v8964 = vadd.f32 %v8828, %v8963
        %v8965 = vpop.f32.mrf.mxu0
        %8966 = vmatprep.mubr.bf16.mxu0 0
        %8967 = vmatmul.mubr.bf16.gmra.mxu0 %v8806
        %v8968 = vpop.f32.mrf.mxu0
        %v8969 = vadd.f32 %v8828, %v8968
        %v8970 = vpop.f32.mrf.mxu0
        %v8971 = vpop.f32.mrf.mxu0
        %v8972 = vadd.f32 %v8828, %v8971
        %v8973 = vpop.f32.mrf.mxu0
        %8974 = vdwg.mxu0
        %v8975 = vadd.f32 %v5802, %v8913
        %v8976 = vadd.f32 %v5803, %v8916
        %v8977 = vadd.f32 %v5804, %v8921
        %v8978 = vadd.f32 %v5805, %v8924
        %v8979 = vadd.f32 %v5806, %v8929
        %v8980 = vadd.f32 %v5807, %v8932
        %v8981 = vadd.f32 %v5808, %v8937
        %v8982 = vadd.f32 %v5809, %v8940
        %v8983 = vadd.f32 %v5810, %v8945
        %v8984 = vadd.f32 %v5811, %v8948
        %v8985 = vadd.f32 %v5812, %v8953
        %v8986 = vadd.f32 %v5813, %v8956
        %v8987 = vadd.f32 %v5814, %v8961
        %v8988 = vadd.f32 %v5815, %v8964
        %v8989 = vadd.f32 %v5816, %v8969
        %v8990 = vadd.f32 %v5817, %v8972
        %v8991 = vld [vmem:[%s18] sm:$0x1]
        %v8992 = vld [vmem:[%s19] sm:$0x1]
        %8993 = vadd.xlane.f32.xlu0 %v8975
        %v8994 = vpop.xlane.xlu0 %8993
        %8995 = vadd.xlane.f32.xlu0 %v8976
        %v8996 = vpop.xlane.xlu0 %8995
        %8997 = vadd.xlane.f32.xlu0 %v8977
        %v8998 = vpop.xlane.xlu0 %8997
        %8999 = vadd.xlane.f32.xlu0 %v8978
        %v9000 = vpop.xlane.xlu0 %8999
        %9001 = vadd.xlane.f32.xlu0 %v8979
        %v9002 = vpop.xlane.xlu0 %9001
        %9003 = vadd.xlane.f32.xlu0 %v8980
        %v9004 = vpop.xlane.xlu0 %9003
        %9005 = vadd.xlane.f32.xlu0 %v8981
        %v9006 = vpop.xlane.xlu0 %9005
        %9007 = vadd.xlane.f32.xlu0 %v8982
        %v9008 = vpop.xlane.xlu0 %9007
        %9009 = vadd.xlane.f32.xlu0 %v8983
        %v9010 = vpop.xlane.xlu0 %9009
        %9011 = vadd.xlane.f32.xlu0 %v8984
        %v9012 = vpop.xlane.xlu0 %9011
        %9013 = vadd.xlane.f32.xlu0 %v8985
        %v9014 = vpop.xlane.xlu0 %9013
        %9015 = vadd.xlane.f32.xlu0 %v8986
        %v9016 = vpop.xlane.xlu0 %9015
        %9017 = vadd.xlane.f32.xlu0 %v8987
        %v9018 = vpop.xlane.xlu0 %9017
        %9019 = vadd.xlane.f32.xlu0 %v8988
        %v9020 = vpop.xlane.xlu0 %9019
        %9021 = vadd.xlane.f32.xlu0 %v8989
        %v9022 = vpop.xlane.xlu0 %9021
        %9023 = vadd.xlane.f32.xlu0 %v8990
        %v9024 = vpop.xlane.xlu0 %9023
        %v9025 = vmul.f32 %v8994, %v5629
        %v9026 = vmul.f32 %v8996, %v5629
        %v9027 = vmul.f32 %v8998, %v5629
        %v9028 = vmul.f32 %v9000, %v5629
        %v9029 = vmul.f32 %v9002, %v5629
        %v9030 = vmul.f32 %v9004, %v5629
        %v9031 = vmul.f32 %v9006, %v5629
        %v9032 = vmul.f32 %v9008, %v5629
        %v9033 = vmul.f32 %v9010, %v5629
        %v9034 = vmul.f32 %v9012, %v5629
        %v9035 = vmul.f32 %v9014, %v5629
        %v9036 = vmul.f32 %v9016, %v5629
        %v9037 = vmul.f32 %v9018, %v5629
        %v9038 = vmul.f32 %v9020, %v5629
        %v9039 = vmul.f32 %v9022, %v5629
        %v9040 = vmul.f32 %v9024, %v5629
        %v9041 = vsub.f32 %v8975, %v9025
        %v9042 = vsub.f32 %v8976, %v9026
        %v9043 = vsub.f32 %v8977, %v9027
        %v9044 = vsub.f32 %v8978, %v9028
        %v9045 = vsub.f32 %v8979, %v9029
        %v9046 = vsub.f32 %v8980, %v9030
        %v9047 = vsub.f32 %v8981, %v9031
        %v9048 = vsub.f32 %v8982, %v9032
        %v9049 = vsub.f32 %v8983, %v9033
        %v9050 = vsub.f32 %v8984, %v9034
        %v9051 = vsub.f32 %v8985, %v9035
        %v9052 = vsub.f32 %v8986, %v9036
        %v9053 = vsub.f32 %v8987, %v9037
        %v9054 = vsub.f32 %v8988, %v9038
        %v9055 = vsub.f32 %v8989, %v9039
        %v9056 = vsub.f32 %v8990, %v9040
        %v9057 = vmul.f32 %v9041, %v9041
        %v9058 = vmul.f32 %v9042, %v9042
        %v9059 = vmul.f32 %v9043, %v9043
        %v9060 = vmul.f32 %v9044, %v9044
        %v9061 = vmul.f32 %v9045, %v9045
        %v9062 = vmul.f32 %v9046, %v9046
        %v9063 = vmul.f32 %v9047, %v9047
        %v9064 = vmul.f32 %v9048, %v9048
        %v9065 = vmul.f32 %v9049, %v9049
        %v9066 = vmul.f32 %v9050, %v9050
        %v9067 = vmul.f32 %v9051, %v9051
        %v9068 = vmul.f32 %v9052, %v9052
        %v9069 = vmul.f32 %v9053, %v9053
        %v9070 = vmul.f32 %v9054, %v9054
        %v9071 = vmul.f32 %v9055, %v9055
        %v9072 = vmul.f32 %v9056, %v9056
        %9073 = vadd.xlane.f32.xlu0 %v9057
        %v9074 = vpop.xlane.xlu0 %9073
        %9075 = vadd.xlane.f32.xlu0 %v9058
        %v9076 = vpop.xlane.xlu0 %9075
        %9077 = vadd.xlane.f32.xlu0 %v9059
        %v9078 = vpop.xlane.xlu0 %9077
        %9079 = vadd.xlane.f32.xlu0 %v9060
        %v9080 = vpop.xlane.xlu0 %9079
        %9081 = vadd.xlane.f32.xlu0 %v9061
        %v9082 = vpop.xlane.xlu0 %9081
        %9083 = vadd.xlane.f32.xlu0 %v9062
        %v9084 = vpop.xlane.xlu0 %9083
        %9085 = vadd.xlane.f32.xlu0 %v9063
        %v9086 = vpop.xlane.xlu0 %9085
        %9087 = vadd.xlane.f32.xlu0 %v9064
        %v9088 = vpop.xlane.xlu0 %9087
        %9089 = vadd.xlane.f32.xlu0 %v9065
        %v9090 = vpop.xlane.xlu0 %9089
        %9091 = vadd.xlane.f32.xlu0 %v9066
        %v9092 = vpop.xlane.xlu0 %9091
        %9093 = vadd.xlane.f32.xlu0 %v9067
        %v9094 = vpop.xlane.xlu0 %9093
        %9095 = vadd.xlane.f32.xlu0 %v9068
        %v9096 = vpop.xlane.xlu0 %9095
        %9097 = vadd.xlane.f32.xlu0 %v9069
        %v9098 = vpop.xlane.xlu0 %9097
        %9099 = vadd.xlane.f32.xlu0 %v9070
        %v9100 = vpop.xlane.xlu0 %9099
        %9101 = vadd.xlane.f32.xlu0 %v9071
        %v9102 = vpop.xlane.xlu0 %9101
        %9103 = vadd.xlane.f32.xlu0 %v9072
        %v9104 = vpop.xlane.xlu0 %9103
        %v9105 = vmul.f32 %v9074, %v5629
        %v9106 = vmul.f32 %v9076, %v5629
        %v9107 = vmul.f32 %v9078, %v5629
        %v9108 = vmul.f32 %v9080, %v5629
        %v9109 = vmul.f32 %v9082, %v5629
        %v9110 = vmul.f32 %v9084, %v5629
        %v9111 = vmul.f32 %v9086, %v5629
        %v9112 = vmul.f32 %v9088, %v5629
        %v9113 = vmul.f32 %v9090, %v5629
        %v9114 = vmul.f32 %v9092, %v5629
        %v9115 = vmul.f32 %v9094, %v5629
        %v9116 = vmul.f32 %v9096, %v5629
        %v9117 = vmul.f32 %v9098, %v5629
        %v9118 = vmul.f32 %v9100, %v5629
        %v9119 = vmul.f32 %v9102, %v5629
        %v9120 = vmul.f32 %v9104, %v5629
        %v9121 = vadd.f32 %v9105, 1e-05
        %v9122 = vadd.f32 %v9106, 1e-05
        %v9123 = vadd.f32 %v9107, 1e-05
        %v9124 = vadd.f32 %v9108, 1e-05
        %v9125 = vadd.f32 %v9109, 1e-05
        %v9126 = vadd.f32 %v9110, 1e-05
        %v9127 = vadd.f32 %v9111, 1e-05
        %v9128 = vadd.f32 %v9112, 1e-05
        %v9129 = vadd.f32 %v9113, 1e-05
        %v9130 = vadd.f32 %v9114, 1e-05
        %v9131 = vadd.f32 %v9115, 1e-05
        %v9132 = vadd.f32 %v9116, 1e-05
        %v9133 = vadd.f32 %v9117, 1e-05
        %v9134 = vadd.f32 %v9118, 1e-05
        %v9135 = vadd.f32 %v9119, 1e-05
        %v9136 = vadd.f32 %v9120, 1e-05
        %v9137 = vrsqrt.pop %v9121
        %v9138 = vrsqrt.pop %v9122
        %v9139 = vrsqrt.pop %v9123
        %v9140 = vrsqrt.pop %v9124
        %v9141 = vrsqrt.pop %v9125
        %v9142 = vrsqrt.pop %v9126
        %v9143 = vrsqrt.pop %v9127
        %v9144 = vrsqrt.pop %v9128
        %v9145 = vrsqrt.pop %v9129
        %v9146 = vrsqrt.pop %v9130
        %v9147 = vrsqrt.pop %v9131
        %v9148 = vrsqrt.pop %v9132
        %v9149 = vrsqrt.pop %v9133
        %v9150 = vrsqrt.pop %v9134
        %v9151 = vrsqrt.pop %v9135
        %v9152 = vrsqrt.pop %v9136
        %v9153 = vmul.f32 %v9041, %v9137
        %v9154 = vmul.f32 %v9042, %v9138
        %v9155 = vmul.f32 %v9043, %v9139
        %v9156 = vmul.f32 %v9044, %v9140
        %v9157 = vmul.f32 %v9045, %v9141
        %v9158 = vmul.f32 %v9046, %v9142
        %v9159 = vmul.f32 %v9047, %v9143
        %v9160 = vmul.f32 %v9048, %v9144
        %v9161 = vmul.f32 %v9049, %v9145
        %v9162 = vmul.f32 %v9050, %v9146
        %v9163 = vmul.f32 %v9051, %v9147
        %v9164 = vmul.f32 %v9052, %v9148
        %v9165 = vmul.f32 %v9053, %v9149
        %v9166 = vmul.f32 %v9054, %v9150
        %v9167 = vmul.f32 %v9055, %v9151
        %v9168 = vmul.f32 %v9056, %v9152
        %v9170 = vlaneseq
        %v9171 = vshrl.u32 %v9170, 7
        %v9172 = vsub.s32 0, %v9171
        %v9173 = vrot.slane %v8991, %v9172
        %v9175 = vmul.f32 %v9153, %v9173
        %v9176 = vmul.f32 %v9154, %v9173
        %v9177 = vmul.f32 %v9155, %v9173
        %v9178 = vmul.f32 %v9156, %v9173
        %v9179 = vmul.f32 %v9157, %v9173
        %v9180 = vmul.f32 %v9158, %v9173
        %v9181 = vmul.f32 %v9159, %v9173
        %v9182 = vmul.f32 %v9160, %v9173
        %v9183 = vmul.f32 %v9161, %v9173
        %v9184 = vmul.f32 %v9162, %v9173
        %v9185 = vmul.f32 %v9163, %v9173
        %v9186 = vmul.f32 %v9164, %v9173
        %v9187 = vmul.f32 %v9165, %v9173
        %v9188 = vmul.f32 %v9166, %v9173
        %v9189 = vmul.f32 %v9167, %v9173
        %v9190 = vmul.f32 %v9168, %v9173
        %v9192 = vlaneseq
        %v9193 = vshrl.u32 %v9192, 7
        %v9194 = vsub.s32 0, %v9193
        %v9195 = vrot.slane %v8992, %v9194
        %v9197 = vadd.f32 %v9175, %v9195
        %v9198 = vadd.f32 %v9176, %v9195
        %v9199 = vadd.f32 %v9177, %v9195
        %v9200 = vadd.f32 %v9178, %v9195
        %v9201 = vadd.f32 %v9179, %v9195
        %v9202 = vadd.f32 %v9180, %v9195
        %v9203 = vadd.f32 %v9181, %v9195
        %v9204 = vadd.f32 %v9182, %v9195
        %v9205 = vadd.f32 %v9183, %v9195
        %v9206 = vadd.f32 %v9184, %v9195
        %v9207 = vadd.f32 %v9185, %v9195
        %v9208 = vadd.f32 %v9186, %v9195
        %v9209 = vadd.f32 %v9187, %v9195
        %v9210 = vadd.f32 %v9188, %v9195
        %v9211 = vadd.f32 %v9189, %v9195
        %v9212 = vadd.f32 %v9190, %v9195
        %v9213 = vpack.c.bf16 %v9198, %v9197
        %v9214 = vpack.c.bf16 %v9200, %v9199
        %v9215 = vpack.c.bf16 %v9202, %v9201
        %v9216 = vpack.c.bf16 %v9204, %v9203
        %v9217 = vpack.c.bf16 %v9206, %v9205
        %v9218 = vpack.c.bf16 %v9208, %v9207
        %v9219 = vpack.c.bf16 %v9210, %v9209
        %v9220 = vpack.c.bf16 %v9212, %v9211
        %v9221 = vld [vmem:[#allocation19] sm:$0xff]
        %v9222 = vld [vmem:[#allocation19 + $0x8] sm:$0xff]
        %v9223 = vld [vmem:[#allocation19 + $0x10] sm:$0xff]
        %v9224 = vld [vmem:[#allocation19 + $0x18] sm:$0xff]
        %v9225 = vld [vmem:[#allocation19 + $0x20] sm:$0xff]
        %v9226 = vld [vmem:[#allocation19 + $0x28] sm:$0xff]
        %v9227 = vld [vmem:[#allocation19 + $0x30] sm:$0xff]
        %v9228 = vld [vmem:[#allocation19 + $0x38] sm:$0xff]
        %v9229 = vld [vmem:[#allocation19 + $0x40] sm:$0xff]
        %v9230 = vld [vmem:[#allocation19 + $0x48] sm:$0xff]
        %v9231 = vld [vmem:[#allocation19 + $0x50] sm:$0xff]
        %v9232 = vld [vmem:[#allocation19 + $0x58] sm:$0xff]
        %v9233 = vld [vmem:[#allocation19 + $0x60] sm:$0xff]
        %v9234 = vld [vmem:[#allocation19 + $0x68] sm:$0xff]
        %v9235 = vld [vmem:[#allocation19 + $0x70] sm:$0xff]
        %v9236 = vld [vmem:[#allocation19 + $0x78] sm:$0xff]
        %v9237 = vld [vmem:[%s23] sm:$0x3]
        %v9239 = vlaneseq
        %v9240 = vshrl.u32 %v9239, 7
        %v9241 = vsub.s32 0, %v9240
        %v9242 = vrot.slane %v9237, %v9241
        %v9243 = vlaneseq
        %v9244 = vshrl.u32 %v9243, 7
        %v9245 = vsub.s32 1, %v9244
        %v9246 = vrot.slane %v9237, %v9245
        %v9265 = vunpack.c.l.b16 %v9221
        %v9266 = vunpack.c.h.b16 %v9221
        %v9267 = vunpack.c.l.b16 %v9222
        %v9268 = vunpack.c.h.b16 %v9222
        %v9269 = vunpack.c.l.b16 %v9223
        %v9270 = vunpack.c.h.b16 %v9223
        %v9271 = vunpack.c.l.b16 %v9224
        %v9272 = vunpack.c.h.b16 %v9224
        %v9273 = vunpack.c.l.b16 %v9225
        %v9274 = vunpack.c.h.b16 %v9225
        %v9275 = vunpack.c.l.b16 %v9226
        %v9276 = vunpack.c.h.b16 %v9226
        %v9277 = vunpack.c.l.b16 %v9227
        %v9278 = vunpack.c.h.b16 %v9227
        %v9279 = vunpack.c.l.b16 %v9228
        %v9280 = vunpack.c.h.b16 %v9228
        %v9281 = vunpack.c.l.b16 %v9229
        %v9282 = vunpack.c.h.b16 %v9229
        %v9283 = vunpack.c.l.b16 %v9230
        %v9284 = vunpack.c.h.b16 %v9230
        %v9285 = vunpack.c.l.b16 %v9231
        %v9286 = vunpack.c.h.b16 %v9231
        %v9287 = vunpack.c.l.b16 %v9232
        %v9288 = vunpack.c.h.b16 %v9232
        %v9289 = vunpack.c.l.b16 %v9233
        %v9290 = vunpack.c.h.b16 %v9233
        %v9291 = vunpack.c.l.b16 %v9234
        %v9292 = vunpack.c.h.b16 %v9234
        %v9293 = vunpack.c.l.b16 %v9235
        %v9294 = vunpack.c.h.b16 %v9235
        %v9295 = vunpack.c.l.b16 %v9236
        %v9296 = vunpack.c.h.b16 %v9236
        %v9297 = vpack.c.b16 %v9267, %v9265
        %v9298 = vpack.c.b16 %v9268, %v9266
        %v9299 = vpack.c.b16 %v9271, %v9269
        %v9300 = vpack.c.b16 %v9272, %v9270
        %v9301 = vpack.c.b16 %v9275, %v9273
        %v9302 = vpack.c.b16 %v9276, %v9274
        %v9303 = vpack.c.b16 %v9279, %v9277
        %v9304 = vpack.c.b16 %v9280, %v9278
        %v9305 = vpack.c.b16 %v9283, %v9281
        %v9306 = vpack.c.b16 %v9284, %v9282
        %v9307 = vpack.c.b16 %v9287, %v9285
        %v9308 = vpack.c.b16 %v9288, %v9286
        %v9309 = vpack.c.b16 %v9291, %v9289
        %v9310 = vpack.c.b16 %v9292, %v9290
        %v9311 = vpack.c.b16 %v9295, %v9293
        %v9312 = vpack.c.b16 %v9296, %v9294
        %9329 = vmatprep.subr.bf16.mxu0 %v9312
        %9330 = vmatpush1.bf16.msra.mxu0 %v9311
        %9331 = vmatprep.subr.bf16.mxu0 %v9310
        %9332 = vmatpush1.bf16.msra.mxu0 %v9309
        %9333 = vmatprep.subr.bf16.mxu0 %v9308
        %9334 = vmatpush1.bf16.msra.mxu0 %v9307
        %9335 = vmatprep.subr.bf16.mxu0 %v9306
        %9336 = vmatpush1.bf16.msra.mxu0 %v9305
        %9337 = vmatprep.subr.bf16.mxu0 %v9304
        %9338 = vmatpush1.bf16.msra.mxu0 %v9303
        %9339 = vmatprep.subr.bf16.mxu0 %v9302
        %9340 = vmatpush1.bf16.msra.mxu0 %v9301
        %9341 = vmatprep.subr.bf16.mxu0 %v9300
        %9342 = vmatpush1.bf16.msra.mxu0 %v9299
        %9343 = vmatprep.subr.bf16.mxu0 %v9298
        %9344 = vmatpush1.bf16.msra.mxu0 %v9297
        %9345 = vmatprep.subr.bf16.mxu0 0
        %9346 = vmatpush2.bf16.msra.mxu0 0
        %9347 = vmatprep.subr.bf16.mxu0 0
        %9348 = vmatpush2.bf16.msra.mxu0 0
        %9349 = vmatprep.subr.bf16.mxu0 0
        %9350 = vmatpush2.bf16.msra.mxu0 0
        %9351 = vmatprep.subr.bf16.mxu0 0
        %9352 = vmatpush2.bf16.msra.mxu0 0
        %9353 = vmatprep.subr.bf16.mxu0 0
        %9354 = vmatpush2.bf16.msra.mxu0 0
        %9355 = vmatprep.subr.bf16.mxu0 0
        %9356 = vmatpush2.bf16.msra.mxu0 0
        %9357 = vmatprep.subr.bf16.mxu0 0
        %9358 = vmatpush2.bf16.msra.mxu0 0
        %9359 = vmatprep.subr.bf16.mxu0 0
        %9360 = vmatpush2.bf16.msra.mxu0 0
        %9361 = vmatprep.mubr.bf16.mxu0 0
        %9362 = vmatmul.mubr.bf16.gmra.mxu0 %v9213
        %v9363 = vpop.f32.mrf.mxu0
        %v9364 = vadd.f32 %v9242, %v9363
        %v9365 = vpop.f32.mrf.mxu0
        %v9366 = vadd.f32 %v9246, %v9365
        %v9367 = vpop.f32.mrf.mxu0
        %v9368 = vadd.f32 %v9242, %v9367
        %v9369 = vpop.f32.mrf.mxu0
        %v9370 = vadd.f32 %v9246, %v9369
        %9371 = vmatprep.mubr.bf16.mxu0 0
        %9372 = vmatmul.mubr.bf16.gmra.mxu0 %v9214
        %v9373 = vpop.f32.mrf.mxu0
        %v9374 = vadd.f32 %v9242, %v9373
        %v9375 = vpop.f32.mrf.mxu0
        %v9376 = vadd.f32 %v9246, %v9375
        %v9377 = vpop.f32.mrf.mxu0
        %v9378 = vadd.f32 %v9242, %v9377
        %v9379 = vpop.f32.mrf.mxu0
        %v9380 = vadd.f32 %v9246, %v9379
        %9381 = vmatprep.mubr.bf16.mxu0 0
        %9382 = vmatmul.mubr.bf16.gmra.mxu0 %v9215
        %v9383 = vpop.f32.mrf.mxu0
        %v9384 = vadd.f32 %v9242, %v9383
        %v9385 = vpop.f32.mrf.mxu0
        %v9386 = vadd.f32 %v9246, %v9385
        %v9387 = vpop.f32.mrf.mxu0
        %v9388 = vadd.f32 %v9242, %v9387
        %v9389 = vpop.f32.mrf.mxu0
        %v9390 = vadd.f32 %v9246, %v9389
        %9391 = vmatprep.mubr.bf16.mxu0 0
        %9392 = vmatmul.mubr.bf16.gmra.mxu0 %v9216
        %v9393 = vpop.f32.mrf.mxu0
        %v9394 = vadd.f32 %v9242, %v9393
        %v9395 = vpop.f32.mrf.mxu0
        %v9396 = vadd.f32 %v9246, %v9395
        %v9397 = vpop.f32.mrf.mxu0
        %v9398 = vadd.f32 %v9242, %v9397
        %v9399 = vpop.f32.mrf.mxu0
        %v9400 = vadd.f32 %v9246, %v9399
        %9401 = vmatprep.mubr.bf16.mxu0 0
        %9402 = vmatmul.mubr.bf16.gmra.mxu0 %v9217
        %v9403 = vpop.f32.mrf.mxu0
        %v9404 = vadd.f32 %v9242, %v9403
        %v9405 = vpop.f32.mrf.mxu0
        %v9406 = vadd.f32 %v9246, %v9405
        %v9407 = vpop.f32.mrf.mxu0
        %v9408 = vadd.f32 %v9242, %v9407
        %v9409 = vpop.f32.mrf.mxu0
        %v9410 = vadd.f32 %v9246, %v9409
        %9411 = vmatprep.mubr.bf16.mxu0 0
        %9412 = vmatmul.mubr.bf16.gmra.mxu0 %v9218
        %v9413 = vpop.f32.mrf.mxu0
        %v9414 = vadd.f32 %v9242, %v9413
        %v9415 = vpop.f32.mrf.mxu0
        %v9416 = vadd.f32 %v9246, %v9415
        %v9417 = vpop.f32.mrf.mxu0
        %v9418 = vadd.f32 %v9242, %v9417
        %v9419 = vpop.f32.mrf.mxu0
        %v9420 = vadd.f32 %v9246, %v9419
        %9421 = vmatprep.mubr.bf16.mxu0 0
        %9422 = vmatmul.mubr.bf16.gmra.mxu0 %v9219
        %v9423 = vpop.f32.mrf.mxu0
        %v9424 = vadd.f32 %v9242, %v9423
        %v9425 = vpop.f32.mrf.mxu0
        %v9426 = vadd.f32 %v9246, %v9425
        %v9427 = vpop.f32.mrf.mxu0
        %v9428 = vadd.f32 %v9242, %v9427
        %v9429 = vpop.f32.mrf.mxu0
        %v9430 = vadd.f32 %v9246, %v9429
        %9431 = vmatprep.mubr.bf16.mxu0 0
        %9432 = vmatmul.mubr.bf16.gmra.mxu0 %v9220
        %v9433 = vpop.f32.mrf.mxu0
        %v9434 = vadd.f32 %v9242, %v9433
        %v9435 = vpop.f32.mrf.mxu0
        %v9436 = vadd.f32 %v9246, %v9435
        %v9437 = vpop.f32.mrf.mxu0
        %v9438 = vadd.f32 %v9242, %v9437
        %v9439 = vpop.f32.mrf.mxu0
        %v9440 = vadd.f32 %v9246, %v9439
        %9441 = vdwg.mxu0
        %v9442 = vmax.f32 %v9364, 0.0
        %v9443 = vmax.f32 %v9366, 0.0
        %v9444 = vmax.f32 %v9368, 0.0
        %v9445 = vmax.f32 %v9370, 0.0
        %v9446 = vmax.f32 %v9374, 0.0
        %v9447 = vmax.f32 %v9376, 0.0
        %v9448 = vmax.f32 %v9378, 0.0
        %v9449 = vmax.f32 %v9380, 0.0
        %v9450 = vmax.f32 %v9384, 0.0
        %v9451 = vmax.f32 %v9386, 0.0
        %v9452 = vmax.f32 %v9388, 0.0
        %v9453 = vmax.f32 %v9390, 0.0
        %v9454 = vmax.f32 %v9394, 0.0
        %v9455 = vmax.f32 %v9396, 0.0
        %v9456 = vmax.f32 %v9398, 0.0
        %v9457 = vmax.f32 %v9400, 0.0
        %v9458 = vmax.f32 %v9404, 0.0
        %v9459 = vmax.f32 %v9406, 0.0
        %v9460 = vmax.f32 %v9408, 0.0
        %v9461 = vmax.f32 %v9410, 0.0
        %v9462 = vmax.f32 %v9414, 0.0
        %v9463 = vmax.f32 %v9416, 0.0
        %v9464 = vmax.f32 %v9418, 0.0
        %v9465 = vmax.f32 %v9420, 0.0
        %v9466 = vmax.f32 %v9424, 0.0
        %v9467 = vmax.f32 %v9426, 0.0
        %v9468 = vmax.f32 %v9428, 0.0
        %v9469 = vmax.f32 %v9430, 0.0
        %v9470 = vmax.f32 %v9434, 0.0
        %v9471 = vmax.f32 %v9436, 0.0
        %v9472 = vmax.f32 %v9438, 0.0
        %v9473 = vmax.f32 %v9440, 0.0
        %v9474 = vpack.c.bf16 %v9444, %v9442
        %v9475 = vpack.c.bf16 %v9445, %v9443
        %v9476 = vpack.c.bf16 %v9448, %v9446
        %v9477 = vpack.c.bf16 %v9449, %v9447
        %v9478 = vpack.c.bf16 %v9452, %v9450
        %v9479 = vpack.c.bf16 %v9453, %v9451
        %v9480 = vpack.c.bf16 %v9456, %v9454
        %v9481 = vpack.c.bf16 %v9457, %v9455
        %v9482 = vpack.c.bf16 %v9460, %v9458
        %v9483 = vpack.c.bf16 %v9461, %v9459
        %v9484 = vpack.c.bf16 %v9464, %v9462
        %v9485 = vpack.c.bf16 %v9465, %v9463
        %v9486 = vpack.c.bf16 %v9468, %v9466
        %v9487 = vpack.c.bf16 %v9469, %v9467
        %v9488 = vpack.c.bf16 %v9472, %v9470
        %v9489 = vpack.c.bf16 %v9473, %v9471
        %v9490 = vld [vmem:[#allocation20] sm:$0xf]
        %v9491 = vld [vmem:[#allocation20 + $0x4] sm:$0xf]
        %v9492 = vld [vmem:[#allocation20 + $0x8] sm:$0xf]
        %v9493 = vld [vmem:[#allocation20 + $0xc] sm:$0xf]
        %v9494 = vld [vmem:[#allocation20 + $0x10] sm:$0xf]
        %v9495 = vld [vmem:[#allocation20 + $0x14] sm:$0xf]
        %v9496 = vld [vmem:[#allocation20 + $0x18] sm:$0xf]
        %v9497 = vld [vmem:[#allocation20 + $0x1c] sm:$0xf]
        %v9498 = vld [vmem:[#allocation20 + $0x20] sm:$0xf]
        %v9499 = vld [vmem:[#allocation20 + $0x24] sm:$0xf]
        %v9500 = vld [vmem:[#allocation20 + $0x28] sm:$0xf]
        %v9501 = vld [vmem:[#allocation20 + $0x2c] sm:$0xf]
        %v9502 = vld [vmem:[#allocation20 + $0x30] sm:$0xf]
        %v9503 = vld [vmem:[#allocation20 + $0x34] sm:$0xf]
        %v9504 = vld [vmem:[#allocation20 + $0x38] sm:$0xf]
        %v9505 = vld [vmem:[#allocation20 + $0x3c] sm:$0xf]
        %v9506 = vld [vmem:[#allocation20 + $0x40] sm:$0xf]
        %v9507 = vld [vmem:[#allocation20 + $0x44] sm:$0xf]
        %v9508 = vld [vmem:[#allocation20 + $0x48] sm:$0xf]
        %v9509 = vld [vmem:[#allocation20 + $0x4c] sm:$0xf]
        %v9510 = vld [vmem:[#allocation20 + $0x50] sm:$0xf]
        %v9511 = vld [vmem:[#allocation20 + $0x54] sm:$0xf]
        %v9512 = vld [vmem:[#allocation20 + $0x58] sm:$0xf]
        %v9513 = vld [vmem:[#allocation20 + $0x5c] sm:$0xf]
        %v9514 = vld [vmem:[#allocation20 + $0x60] sm:$0xf]
        %v9515 = vld [vmem:[#allocation20 + $0x64] sm:$0xf]
        %v9516 = vld [vmem:[#allocation20 + $0x68] sm:$0xf]
        %v9517 = vld [vmem:[#allocation20 + $0x6c] sm:$0xf]
        %v9518 = vld [vmem:[#allocation20 + $0x70] sm:$0xf]
        %v9519 = vld [vmem:[#allocation20 + $0x74] sm:$0xf]
        %v9520 = vld [vmem:[#allocation20 + $0x78] sm:$0xf]
        %v9521 = vld [vmem:[#allocation20 + $0x7c] sm:$0xf]
        %v9522 = vld [vmem:[%s25] sm:$0x1]
        %v9524 = vlaneseq
        %v9525 = vshrl.u32 %v9524, 7
        %v9526 = vsub.s32 0, %v9525
        %v9527 = vrot.slane %v9522, %v9526
        %v9561 = vunpack.c.l.b16 %v9490
        %v9562 = vunpack.c.l.b16 %v9491
        %v9563 = vunpack.c.l.b16 %v9492
        %v9564 = vunpack.c.l.b16 %v9493
        %v9565 = vunpack.c.l.b16 %v9494
        %v9566 = vunpack.c.l.b16 %v9495
        %v9567 = vunpack.c.l.b16 %v9496
        %v9568 = vunpack.c.l.b16 %v9497
        %v9569 = vunpack.c.l.b16 %v9498
        %v9570 = vunpack.c.l.b16 %v9499
        %v9571 = vunpack.c.l.b16 %v9500
        %v9572 = vunpack.c.l.b16 %v9501
        %v9573 = vunpack.c.l.b16 %v9502
        %v9574 = vunpack.c.l.b16 %v9503
        %v9575 = vunpack.c.l.b16 %v9504
        %v9576 = vunpack.c.l.b16 %v9505
        %v9577 = vunpack.c.l.b16 %v9506
        %v9578 = vunpack.c.l.b16 %v9507
        %v9579 = vunpack.c.l.b16 %v9508
        %v9580 = vunpack.c.l.b16 %v9509
        %v9581 = vunpack.c.l.b16 %v9510
        %v9582 = vunpack.c.l.b16 %v9511
        %v9583 = vunpack.c.l.b16 %v9512
        %v9584 = vunpack.c.l.b16 %v9513
        %v9585 = vunpack.c.l.b16 %v9514
        %v9586 = vunpack.c.l.b16 %v9515
        %v9587 = vunpack.c.l.b16 %v9516
        %v9588 = vunpack.c.l.b16 %v9517
        %v9589 = vunpack.c.l.b16 %v9518
        %v9590 = vunpack.c.l.b16 %v9519
        %v9591 = vunpack.c.l.b16 %v9520
        %v9592 = vunpack.c.l.b16 %v9521
        %v9593 = vpack.c.b16 %v9562, %v9561
        %v9594 = vpack.c.b16 %v9564, %v9563
        %v9595 = vpack.c.b16 %v9566, %v9565
        %v9596 = vpack.c.b16 %v9568, %v9567
        %v9597 = vpack.c.b16 %v9570, %v9569
        %v9598 = vpack.c.b16 %v9572, %v9571
        %v9599 = vpack.c.b16 %v9574, %v9573
        %v9600 = vpack.c.b16 %v9576, %v9575
        %v9601 = vpack.c.b16 %v9578, %v9577
        %v9602 = vpack.c.b16 %v9580, %v9579
        %v9603 = vpack.c.b16 %v9582, %v9581
        %v9604 = vpack.c.b16 %v9584, %v9583
        %v9605 = vpack.c.b16 %v9586, %v9585
        %v9606 = vpack.c.b16 %v9588, %v9587
        %v9607 = vpack.c.b16 %v9590, %v9589
        %v9608 = vpack.c.b16 %v9592, %v9591
        %9625 = vmatprep.subr.bf16.mxu0 0
        %9626 = vmatpush1.bf16.msra.mxu0 %v9600
        %9627 = vmatprep.subr.bf16.mxu0 0
        %9628 = vmatpush1.bf16.msra.mxu0 %v9599
        %9629 = vmatprep.subr.bf16.mxu0 0
        %9630 = vmatpush1.bf16.msra.mxu0 %v9598
        %9631 = vmatprep.subr.bf16.mxu0 0
        %9632 = vmatpush1.bf16.msra.mxu0 %v9597
        %9633 = vmatprep.subr.bf16.mxu0 0
        %9634 = vmatpush1.bf16.msra.mxu0 %v9596
        %9635 = vmatprep.subr.bf16.mxu0 0
        %9636 = vmatpush1.bf16.msra.mxu0 %v9595
        %9637 = vmatprep.subr.bf16.mxu0 0
        %9638 = vmatpush1.bf16.msra.mxu0 %v9594
        %9639 = vmatprep.subr.bf16.mxu0 0
        %9640 = vmatpush1.bf16.msra.mxu0 %v9593
        %9641 = vmatprep.subr.bf16.mxu0 0
        %9642 = vmatpush2.bf16.msra.mxu0 %v9608
        %9643 = vmatprep.subr.bf16.mxu0 0
        %9644 = vmatpush2.bf16.msra.mxu0 %v9607
        %9645 = vmatprep.subr.bf16.mxu0 0
        %9646 = vmatpush2.bf16.msra.mxu0 %v9606
        %9647 = vmatprep.subr.bf16.mxu0 0
        %9648 = vmatpush2.bf16.msra.mxu0 %v9605
        %9649 = vmatprep.subr.bf16.mxu0 0
        %9650 = vmatpush2.bf16.msra.mxu0 %v9604
        %9651 = vmatprep.subr.bf16.mxu0 0
        %9652 = vmatpush2.bf16.msra.mxu0 %v9603
        %9653 = vmatprep.subr.bf16.mxu0 0
        %9654 = vmatpush2.bf16.msra.mxu0 %v9602
        %9655 = vmatprep.subr.bf16.mxu0 0
        %9656 = vmatpush2.bf16.msra.mxu0 %v9601
        %9657 = vmatprep.mubr.bf16.mxu0 %v9475
        %9658 = vmatmul.mubr.bf16.gmra.mxu0 %v9474
        %v9659 = vpop.f32.mrf.mxu0
        %v9660 = vadd.f32 %v9527, %v9659
        %v9661 = vpop.f32.mrf.mxu0
        %v9662 = vpop.f32.mrf.mxu0
        %v9663 = vadd.f32 %v9527, %v9662
        %v9664 = vpop.f32.mrf.mxu0
        %9665 = vmatprep.mubr.bf16.mxu0 %v9477
        %9666 = vmatmul.mubr.bf16.gmra.mxu0 %v9476
        %v9667 = vpop.f32.mrf.mxu0
        %v9668 = vadd.f32 %v9527, %v9667
        %v9669 = vpop.f32.mrf.mxu0
        %v9670 = vpop.f32.mrf.mxu0
        %v9671 = vadd.f32 %v9527, %v9670
        %v9672 = vpop.f32.mrf.mxu0
        %9673 = vmatprep.mubr.bf16.mxu0 %v9479
        %9674 = vmatmul.mubr.bf16.gmra.mxu0 %v9478
        %v9675 = vpop.f32.mrf.mxu0
        %v9676 = vadd.f32 %v9527, %v9675
        %v9677 = vpop.f32.mrf.mxu0
        %v9678 = vpop.f32.mrf.mxu0
        %v9679 = vadd.f32 %v9527, %v9678
        %v9680 = vpop.f32.mrf.mxu0
        %9681 = vmatprep.mubr.bf16.mxu0 %v9481
        %9682 = vmatmul.mubr.bf16.gmra.mxu0 %v9480
        %v9683 = vpop.f32.mrf.mxu0
        %v9684 = vadd.f32 %v9527, %v9683
        %v9685 = vpop.f32.mrf.mxu0
        %v9686 = vpop.f32.mrf.mxu0
        %v9687 = vadd.f32 %v9527, %v9686
        %v9688 = vpop.f32.mrf.mxu0
        %9689 = vmatprep.mubr.bf16.mxu0 %v9483
        %9690 = vmatmul.mubr.bf16.gmra.mxu0 %v9482
        %v9691 = vpop.f32.mrf.mxu0
        %v9692 = vadd.f32 %v9527, %v9691
        %v9693 = vpop.f32.mrf.mxu0
        %v9694 = vpop.f32.mrf.mxu0
        %v9695 = vadd.f32 %v9527, %v9694
        %v9696 = vpop.f32.mrf.mxu0
        %9697 = vmatprep.mubr.bf16.mxu0 %v9485
        %9698 = vmatmul.mubr.bf16.gmra.mxu0 %v9484
        %v9699 = vpop.f32.mrf.mxu0
        %v9700 = vadd.f32 %v9527, %v9699
        %v9701 = vpop.f32.mrf.mxu0
        %v9702 = vpop.f32.mrf.mxu0
        %v9703 = vadd.f32 %v9527, %v9702
        %v9704 = vpop.f32.mrf.mxu0
        %9705 = vmatprep.mubr.bf16.mxu0 %v9487
        %9706 = vmatmul.mubr.bf16.gmra.mxu0 %v9486
        %v9707 = vpop.f32.mrf.mxu0
        %v9708 = vadd.f32 %v9527, %v9707
        %v9709 = vpop.f32.mrf.mxu0
        %v9710 = vpop.f32.mrf.mxu0
        %v9711 = vadd.f32 %v9527, %v9710
        %v9712 = vpop.f32.mrf.mxu0
        %9713 = vmatprep.mubr.bf16.mxu0 %v9489
        %9714 = vmatmul.mubr.bf16.gmra.mxu0 %v9488
        %v9715 = vpop.f32.mrf.mxu0
        %v9716 = vadd.f32 %v9527, %v9715
        %v9717 = vpop.f32.mrf.mxu0
        %v9718 = vpop.f32.mrf.mxu0
        %v9719 = vadd.f32 %v9527, %v9718
        %v9720 = vpop.f32.mrf.mxu0
        %9721 = vdwg.mxu0
        %v9722 = vadd.f32 %v9197, %v9660
        %v9723 = vadd.f32 %v9198, %v9663
        %v9724 = vadd.f32 %v9199, %v9668
        %v9725 = vadd.f32 %v9200, %v9671
        %v9726 = vadd.f32 %v9201, %v9676
        %v9727 = vadd.f32 %v9202, %v9679
        %v9728 = vadd.f32 %v9203, %v9684
        %v9729 = vadd.f32 %v9204, %v9687
        %v9730 = vadd.f32 %v9205, %v9692
        %v9731 = vadd.f32 %v9206, %v9695
        %v9732 = vadd.f32 %v9207, %v9700
        %v9733 = vadd.f32 %v9208, %v9703
        %v9734 = vadd.f32 %v9209, %v9708
        %v9735 = vadd.f32 %v9210, %v9711
        %v9736 = vadd.f32 %v9211, %v9716
        %v9737 = vadd.f32 %v9212, %v9719
        %v9738 = vld [vmem:[%s20] sm:$0x1]
        %v9739 = vld [vmem:[%s21] sm:$0x1]
        %9740 = vadd.xlane.f32.xlu0 %v9722
        %v9741 = vpop.xlane.xlu0 %9740
        %9742 = vadd.xlane.f32.xlu0 %v9723
        %v9743 = vpop.xlane.xlu0 %9742
        %9744 = vadd.xlane.f32.xlu0 %v9724
        %v9745 = vpop.xlane.xlu0 %9744
        %9746 = vadd.xlane.f32.xlu0 %v9725
        %v9747 = vpop.xlane.xlu0 %9746
        %9748 = vadd.xlane.f32.xlu0 %v9726
        %v9749 = vpop.xlane.xlu0 %9748
        %9750 = vadd.xlane.f32.xlu0 %v9727
        %v9751 = vpop.xlane.xlu0 %9750
        %9752 = vadd.xlane.f32.xlu0 %v9728
        %v9753 = vpop.xlane.xlu0 %9752
        %9754 = vadd.xlane.f32.xlu0 %v9729
        %v9755 = vpop.xlane.xlu0 %9754
        %9756 = vadd.xlane.f32.xlu0 %v9730
        %v9757 = vpop.xlane.xlu0 %9756
        %9758 = vadd.xlane.f32.xlu0 %v9731
        %v9759 = vpop.xlane.xlu0 %9758
        %9760 = vadd.xlane.f32.xlu0 %v9732
        %v9761 = vpop.xlane.xlu0 %9760
        %9762 = vadd.xlane.f32.xlu0 %v9733
        %v9763 = vpop.xlane.xlu0 %9762
        %9764 = vadd.xlane.f32.xlu0 %v9734
        %v9765 = vpop.xlane.xlu0 %9764
        %9766 = vadd.xlane.f32.xlu0 %v9735
        %v9767 = vpop.xlane.xlu0 %9766
        %9768 = vadd.xlane.f32.xlu0 %v9736
        %v9769 = vpop.xlane.xlu0 %9768
        %9770 = vadd.xlane.f32.xlu0 %v9737
        %v9771 = vpop.xlane.xlu0 %9770
        %v9772 = vmul.f32 %v9741, %v5629
        %v9773 = vmul.f32 %v9743, %v5629
        %v9774 = vmul.f32 %v9745, %v5629
        %v9775 = vmul.f32 %v9747, %v5629
        %v9776 = vmul.f32 %v9749, %v5629
        %v9777 = vmul.f32 %v9751, %v5629
        %v9778 = vmul.f32 %v9753, %v5629
        %v9779 = vmul.f32 %v9755, %v5629
        %v9780 = vmul.f32 %v9757, %v5629
        %v9781 = vmul.f32 %v9759, %v5629
        %v9782 = vmul.f32 %v9761, %v5629
        %v9783 = vmul.f32 %v9763, %v5629
        %v9784 = vmul.f32 %v9765, %v5629
        %v9785 = vmul.f32 %v9767, %v5629
        %v9786 = vmul.f32 %v9769, %v5629
        %v9787 = vmul.f32 %v9771, %v5629
        %v9788 = vsub.f32 %v9722, %v9772
        %v9789 = vsub.f32 %v9723, %v9773
        %v9790 = vsub.f32 %v9724, %v9774
        %v9791 = vsub.f32 %v9725, %v9775
        %v9792 = vsub.f32 %v9726, %v9776
        %v9793 = vsub.f32 %v9727, %v9777
        %v9794 = vsub.f32 %v9728, %v9778
        %v9795 = vsub.f32 %v9729, %v9779
        %v9796 = vsub.f32 %v9730, %v9780
        %v9797 = vsub.f32 %v9731, %v9781
        %v9798 = vsub.f32 %v9732, %v9782
        %v9799 = vsub.f32 %v9733, %v9783
        %v9800 = vsub.f32 %v9734, %v9784
        %v9801 = vsub.f32 %v9735, %v9785
        %v9802 = vsub.f32 %v9736, %v9786
        %v9803 = vsub.f32 %v9737, %v9787
        %v9804 = vmul.f32 %v9788, %v9788
        %v9805 = vmul.f32 %v9789, %v9789
        %v9806 = vmul.f32 %v9790, %v9790
        %v9807 = vmul.f32 %v9791, %v9791
        %v9808 = vmul.f32 %v9792, %v9792
        %v9809 = vmul.f32 %v9793, %v9793
        %v9810 = vmul.f32 %v9794, %v9794
        %v9811 = vmul.f32 %v9795, %v9795
        %v9812 = vmul.f32 %v9796, %v9796
        %v9813 = vmul.f32 %v9797, %v9797
        %v9814 = vmul.f32 %v9798, %v9798
        %v9815 = vmul.f32 %v9799, %v9799
        %v9816 = vmul.f32 %v9800, %v9800
        %v9817 = vmul.f32 %v9801, %v9801
        %v9818 = vmul.f32 %v9802, %v9802
        %v9819 = vmul.f32 %v9803, %v9803
        %9820 = vadd.xlane.f32.xlu0 %v9804
        %v9821 = vpop.xlane.xlu0 %9820
        %9822 = vadd.xlane.f32.xlu0 %v9805
        %v9823 = vpop.xlane.xlu0 %9822
        %9824 = vadd.xlane.f32.xlu0 %v9806
        %v9825 = vpop.xlane.xlu0 %9824
        %9826 = vadd.xlane.f32.xlu0 %v9807
        %v9827 = vpop.xlane.xlu0 %9826
        %9828 = vadd.xlane.f32.xlu0 %v9808
        %v9829 = vpop.xlane.xlu0 %9828
        %9830 = vadd.xlane.f32.xlu0 %v9809
        %v9831 = vpop.xlane.xlu0 %9830
        %9832 = vadd.xlane.f32.xlu0 %v9810
        %v9833 = vpop.xlane.xlu0 %9832
        %9834 = vadd.xlane.f32.xlu0 %v9811
        %v9835 = vpop.xlane.xlu0 %9834
        %9836 = vadd.xlane.f32.xlu0 %v9812
        %v9837 = vpop.xlane.xlu0 %9836
        %9838 = vadd.xlane.f32.xlu0 %v9813
        %v9839 = vpop.xlane.xlu0 %9838
        %9840 = vadd.xlane.f32.xlu0 %v9814
        %v9841 = vpop.xlane.xlu0 %9840
        %9842 = vadd.xlane.f32.xlu0 %v9815
        %v9843 = vpop.xlane.xlu0 %9842
        %9844 = vadd.xlane.f32.xlu0 %v9816
        %v9845 = vpop.xlane.xlu0 %9844
        %9846 = vadd.xlane.f32.xlu0 %v9817
        %v9847 = vpop.xlane.xlu0 %9846
        %9848 = vadd.xlane.f32.xlu0 %v9818
        %v9849 = vpop.xlane.xlu0 %9848
        %9850 = vadd.xlane.f32.xlu0 %v9819
        %v9851 = vpop.xlane.xlu0 %9850
        %v9852 = vmul.f32 %v9821, %v5629
        %v9853 = vmul.f32 %v9823, %v5629
        %v9854 = vmul.f32 %v9825, %v5629
        %v9855 = vmul.f32 %v9827, %v5629
        %v9856 = vmul.f32 %v9829, %v5629
        %v9857 = vmul.f32 %v9831, %v5629
        %v9858 = vmul.f32 %v9833, %v5629
        %v9859 = vmul.f32 %v9835, %v5629
        %v9860 = vmul.f32 %v9837, %v5629
        %v9861 = vmul.f32 %v9839, %v5629
        %v9862 = vmul.f32 %v9841, %v5629
        %v9863 = vmul.f32 %v9843, %v5629
        %v9864 = vmul.f32 %v9845, %v5629
        %v9865 = vmul.f32 %v9847, %v5629
        %v9866 = vmul.f32 %v9849, %v5629
        %v9867 = vmul.f32 %v9851, %v5629
        %v9868 = vadd.f32 %v9852, 1e-05
        %v9869 = vadd.f32 %v9853, 1e-05
        %v9870 = vadd.f32 %v9854, 1e-05
        %v9871 = vadd.f32 %v9855, 1e-05
        %v9872 = vadd.f32 %v9856, 1e-05
        %v9873 = vadd.f32 %v9857, 1e-05
        %v9874 = vadd.f32 %v9858, 1e-05
        %v9875 = vadd.f32 %v9859, 1e-05
        %v9876 = vadd.f32 %v9860, 1e-05
        %v9877 = vadd.f32 %v9861, 1e-05
        %v9878 = vadd.f32 %v9862, 1e-05
        %v9879 = vadd.f32 %v9863, 1e-05
        %v9880 = vadd.f32 %v9864, 1e-05
        %v9881 = vadd.f32 %v9865, 1e-05
        %v9882 = vadd.f32 %v9866, 1e-05
        %v9883 = vadd.f32 %v9867, 1e-05
        %v9884 = vrsqrt.pop %v9868
        %v9885 = vrsqrt.pop %v9869
        %v9886 = vrsqrt.pop %v9870
        %v9887 = vrsqrt.pop %v9871
        %v9888 = vrsqrt.pop %v9872
        %v9889 = vrsqrt.pop %v9873
        %v9890 = vrsqrt.pop %v9874
        %v9891 = vrsqrt.pop %v9875
        %v9892 = vrsqrt.pop %v9876
        %v9893 = vrsqrt.pop %v9877
        %v9894 = vrsqrt.pop %v9878
        %v9895 = vrsqrt.pop %v9879
        %v9896 = vrsqrt.pop %v9880
        %v9897 = vrsqrt.pop %v9881
        %v9898 = vrsqrt.pop %v9882
        %v9899 = vrsqrt.pop %v9883
        %v9900 = vmul.f32 %v9788, %v9884
        %v9901 = vmul.f32 %v9789, %v9885
        %v9902 = vmul.f32 %v9790, %v9886
        %v9903 = vmul.f32 %v9791, %v9887
        %v9904 = vmul.f32 %v9792, %v9888
        %v9905 = vmul.f32 %v9793, %v9889
        %v9906 = vmul.f32 %v9794, %v9890
        %v9907 = vmul.f32 %v9795, %v9891
        %v9908 = vmul.f32 %v9796, %v9892
        %v9909 = vmul.f32 %v9797, %v9893
        %v9910 = vmul.f32 %v9798, %v9894
        %v9911 = vmul.f32 %v9799, %v9895
        %v9912 = vmul.f32 %v9800, %v9896
        %v9913 = vmul.f32 %v9801, %v9897
        %v9914 = vmul.f32 %v9802, %v9898
        %v9915 = vmul.f32 %v9803, %v9899
        %v9917 = vlaneseq
        %v9918 = vshrl.u32 %v9917, 7
        %v9919 = vsub.s32 0, %v9918
        %v9920 = vrot.slane %v9738, %v9919
        %v9922 = vmul.f32 %v9900, %v9920
        %v9923 = vmul.f32 %v9901, %v9920
        %v9924 = vmul.f32 %v9902, %v9920
        %v9925 = vmul.f32 %v9903, %v9920
        %v9926 = vmul.f32 %v9904, %v9920
        %v9927 = vmul.f32 %v9905, %v9920
        %v9928 = vmul.f32 %v9906, %v9920
        %v9929 = vmul.f32 %v9907, %v9920
        %v9930 = vmul.f32 %v9908, %v9920
        %v9931 = vmul.f32 %v9909, %v9920
        %v9932 = vmul.f32 %v9910, %v9920
        %v9933 = vmul.f32 %v9911, %v9920
        %v9934 = vmul.f32 %v9912, %v9920
        %v9935 = vmul.f32 %v9913, %v9920
        %v9936 = vmul.f32 %v9914, %v9920
        %v9937 = vmul.f32 %v9915, %v9920
        %v9939 = vlaneseq
        %v9940 = vshrl.u32 %v9939, 7
        %v9941 = vsub.s32 0, %v9940
        %v9942 = vrot.slane %v9739, %v9941
        %v9944 = vadd.f32 %v9922, %v9942
        %v9945 = vadd.f32 %v9923, %v9942
        %v9946 = vadd.f32 %v9924, %v9942
        %v9947 = vadd.f32 %v9925, %v9942
        %v9948 = vadd.f32 %v9926, %v9942
        %v9949 = vadd.f32 %v9927, %v9942
        %v9950 = vadd.f32 %v9928, %v9942
        %v9951 = vadd.f32 %v9929, %v9942
        %v9952 = vadd.f32 %v9930, %v9942
        %v9953 = vadd.f32 %v9931, %v9942
        %v9954 = vadd.f32 %v9932, %v9942
        %v9955 = vadd.f32 %v9933, %v9942
        %v9956 = vadd.f32 %v9934, %v9942
        %v9957 = vadd.f32 %v9935, %v9942
        %v9958 = vadd.f32 %v9936, %v9942
        %v9959 = vadd.f32 %v9937, %v9942
        %9960 = vst [vmem:[%s1057] sm:$0xff] %v9944
        %9961 = vst [vmem:[%s1057 + $0x8] sm:$0xff] %v9945
        %9962 = vst [vmem:[%s1057 + $0x10] sm:$0xff] %v9946
        %9963 = vst [vmem:[%s1057 + $0x18] sm:$0xff] %v9947
        %9964 = vst [vmem:[%s1057 + $0x20] sm:$0xff] %v9948
        %9965 = vst [vmem:[%s1057 + $0x28] sm:$0xff] %v9949
        %9966 = vst [vmem:[%s1057 + $0x30] sm:$0xff] %v9950
        %9967 = vst [vmem:[%s1057 + $0x38] sm:$0xff] %v9951
        %9968 = vst [vmem:[%s1057 + $0x40] sm:$0xff] %v9952
        %9969 = vst [vmem:[%s1057 + $0x48] sm:$0xff] %v9953
        %9970 = vst [vmem:[%s1057 + $0x50] sm:$0xff] %v9954
        %9971 = vst [vmem:[%s1057 + $0x58] sm:$0xff] %v9955
        %9972 = vst [vmem:[%s1057 + $0x60] sm:$0xff] %v9956
        %9973 = vst [vmem:[%s1057 + $0x68] sm:$0xff] %v9957
        %9974 = vst [vmem:[%s1057 + $0x70] sm:$0xff] %v9958
        %9975 = vst [vmem:[%s1057 + $0x78] sm:$0xff] %v9959
        %s9976 = sand.u32 %s641, 1
        %s9977 = scalar_lea.sflag [#allocation4], %s9976
        %s9978 = sand.u32 %s641, 1
        %s9979 = smul.addr %s9978, 128
        %s9980 = scalar_lea.vmem [#allocation22], %s9979
        // Predicated region
        $region173: #{tpu_custom_call.1} parent=123 // pred_check
          %p9981 = pneg %p651
        $region174: #{tpu_custom_call.1} parent=123 // pred_check_branch
          %9983 = sbr.rel (%p9981) target = $region176
        $region175: #{tpu_custom_call.1} parent=123 // pred_region
          %s9984 = smul.u32 16, %s58
          %s9986 = ssub.s32 2048, 2048
          %9987 = vsyncadd %s9977, %s9986
          %s9988 = smul.addr %s57, 32
          %s9989 = sadd.s32 %s9984, %s9988
          %s9990 = smul.addr %s9989, 128
          %s9991 = scalar_lea.hbm %s26, %s9990
          %s9992 = sshll.u32 %s9980, 4
          %s9993 = int_to_ptr.vmem [resolvable:$true] %s9992
          %9998 = dma.vmem_to_hbm [thread:$0]  %s9993, 2048, %s9991, %s9977, 128, 128, 8
        $region176: #{tpu_custom_call.1} parent=123 // pred_fallthru
          _
      $region124: #{tpu_custom_call.1} parent=5 // pred_fallthru
        _
      %p9999 = scmp.le.s32.totalorder 2, %s48
      // Predicated region
      $region177: #{tpu_custom_call.1} parent=5 // pred_check
        %p10000 = pneg %p9999
      $region178: #{tpu_custom_call.1} parent=5 // pred_check_branch
        %10002 = sbr.rel (%p10000) target = $region180
      $region179: #{tpu_custom_call.1} parent=5 // pred_region
        %s10003 = ssub.s32 %s48, 2
        // Predicated region
        $region181: #{tpu_custom_call.1} parent=179 // pred_check
          %p10004 = pneg %p657
        $region182: #{tpu_custom_call.1} parent=179 // pred_check_branch
          %10006 = sbr.rel (%p10004) target = $region184
        $region183: #{tpu_custom_call.1} parent=179 // pred_region
          %s10007 = sand.u32 %s642, 1
          %s10008 = scalar_lea.sflag [#allocation4], %s10007
          %s10009 = sand.u32 %s642, 1
          %s10010 = smul.addr %s10009, 128
          %s10011 = scalar_lea.vmem [#allocation22], %s10010
          %10012 = dma.done %s10008, 2048
        $region184: #{tpu_custom_call.1} parent=179 // pred_fallthru
          _
      $region180: #{tpu_custom_call.1} parent=5 // pred_fallthru
        _
    $region6: #{tpu_custom_call.1} parent=1 // loop_footer
      %s52 = sadd.s32 1, %s48
    $region7: #{tpu_custom_call.1} parent=1 // loop_footer_branch
      %47 = sbr.rel target = $region3
    $region8: #{tpu_custom_call.1} parent=1 // loop_exit
      _
    %10013 = vsyncpa [#allocation3], 1
    %s10014 = scalar_lea.sflag [#allocation3], 1
    %10015 = vsyncpa %s10014, 1
    %10016 = vsyncpa [#allocation6], 1
    %s10017 = scalar_lea.sflag [#allocation6], 1
    %10018 = vsyncpa %s10017, 1
    %10019 = vsyncpa [#allocation9], 1
    %s10020 = scalar_lea.sflag [#allocation9], 1
    %10021 = vsyncpa %s10020, 1
    %10022 = vsyncpa [#allocation12], 1
    %10023 = vsyncpa [#allocation15], 1
    %10024 = vsyncpa [#allocation18], 1
    %10025 = vsyncpa [#allocation21], 1
    %10026 = vsyncpa [#allocation4], 1
    %s10027 = scalar_lea.sflag [#allocation4], 1
    %10028 = vsyncpa %s10027, 1

</llo_original>
